<compile_context>
chip_gen: v7x
topology: tpu7x:2x2x1
jax: 0.10.0
libtpu: 0.0.40
codegen_flags: <defaults>
</compile_context>

<pallas_src>
import functools

import numpy as np

import jax
import jax.numpy as jnp
from jax.experimental import pallas as pl
from jax.experimental.pallas import tpu as pltpu

N_LAYER = 3
BN_EPS = 1e-5
LANE = 128
MAX_UNROLL_TILES = 32  # statically unroll the streaming loop up to this many tiles


def _round_up(v, m):
    return (v + m - 1) // m * m


def _vmem_capacity_bytes():
    """Per-TensorCore VMEM capacity; conservative fallback if the query fails."""
    try:
        info = pltpu.get_tpu_info()
        for name in ("vmem_capacity_bytes", "vmem_bytes", "vmem_size_bytes"):
            v = getattr(info, name, None)
            if v:
                return int(v)
    except Exception:
        pass
    return 64 * 1024 * 1024  # v7x per-TC VMEM (most conservative)


def _column_bands(adj, n_pad, tm, lane=LANE):
    """Lane-aligned nonzero column band start per row tile + max band width."""
    a = np.asarray(jax.device_get(adj))
    n = a.shape[0]
    n_tiles = n_pad // tm
    lo_list = []
    width = lane
    for t in range(n_tiles):
        r0 = t * tm
        r1 = min(r0 + tm, n)
        if r0 >= n:
            lo_list.append(0)
            continue
        nz = np.nonzero(np.any(a[r0:r1] != 0.0, axis=0))[0]
        if nz.size == 0:
            lo_list.append(0)
            continue
        lo = (int(nz[0]) // lane) * lane
        hi = _round_up(int(nz[-1]) + 1, lane)
        lo_list.append(lo)
        width = max(width, hi - lo)
    return lo_list, width


# ----------------------------------------------------------------------------
# Pallas kernel: full Cy2C_GCN forward for one batch of graphs.
# ----------------------------------------------------------------------------
def cy2c_gcn_kernel(
    # inputs
    x_ref,        # (Np, Fp)  bf16  VMEM
    a_ref,        # (Np, Np)  bf16  VMEM (cached) or HBM (pl.ANY, streamed)
    c_ref,        # (Np, Np)  bf16  VMEM (cached) or HBM (pl.ANY, streamed)
    p_ref,        # (Gp, Np)  f32   VMEM  mean-pooling matrix
    emb_w_ref, emb_b_ref,
    convA_w_ref, convA_b_ref,      # (L, Hp, Hp), (L, 1, Hp)
    convB_w_ref, convB_b_ref,      # (Hp, Hp),    (1, Hp)
    bnA_g_ref, bnA_b_ref,          # (L, 1, Hp)
    bnB_g_ref, bnB_b_ref,          # (1, Hp)
    lin1a_w_ref, lin1b_w_ref, lin1_b_ref,
    lin2_w_ref, lin2_b_ref,
    lin3_w_ref, lin3_b_ref,
    # output
    out_ref,      # (Gp, Op)  f32
    # scratch
    abuf,         # (2, TM, band) bf16 double-buffered adjacency tiles (streamed)
    dma_sem,      # DMA semaphores (2,)
    y_ref,        # (Np, Hp)  bf16  projected features (streamed path only)
    h_ref,        # (Np, Hp)  f32   aggregation result (streamed path only)
    *,
    n_true,       # true (unpadded) node count (for BN statistics)
    n_tiles,      # row tiles per streamed aggregation
    tm,           # adjacency row-tile size
    band,         # streamed column band width (lane multiple)
    a_cached, c_cached,            # adjacency residency flags
    unroll,                        # statically unroll the streaming loop
    a_lo, c_lo,                    # static per-tile column-band offsets
):
    f32 = jnp.float32
    bf16 = jnp.bfloat16

    def bdot(a, b):
        return jnp.dot(a.astype(bf16), b.astype(bf16),
                       preferred_element_type=f32)

    # ---- streamed aggregation: h_ref <- A_hat @ Y (banded, double-buffered) --
    def aggregate_streamed(adj_hbm, lo_tbl, make_y):
        def issue(t, slot, lo):
            pltpu.make_async_copy(
                adj_hbm.at[pl.ds(t * tm, tm), pl.ds(lo, band)],
                abuf.at[slot], dma_sem.at[slot]).start()

        def wait(slot):
            # Dummy src only sizes the transfer; the semaphore/dst do the work.
            pltpu.make_async_copy(
                adj_hbm.at[pl.ds(0, tm), pl.ds(0, band)],
                abuf.at[slot], dma_sem.at[slot]).wait()

        # Hoist the first-tile DMA ahead of the X @ W projection so its
        # latency is hidden behind the MXU work.
        issue(0, 0, lo_tbl[0])
        y_ref[...] = make_y().astype(bf16)

        if unroll:
            # Static unroll: LLO can interleave waits / prefetch issues /
            # matmuls, and the per-tile column band is a compile-time offset.
            for t in range(n_tiles):
                slot = t % 2
                wait(slot)
                if t + 1 < n_tiles:
                    issue(t + 1, 1 - slot, lo_tbl[t + 1])
                lo = lo_tbl[t]
                h_ref[pl.ds(t * tm, tm), :] = jnp.dot(
                    abuf[slot], y_ref[pl.ds(lo, band), :],
                    preferred_element_type=f32)
        else:
            # TODO(synk): banded columns for the rolled loop need an SMEM
            # per-tile offset table; full rows (band == Np) are streamed here.
            @pl.loop(0, n_tiles)
            def _(t):
                slot = t % 2
                wait(slot)

                @pl.when(t + 1 < n_tiles)
                def _prefetch():
                    issue(t + 1, 1 - slot, 0)

                row0 = pl.multiple_of(t * tm, tm)
                h_ref[pl.ds(row0, tm), :] = jnp.dot(
                    abuf[slot], y_ref[pl.ds(0, band), :],
                    preferred_element_type=f32)

        return h_ref[...]

    def aggregate(adj_ref, lo_tbl, cached, make_y):
        if cached:
            # Adjacency is VMEM-resident: reused across layers at zero extra
            # HBM traffic.
            return jnp.dot(adj_ref[...], make_y().astype(bf16),
                           preferred_element_type=f32)
        return aggregate_streamed(adj_ref, lo_tbl, make_y)

    # ---- BatchNorm: two-pass batch statistics, padded rows masked out --------
    n_pad = x_ref.shape[0]
    row_ids = jax.lax.broadcasted_iota(jnp.int32, (n_pad, 1), 0)
    mask = (row_ids < n_true).astype(f32)          # (Np, 1), built once
    inv_n = 1.0 / float(n_true)

    def batchnorm(h, gamma, beta):
        mean = jnp.sum(h * mask, axis=0, keepdims=True) * inv_n
        cen = (h - mean) * mask
        var = jnp.sum(cen * cen, axis=0, keepdims=True) * inv_n
        return (h - mean) * jax.lax.rsqrt(var + BN_EPS) * gamma + beta

    x = x_ref[...]      # bf16
    P = p_ref[...]      # f32

    # x_0 = dropout(emb(x))  (dropout p = 0 -> identity)
    x0 = bdot(x, emb_w_ref[...]) + emb_b_ref[...]          # (Np, Hp) f32

    # ---- branch A: n_layer GCN blocks over edge_index -----------------------
    # TODO(synk): ping-pong VMEM scratch for xa/x0 to bound activation VMEM at
    # very large node counts.
    xa = x0
    for i in range(N_LAYER):
        h = aggregate(a_ref, a_lo, a_cached,
                      lambda xa=xa, i=i: bdot(xa, convA_w_ref[i]))
        h = h + convA_b_ref[i]                             # A_hat @ (X @ W) + b
        h = batchnorm(h, bnA_g_ref[i], bnA_b_ref[i])
        xa = jnp.maximum(h, 0.0) + xa                      # relu + residual

    # ---- branch B: one GCN block over cycle_index ----------------------------
    h = aggregate(c_ref, c_lo, c_cached, lambda: bdot(x0, convB_w_ref[...]))
    h = h + convB_b_ref[...]
    h = batchnorm(h, bnB_g_ref[...], bnB_b_ref[...])
    xb = jnp.maximum(h, 0.0) + x0

    # ---- global mean pool -----------------------------------------------------
    aa = bdot(P, xa)                                       # (Gp, Hp)
    bb = bdot(P, xb)

    # ---- MLP head: lin3(relu(lin2(relu(lin1(cat(aa,bb)))))) -------------------
    o = bdot(aa, lin1a_w_ref[...]) + bdot(bb, lin1b_w_ref[...]) + lin1_b_ref[...]
    o = jnp.maximum(o, 0.0)
    o = jnp.maximum(bdot(o, lin2_w_ref[...]) + lin2_b_ref[...], 0.0)
    out_ref[...] = bdot(o, lin3_w_ref[...]) + lin3_b_ref[...]


def _full_spec(shape):
    # whole-array block, single grid step
    return pl.BlockSpec(shape, lambda i: (0,) * len(shape))


def cy2c_gcn_forward(x, a_hat, c_hat, pool, params, *,
                     row_tile=None, force_stream=False):
    n, in_dim = x.shape
    g = pool.shape[0]
    hidden = params["emb_w"].shape[1]
    out_dim = params["lin3_w"].shape[1]

    # ---- per-generation sizing (VMEM capacity drives tile + limit choices) ---
    vmem_cap = _vmem_capacity_bytes()
    vmem_limit = max(min(vmem_cap - 16 * 1024 * 1024, 100 * 1024 * 1024),
                     32 * 1024 * 1024)
    if row_tile is None:
        row_tile = 512 if vmem_cap >= 96 * 1024 * 1024 else 256
    row_tile = max(LANE, min(row_tile, _round_up(n, LANE)))
    assert row_tile % LANE == 0

    f_pad = _round_up(in_dim, LANE)
    h_pad = _round_up(hidden, LANE)
    o_pad = _round_up(out_dim, LANE)
    g_pad = _round_up(g, 8)
    n_pad128 = _round_up(n, LANE)

    # ---- decide VMEM-resident vs. HBM-streamed adjacency ----------------------
    budget = int(vmem_limit * 0.75)         # headroom for Mosaic scratch/regalloc
    base_bytes = (n_pad128 * f_pad * 2 + g_pad * n_pad128 * 4
                  + g_pad * o_pad * 4 + 5 * n_pad128 * h_pad * 4
                  + 2 * 1024 * 1024)
    adj_bytes = n_pad128 * n_pad128 * 2
    a_cached = (not force_stream) and (base_bytes + adj_bytes <= budget)
    c_cached = a_cached and (base_bytes + 2 * adj_bytes <= budget)
    stream_any = (not a_cached) or (not c_cached)

    n_pad = _round_up(n, row_tile) if stream_any else n_pad128
    n_tiles = (n_pad // row_tile) if stream_any else 1
    unroll = n_tiles <= MAX_UNROLL_TILES

    # ---- column bands of the block-diagonal batched adjacency (streamed path) -
    if stream_any and unroll:
        a_lo, band_a = _column_bands(a_hat, n_pad, row_tile)
        c_lo, band_c = _column_bands(c_hat, n_pad, row_tile)
        band = min(max(band_a, band_c), n_pad)
        a_lo = tuple(min(lo, n_pad - band) for lo in a_lo)
        c_lo = tuple(min(lo, n_pad - band) for lo in c_lo)
    else:
        band = n_pad
        a_lo = c_lo = (0,) * max(n_tiles, 1)

    def pad2(t, r, c):
        return jnp.pad(t, ((0, r - t.shape[0]), (0, c - t.shape[1])))

    def pad3(t, r, c):
        return jnp.pad(t, ((0, 0), (0, r - t.shape[1]), (0, c - t.shape[2])))

    w1a = params["lin1_w"][:hidden]
    w1b = params["lin1_w"][hidden:]

    inputs = (
        pad2(x, n_pad, f_pad).astype(jnp.bfloat16),
        pad2(a_hat, n_pad, n_pad).astype(jnp.bfloat16),
        pad2(c_hat, n_pad, n_pad).astype(jnp.bfloat16),
        pad2(pool, g_pad, n_pad),
        pad2(params["emb_w"], f_pad, h_pad),
        pad2(params["emb_b"], 1, h_pad),
        pad3(params["convA_w"], h_pad, h_pad),
        pad3(params["convA_b"], 1, h_pad),
        pad2(params["convB_w"], h_pad, h_pad),
        pad2(params["convB_b"], 1, h_pad),
        pad3(params["bnA_g"], 1, h_pad),
        pad3(params["bnA_b"], 1, h_pad),
        pad2(params["bnB_g"], 1, h_pad),
        pad2(params["bnB_b"], 1, h_pad),
        pad2(w1a, h_pad, h_pad),
        pad2(w1b, h_pad, h_pad),
        pad2(params["lin1_b"], 1, h_pad),
        pad2(params["lin2_w"], h_pad, h_pad),
        pad2(params["lin2_b"], 1, h_pad),
        pad2(params["lin3_w"], h_pad, o_pad),
        pad2(params["lin3_b"], 1, o_pad),
    )

    def adj_spec(cached):
        if cached:
            return _full_spec((n_pad, n_pad))        # VMEM-resident, reused
        return pl.BlockSpec(memory_space=pl.ANY)     # HBM, streamed manually

    in_specs = ([_full_spec(inputs[0].shape), adj_spec(a_cached),
                 adj_spec(c_cached)]
                + [_full_spec(t.shape) for t in inputs[3:]])

    if stream_any:
        abuf_shape = (2, row_tile, band)
        yh_shape = (n_pad, h_pad)
    else:
        abuf_shape = (2, 8, LANE)                    # dummy (unused) scratch
        yh_shape = (8, LANE)

    kernel = functools.partial(
        cy2c_gcn_kernel, n_true=n, n_tiles=n_tiles, tm=row_tile, band=band,
        a_cached=a_cached, c_cached=c_cached, unroll=unroll,
        a_lo=tuple(a_lo), c_lo=tuple(c_lo))

    agg_cols_a = n_pad if a_cached else band
    agg_cols_c = n_pad if c_cached else band
    flops = (
        2 * N_LAYER * n_pad * agg_cols_a * h_pad     # branch-A aggregations
        + 2 * n_pad * agg_cols_c * h_pad             # branch-B aggregation
        + 2 * n_pad * f_pad * h_pad                  # embedding
        + 2 * (N_LAYER + 1) * n_pad * h_pad * h_pad  # X @ W projections
        + 4 * g_pad * n_pad * h_pad                  # pooling matmuls
        + 2 * g_pad * h_pad * (3 * h_pad + o_pad)    # MLP head
    )
    adj_a_bytes = (n_pad * n_pad * 2) if a_cached else (N_LAYER * n_pad * band * 2)
    adj_c_bytes = (n_pad * n_pad * 2) if c_cached else (n_pad * band * 2)
    bytes_accessed = (
        adj_a_bytes + adj_c_bytes
        + 2 * n_pad * f_pad
        + 4 * g_pad * n_pad + 4 * g_pad * o_pad
        + 4 * h_pad * (f_pad + (N_LAYER + 8) * h_pad + o_pad)
    )

    out = pl.pallas_call(
        kernel,
        out_shape=jax.ShapeDtypeStruct((g_pad, o_pad), jnp.float32),
        grid=(1,),
        in_specs=in_specs,
        out_specs=_full_spec((g_pad, o_pad)),
        scratch_shapes=[
            pltpu.VMEM(abuf_shape, jnp.bfloat16),    # adjacency tiles
            pltpu.SemaphoreType.DMA((2,)),
            pltpu.VMEM(yh_shape, jnp.bfloat16),      # projected features
            pltpu.VMEM(yh_shape, jnp.float32),       # aggregation output
        ],
        compiler_params=pltpu.CompilerParams(
            dimension_semantics=("arbitrary",),
            vmem_limit_bytes=int(vmem_limit),
        ),
        cost_estimate=pl.CostEstimate(
            flops=int(flops),
            transcendentals=int(4 * h_pad),
            bytes_accessed=int(bytes_accessed)),
    )(*inputs)

    return out[:g, :out_dim]


# ----------------------------------------------------------------------------
# Plain-JAX glue: dense normalized adjacency, pooling matrix, parameter init.
# ----------------------------------------------------------------------------
def normalized_adj(edge_index, num_nodes):
    src = edge_index[0]
    dst = edge_index[1]
    A = jnp.zeros((num_nodes, num_nodes), jnp.float32)
    A = A.at[dst, src].add(1.0)                     # message src -> dst
    A = A + jnp.eye(num_nodes, dtype=jnp.float32)   # add self loops
    deg = jnp.sum(A, axis=1)
    dinv = jax.lax.rsqrt(deg)
    return A * dinv[:, None] * dinv[None, :]


def pooling_matrix(batch, num_graphs):
    onehot = (batch[None, :] == jnp.arange(num_graphs)[:, None]).astype(jnp.float32)
    counts = jnp.sum(onehot, axis=1, keepdims=True)
    return onehot / counts  # (G, N)


def init_params(key, in_dim, hidden, out_dim, n_layer=N_LAYER):
    ks = jax.random.split(key, 16)
    s = 0.1
    return {
        "emb_w":   s * jax.random.normal(ks[0], (in_dim, hidden), jnp.float32),
        "emb_b":   s * jax.random.normal(ks[1], (1, hidden), jnp.float32),
        "convA_w": s * jax.random.normal(ks[2], (n_layer, hidden, hidden), jnp.float32),
        "convA_b": s * jax.random.normal(ks[3], (n_layer, 1, hidden), jnp.float32),
        "convB_w": s * jax.random.normal(ks[4], (hidden, hidden), jnp.float32),
        "convB_b": s * jax.random.normal(ks[5], (1, hidden), jnp.float32),
        # BatchNorm default init: gamma=1, beta=0
        "bnA_g":   jnp.ones((n_layer, 1, hidden), jnp.float32),
        "bnA_b":   jnp.zeros((n_layer, 1, hidden), jnp.float32),
        "bnB_g":   jnp.ones((1, hidden), jnp.float32),
        "bnB_b":   jnp.zeros((1, hidden), jnp.float32),
        "lin1_w":  s * jax.random.normal(ks[6], (2 * hidden, hidden), jnp.float32),
        "lin1_b":  s * jax.random.normal(ks[7], (1, hidden), jnp.float32),
        "lin2_w":  s * jax.random.normal(ks[8], (hidden, hidden), jnp.float32),
        "lin2_b":  s * jax.random.normal(ks[9], (1, hidden), jnp.float32),
        "lin3_w":  s * jax.random.normal(ks[10], (hidden, out_dim), jnp.float32),
        "lin3_b":  s * jax.random.normal(ks[11], (1, out_dim), jnp.float32),
    }


def reference_forward(x, a_hat, c_hat, pool, params):
    """Pure-JAX reference (mirrors the kernel's bf16 operand quantization)."""
    bf16 = jnp.bfloat16

    def bdot(a, b):
        return jnp.dot(a.astype(bf16), b.astype(bf16),
                       preferred_element_type=jnp.float32)

    def bn(h, g, b):
        m = jnp.mean(h, axis=0, keepdims=True)
        v = jnp.mean((h - m) ** 2, axis=0, keepdims=True)
        return (h - m) * jax.lax.rsqrt(v + BN_EPS) * g + b

    x0 = bdot(x, params["emb_w"]) + params["emb_b"]
    xa = x0
    for i in range(N_LAYER):
        h = bdot(a_hat, bdot(xa, params["convA_w"][i])) + params["convA_b"][i]
        xa = jnp.maximum(bn(h, params["bnA_g"][i], params["bnA_b"][i]), 0.0) + xa
    h = bdot(c_hat, bdot(x0, params["convB_w"])) + params["convB_b"]
    xb = jnp.maximum(bn(h, params["bnB_g"], params["bnB_b"]), 0.0) + x0
    aa = bdot(pool, xa)
    bb = bdot(pool, xb)
    cat = jnp.concatenate([aa, bb], axis=1)
    o = bdot(cat, params["lin1_w"]) + params["lin1_b"]
    o = jnp.maximum(o, 0.0)
    o = jnp.maximum(bdot(o, params["lin2_w"]) + params["lin2_b"], 0.0)
    return bdot(o, params["lin3_w"]) + params["lin3_b"]


if __name__ == "__main__":
    # 20 graphs x 16 nodes = 320 nodes.
    in_dim, hidden, out_dim = 16, 32, 8
    nodes_per_graph, num_graphs = 16, 20
    N = nodes_per_graph * num_graphs

    key = jax.random.PRNGKey(0)
    k_x, k_p = jax.random.split(key)
    x = jax.random.normal(k_x, (N, in_dim), jnp.float32)

    # edge_index: undirected ring inside each graph
    src, dst = [], []
    for gi in range(num_graphs):
        off = gi * nodes_per_graph
        for i in range(nodes_per_graph):
            j = (i + 1) % nodes_per_graph
            src += [off + i, off + j]
            dst += [off + j, off + i]
    edge_index = jnp.array([src, dst], dtype=jnp.int32)

    # cycle_index: undirected chords (i <-> i+2) inside each graph
    csrc, cdst = [], []
    for gi in range(num_graphs):
        off = gi * nodes_per_graph
        for i in range(nodes_per_graph):
            j = (i + 2) % nodes_per_graph
            csrc += [off + i, off + j]
            cdst += [off + j, off + i]
    cycle_index = jnp.array([csrc, cdst], dtype=jnp.int32)

    batch = jnp.repeat(jnp.arange(num_graphs, dtype=jnp.int32), nodes_per_graph)

    a_hat = normalized_adj(edge_index, N)
    c_hat = normalized_adj(cycle_index, N)
    pool = pooling_matrix(batch, num_graphs)
    params = init_params(k_p, in_dim, hidden, out_dim)

    ref = reference_forward(x, a_hat, c_hat, pool, params)

    # Path 1: default sizing -> adjacencies cached in VMEM (small N).
    out = cy2c_gcn_forward(x, a_hat, c_hat, pool, params)
    out = jax.block_until_ready(out)
    assert out.shape == (num_graphs, out_dim)
    err1 = float(jnp.max(jnp.abs(out - ref)))
    assert jnp.allclose(out, ref, rtol=3e-3, atol=3e-3), f"cached max_err={err1}"

    # Path 2: force the HBM streaming path (banded, double-buffered DMA).
    out_s = cy2c_gcn_forward(x, a_hat, c_hat, pool, params,
                             force_stream=True, row_tile=128)
    out_s = jax.block_until_ready(out_s)
    err2 = float(jnp.max(jnp.abs(out_s - ref)))
    assert jnp.allclose(out_s, ref, rtol=3e-3, atol=3e-3), f"streamed max_err={err2}"

    print("KERNEL_OK")
</pallas_src>

<mosaic_0001>
module attributes {stable_mosaic.version = 11 : i64} {
  func.func @cy2c_gcn_kernel(%arg0: i32, %arg1: memref<384x128xbf16, #tpu.memory_space<vmem>>, %arg2: memref<384x384xbf16, #tpu.memory_space<vmem>>, %arg3: memref<384x384xbf16, #tpu.memory_space<vmem>>, %arg4: memref<24x384xf32, #tpu.memory_space<vmem>>, %arg5: memref<128x128xf32, #tpu.memory_space<vmem>>, %arg6: memref<1x128xf32, #tpu.memory_space<vmem>>, %arg7: memref<3x128x128xf32, #tpu.memory_space<vmem>>, %arg8: memref<3x1x128xf32, #tpu.memory_space<vmem>>, %arg9: memref<128x128xf32, #tpu.memory_space<vmem>>, %arg10: memref<1x128xf32, #tpu.memory_space<vmem>>, %arg11: memref<3x1x128xf32, #tpu.memory_space<vmem>>, %arg12: memref<3x1x128xf32, #tpu.memory_space<vmem>>, %arg13: memref<1x128xf32, #tpu.memory_space<vmem>>, %arg14: memref<1x128xf32, #tpu.memory_space<vmem>>, %arg15: memref<128x128xf32, #tpu.memory_space<vmem>>, %arg16: memref<128x128xf32, #tpu.memory_space<vmem>>, %arg17: memref<1x128xf32, #tpu.memory_space<vmem>>, %arg18: memref<128x128xf32, #tpu.memory_space<vmem>>, %arg19: memref<1x128xf32, #tpu.memory_space<vmem>>, %arg20: memref<128x128xf32, #tpu.memory_space<vmem>>, %arg21: memref<1x128xf32, #tpu.memory_space<vmem>>, %arg22: memref<24x128xf32, #tpu.memory_space<vmem>>, %arg23: memref<2x8x128xbf16, #tpu.memory_space<vmem>>, %arg24: memref<2x!tpu.dma_semaphore, #tpu.memory_space<semaphore_mem>>, %arg25: memref<8x128xbf16, #tpu.memory_space<vmem>>, %arg26: memref<8x128xf32, #tpu.memory_space<vmem>>) attributes {dimension_semantics = [#tpu.dimension_semantics<arbitrary>], iteration_bounds = array<i64: 1>, scalar_prefetch = 0 : i64, scratch_operands = 4 : i64, tpu.core_type = #tpu.core_type<tc>, window_params = [{pipeline_mode = #tpu.pipeline_mode<synchronous>, transform_indices = @transform_0, window_bounds = array<i64: 384, 128>}, {pipeline_mode = #tpu.pipeline_mode<synchronous>, transform_indices = @transform_1, window_bounds = array<i64: 384, 384>}, {pipeline_mode = #tpu.pipeline_mode<synchronous>, transform_indices = @transform_2, window_bounds = array<i64: 384, 384>}, {pipeline_mode = #tpu.pipeline_mode<synchronous>, transform_indices = @transform_3, window_bounds = array<i64: 24, 384>}, {pipeline_mode = #tpu.pipeline_mode<synchronous>, transform_indices = @transform_4, window_bounds = array<i64: 128, 128>}, {pipeline_mode = #tpu.pipeline_mode<synchronous>, transform_indices = @transform_5, window_bounds = array<i64: 1, 128>}, {pipeline_mode = #tpu.pipeline_mode<synchronous>, transform_indices = @transform_6, window_bounds = array<i64: 3, 128, 128>}, {pipeline_mode = #tpu.pipeline_mode<synchronous>, transform_indices = @transform_7, window_bounds = array<i64: 3, 1, 128>}, {pipeline_mode = #tpu.pipeline_mode<synchronous>, transform_indices = @transform_8, window_bounds = array<i64: 128, 128>}, {pipeline_mode = #tpu.pipeline_mode<synchronous>, transform_indices = @transform_9, window_bounds = array<i64: 1, 128>}, {pipeline_mode = #tpu.pipeline_mode<synchronous>, transform_indices = @transform_10, window_bounds = array<i64: 3, 1, 128>}, {pipeline_mode = #tpu.pipeline_mode<synchronous>, transform_indices = @transform_11, window_bounds = array<i64: 3, 1, 128>}, {pipeline_mode = #tpu.pipeline_mode<synchronous>, transform_indices = @transform_12, window_bounds = array<i64: 1, 128>}, {pipeline_mode = #tpu.pipeline_mode<synchronous>, transform_indices = @transform_13, window_bounds = array<i64: 1, 128>}, {pipeline_mode = #tpu.pipeline_mode<synchronous>, transform_indices = @transform_14, window_bounds = array<i64: 128, 128>}, {pipeline_mode = #tpu.pipeline_mode<synchronous>, transform_indices = @transform_15, window_bounds = array<i64: 128, 128>}, {pipeline_mode = #tpu.pipeline_mode<synchronous>, transform_indices = @transform_16, window_bounds = array<i64: 1, 128>}, {pipeline_mode = #tpu.pipeline_mode<synchronous>, transform_indices = @transform_17, window_bounds = array<i64: 128, 128>}, {pipeline_mode = #tpu.pipeline_mode<synchronous>, transform_indices = @transform_18, window_bounds = array<i64: 1, 128>}, {pipeline_mode = #tpu.pipeline_mode<synchronous>, transform_indices = @transform_19, window_bounds = array<i64: 128, 128>}, {pipeline_mode = #tpu.pipeline_mode<synchronous>, transform_indices = @transform_20, window_bounds = array<i64: 1, 128>}, {pipeline_mode = #tpu.pipeline_mode<synchronous>, transform_indices = @transform_21, window_bounds = array<i64: 24, 128>}]} {
    %0 = tpu.iota {dimensions = array<i32: 0>} : vector<384x1xi32>
    %c320_i32 = arith.constant 320 : i32
    %1 = vector.broadcast %c320_i32 : i32 to vector<384x1xi32>
    %2 = arith.cmpi slt, %0, %1 : vector<384x1xi32>
    %3 = arith.extui %2 : vector<384x1xi1> to vector<384x1xi32>
    %4 = arith.sitofp %3 : vector<384x1xi32> to vector<384x1xf32>
    %c0 = arith.constant 0 : index
    %c0_0 = arith.constant 0 : index
    %5 = vector.load %arg1[%c0, %c0_0] : memref<384x128xbf16, #tpu.memory_space<vmem>>, vector<384x128xbf16>
    %c0_1 = arith.constant 0 : index
    %c0_2 = arith.constant 0 : index
    %6 = vector.load %arg4[%c0_1, %c0_2] : memref<24x384xf32, #tpu.memory_space<vmem>>, vector<24x384xf32>
    %c0_3 = arith.constant 0 : index
    %c0_4 = arith.constant 0 : index
    %7 = vector.load %arg5[%c0_3, %c0_4] : memref<128x128xf32, #tpu.memory_space<vmem>>, vector<128x128xf32>
    %8 = arith.truncf %7 : vector<128x128xf32> to vector<128x128xbf16>
    %cst = arith.constant dense<0.000000e+00> : vector<384x128xf32>
    %9 = tpu.matmul %5, %8, %cst {dimension_numbers = #tpu.dot_dimension_numbers<[1], [0], [0], [1], [0, 0, 1, 1], [], []>} : vector<384x128xbf16>, vector<128x128xbf16>, vector<384x128xf32> -> vector<384x128xf32>
    %c0_5 = arith.constant 0 : index
    %c0_6 = arith.constant 0 : index
    %10 = vector.load %arg6[%c0_5, %c0_6] : memref<1x128xf32, #tpu.memory_space<vmem>>, vector<1x128xf32>
    %11 = vector.broadcast %10 : vector<1x128xf32> to vector<384x128xf32>
    %12 = arith.addf %9, %11 : vector<384x128xf32>
    %c0_7 = arith.constant 0 : index
    %c0_8 = arith.constant 0 : index
    %13 = vector.load %arg2[%c0_7, %c0_8] : memref<384x384xbf16, #tpu.memory_space<vmem>>, vector<384x384xbf16>
    %c0_9 = arith.constant 0 : index
    %c0_10 = arith.constant 0 : index
    %c0_11 = arith.constant 0 : index
    %14 = vector.load %arg7[%c0_9, %c0_10, %c0_11] : memref<3x128x128xf32, #tpu.memory_space<vmem>>, vector<1x128x128xf32>
    %15 = vector.shape_cast %14 : vector<1x128x128xf32> to vector<128x128xf32>
    %16 = arith.truncf %12 : vector<384x128xf32> to vector<384x128xbf16>
    %17 = arith.truncf %15 : vector<128x128xf32> to vector<128x128xbf16>
    %cst_12 = arith.constant dense<0.000000e+00> : vector<384x128xf32>
    %18 = tpu.matmul %16, %17, %cst_12 {dimension_numbers = #tpu.dot_dimension_numbers<[1], [0], [0], [1], [0, 0, 1, 1], [], []>} : vector<384x128xbf16>, vector<128x128xbf16>, vector<384x128xf32> -> vector<384x128xf32>
    %19 = arith.truncf %18 : vector<384x128xf32> to vector<384x128xbf16>
    %cst_13 = arith.constant dense<0.000000e+00> : vector<384x128xf32>
    %20 = tpu.matmul %13, %19, %cst_13 {dimension_numbers = #tpu.dot_dimension_numbers<[1], [0], [0], [1], [0, 0, 1, 1], [], []>} : vector<384x384xbf16>, vector<384x128xbf16>, vector<384x128xf32> -> vector<384x128xf32>
    %c0_14 = arith.constant 0 : index
    %c0_15 = arith.constant 0 : index
    %c0_16 = arith.constant 0 : index
    %21 = vector.load %arg8[%c0_14, %c0_15, %c0_16] : memref<3x1x128xf32, #tpu.memory_space<vmem>>, vector<1x1x128xf32>
    %22 = vector.shape_cast %21 : vector<1x1x128xf32> to vector<1x128xf32>
    %23 = vector.broadcast %22 : vector<1x128xf32> to vector<384x128xf32>
    %24 = arith.addf %20, %23 : vector<384x128xf32>
    %c0_17 = arith.constant 0 : index
    %c0_18 = arith.constant 0 : index
    %c0_19 = arith.constant 0 : index
    %25 = vector.load %arg11[%c0_17, %c0_18, %c0_19] : memref<3x1x128xf32, #tpu.memory_space<vmem>>, vector<1x1x128xf32>
    %26 = vector.shape_cast %25 : vector<1x1x128xf32> to vector<1x128xf32>
    %c0_20 = arith.constant 0 : index
    %c0_21 = arith.constant 0 : index
    %c0_22 = arith.constant 0 : index
    %27 = vector.load %arg12[%c0_20, %c0_21, %c0_22] : memref<3x1x128xf32, #tpu.memory_space<vmem>>, vector<1x1x128xf32>
    %28 = vector.shape_cast %27 : vector<1x1x128xf32> to vector<1x128xf32>
    %29 = vector.broadcast %4 : vector<384x1xf32> to vector<384x128xf32>
    %30 = arith.mulf %24, %29 : vector<384x128xf32>
    %cst_23 = arith.constant dense<0.000000e+00> : vector<128xf32>
    %31 = vector.multi_reduction <add>, %30, %cst_23 [0] : vector<384x128xf32> to vector<128xf32>
    %32 = vector.shape_cast %31 : vector<128xf32> to vector<1x128xf32>
    %cst_24 = arith.constant 3.125000e-03 : f32
    %33 = vector.broadcast %cst_24 : f32 to vector<1x128xf32>
    %34 = arith.mulf %32, %33 : vector<1x128xf32>
    %35 = vector.broadcast %34 : vector<1x128xf32> to vector<384x128xf32>
    %36 = arith.subf %24, %35 : vector<384x128xf32>
    %37 = vector.broadcast %4 : vector<384x1xf32> to vector<384x128xf32>
    %38 = arith.mulf %36, %37 : vector<384x128xf32>
    %39 = arith.mulf %38, %38 : vector<384x128xf32>
    %cst_25 = arith.constant dense<0.000000e+00> : vector<128xf32>
    %40 = vector.multi_reduction <add>, %39, %cst_25 [0] : vector<384x128xf32> to vector<128xf32>
    %41 = vector.shape_cast %40 : vector<128xf32> to vector<1x128xf32>
    %cst_26 = arith.constant 3.125000e-03 : f32
    %42 = vector.broadcast %cst_26 : f32 to vector<1x128xf32>
    %43 = arith.mulf %41, %42 : vector<1x128xf32>
    %44 = vector.broadcast %34 : vector<1x128xf32> to vector<384x128xf32>
    %45 = arith.subf %24, %44 : vector<384x128xf32>
    %cst_27 = arith.constant 9.99999974E-6 : f32
    %46 = vector.broadcast %cst_27 : f32 to vector<1x128xf32>
    %47 = arith.addf %43, %46 : vector<1x128xf32>
    %48 = math.rsqrt %47 : vector<1x128xf32>
    %49 = vector.broadcast %48 : vector<1x128xf32> to vector<384x128xf32>
    %50 = arith.mulf %45, %49 : vector<384x128xf32>
    %51 = vector.broadcast %26 : vector<1x128xf32> to vector<384x128xf32>
    %52 = arith.mulf %50, %51 : vector<384x128xf32>
    %53 = vector.broadcast %28 : vector<1x128xf32> to vector<384x128xf32>
    %54 = arith.addf %52, %53 : vector<384x128xf32>
    %cst_28 = arith.constant 0.000000e+00 : f32
    %55 = vector.broadcast %cst_28 : f32 to vector<384x128xf32>
    %56 = arith.maximumf %54, %55 : vector<384x128xf32>
    %57 = arith.addf %56, %12 : vector<384x128xf32>
    %c0_29 = arith.constant 0 : index
    %c0_30 = arith.constant 0 : index
    %58 = vector.load %arg2[%c0_29, %c0_30] : memref<384x384xbf16, #tpu.memory_space<vmem>>, vector<384x384xbf16>
    %c1 = arith.constant 1 : index
    %c0_31 = arith.constant 0 : index
    %c0_32 = arith.constant 0 : index
    %59 = vector.load %arg7[%c1, %c0_31, %c0_32] : memref<3x128x128xf32, #tpu.memory_space<vmem>>, vector<1x128x128xf32>
    %60 = vector.shape_cast %59 : vector<1x128x128xf32> to vector<128x128xf32>
    %61 = arith.truncf %57 : vector<384x128xf32> to vector<384x128xbf16>
    %62 = arith.truncf %60 : vector<128x128xf32> to vector<128x128xbf16>
    %cst_33 = arith.constant dense<0.000000e+00> : vector<384x128xf32>
    %63 = tpu.matmul %61, %62, %cst_33 {dimension_numbers = #tpu.dot_dimension_numbers<[1], [0], [0], [1], [0, 0, 1, 1], [], []>} : vector<384x128xbf16>, vector<128x128xbf16>, vector<384x128xf32> -> vector<384x128xf32>
    %64 = arith.truncf %63 : vector<384x128xf32> to vector<384x128xbf16>
    %cst_34 = arith.constant dense<0.000000e+00> : vector<384x128xf32>
    %65 = tpu.matmul %58, %64, %cst_34 {dimension_numbers = #tpu.dot_dimension_numbers<[1], [0], [0], [1], [0, 0, 1, 1], [], []>} : vector<384x384xbf16>, vector<384x128xbf16>, vector<384x128xf32> -> vector<384x128xf32>
    %c1_35 = arith.constant 1 : index
    %c0_36 = arith.constant 0 : index
    %c0_37 = arith.constant 0 : index
    %66 = vector.load %arg8[%c1_35, %c0_36, %c0_37] : memref<3x1x128xf32, #tpu.memory_space<vmem>>, vector<1x1x128xf32>
    %67 = vector.shape_cast %66 : vector<1x1x128xf32> to vector<1x128xf32>
    %68 = vector.broadcast %67 : vector<1x128xf32> to vector<384x128xf32>
    %69 = arith.addf %65, %68 : vector<384x128xf32>
    %c1_38 = arith.constant 1 : index
    %c0_39 = arith.constant 0 : index
    %c0_40 = arith.constant 0 : index
    %70 = vector.load %arg11[%c1_38, %c0_39, %c0_40] : memref<3x1x128xf32, #tpu.memory_space<vmem>>, vector<1x1x128xf32>
    %71 = vector.shape_cast %70 : vector<1x1x128xf32> to vector<1x128xf32>
    %c1_41 = arith.constant 1 : index
    %c0_42 = arith.constant 0 : index
    %c0_43 = arith.constant 0 : index
    %72 = vector.load %arg12[%c1_41, %c0_42, %c0_43] : memref<3x1x128xf32, #tpu.memory_space<vmem>>, vector<1x1x128xf32>
    %73 = vector.shape_cast %72 : vector<1x1x128xf32> to vector<1x128xf32>
    %74 = vector.broadcast %4 : vector<384x1xf32> to vector<384x128xf32>
    %75 = arith.mulf %69, %74 : vector<384x128xf32>
    %cst_44 = arith.constant dense<0.000000e+00> : vector<128xf32>
    %76 = vector.multi_reduction <add>, %75, %cst_44 [0] : vector<384x128xf32> to vector<128xf32>
    %77 = vector.shape_cast %76 : vector<128xf32> to vector<1x128xf32>
    %cst_45 = arith.constant 3.125000e-03 : f32
    %78 = vector.broadcast %cst_45 : f32 to vector<1x128xf32>
    %79 = arith.mulf %77, %78 : vector<1x128xf32>
    %80 = vector.broadcast %79 : vector<1x128xf32> to vector<384x128xf32>
    %81 = arith.subf %69, %80 : vector<384x128xf32>
    %82 = vector.broadcast %4 : vector<384x1xf32> to vector<384x128xf32>
    %83 = arith.mulf %81, %82 : vector<384x128xf32>
    %84 = arith.mulf %83, %83 : vector<384x128xf32>
    %cst_46 = arith.constant dense<0.000000e+00> : vector<128xf32>
    %85 = vector.multi_reduction <add>, %84, %cst_46 [0] : vector<384x128xf32> to vector<128xf32>
    %86 = vector.shape_cast %85 : vector<128xf32> to vector<1x128xf32>
    %cst_47 = arith.constant 3.125000e-03 : f32
    %87 = vector.broadcast %cst_47 : f32 to vector<1x128xf32>
    %88 = arith.mulf %86, %87 : vector<1x128xf32>
    %89 = vector.broadcast %79 : vector<1x128xf32> to vector<384x128xf32>
    %90 = arith.subf %69, %89 : vector<384x128xf32>
    %cst_48 = arith.constant 9.99999974E-6 : f32
    %91 = vector.broadcast %cst_48 : f32 to vector<1x128xf32>
    %92 = arith.addf %88, %91 : vector<1x128xf32>
    %93 = math.rsqrt %92 : vector<1x128xf32>
    %94 = vector.broadcast %93 : vector<1x128xf32> to vector<384x128xf32>
    %95 = arith.mulf %90, %94 : vector<384x128xf32>
    %96 = vector.broadcast %71 : vector<1x128xf32> to vector<384x128xf32>
    %97 = arith.mulf %95, %96 : vector<384x128xf32>
    %98 = vector.broadcast %73 : vector<1x128xf32> to vector<384x128xf32>
    %99 = arith.addf %97, %98 : vector<384x128xf32>
    %cst_49 = arith.constant 0.000000e+00 : f32
    %100 = vector.broadcast %cst_49 : f32 to vector<384x128xf32>
    %101 = arith.maximumf %99, %100 : vector<384x128xf32>
    %102 = arith.addf %101, %57 : vector<384x128xf32>
    %c0_50 = arith.constant 0 : index
    %c0_51 = arith.constant 0 : index
    %103 = vector.load %arg2[%c0_50, %c0_51] : memref<384x384xbf16, #tpu.memory_space<vmem>>, vector<384x384xbf16>
    %c2 = arith.constant 2 : index
    %c0_52 = arith.constant 0 : index
    %c0_53 = arith.constant 0 : index
    %104 = vector.load %arg7[%c2, %c0_52, %c0_53] : memref<3x128x128xf32, #tpu.memory_space<vmem>>, vector<1x128x128xf32>
    %105 = vector.shape_cast %104 : vector<1x128x128xf32> to vector<128x128xf32>
    %106 = arith.truncf %102 : vector<384x128xf32> to vector<384x128xbf16>
    %107 = arith.truncf %105 : vector<128x128xf32> to vector<128x128xbf16>
    %cst_54 = arith.constant dense<0.000000e+00> : vector<384x128xf32>
    %108 = tpu.matmul %106, %107, %cst_54 {dimension_numbers = #tpu.dot_dimension_numbers<[1], [0], [0], [1], [0, 0, 1, 1], [], []>} : vector<384x128xbf16>, vector<128x128xbf16>, vector<384x128xf32> -> vector<384x128xf32>
    %109 = arith.truncf %108 : vector<384x128xf32> to vector<384x128xbf16>
    %cst_55 = arith.constant dense<0.000000e+00> : vector<384x128xf32>
    %110 = tpu.matmul %103, %109, %cst_55 {dimension_numbers = #tpu.dot_dimension_numbers<[1], [0], [0], [1], [0, 0, 1, 1], [], []>} : vector<384x384xbf16>, vector<384x128xbf16>, vector<384x128xf32> -> vector<384x128xf32>
    %c2_56 = arith.constant 2 : index
    %c0_57 = arith.constant 0 : index
    %c0_58 = arith.constant 0 : index
    %111 = vector.load %arg8[%c2_56, %c0_57, %c0_58] : memref<3x1x128xf32, #tpu.memory_space<vmem>>, vector<1x1x128xf32>
    %112 = vector.shape_cast %111 : vector<1x1x128xf32> to vector<1x128xf32>
    %113 = vector.broadcast %112 : vector<1x128xf32> to vector<384x128xf32>
    %114 = arith.addf %110, %113 : vector<384x128xf32>
    %c2_59 = arith.constant 2 : index
    %c0_60 = arith.constant 0 : index
    %c0_61 = arith.constant 0 : index
    %115 = vector.load %arg11[%c2_59, %c0_60, %c0_61] : memref<3x1x128xf32, #tpu.memory_space<vmem>>, vector<1x1x128xf32>
    %116 = vector.shape_cast %115 : vector<1x1x128xf32> to vector<1x128xf32>
    %c2_62 = arith.constant 2 : index
    %c0_63 = arith.constant 0 : index
    %c0_64 = arith.constant 0 : index
    %117 = vector.load %arg12[%c2_62, %c0_63, %c0_64] : memref<3x1x128xf32, #tpu.memory_space<vmem>>, vector<1x1x128xf32>
    %118 = vector.shape_cast %117 : vector<1x1x128xf32> to vector<1x128xf32>
    %119 = vector.broadcast %4 : vector<384x1xf32> to vector<384x128xf32>
    %120 = arith.mulf %114, %119 : vector<384x128xf32>
    %cst_65 = arith.constant dense<0.000000e+00> : vector<128xf32>
    %121 = vector.multi_reduction <add>, %120, %cst_65 [0] : vector<384x128xf32> to vector<128xf32>
    %122 = vector.shape_cast %121 : vector<128xf32> to vector<1x128xf32>
    %cst_66 = arith.constant 3.125000e-03 : f32
    %123 = vector.broadcast %cst_66 : f32 to vector<1x128xf32>
    %124 = arith.mulf %122, %123 : vector<1x128xf32>
    %125 = vector.broadcast %124 : vector<1x128xf32> to vector<384x128xf32>
    %126 = arith.subf %114, %125 : vector<384x128xf32>
    %127 = vector.broadcast %4 : vector<384x1xf32> to vector<384x128xf32>
    %128 = arith.mulf %126, %127 : vector<384x128xf32>
    %129 = arith.mulf %128, %128 : vector<384x128xf32>
    %cst_67 = arith.constant dense<0.000000e+00> : vector<128xf32>
    %130 = vector.multi_reduction <add>, %129, %cst_67 [0] : vector<384x128xf32> to vector<128xf32>
    %131 = vector.shape_cast %130 : vector<128xf32> to vector<1x128xf32>
    %cst_68 = arith.constant 3.125000e-03 : f32
    %132 = vector.broadcast %cst_68 : f32 to vector<1x128xf32>
    %133 = arith.mulf %131, %132 : vector<1x128xf32>
    %134 = vector.broadcast %124 : vector<1x128xf32> to vector<384x128xf32>
    %135 = arith.subf %114, %134 : vector<384x128xf32>
    %cst_69 = arith.constant 9.99999974E-6 : f32
    %136 = vector.broadcast %cst_69 : f32 to vector<1x128xf32>
    %137 = arith.addf %133, %136 : vector<1x128xf32>
    %138 = math.rsqrt %137 : vector<1x128xf32>
    %139 = vector.broadcast %138 : vector<1x128xf32> to vector<384x128xf32>
    %140 = arith.mulf %135, %139 : vector<384x128xf32>
    %141 = vector.broadcast %116 : vector<1x128xf32> to vector<384x128xf32>
    %142 = arith.mulf %140, %141 : vector<384x128xf32>
    %143 = vector.broadcast %118 : vector<1x128xf32> to vector<384x128xf32>
    %144 = arith.addf %142, %143 : vector<384x128xf32>
    %cst_70 = arith.constant 0.000000e+00 : f32
    %145 = vector.broadcast %cst_70 : f32 to vector<384x128xf32>
    %146 = arith.maximumf %144, %145 : vector<384x128xf32>
    %147 = arith.addf %146, %102 : vector<384x128xf32>
    %c0_71 = arith.constant 0 : index
    %c0_72 = arith.constant 0 : index
    %148 = vector.load %arg3[%c0_71, %c0_72] : memref<384x384xbf16, #tpu.memory_space<vmem>>, vector<384x384xbf16>
    %c0_73 = arith.constant 0 : index
    %c0_74 = arith.constant 0 : index
    %149 = vector.load %arg9[%c0_73, %c0_74] : memref<128x128xf32, #tpu.memory_space<vmem>>, vector<128x128xf32>
    %150 = arith.truncf %12 : vector<384x128xf32> to vector<384x128xbf16>
    %151 = arith.truncf %149 : vector<128x128xf32> to vector<128x128xbf16>
    %cst_75 = arith.constant dense<0.000000e+00> : vector<384x128xf32>
    %152 = tpu.matmul %150, %151, %cst_75 {dimension_numbers = #tpu.dot_dimension_numbers<[1], [0], [0], [1], [0, 0, 1, 1], [], []>} : vector<384x128xbf16>, vector<128x128xbf16>, vector<384x128xf32> -> vector<384x128xf32>
    %153 = arith.truncf %152 : vector<384x128xf32> to vector<384x128xbf16>
    %cst_76 = arith.constant dense<0.000000e+00> : vector<384x128xf32>
    %154 = tpu.matmul %148, %153, %cst_76 {dimension_numbers = #tpu.dot_dimension_numbers<[1], [0], [0], [1], [0, 0, 1, 1], [], []>} : vector<384x384xbf16>, vector<384x128xbf16>, vector<384x128xf32> -> vector<384x128xf32>
    %c0_77 = arith.constant 0 : index
    %c0_78 = arith.constant 0 : index
    %155 = vector.load %arg10[%c0_77, %c0_78] : memref<1x128xf32, #tpu.memory_space<vmem>>, vector<1x128xf32>
    %156 = vector.broadcast %155 : vector<1x128xf32> to vector<384x128xf32>
    %157 = arith.addf %154, %156 : vector<384x128xf32>
    %c0_79 = arith.constant 0 : index
    %c0_80 = arith.constant 0 : index
    %158 = vector.load %arg13[%c0_79, %c0_80] : memref<1x128xf32, #tpu.memory_space<vmem>>, vector<1x128xf32>
    %c0_81 = arith.constant 0 : index
    %c0_82 = arith.constant 0 : index
    %159 = vector.load %arg14[%c0_81, %c0_82] : memref<1x128xf32, #tpu.memory_space<vmem>>, vector<1x128xf32>
    %160 = vector.broadcast %4 : vector<384x1xf32> to vector<384x128xf32>
    %161 = arith.mulf %157, %160 : vector<384x128xf32>
    %cst_83 = arith.constant dense<0.000000e+00> : vector<128xf32>
    %162 = vector.multi_reduction <add>, %161, %cst_83 [0] : vector<384x128xf32> to vector<128xf32>
    %163 = vector.shape_cast %162 : vector<128xf32> to vector<1x128xf32>
    %cst_84 = arith.constant 3.125000e-03 : f32
    %164 = vector.broadcast %cst_84 : f32 to vector<1x128xf32>
    %165 = arith.mulf %163, %164 : vector<1x128xf32>
    %166 = vector.broadcast %165 : vector<1x128xf32> to vector<384x128xf32>
    %167 = arith.subf %157, %166 : vector<384x128xf32>
    %168 = vector.broadcast %4 : vector<384x1xf32> to vector<384x128xf32>
    %169 = arith.mulf %167, %168 : vector<384x128xf32>
    %170 = arith.mulf %169, %169 : vector<384x128xf32>
    %cst_85 = arith.constant dense<0.000000e+00> : vector<128xf32>
    %171 = vector.multi_reduction <add>, %170, %cst_85 [0] : vector<384x128xf32> to vector<128xf32>
    %172 = vector.shape_cast %171 : vector<128xf32> to vector<1x128xf32>
    %cst_86 = arith.constant 3.125000e-03 : f32
    %173 = vector.broadcast %cst_86 : f32 to vector<1x128xf32>
    %174 = arith.mulf %172, %173 : vector<1x128xf32>
    %175 = vector.broadcast %165 : vector<1x128xf32> to vector<384x128xf32>
    %176 = arith.subf %157, %175 : vector<384x128xf32>
    %cst_87 = arith.constant 9.99999974E-6 : f32
    %177 = vector.broadcast %cst_87 : f32 to vector<1x128xf32>
    %178 = arith.addf %174, %177 : vector<1x128xf32>
    %179 = math.rsqrt %178 : vector<1x128xf32>
    %180 = vector.broadcast %179 : vector<1x128xf32> to vector<384x128xf32>
    %181 = arith.mulf %176, %180 : vector<384x128xf32>
    %182 = vector.broadcast %158 : vector<1x128xf32> to vector<384x128xf32>
    %183 = arith.mulf %181, %182 : vector<384x128xf32>
    %184 = vector.broadcast %159 : vector<1x128xf32> to vector<384x128xf32>
    %185 = arith.addf %183, %184 : vector<384x128xf32>
    %cst_88 = arith.constant 0.000000e+00 : f32
    %186 = vector.broadcast %cst_88 : f32 to vector<384x128xf32>
    %187 = arith.maximumf %185, %186 : vector<384x128xf32>
    %188 = arith.addf %187, %12 : vector<384x128xf32>
    %189 = arith.truncf %6 : vector<24x384xf32> to vector<24x384xbf16>
    %190 = arith.truncf %147 : vector<384x128xf32> to vector<384x128xbf16>
    %cst_89 = arith.constant dense<0.000000e+00> : vector<24x128xf32>
    %191 = tpu.matmul %189, %190, %cst_89 {dimension_numbers = #tpu.dot_dimension_numbers<[1], [0], [0], [1], [0, 0, 1, 1], [], []>} : vector<24x384xbf16>, vector<384x128xbf16>, vector<24x128xf32> -> vector<24x128xf32>
    %192 = arith.truncf %6 : vector<24x384xf32> to vector<24x384xbf16>
    %193 = arith.truncf %188 : vector<384x128xf32> to vector<384x128xbf16>
    %cst_90 = arith.constant dense<0.000000e+00> : vector<24x128xf32>
    %194 = tpu.matmul %192, %193, %cst_90 {dimension_numbers = #tpu.dot_dimension_numbers<[1], [0], [0], [1], [0, 0, 1, 1], [], []>} : vector<24x384xbf16>, vector<384x128xbf16>, vector<24x128xf32> -> vector<24x128xf32>
    %c0_91 = arith.constant 0 : index
    %c0_92 = arith.constant 0 : index
    %195 = vector.load %arg15[%c0_91, %c0_92] : memref<128x128xf32, #tpu.memory_space<vmem>>, vector<128x128xf32>
    %196 = arith.truncf %191 : vector<24x128xf32> to vector<24x128xbf16>
    %197 = arith.truncf %195 : vector<128x128xf32> to vector<128x128xbf16>
    %cst_93 = arith.constant dense<0.000000e+00> : vector<24x128xf32>
    %198 = tpu.matmul %196, %197, %cst_93 {dimension_numbers = #tpu.dot_dimension_numbers<[1], [0], [0], [1], [0, 0, 1, 1], [], []>} : vector<24x128xbf16>, vector<128x128xbf16>, vector<24x128xf32> -> vector<24x128xf32>
    %c0_94 = arith.constant 0 : index
    %c0_95 = arith.constant 0 : index
    %199 = vector.load %arg16[%c0_94, %c0_95] : memref<128x128xf32, #tpu.memory_space<vmem>>, vector<128x128xf32>
    %200 = arith.truncf %194 : vector<24x128xf32> to vector<24x128xbf16>
    %201 = arith.truncf %199 : vector<128x128xf32> to vector<128x128xbf16>
    %cst_96 = arith.constant dense<0.000000e+00> : vector<24x128xf32>
    %202 = tpu.matmul %200, %201, %cst_96 {dimension_numbers = #tpu.dot_dimension_numbers<[1], [0], [0], [1], [0, 0, 1, 1], [], []>} : vector<24x128xbf16>, vector<128x128xbf16>, vector<24x128xf32> -> vector<24x128xf32>
    %203 = arith.addf %198, %202 : vector<24x128xf32>
    %c0_97 = arith.constant 0 : index
    %c0_98 = arith.constant 0 : index
    %204 = vector.load %arg17[%c0_97, %c0_98] : memref<1x128xf32, #tpu.memory_space<vmem>>, vector<1x128xf32>
    %205 = vector.broadcast %204 : vector<1x128xf32> to vector<24x128xf32>
    %206 = arith.addf %203, %205 : vector<24x128xf32>
    %cst_99 = arith.constant 0.000000e+00 : f32
    %207 = vector.broadcast %cst_99 : f32 to vector<24x128xf32>
    %208 = arith.maximumf %206, %207 : vector<24x128xf32>
    %c0_100 = arith.constant 0 : index
    %c0_101 = arith.constant 0 : index
    %209 = vector.load %arg18[%c0_100, %c0_101] : memref<128x128xf32, #tpu.memory_space<vmem>>, vector<128x128xf32>
    %210 = arith.truncf %208 : vector<24x128xf32> to vector<24x128xbf16>
    %211 = arith.truncf %209 : vector<128x128xf32> to vector<128x128xbf16>
    %cst_102 = arith.constant dense<0.000000e+00> : vector<24x128xf32>
    %212 = tpu.matmul %210, %211, %cst_102 {dimension_numbers = #tpu.dot_dimension_numbers<[1], [0], [0], [1], [0, 0, 1, 1], [], []>} : vector<24x128xbf16>, vector<128x128xbf16>, vector<24x128xf32> -> vector<24x128xf32>
    %c0_103 = arith.constant 0 : index
    %c0_104 = arith.constant 0 : index
    %213 = vector.load %arg19[%c0_103, %c0_104] : memref<1x128xf32, #tpu.memory_space<vmem>>, vector<1x128xf32>
    %214 = vector.broadcast %213 : vector<1x128xf32> to vector<24x128xf32>
    %215 = arith.addf %212, %214 : vector<24x128xf32>
    %cst_105 = arith.constant 0.000000e+00 : f32
    %216 = vector.broadcast %cst_105 : f32 to vector<24x128xf32>
    %217 = arith.maximumf %215, %216 : vector<24x128xf32>
    %c0_106 = arith.constant 0 : index
    %c0_107 = arith.constant 0 : index
    %218 = vector.load %arg20[%c0_106, %c0_107] : memref<128x128xf32, #tpu.memory_space<vmem>>, vector<128x128xf32>
    %219 = arith.truncf %217 : vector<24x128xf32> to vector<24x128xbf16>
    %220 = arith.truncf %218 : vector<128x128xf32> to vector<128x128xbf16>
    %cst_108 = arith.constant dense<0.000000e+00> : vector<24x128xf32>
    %221 = tpu.matmul %219, %220, %cst_108 {dimension_numbers = #tpu.dot_dimension_numbers<[1], [0], [0], [1], [0, 0, 1, 1], [], []>} : vector<24x128xbf16>, vector<128x128xbf16>, vector<24x128xf32> -> vector<24x128xf32>
    %c0_109 = arith.constant 0 : index
    %c0_110 = arith.constant 0 : index
    %222 = vector.load %arg21[%c0_109, %c0_110] : memref<1x128xf32, #tpu.memory_space<vmem>>, vector<1x128xf32>
    %223 = vector.broadcast %222 : vector<1x128xf32> to vector<24x128xf32>
    %224 = arith.addf %221, %223 : vector<24x128xf32>
    %c0_111 = arith.constant 0 : index
    %c0_112 = arith.constant 0 : index
    %225 = vector.load %arg22[%c0_111, %c0_112] : memref<24x128xf32, #tpu.memory_space<vmem>>, vector<24x128xf32>
    tpu.vector_store %arg22[%c0_111, %c0_112], %224 {strides = array<i32>} : memref<24x128xf32, #tpu.memory_space<vmem>>, vector<24x128xf32>,
    return
  }
  func.func @transform_0(%arg0: i32) -> (i32, i32) {
    %c0_i32 = arith.constant 0 : i32
    %c0_i32_0 = arith.constant 0 : i32
    %c0_i32_1 = arith.constant 0 : i32
    return %c0_i32, %c0_i32_0 : i32, i32
  }
  func.func @transform_1(%arg0: i32) -> (i32, i32) {
    %c0_i32 = arith.constant 0 : i32
    %c0_i32_0 = arith.constant 0 : i32
    %c0_i32_1 = arith.constant 0 : i32
    return %c0_i32, %c0_i32_0 : i32, i32
  }
  func.func @transform_2(%arg0: i32) -> (i32, i32) {
    %c0_i32 = arith.constant 0 : i32
    %c0_i32_0 = arith.constant 0 : i32
    %c0_i32_1 = arith.constant 0 : i32
    return %c0_i32, %c0_i32_0 : i32, i32
  }
  func.func @transform_3(%arg0: i32) -> (i32, i32) {
    %c0_i32 = arith.constant 0 : i32
    %c0_i32_0 = arith.constant 0 : i32
    %c0_i32_1 = arith.constant 0 : i32
    return %c0_i32, %c0_i32_0 : i32, i32
  }
  func.func @transform_4(%arg0: i32) -> (i32, i32) {
    %c0_i32 = arith.constant 0 : i32
    %c0_i32_0 = arith.constant 0 : i32
    %c0_i32_1 = arith.constant 0 : i32
    return %c0_i32, %c0_i32_0 : i32, i32
  }
  func.func @transform_5(%arg0: i32) -> (i32, i32) {
    %c0_i32 = arith.constant 0 : i32
    %c0_i32_0 = arith.constant 0 : i32
    %c0_i32_1 = arith.constant 0 : i32
    return %c0_i32, %c0_i32_0 : i32, i32
  }
  func.func @transform_6(%arg0: i32) -> (i32, i32, i32) {
    %c0_i32 = arith.constant 0 : i32
    %c0_i32_0 = arith.constant 0 : i32
    %c0_i32_1 = arith.constant 0 : i32
    %c0_i32_2 = arith.constant 0 : i32
    return %c0_i32, %c0_i32_0, %c0_i32_1 : i32, i32, i32
  }
  func.func @transform_7(%arg0: i32) -> (i32, i32, i32) {
    %c0_i32 = arith.constant 0 : i32
    %c0_i32_0 = arith.constant 0 : i32
    %c0_i32_1 = arith.constant 0 : i32
    %c0_i32_2 = arith.constant 0 : i32
    return %c0_i32, %c0_i32_0, %c0_i32_1 : i32, i32, i32
  }
  func.func @transform_8(%arg0: i32) -> (i32, i32) {
    %c0_i32 = arith.constant 0 : i32
    %c0_i32_0 = arith.constant 0 : i32
    %c0_i32_1 = arith.constant 0 : i32
    return %c0_i32, %c0_i32_0 : i32, i32
  }
  func.func @transform_9(%arg0: i32) -> (i32, i32) {
    %c0_i32 = arith.constant 0 : i32
    %c0_i32_0 = arith.constant 0 : i32
    %c0_i32_1 = arith.constant 0 : i32
    return %c0_i32, %c0_i32_0 : i32, i32
  }
  func.func @transform_10(%arg0: i32) -> (i32, i32, i32) {
    %c0_i32 = arith.constant 0 : i32
    %c0_i32_0 = arith.constant 0 : i32
    %c0_i32_1 = arith.constant 0 : i32
    %c0_i32_2 = arith.constant 0 : i32
    return %c0_i32, %c0_i32_0, %c0_i32_1 : i32, i32, i32
  }
  func.func @transform_11(%arg0: i32) -> (i32, i32, i32) {
    %c0_i32 = arith.constant 0 : i32
    %c0_i32_0 = arith.constant 0 : i32
    %c0_i32_1 = arith.constant 0 : i32
    %c0_i32_2 = arith.constant 0 : i32
    return %c0_i32, %c0_i32_0, %c0_i32_1 : i32, i32, i32
  }
  func.func @transform_12(%arg0: i32) -> (i32, i32) {
    %c0_i32 = arith.constant 0 : i32
    %c0_i32_0 = arith.constant 0 : i32
    %c0_i32_1 = arith.constant 0 : i32
    return %c0_i32, %c0_i32_0 : i32, i32
  }
  func.func @transform_13(%arg0: i32) -> (i32, i32) {
    %c0_i32 = arith.constant 0 : i32
    %c0_i32_0 = arith.constant 0 : i32
    %c0_i32_1 = arith.constant 0 : i32
    return %c0_i32, %c0_i32_0 : i32, i32
  }
  func.func @transform_14(%arg0: i32) -> (i32, i32) {
    %c0_i32 = arith.constant 0 : i32
    %c0_i32_0 = arith.constant 0 : i32
    %c0_i32_1 = arith.constant 0 : i32
    return %c0_i32, %c0_i32_0 : i32, i32
  }
  func.func @transform_15(%arg0: i32) -> (i32, i32) {
    %c0_i32 = arith.constant 0 : i32
    %c0_i32_0 = arith.constant 0 : i32
    %c0_i32_1 = arith.constant 0 : i32
    return %c0_i32, %c0_i32_0 : i32, i32
  }
  func.func @transform_16(%arg0: i32) -> (i32, i32) {
    %c0_i32 = arith.constant 0 : i32
    %c0_i32_0 = arith.constant 0 : i32
    %c0_i32_1 = arith.constant 0 : i32
    return %c0_i32, %c0_i32_0 : i32, i32
  }
  func.func @transform_17(%arg0: i32) -> (i32, i32) {
    %c0_i32 = arith.constant 0 : i32
    %c0_i32_0 = arith.constant 0 : i32
    %c0_i32_1 = arith.constant 0 : i32
    return %c0_i32, %c0_i32_0 : i32, i32
  }
  func.func @transform_18(%arg0: i32) -> (i32, i32) {
    %c0_i32 = arith.constant 0 : i32
    %c0_i32_0 = arith.constant 0 : i32
    %c0_i32_1 = arith.constant 0 : i32
    return %c0_i32, %c0_i32_0 : i32, i32
  }
  func.func @transform_19(%arg0: i32) -> (i32, i32) {
    %c0_i32 = arith.constant 0 : i32
    %c0_i32_0 = arith.constant 0 : i32
    %c0_i32_1 = arith.constant 0 : i32
    return %c0_i32, %c0_i32_0 : i32, i32
  }
  func.func @transform_20(%arg0: i32) -> (i32, i32) {
    %c0_i32 = arith.constant 0 : i32
    %c0_i32_0 = arith.constant 0 : i32
    %c0_i32_1 = arith.constant 0 : i32
    return %c0_i32, %c0_i32_0 : i32, i32
  }
  func.func @transform_21(%arg0: i32) -> (i32, i32) {
    %c0_i32 = arith.constant 0 : i32
    %c0_i32_0 = arith.constant 0 : i32
    %c0_i32_1 = arith.constant 0 : i32
    return %c0_i32, %c0_i32_0 : i32, i32
  }
}

</mosaic_0001>

<llo_original>
// kernel: tpu_custom_call.1
$region0: #{tpu_custom_call.1}
  #allocation0 [shape = 'u32[]', space=smem, size = 0x4, offset = 0x4, fixed_abs, tag = 'smem constant byte address 0x4 - core index']
  #allocation1 [shape = 'u32[144,128]{1,0:T(1,128)}', space=vmem, size = 0x12000, scoped, tag = 'internal scratch']
  #allocation2 [shape = 'bf16[2,8,128]{2,1,0:T(8,128)(2,1)}', space=vmem, size = 0x1000, scoped, tag = 'scratch operand']
  #allocation3 [shape = 's32[2]{0}', space=sflag, size = 0x8, scoped, tag = 'scratch operand']
  #allocation4 [shape = 'bf16[8,128]{1,0:T(8,128)(2,1)}', space=vmem, size = 0x800, scoped, tag = 'scratch operand']
  #allocation5 [shape = 'f32[8,128]{1,0:T(8,128)}', space=vmem, size = 0x1000, scoped, tag = 'scratch operand']
  %s0 = inlined_call_operand.hbm [shape: bf16[384,128], index: 0, kind: input, shape index: {}]
  %s1 = inlined_call_operand.hbm [shape: bf16[384,384], index: 1, kind: input, shape index: {}]
  %s2 = inlined_call_operand.hbm [shape: bf16[384,384], index: 2, kind: input, shape index: {}]
  %s3 = inlined_call_operand.hbm [shape: f32[24,384], index: 3, kind: input, shape index: {}]
  %s4 = inlined_call_operand.hbm [shape: f32[128,128], index: 4, kind: input, shape index: {}]
  %s5 = inlined_call_operand.vmem [shape: f32[1,128], index: 5, kind: input, shape index: {}]
  %s6 = inlined_call_operand.hbm [shape: f32[3,128,128], index: 6, kind: input, shape index: {}]
  %s7 = inlined_call_operand.vmem [shape: f32[3,1,128], index: 7, kind: input, shape index: {}]
  %s8 = inlined_call_operand.hbm [shape: f32[128,128], index: 8, kind: input, shape index: {}]
  %s9 = inlined_call_operand.vmem [shape: f32[1,128], index: 9, kind: input, shape index: {}]
  %s10 = inlined_call_operand.vmem [shape: f32[3,1,128], index: 10, kind: input, shape index: {}]
  %s11 = inlined_call_operand.vmem [shape: f32[3,1,128], index: 11, kind: input, shape index: {}]
  %s12 = inlined_call_operand.vmem [shape: f32[1,128], index: 12, kind: input, shape index: {}]
  %s13 = inlined_call_operand.vmem [shape: f32[1,128], index: 13, kind: input, shape index: {}]
  %s14 = inlined_call_operand.hbm [shape: f32[128,128], index: 14, kind: input, shape index: {}]
  %s15 = inlined_call_operand.hbm [shape: f32[128,128], index: 15, kind: input, shape index: {}]
  %s16 = inlined_call_operand.vmem [shape: f32[1,128], index: 16, kind: input, shape index: {}]
  %s17 = inlined_call_operand.hbm [shape: f32[128,128], index: 17, kind: input, shape index: {}]
  %s18 = inlined_call_operand.vmem [shape: f32[1,128], index: 18, kind: input, shape index: {}]
  %s19 = inlined_call_operand.hbm [shape: f32[128,128], index: 19, kind: input, shape index: {}]
  %s20 = inlined_call_operand.vmem [shape: f32[1,128], index: 20, kind: input, shape index: {}]
  %s21 = inlined_call_operand.hbm [shape: f32[24,128], index: 21, kind: output, shape index: {}]
  %s22 = sld [smem:[#allocation0]]
  $region138: #{tpu_custom_call.1} parent=0
    _
  %s24 = ssub.s32 1, %s22
  %s25 = scalar_select 0, %s24, %s22
  $region1: #{tpu_custom_call.1} parent=0
    #allocation6 [shape = 'u8[98304]{0}', space=vmem, size = 0x18000, scoped, tag = 'input window, operand 0, single buffered']
    #allocation7 [shape = 's32[1]{0}', space=sflag, size = 0x4, scoped, tag = 'scoped memory for tpu_custom_call.1']
    #allocation8 [shape = 's32[1]{0}', space=sflag, size = 0x4, scoped, tag = 'scoped memory for tpu_custom_call.1']
    #allocation9 [shape = 'u8[294912]{0}', space=vmem, size = 0x48000, scoped, tag = 'input window, operand 1, single buffered']
    #allocation10 [shape = 's32[1]{0}', space=sflag, size = 0x4, scoped, tag = 'scoped memory for tpu_custom_call.1']
    #allocation11 [shape = 'u8[294912]{0}', space=vmem, size = 0x48000, scoped, tag = 'input window, operand 2, single buffered']
    #allocation12 [shape = 'u8[36864]{0}', space=vmem, size = 0x9000, scoped, tag = 'input window, operand 3, single buffered']
    #allocation13 [shape = 's32[1]{0}', space=sflag, size = 0x4, scoped, tag = 'scoped memory for tpu_custom_call.1']
    #allocation14 [shape = 'u8[65536]{0}', space=vmem, size = 0x10000, scoped, tag = 'input window, operand 4, single buffered']
    #allocation15 [shape = 'u8[196608]{0}', space=vmem, size = 0x30000, scoped, tag = 'input window, operand 6, single buffered']
    #allocation16 [shape = 's32[1]{0}', space=sflag, size = 0x4, scoped, tag = 'scoped memory for tpu_custom_call.1']
    #allocation17 [shape = 'u8[65536]{0}', space=vmem, size = 0x10000, scoped, tag = 'input window, operand 8, single buffered']
    #allocation18 [shape = 'u8[65536]{0}', space=vmem, size = 0x10000, scoped, tag = 'input window, operand 14, single buffered']
    #allocation19 [shape = 's32[1]{0}', space=sflag, size = 0x4, scoped, tag = 'scoped memory for tpu_custom_call.1']
    #allocation20 [shape = 'u8[65536]{0}', space=vmem, size = 0x10000, scoped, tag = 'input window, operand 15, single buffered']
    #allocation21 [shape = 'u8[65536]{0}', space=vmem, size = 0x10000, scoped, tag = 'input window, operand 17, single buffered']
    #allocation22 [shape = 's32[1]{0}', space=sflag, size = 0x4, scoped, tag = 'scoped memory for tpu_custom_call.1']
    #allocation23 [shape = 'u8[65536]{0}', space=vmem, size = 0x10000, scoped, tag = 'input window, operand 19, single buffered']
    #allocation24 [shape = 'u8[12288]{0}', space=vmem, size = 0x3000, scoped, tag = 'output window, operand 0, single buffered']
    %26 = vsyncpa [#allocation7], 0
    %27 = vsyncpa [#allocation10], 0
    %28 = vsyncpa [#allocation13], 0
    %29 = vsyncpa [#allocation16], 0
    %30 = vsyncpa [#allocation19], 0
    %31 = vsyncpa [#allocation22], 0
    %32 = vsyncpa [#allocation8], 0
    // Predicated region
    $region2: #{tpu_custom_call.1} parent=1 // pred_check
      _
    $region3: #{tpu_custom_call.1} parent=1 // pred_check_branch
      %34 = sbr.rel (0) target = $region5
    $region4: #{tpu_custom_call.1} parent=1 // pred_region
      %s36 = ssub.s32 3072, 3072
      %37 = vsyncadd [#allocation7], %s36
      %s38 = sshll.u32 [#allocation6], 4
      %s39 = int_to_ptr.vmem [resolvable:$true] %s38
      %44 = dma.hbm_to_vmem [thread:$0]  %s0, 3072, %s39, [#allocation7], 64, 64, 4
    $region5: #{tpu_custom_call.1} parent=1 // pred_fallthru
      _
    // Predicated region
    $region6: #{tpu_custom_call.1} parent=1 // pred_check
      _
    $region7: #{tpu_custom_call.1} parent=1 // pred_check_branch
      %46 = sbr.rel (0) target = $region9
    $region8: #{tpu_custom_call.1} parent=1 // pred_region
      %s48 = ssub.s32 9216, 9216
      %49 = vsyncadd [#allocation10], %s48
      %s50 = sshll.u32 [#allocation9], 4
      %s51 = int_to_ptr.vmem [resolvable:$true] %s50
      %56 = dma.hbm_to_vmem [thread:$0]  %s1, 9216, %s51, [#allocation10], 192, 192, 12
    $region9: #{tpu_custom_call.1} parent=1 // pred_fallthru
      _
    // Predicated region
    $region10: #{tpu_custom_call.1} parent=1 // pred_check
      _
    $region11: #{tpu_custom_call.1} parent=1 // pred_check_branch
      %58 = sbr.rel (0) target = $region13
    $region12: #{tpu_custom_call.1} parent=1 // pred_region
      %s60 = ssub.s32 9216, 9216
      %61 = vsyncadd [#allocation10], %s60
      %s62 = sshll.u32 [#allocation11], 4
      %s63 = int_to_ptr.vmem [resolvable:$true] %s62
      %68 = dma.hbm_to_vmem [thread:$0]  %s2, 9216, %s63, [#allocation10], 192, 192, 12
    $region13: #{tpu_custom_call.1} parent=1 // pred_fallthru
      _
    // Predicated region
    $region14: #{tpu_custom_call.1} parent=1 // pred_check
      _
    $region15: #{tpu_custom_call.1} parent=1 // pred_check_branch
      %70 = sbr.rel (0) target = $region17
    $region16: #{tpu_custom_call.1} parent=1 // pred_region
      %s72 = ssub.s32 1152, 1152
      %73 = vsyncadd [#allocation13], %s72
      %s74 = sshll.u32 [#allocation12], 4
      %s75 = int_to_ptr.vmem [resolvable:$true] %s74
      %80 = dma.hbm_to_vmem [thread:$0]  %s3, 1152, %s75, [#allocation13], 384, 384, 24
    $region17: #{tpu_custom_call.1} parent=1 // pred_fallthru
      _
    // Predicated region
    $region18: #{tpu_custom_call.1} parent=1 // pred_check
      _
    $region19: #{tpu_custom_call.1} parent=1 // pred_check_branch
      %82 = sbr.rel (0) target = $region21
    $region20: #{tpu_custom_call.1} parent=1 // pred_region
      %s84 = ssub.s32 2048, 2048
      %85 = vsyncadd [#allocation13], %s84
      %s86 = sshll.u32 [#allocation14], 4
      %s87 = int_to_ptr.vmem [resolvable:$true] %s86
      %92 = dma.hbm_to_vmem [thread:$0]  %s4, 2048, %s87, [#allocation13], 128, 128, 8
    $region21: #{tpu_custom_call.1} parent=1 // pred_fallthru
      _
    // Predicated region
    $region22: #{tpu_custom_call.1} parent=1 // pred_check
      _
    $region23: #{tpu_custom_call.1} parent=1 // pred_check_branch
      %94 = sbr.rel (0) target = $region25
    $region24: #{tpu_custom_call.1} parent=1 // pred_region
      _
    $region25: #{tpu_custom_call.1} parent=1 // pred_fallthru
      _
    // Predicated region
    $region26: #{tpu_custom_call.1} parent=1 // pred_check
      _
    $region27: #{tpu_custom_call.1} parent=1 // pred_check_branch
      %96 = sbr.rel (0) target = $region29
    $region28: #{tpu_custom_call.1} parent=1 // pred_region
      %s98 = ssub.s32 6144, 6144
      %99 = vsyncadd [#allocation16], %s98
      %s100 = sshll.u32 [#allocation15], 4
      %s101 = int_to_ptr.vmem [resolvable:$true] %s100
      %106 = dma.hbm_to_vmem [thread:$0]  %s6, 6144, %s101, [#allocation16], 128, 128, 8
    $region29: #{tpu_custom_call.1} parent=1 // pred_fallthru
      _
    // Predicated region
    $region30: #{tpu_custom_call.1} parent=1 // pred_check
      _
    $region31: #{tpu_custom_call.1} parent=1 // pred_check_branch
      %108 = sbr.rel (0) target = $region33
    $region32: #{tpu_custom_call.1} parent=1 // pred_region
      _
    $region33: #{tpu_custom_call.1} parent=1 // pred_fallthru
      _
    // Predicated region
    $region34: #{tpu_custom_call.1} parent=1 // pred_check
      _
    $region35: #{tpu_custom_call.1} parent=1 // pred_check_branch
      %110 = sbr.rel (0) target = $region37
    $region36: #{tpu_custom_call.1} parent=1 // pred_region
      %s112 = ssub.s32 2048, 2048
      %113 = vsyncadd [#allocation16], %s112
      %s114 = sshll.u32 [#allocation17], 4
      %s115 = int_to_ptr.vmem [resolvable:$true] %s114
      %120 = dma.hbm_to_vmem [thread:$0]  %s8, 2048, %s115, [#allocation16], 128, 128, 8
    $region37: #{tpu_custom_call.1} parent=1 // pred_fallthru
      _
    // Predicated region
    $region38: #{tpu_custom_call.1} parent=1 // pred_check
      _
    $region39: #{tpu_custom_call.1} parent=1 // pred_check_branch
      %122 = sbr.rel (0) target = $region41
    $region40: #{tpu_custom_call.1} parent=1 // pred_region
      _
    $region41: #{tpu_custom_call.1} parent=1 // pred_fallthru
      _
    // Predicated region
    $region42: #{tpu_custom_call.1} parent=1 // pred_check
      _
    $region43: #{tpu_custom_call.1} parent=1 // pred_check_branch
      %124 = sbr.rel (0) target = $region45
    $region44: #{tpu_custom_call.1} parent=1 // pred_region
      _
    $region45: #{tpu_custom_call.1} parent=1 // pred_fallthru
      _
    // Predicated region
    $region46: #{tpu_custom_call.1} parent=1 // pred_check
      _
    $region47: #{tpu_custom_call.1} parent=1 // pred_check_branch
      %126 = sbr.rel (0) target = $region49
    $region48: #{tpu_custom_call.1} parent=1 // pred_region
      _
    $region49: #{tpu_custom_call.1} parent=1 // pred_fallthru
      _
    // Predicated region
    $region50: #{tpu_custom_call.1} parent=1 // pred_check
      _
    $region51: #{tpu_custom_call.1} parent=1 // pred_check_branch
      %128 = sbr.rel (0) target = $region53
    $region52: #{tpu_custom_call.1} parent=1 // pred_region
      _
    $region53: #{tpu_custom_call.1} parent=1 // pred_fallthru
      _
    // Predicated region
    $region54: #{tpu_custom_call.1} parent=1 // pred_check
      _
    $region55: #{tpu_custom_call.1} parent=1 // pred_check_branch
      %130 = sbr.rel (0) target = $region57
    $region56: #{tpu_custom_call.1} parent=1 // pred_region
      _
    $region57: #{tpu_custom_call.1} parent=1 // pred_fallthru
      _
    // Predicated region
    $region58: #{tpu_custom_call.1} parent=1 // pred_check
      _
    $region59: #{tpu_custom_call.1} parent=1 // pred_check_branch
      %132 = sbr.rel (0) target = $region61
    $region60: #{tpu_custom_call.1} parent=1 // pred_region
      %s134 = ssub.s32 2048, 2048
      %135 = vsyncadd [#allocation19], %s134
      %s136 = sshll.u32 [#allocation18], 4
      %s137 = int_to_ptr.vmem [resolvable:$true] %s136
      %142 = dma.hbm_to_vmem [thread:$0]  %s14, 2048, %s137, [#allocation19], 128, 128, 8
    $region61: #{tpu_custom_call.1} parent=1 // pred_fallthru
      _
    // Predicated region
    $region62: #{tpu_custom_call.1} parent=1 // pred_check
      _
    $region63: #{tpu_custom_call.1} parent=1 // pred_check_branch
      %144 = sbr.rel (0) target = $region65
    $region64: #{tpu_custom_call.1} parent=1 // pred_region
      %s146 = ssub.s32 2048, 2048
      %147 = vsyncadd [#allocation19], %s146
      %s148 = sshll.u32 [#allocation20], 4
      %s149 = int_to_ptr.vmem [resolvable:$true] %s148
      %154 = dma.hbm_to_vmem [thread:$0]  %s15, 2048, %s149, [#allocation19], 128, 128, 8
    $region65: #{tpu_custom_call.1} parent=1 // pred_fallthru
      _
    // Predicated region
    $region66: #{tpu_custom_call.1} parent=1 // pred_check
      _
    $region67: #{tpu_custom_call.1} parent=1 // pred_check_branch
      %156 = sbr.rel (0) target = $region69
    $region68: #{tpu_custom_call.1} parent=1 // pred_region
      _
    $region69: #{tpu_custom_call.1} parent=1 // pred_fallthru
      _
    // Predicated region
    $region70: #{tpu_custom_call.1} parent=1 // pred_check
      _
    $region71: #{tpu_custom_call.1} parent=1 // pred_check_branch
      %158 = sbr.rel (0) target = $region73
    $region72: #{tpu_custom_call.1} parent=1 // pred_region
      %s160 = ssub.s32 2048, 2048
      %161 = vsyncadd [#allocation22], %s160
      %s162 = sshll.u32 [#allocation21], 4
      %s163 = int_to_ptr.vmem [resolvable:$true] %s162
      %168 = dma.hbm_to_vmem [thread:$0]  %s17, 2048, %s163, [#allocation22], 128, 128, 8
    $region73: #{tpu_custom_call.1} parent=1 // pred_fallthru
      _
    // Predicated region
    $region74: #{tpu_custom_call.1} parent=1 // pred_check
      _
    $region75: #{tpu_custom_call.1} parent=1 // pred_check_branch
      %170 = sbr.rel (0) target = $region77
    $region76: #{tpu_custom_call.1} parent=1 // pred_region
      _
    $region77: #{tpu_custom_call.1} parent=1 // pred_fallthru
      _
    // Predicated region
    $region78: #{tpu_custom_call.1} parent=1 // pred_check
      _
    $region79: #{tpu_custom_call.1} parent=1 // pred_check_branch
      %172 = sbr.rel (0) target = $region81
    $region80: #{tpu_custom_call.1} parent=1 // pred_region
      %s174 = ssub.s32 2048, 2048
      %175 = vsyncadd [#allocation22], %s174
      %s176 = sshll.u32 [#allocation23], 4
      %s177 = int_to_ptr.vmem [resolvable:$true] %s176
      %182 = dma.hbm_to_vmem [thread:$0]  %s19, 2048, %s177, [#allocation22], 128, 128, 8
    $region81: #{tpu_custom_call.1} parent=1 // pred_fallthru
      _
    // Predicated region
    $region82: #{tpu_custom_call.1} parent=1 // pred_check
      _
    $region83: #{tpu_custom_call.1} parent=1 // pred_check_branch
      %184 = sbr.rel (0) target = $region85
    $region84: #{tpu_custom_call.1} parent=1 // pred_region
      _
    $region85: #{tpu_custom_call.1} parent=1 // pred_fallthru
      _
    // Predicated region
    $region86: #{tpu_custom_call.1} parent=1 // pred_check
      _
    $region87: #{tpu_custom_call.1} parent=1 // pred_check_branch
      %186 = sbr.rel (0) target = $region89
    $region88: #{tpu_custom_call.1} parent=1 // pred_region
      %187 = dma.done [#allocation7], 3072
    $region89: #{tpu_custom_call.1} parent=1 // pred_fallthru
      _
    // Predicated region
    $region90: #{tpu_custom_call.1} parent=1 // pred_check
      _
    $region91: #{tpu_custom_call.1} parent=1 // pred_check_branch
      %189 = sbr.rel (0) target = $region93
    $region92: #{tpu_custom_call.1} parent=1 // pred_region
      %190 = dma.done [#allocation10], 9216
    $region93: #{tpu_custom_call.1} parent=1 // pred_fallthru
      _
    // Predicated region
    $region94: #{tpu_custom_call.1} parent=1 // pred_check
      _
    $region95: #{tpu_custom_call.1} parent=1 // pred_check_branch
      %192 = sbr.rel (0) target = $region97
    $region96: #{tpu_custom_call.1} parent=1 // pred_region
      %193 = dma.done [#allocation10], 9216
    $region97: #{tpu_custom_call.1} parent=1 // pred_fallthru
      _
    // Predicated region
    $region98: #{tpu_custom_call.1} parent=1 // pred_check
      _
    $region99: #{tpu_custom_call.1} parent=1 // pred_check_branch
      %195 = sbr.rel (0) target = $region101
    $region100: #{tpu_custom_call.1} parent=1 // pred_region
      %196 = dma.done [#allocation13], 1152
    $region101: #{tpu_custom_call.1} parent=1 // pred_fallthru
      _
    // Predicated region
    $region102: #{tpu_custom_call.1} parent=1 // pred_check
      _
    $region103: #{tpu_custom_call.1} parent=1 // pred_check_branch
      %198 = sbr.rel (0) target = $region105
    $region104: #{tpu_custom_call.1} parent=1 // pred_region
      %199 = dma.done [#allocation13], 2048
    $region105: #{tpu_custom_call.1} parent=1 // pred_fallthru
      _
    // Predicated region
    $region106: #{tpu_custom_call.1} parent=1 // pred_check
      _
    $region107: #{tpu_custom_call.1} parent=1 // pred_check_branch
      %201 = sbr.rel (0) target = $region109
    $region108: #{tpu_custom_call.1} parent=1 // pred_region
      %202 = dma.done [#allocation16], 6144
    $region109: #{tpu_custom_call.1} parent=1 // pred_fallthru
      _
    // Predicated region
    $region110: #{tpu_custom_call.1} parent=1 // pred_check
      _
    $region111: #{tpu_custom_call.1} parent=1 // pred_check_branch
      %204 = sbr.rel (0) target = $region113
    $region112: #{tpu_custom_call.1} parent=1 // pred_region
      %205 = dma.done [#allocation16], 2048
    $region113: #{tpu_custom_call.1} parent=1 // pred_fallthru
      _
    // Predicated region
    $region114: #{tpu_custom_call.1} parent=1 // pred_check
      _
    $region115: #{tpu_custom_call.1} parent=1 // pred_check_branch
      %207 = sbr.rel (0) target = $region117
    $region116: #{tpu_custom_call.1} parent=1 // pred_region
      %208 = dma.done [#allocation19], 2048
    $region117: #{tpu_custom_call.1} parent=1 // pred_fallthru
      _
    // Predicated region
    $region118: #{tpu_custom_call.1} parent=1 // pred_check
      _
    $region119: #{tpu_custom_call.1} parent=1 // pred_check_branch
      %210 = sbr.rel (0) target = $region121
    $region120: #{tpu_custom_call.1} parent=1 // pred_region
      %211 = dma.done [#allocation19], 2048
    $region121: #{tpu_custom_call.1} parent=1 // pred_fallthru
      _
    // Predicated region
    $region122: #{tpu_custom_call.1} parent=1 // pred_check
      _
    $region123: #{tpu_custom_call.1} parent=1 // pred_check_branch
      %213 = sbr.rel (0) target = $region125
    $region124: #{tpu_custom_call.1} parent=1 // pred_region
      %214 = dma.done [#allocation22], 2048
    $region125: #{tpu_custom_call.1} parent=1 // pred_fallthru
      _
    // Predicated region
    $region126: #{tpu_custom_call.1} parent=1 // pred_check
      _
    $region127: #{tpu_custom_call.1} parent=1 // pred_check_branch
      %216 = sbr.rel (0) target = $region129
    $region128: #{tpu_custom_call.1} parent=1 // pred_region
      %217 = dma.done [#allocation22], 2048
    $region129: #{tpu_custom_call.1} parent=1 // pred_fallthru
      _
    %v219 = vlaneseq
    %v220 = vshrl.u32 %v219, 7
    %v221 = vadd.s32 %v220, 8
    %v222 = vadd.s32 %v220, 16
    %v223 = vadd.s32 %v220, 24
    %v224 = vadd.s32 %v220, 32
    %v225 = vadd.s32 %v220, 40
    %v226 = vadd.s32 %v220, 48
    %v227 = vadd.s32 %v220, 56
    %v228 = vadd.s32 %v220, 64
    %v229 = vadd.s32 %v220, 72
    %v230 = vadd.s32 %v220, 80
    %v231 = vadd.s32 %v220, 88
    %v232 = vadd.s32 %v220, 96
    %v233 = vadd.s32 %v220, 104
    %v234 = vadd.s32 %v220, 112
    %v235 = vadd.s32 %v220, 120
    %v236 = vadd.s32 %v220, 128
    %v237 = vadd.s32 %v220, 136
    %v238 = vadd.s32 %v220, 144
    %v239 = vadd.s32 %v220, 152
    %v240 = vadd.s32 %v220, 160
    %v241 = vadd.s32 %v220, 168
    %v242 = vadd.s32 %v220, 176
    %v243 = vadd.s32 %v220, 184
    %v244 = vadd.s32 %v220, 192
    %v245 = vadd.s32 %v220, 200
    %v246 = vadd.s32 %v220, 208
    %v247 = vadd.s32 %v220, 216
    %v248 = vadd.s32 %v220, 224
    %v249 = vadd.s32 %v220, 232
    %v250 = vadd.s32 %v220, 240
    %v251 = vadd.s32 %v220, 248
    %v252 = vadd.s32 %v220, 256
    %v253 = vadd.s32 %v220, 264
    %v254 = vadd.s32 %v220, 272
    %v255 = vadd.s32 %v220, 280
    %v256 = vadd.s32 %v220, 288
    %v257 = vadd.s32 %v220, 296
    %v258 = vadd.s32 %v220, 304
    %v259 = vadd.s32 %v220, 312
    %v260 = vadd.s32 %v220, 320
    %v261 = vadd.s32 %v220, 328
    %v262 = vadd.s32 %v220, 336
    %v263 = vadd.s32 %v220, 344
    %v264 = vadd.s32 %v220, 352
    %v265 = vadd.s32 %v220, 360
    %v266 = vadd.s32 %v220, 368
    %v267 = vadd.s32 %v220, 376
    %vm268 = vcmp.lt.s32.totalorder %v220, 320
    %vm269 = vcmp.lt.s32.totalorder %v221, 320
    %vm270 = vcmp.lt.s32.totalorder %v222, 320
    %vm271 = vcmp.lt.s32.totalorder %v223, 320
    %vm272 = vcmp.lt.s32.totalorder %v224, 320
    %vm273 = vcmp.lt.s32.totalorder %v225, 320
    %vm274 = vcmp.lt.s32.totalorder %v226, 320
    %vm275 = vcmp.lt.s32.totalorder %v227, 320
    %vm276 = vcmp.lt.s32.totalorder %v228, 320
    %vm277 = vcmp.lt.s32.totalorder %v229, 320
    %vm278 = vcmp.lt.s32.totalorder %v230, 320
    %vm279 = vcmp.lt.s32.totalorder %v231, 320
    %vm280 = vcmp.lt.s32.totalorder %v232, 320
    %vm281 = vcmp.lt.s32.totalorder %v233, 320
    %vm282 = vcmp.lt.s32.totalorder %v234, 320
    %vm283 = vcmp.lt.s32.totalorder %v235, 320
    %vm284 = vcmp.lt.s32.totalorder %v236, 320
    %vm285 = vcmp.lt.s32.totalorder %v237, 320
    %vm286 = vcmp.lt.s32.totalorder %v238, 320
    %vm287 = vcmp.lt.s32.totalorder %v239, 320
    %vm288 = vcmp.lt.s32.totalorder %v240, 320
    %vm289 = vcmp.lt.s32.totalorder %v241, 320
    %vm290 = vcmp.lt.s32.totalorder %v242, 320
    %vm291 = vcmp.lt.s32.totalorder %v243, 320
    %vm292 = vcmp.lt.s32.totalorder %v244, 320
    %vm293 = vcmp.lt.s32.totalorder %v245, 320
    %vm294 = vcmp.lt.s32.totalorder %v246, 320
    %vm295 = vcmp.lt.s32.totalorder %v247, 320
    %vm296 = vcmp.lt.s32.totalorder %v248, 320
    %vm297 = vcmp.lt.s32.totalorder %v249, 320
    %vm298 = vcmp.lt.s32.totalorder %v250, 320
    %vm299 = vcmp.lt.s32.totalorder %v251, 320
    %vm300 = vcmp.lt.s32.totalorder %v252, 320
    %vm301 = vcmp.lt.s32.totalorder %v253, 320
    %vm302 = vcmp.lt.s32.totalorder %v254, 320
    %vm303 = vcmp.lt.s32.totalorder %v255, 320
    %vm304 = vcmp.lt.s32.totalorder %v256, 320
    %vm305 = vcmp.lt.s32.totalorder %v257, 320
    %vm306 = vcmp.lt.s32.totalorder %v258, 320
    %vm307 = vcmp.lt.s32.totalorder %v259, 320
    %vm308 = vcmp.lt.s32.totalorder %v260, 320
    %vm309 = vcmp.lt.s32.totalorder %v261, 320
    %vm310 = vcmp.lt.s32.totalorder %v262, 320
    %vm311 = vcmp.lt.s32.totalorder %v263, 320
    %vm312 = vcmp.lt.s32.totalorder %v264, 320
    %vm313 = vcmp.lt.s32.totalorder %v265, 320
    %vm314 = vcmp.lt.s32.totalorder %v266, 320
    %vm315 = vcmp.lt.s32.totalorder %v267, 320
    %v316 = vsel %vm268, 1, 0
    %v317 = vsel %vm269, 1, 0
    %v318 = vsel %vm270, 1, 0
    %v319 = vsel %vm271, 1, 0
    %v320 = vsel %vm272, 1, 0
    %v321 = vsel %vm273, 1, 0
    %v322 = vsel %vm274, 1, 0
    %v323 = vsel %vm275, 1, 0
    %v324 = vsel %vm276, 1, 0
    %v325 = vsel %vm277, 1, 0
    %v326 = vsel %vm278, 1, 0
    %v327 = vsel %vm279, 1, 0
    %v328 = vsel %vm280, 1, 0
    %v329 = vsel %vm281, 1, 0
    %v330 = vsel %vm282, 1, 0
    %v331 = vsel %vm283, 1, 0
    %v332 = vsel %vm284, 1, 0
    %v333 = vsel %vm285, 1, 0
    %v334 = vsel %vm286, 1, 0
    %v335 = vsel %vm287, 1, 0
    %v336 = vsel %vm288, 1, 0
    %v337 = vsel %vm289, 1, 0
    %v338 = vsel %vm290, 1, 0
    %v339 = vsel %vm291, 1, 0
    %v340 = vsel %vm292, 1, 0
    %v341 = vsel %vm293, 1, 0
    %v342 = vsel %vm294, 1, 0
    %v343 = vsel %vm295, 1, 0
    %v344 = vsel %vm296, 1, 0
    %v345 = vsel %vm297, 1, 0
    %v346 = vsel %vm298, 1, 0
    %v347 = vsel %vm299, 1, 0
    %v348 = vsel %vm300, 1, 0
    %v349 = vsel %vm301, 1, 0
    %v350 = vsel %vm302, 1, 0
    %v351 = vsel %vm303, 1, 0
    %v352 = vsel %vm304, 1, 0
    %v353 = vsel %vm305, 1, 0
    %v354 = vsel %vm306, 1, 0
    %v355 = vsel %vm307, 1, 0
    %v356 = vsel %vm308, 1, 0
    %v357 = vsel %vm309, 1, 0
    %v358 = vsel %vm310, 1, 0
    %v359 = vsel %vm311, 1, 0
    %v360 = vsel %vm312, 1, 0
    %v361 = vsel %vm313, 1, 0
    %v362 = vsel %vm314, 1, 0
    %v363 = vsel %vm315, 1, 0
    %v364 = vcvt.s32.f32 %v316
    %v365 = vcvt.s32.f32 %v317
    %v366 = vcvt.s32.f32 %v318
    %v367 = vcvt.s32.f32 %v319
    %v368 = vcvt.s32.f32 %v320
    %v369 = vcvt.s32.f32 %v321
    %v370 = vcvt.s32.f32 %v322
    %v371 = vcvt.s32.f32 %v323
    %v372 = vcvt.s32.f32 %v324
    %v373 = vcvt.s32.f32 %v325
    %v374 = vcvt.s32.f32 %v326
    %v375 = vcvt.s32.f32 %v327
    %v376 = vcvt.s32.f32 %v328
    %v377 = vcvt.s32.f32 %v329
    %v378 = vcvt.s32.f32 %v330
    %v379 = vcvt.s32.f32 %v331
    %v380 = vcvt.s32.f32 %v332
    %v381 = vcvt.s32.f32 %v333
    %v382 = vcvt.s32.f32 %v334
    %v383 = vcvt.s32.f32 %v335
    %v384 = vcvt.s32.f32 %v336
    %v385 = vcvt.s32.f32 %v337
    %v386 = vcvt.s32.f32 %v338
    %v387 = vcvt.s32.f32 %v339
    %v388 = vcvt.s32.f32 %v340
    %v389 = vcvt.s32.f32 %v341
    %v390 = vcvt.s32.f32 %v342
    %v391 = vcvt.s32.f32 %v343
    %v392 = vcvt.s32.f32 %v344
    %v393 = vcvt.s32.f32 %v345
    %v394 = vcvt.s32.f32 %v346
    %v395 = vcvt.s32.f32 %v347
    %v396 = vcvt.s32.f32 %v348
    %v397 = vcvt.s32.f32 %v349
    %v398 = vcvt.s32.f32 %v350
    %v399 = vcvt.s32.f32 %v351
    %v400 = vcvt.s32.f32 %v352
    %v401 = vcvt.s32.f32 %v353
    %v402 = vcvt.s32.f32 %v354
    %v403 = vcvt.s32.f32 %v355
    %v404 = vcvt.s32.f32 %v356
    %v405 = vcvt.s32.f32 %v357
    %v406 = vcvt.s32.f32 %v358
    %v407 = vcvt.s32.f32 %v359
    %v408 = vcvt.s32.f32 %v360
    %v409 = vcvt.s32.f32 %v361
    %v410 = vcvt.s32.f32 %v362
    %v411 = vcvt.s32.f32 %v363
    %v412 = vld [vmem:[#allocation6] sm:$0xf]
    %v413 = vld [vmem:[#allocation6 + $0x4] sm:$0xf]
    %v414 = vld [vmem:[#allocation6 + $0x8] sm:$0xf]
    %v415 = vld [vmem:[#allocation6 + $0xc] sm:$0xf]
    %v416 = vld [vmem:[#allocation6 + $0x10] sm:$0xf]
    %v417 = vld [vmem:[#allocation6 + $0x14] sm:$0xf]
    %v418 = vld [vmem:[#allocation6 + $0x18] sm:$0xf]
    %v419 = vld [vmem:[#allocation6 + $0x1c] sm:$0xf]
    %v420 = vld [vmem:[#allocation6 + $0x20] sm:$0xf]
    %v421 = vld [vmem:[#allocation6 + $0x24] sm:$0xf]
    %v422 = vld [vmem:[#allocation6 + $0x28] sm:$0xf]
    %v423 = vld [vmem:[#allocation6 + $0x2c] sm:$0xf]
    %v424 = vld [vmem:[#allocation6 + $0x30] sm:$0xf]
    %v425 = vld [vmem:[#allocation6 + $0x34] sm:$0xf]
    %v426 = vld [vmem:[#allocation6 + $0x38] sm:$0xf]
    %v427 = vld [vmem:[#allocation6 + $0x3c] sm:$0xf]
    %v428 = vld [vmem:[#allocation6 + $0x40] sm:$0xf]
    %v429 = vld [vmem:[#allocation6 + $0x44] sm:$0xf]
    %v430 = vld [vmem:[#allocation6 + $0x48] sm:$0xf]
    %v431 = vld [vmem:[#allocation6 + $0x4c] sm:$0xf]
    %v432 = vld [vmem:[#allocation6 + $0x50] sm:$0xf]
    %v433 = vld [vmem:[#allocation6 + $0x54] sm:$0xf]
    %v434 = vld [vmem:[#allocation6 + $0x58] sm:$0xf]
    %v435 = vld [vmem:[#allocation6 + $0x5c] sm:$0xf]
    %v436 = vld [vmem:[#allocation6 + $0x60] sm:$0xf]
    %v437 = vld [vmem:[#allocation6 + $0x64] sm:$0xf]
    %v438 = vld [vmem:[#allocation6 + $0x68] sm:$0xf]
    %v439 = vld [vmem:[#allocation6 + $0x6c] sm:$0xf]
    %v440 = vld [vmem:[#allocation6 + $0x70] sm:$0xf]
    %v441 = vld [vmem:[#allocation6 + $0x74] sm:$0xf]
    %v442 = vld [vmem:[#allocation6 + $0x78] sm:$0xf]
    %v443 = vld [vmem:[#allocation6 + $0x7c] sm:$0xf]
    %v444 = vld [vmem:[#allocation6 + $0x80] sm:$0xf]
    %v445 = vld [vmem:[#allocation6 + $0x84] sm:$0xf]
    %v446 = vld [vmem:[#allocation6 + $0x88] sm:$0xf]
    %v447 = vld [vmem:[#allocation6 + $0x8c] sm:$0xf]
    %v448 = vld [vmem:[#allocation6 + $0x90] sm:$0xf]
    %v449 = vld [vmem:[#allocation6 + $0x94] sm:$0xf]
    %v450 = vld [vmem:[#allocation6 + $0x98] sm:$0xf]
    %v451 = vld [vmem:[#allocation6 + $0x9c] sm:$0xf]
    %v452 = vld [vmem:[#allocation6 + $0xa0] sm:$0xf]
    %v453 = vld [vmem:[#allocation6 + $0xa4] sm:$0xf]
    %v454 = vld [vmem:[#allocation6 + $0xa8] sm:$0xf]
    %v455 = vld [vmem:[#allocation6 + $0xac] sm:$0xf]
    %v456 = vld [vmem:[#allocation6 + $0xb0] sm:$0xf]
    %v457 = vld [vmem:[#allocation6 + $0xb4] sm:$0xf]
    %v458 = vld [vmem:[#allocation6 + $0xb8] sm:$0xf]
    %v459 = vld [vmem:[#allocation6 + $0xbc] sm:$0xf]
    %v460 = vld [vmem:[#allocation12] sm:$0xff]
    %v461 = vld [vmem:[#allocation12 + $0x8] sm:$0xff]
    %v462 = vld [vmem:[#allocation12 + $0x10] sm:$0xff]
    %v463 = vld [vmem:[#allocation12 + $0x18] sm:$0xff]
    %v464 = vld [vmem:[#allocation12 + $0x20] sm:$0xff]
    %v465 = vld [vmem:[#allocation12 + $0x28] sm:$0xff]
    %v466 = vld [vmem:[#allocation12 + $0x30] sm:$0xff]
    %v467 = vld [vmem:[#allocation12 + $0x38] sm:$0xff]
    %v468 = vld [vmem:[#allocation12 + $0x40] sm:$0xff]
    %v469 = vld [vmem:[#allocation14] sm:$0xff]
    %v470 = vld [vmem:[#allocation14 + $0x8] sm:$0xff]
    %v471 = vld [vmem:[#allocation14 + $0x10] sm:$0xff]
    %v472 = vld [vmem:[#allocation14 + $0x18] sm:$0xff]
    %v473 = vld [vmem:[#allocation14 + $0x20] sm:$0xff]
    %v474 = vld [vmem:[#allocation14 + $0x28] sm:$0xff]
    %v475 = vld [vmem:[#allocation14 + $0x30] sm:$0xff]
    %v476 = vld [vmem:[#allocation14 + $0x38] sm:$0xff]
    %v477 = vld [vmem:[#allocation14 + $0x40] sm:$0xff]
    %v478 = vld [vmem:[#allocation14 + $0x48] sm:$0xff]
    %v479 = vld [vmem:[#allocation14 + $0x50] sm:$0xff]
    %v480 = vld [vmem:[#allocation14 + $0x58] sm:$0xff]
    %v481 = vld [vmem:[#allocation14 + $0x60] sm:$0xff]
    %v482 = vld [vmem:[#allocation14 + $0x68] sm:$0xff]
    %v483 = vld [vmem:[#allocation14 + $0x70] sm:$0xff]
    %v484 = vld [vmem:[#allocation14 + $0x78] sm:$0xff]
    %v485 = vpack.c.bf16 %v470, %v469
    %v486 = vpack.c.bf16 %v472, %v471
    %v487 = vpack.c.bf16 %v474, %v473
    %v488 = vpack.c.bf16 %v476, %v475
    %v489 = vpack.c.bf16 %v478, %v477
    %v490 = vpack.c.bf16 %v480, %v479
    %v491 = vpack.c.bf16 %v482, %v481
    %v492 = vpack.c.bf16 %v484, %v483
    %v493 = vld [vmem:[%s5] sm:$0x1]
    %v495 = vlaneseq
    %v496 = vshrl.u32 %v495, 7
    %v497 = vsub.s32 0, %v496
    %v498 = vrot.slane %v493, %v497
    %v548 = vunpack.c.l.b16 %v412
    %v549 = vunpack.c.l.b16 %v413
    %v550 = vunpack.c.l.b16 %v414
    %v551 = vunpack.c.l.b16 %v415
    %v552 = vunpack.c.l.b16 %v416
    %v553 = vunpack.c.l.b16 %v417
    %v554 = vunpack.c.l.b16 %v418
    %v555 = vunpack.c.l.b16 %v419
    %v556 = vunpack.c.l.b16 %v420
    %v557 = vunpack.c.l.b16 %v421
    %v558 = vunpack.c.l.b16 %v422
    %v559 = vunpack.c.l.b16 %v423
    %v560 = vunpack.c.l.b16 %v424
    %v561 = vunpack.c.l.b16 %v425
    %v562 = vunpack.c.l.b16 %v426
    %v563 = vunpack.c.l.b16 %v427
    %v564 = vunpack.c.l.b16 %v428
    %v565 = vunpack.c.l.b16 %v429
    %v566 = vunpack.c.l.b16 %v430
    %v567 = vunpack.c.l.b16 %v431
    %v568 = vunpack.c.l.b16 %v432
    %v569 = vunpack.c.l.b16 %v433
    %v570 = vunpack.c.l.b16 %v434
    %v571 = vunpack.c.l.b16 %v435
    %v572 = vunpack.c.l.b16 %v436
    %v573 = vunpack.c.l.b16 %v437
    %v574 = vunpack.c.l.b16 %v438
    %v575 = vunpack.c.l.b16 %v439
    %v576 = vunpack.c.l.b16 %v440
    %v577 = vunpack.c.l.b16 %v441
    %v578 = vunpack.c.l.b16 %v442
    %v579 = vunpack.c.l.b16 %v443
    %v580 = vunpack.c.l.b16 %v444
    %v581 = vunpack.c.l.b16 %v445
    %v582 = vunpack.c.l.b16 %v446
    %v583 = vunpack.c.l.b16 %v447
    %v584 = vunpack.c.l.b16 %v448
    %v585 = vunpack.c.l.b16 %v449
    %v586 = vunpack.c.l.b16 %v450
    %v587 = vunpack.c.l.b16 %v451
    %v588 = vunpack.c.l.b16 %v452
    %v589 = vunpack.c.l.b16 %v453
    %v590 = vunpack.c.l.b16 %v454
    %v591 = vunpack.c.l.b16 %v455
    %v592 = vunpack.c.l.b16 %v456
    %v593 = vunpack.c.l.b16 %v457
    %v594 = vunpack.c.l.b16 %v458
    %v595 = vunpack.c.l.b16 %v459
    %v596 = vpack.c.b16 %v549, %v548
    %v597 = vpack.c.b16 %v551, %v550
    %v598 = vpack.c.b16 %v553, %v552
    %v599 = vpack.c.b16 %v555, %v554
    %v600 = vpack.c.b16 %v557, %v556
    %v601 = vpack.c.b16 %v559, %v558
    %v602 = vpack.c.b16 %v561, %v560
    %v603 = vpack.c.b16 %v563, %v562
    %v604 = vpack.c.b16 %v565, %v564
    %v605 = vpack.c.b16 %v567, %v566
    %v606 = vpack.c.b16 %v569, %v568
    %v607 = vpack.c.b16 %v571, %v570
    %v608 = vpack.c.b16 %v573, %v572
    %v609 = vpack.c.b16 %v575, %v574
    %v610 = vpack.c.b16 %v577, %v576
    %v611 = vpack.c.b16 %v579, %v578
    %v612 = vpack.c.b16 %v581, %v580
    %v613 = vpack.c.b16 %v583, %v582
    %v614 = vpack.c.b16 %v585, %v584
    %v615 = vpack.c.b16 %v587, %v586
    %v616 = vpack.c.b16 %v589, %v588
    %v617 = vpack.c.b16 %v591, %v590
    %v618 = vpack.c.b16 %v593, %v592
    %v619 = vpack.c.b16 %v595, %v594
    %644 = vmatprep.subr.bf16.mxu0 0
    %645 = vmatpush1.bf16.msra.mxu0 %v485
    %646 = vmatprep.subr.bf16.mxu0 0
    %647 = vmatpush1.bf16.msra.mxu0 %v486
    %648 = vmatprep.subr.bf16.mxu0 0
    %649 = vmatpush1.bf16.msra.mxu0 %v487
    %650 = vmatprep.subr.bf16.mxu0 0
    %651 = vmatpush1.bf16.msra.mxu0 %v488
    %652 = vmatprep.subr.bf16.mxu0 0
    %653 = vmatpush1.bf16.msra.mxu0 %v489
    %654 = vmatprep.subr.bf16.mxu0 0
    %655 = vmatpush1.bf16.msra.mxu0 %v490
    %656 = vmatprep.subr.bf16.mxu0 0
    %657 = vmatpush1.bf16.msra.mxu0 %v491
    %658 = vmatprep.subr.bf16.mxu0 0
    %659 = vmatpush1.bf16.msra.mxu0 %v492
    %660 = vmatprep.subr.bf16.mxu0 0
    %661 = vmatpush1.bf16.msra.mxu0 0
    %662 = vmatprep.subr.bf16.mxu0 0
    %663 = vmatpush1.bf16.msra.mxu0 0
    %664 = vmatprep.subr.bf16.mxu0 0
    %665 = vmatpush1.bf16.msra.mxu0 0
    %666 = vmatprep.subr.bf16.mxu0 0
    %667 = vmatpush1.bf16.msra.mxu0 0
    %668 = vmatprep.subr.bf16.mxu0 0
    %669 = vmatpush1.bf16.msra.mxu0 0
    %670 = vmatprep.subr.bf16.mxu0 0
    %671 = vmatpush1.bf16.msra.mxu0 0
    %672 = vmatprep.subr.bf16.mxu0 0
    %673 = vmatpush1.bf16.msra.mxu0 0
    %674 = vmatprep.subr.bf16.mxu0 0
    %675 = vmatpush1.bf16.msra.mxu0 0
    %676 = vmatprep.mubr.bf16.mxu0 0
    %677 = vmatmul.mubr.bf16.gmra.mrb[0].mxu0 %v596
    %v678 = vpop.f32.mrb[0].mxu0
    %v679 = vadd.f32 %v498, %v678
    %v680 = vpop.f32.mrb[0].mxu0
    %v681 = vpop.f32.mrb[0].mxu0
    %v682 = vadd.f32 %v498, %v681
    %v683 = vpop.f32.mrb[0].mxu0
    %684 = vmatprep.mubr.bf16.mxu0 0
    %685 = vmatmul.mubr.bf16.gmra.mrb[0].mxu0 %v597
    %v686 = vpop.f32.mrb[0].mxu0
    %v687 = vadd.f32 %v498, %v686
    %v688 = vpop.f32.mrb[0].mxu0
    %v689 = vpop.f32.mrb[0].mxu0
    %v690 = vadd.f32 %v498, %v689
    %v691 = vpop.f32.mrb[0].mxu0
    %692 = vmatprep.mubr.bf16.mxu0 0
    %693 = vmatmul.mubr.bf16.gmra.mrb[0].mxu0 %v598
    %v694 = vpop.f32.mrb[0].mxu0
    %v695 = vadd.f32 %v498, %v694
    %v696 = vpop.f32.mrb[0].mxu0
    %v697 = vpop.f32.mrb[0].mxu0
    %v698 = vadd.f32 %v498, %v697
    %v699 = vpop.f32.mrb[0].mxu0
    %700 = vmatprep.mubr.bf16.mxu0 0
    %701 = vmatmul.mubr.bf16.gmra.mrb[0].mxu0 %v599
    %v702 = vpop.f32.mrb[0].mxu0
    %v703 = vadd.f32 %v498, %v702
    %v704 = vpop.f32.mrb[0].mxu0
    %v705 = vpop.f32.mrb[0].mxu0
    %v706 = vadd.f32 %v498, %v705
    %v707 = vpop.f32.mrb[0].mxu0
    %708 = vmatprep.mubr.bf16.mxu0 0
    %709 = vmatmul.mubr.bf16.gmra.mrb[0].mxu0 %v600
    %v710 = vpop.f32.mrb[0].mxu0
    %v711 = vadd.f32 %v498, %v710
    %v712 = vpop.f32.mrb[0].mxu0
    %v713 = vpop.f32.mrb[0].mxu0
    %v714 = vadd.f32 %v498, %v713
    %v715 = vpop.f32.mrb[0].mxu0
    %716 = vmatprep.mubr.bf16.mxu0 0
    %717 = vmatmul.mubr.bf16.gmra.mrb[0].mxu0 %v601
    %v718 = vpop.f32.mrb[0].mxu0
    %v719 = vadd.f32 %v498, %v718
    %v720 = vpop.f32.mrb[0].mxu0
    %v721 = vpop.f32.mrb[0].mxu0
    %v722 = vadd.f32 %v498, %v721
    %v723 = vpop.f32.mrb[0].mxu0
    %724 = vmatprep.mubr.bf16.mxu0 0
    %725 = vmatmul.mubr.bf16.gmra.mrb[0].mxu0 %v602
    %v726 = vpop.f32.mrb[0].mxu0
    %v727 = vadd.f32 %v498, %v726
    %v728 = vpop.f32.mrb[0].mxu0
    %v729 = vpop.f32.mrb[0].mxu0
    %v730 = vadd.f32 %v498, %v729
    %v731 = vpop.f32.mrb[0].mxu0
    %732 = vmatprep.mubr.bf16.mxu0 0
    %733 = vmatmul.mubr.bf16.gmra.mrb[0].mxu0 %v603
    %v734 = vpop.f32.mrb[0].mxu0
    %v735 = vadd.f32 %v498, %v734
    %v736 = vpop.f32.mrb[0].mxu0
    %v737 = vpop.f32.mrb[0].mxu0
    %v738 = vadd.f32 %v498, %v737
    %v739 = vpop.f32.mrb[0].mxu0
    %740 = vmatprep.mubr.bf16.mxu0 0
    %741 = vmatmul.mubr.bf16.gmra.mrb[0].mxu0 %v604
    %v742 = vpop.f32.mrb[0].mxu0
    %v743 = vadd.f32 %v498, %v742
    %v744 = vpop.f32.mrb[0].mxu0
    %v745 = vpop.f32.mrb[0].mxu0
    %v746 = vadd.f32 %v498, %v745
    %v747 = vpop.f32.mrb[0].mxu0
    %748 = vmatprep.mubr.bf16.mxu0 0
    %749 = vmatmul.mubr.bf16.gmra.mrb[0].mxu0 %v605
    %v750 = vpop.f32.mrb[0].mxu0
    %v751 = vadd.f32 %v498, %v750
    %v752 = vpop.f32.mrb[0].mxu0
    %v753 = vpop.f32.mrb[0].mxu0
    %v754 = vadd.f32 %v498, %v753
    %v755 = vpop.f32.mrb[0].mxu0
    %756 = vmatprep.mubr.bf16.mxu0 0
    %757 = vmatmul.mubr.bf16.gmra.mrb[0].mxu0 %v606
    %v758 = vpop.f32.mrb[0].mxu0
    %v759 = vadd.f32 %v498, %v758
    %v760 = vpop.f32.mrb[0].mxu0
    %v761 = vpop.f32.mrb[0].mxu0
    %v762 = vadd.f32 %v498, %v761
    %v763 = vpop.f32.mrb[0].mxu0
    %764 = vmatprep.mubr.bf16.mxu0 0
    %765 = vmatmul.mubr.bf16.gmra.mrb[0].mxu0 %v607
    %v766 = vpop.f32.mrb[0].mxu0
    %v767 = vadd.f32 %v498, %v766
    %v768 = vpop.f32.mrb[0].mxu0
    %v769 = vpop.f32.mrb[0].mxu0
    %v770 = vadd.f32 %v498, %v769
    %v771 = vpop.f32.mrb[0].mxu0
    %772 = vmatprep.mubr.bf16.mxu0 0
    %773 = vmatmul.mubr.bf16.gmra.mrb[0].mxu0 %v608
    %v774 = vpop.f32.mrb[0].mxu0
    %v775 = vadd.f32 %v498, %v774
    %v776 = vpop.f32.mrb[0].mxu0
    %v777 = vpop.f32.mrb[0].mxu0
    %v778 = vadd.f32 %v498, %v777
    %v779 = vpop.f32.mrb[0].mxu0
    %780 = vmatprep.mubr.bf16.mxu0 0
    %781 = vmatmul.mubr.bf16.gmra.mrb[0].mxu0 %v609
    %v782 = vpop.f32.mrb[0].mxu0
    %v783 = vadd.f32 %v498, %v782
    %v784 = vpop.f32.mrb[0].mxu0
    %v785 = vpop.f32.mrb[0].mxu0
    %v786 = vadd.f32 %v498, %v785
    %v787 = vpop.f32.mrb[0].mxu0
    %788 = vmatprep.mubr.bf16.mxu0 0
    %789 = vmatmul.mubr.bf16.gmra.mrb[0].mxu0 %v610
    %v790 = vpop.f32.mrb[0].mxu0
    %v791 = vadd.f32 %v498, %v790
    %v792 = vpop.f32.mrb[0].mxu0
    %v793 = vpop.f32.mrb[0].mxu0
    %v794 = vadd.f32 %v498, %v793
    %v795 = vpop.f32.mrb[0].mxu0
    %796 = vmatprep.mubr.bf16.mxu0 0
    %797 = vmatmul.mubr.bf16.gmra.mrb[0].mxu0 %v611
    %v798 = vpop.f32.mrb[0].mxu0
    %v799 = vadd.f32 %v498, %v798
    %v800 = vpop.f32.mrb[0].mxu0
    %v801 = vpop.f32.mrb[0].mxu0
    %v802 = vadd.f32 %v498, %v801
    %v803 = vpop.f32.mrb[0].mxu0
    %804 = vmatprep.mubr.bf16.mxu0 0
    %805 = vmatmul.mubr.bf16.gmra.mrb[0].mxu0 %v612
    %v806 = vpop.f32.mrb[0].mxu0
    %v807 = vadd.f32 %v498, %v806
    %v808 = vpop.f32.mrb[0].mxu0
    %v809 = vpop.f32.mrb[0].mxu0
    %v810 = vadd.f32 %v498, %v809
    %v811 = vpop.f32.mrb[0].mxu0
    %812 = vmatprep.mubr.bf16.mxu0 0
    %813 = vmatmul.mubr.bf16.gmra.mrb[0].mxu0 %v613
    %v814 = vpop.f32.mrb[0].mxu0
    %v815 = vadd.f32 %v498, %v814
    %v816 = vpop.f32.mrb[0].mxu0
    %v817 = vpop.f32.mrb[0].mxu0
    %v818 = vadd.f32 %v498, %v817
    %v819 = vpop.f32.mrb[0].mxu0
    %820 = vmatprep.mubr.bf16.mxu0 0
    %821 = vmatmul.mubr.bf16.gmra.mrb[0].mxu0 %v614
    %v822 = vpop.f32.mrb[0].mxu0
    %v823 = vadd.f32 %v498, %v822
    %v824 = vpop.f32.mrb[0].mxu0
    %v825 = vpop.f32.mrb[0].mxu0
    %v826 = vadd.f32 %v498, %v825
    %v827 = vpop.f32.mrb[0].mxu0
    %828 = vmatprep.mubr.bf16.mxu0 0
    %829 = vmatmul.mubr.bf16.gmra.mrb[0].mxu0 %v615
    %v830 = vpop.f32.mrb[0].mxu0
    %v831 = vadd.f32 %v498, %v830
    %v832 = vpop.f32.mrb[0].mxu0
    %v833 = vpop.f32.mrb[0].mxu0
    %v834 = vadd.f32 %v498, %v833
    %v835 = vpop.f32.mrb[0].mxu0
    %836 = vmatprep.mubr.bf16.mxu0 0
    %837 = vmatmul.mubr.bf16.gmra.mrb[0].mxu0 %v616
    %v838 = vpop.f32.mrb[0].mxu0
    %v839 = vadd.f32 %v498, %v838
    %v840 = vpop.f32.mrb[0].mxu0
    %v841 = vpop.f32.mrb[0].mxu0
    %v842 = vadd.f32 %v498, %v841
    %v843 = vpop.f32.mrb[0].mxu0
    %844 = vmatprep.mubr.bf16.mxu0 0
    %845 = vmatmul.mubr.bf16.gmra.mrb[0].mxu0 %v617
    %v846 = vpop.f32.mrb[0].mxu0
    %v847 = vadd.f32 %v498, %v846
    %v848 = vpop.f32.mrb[0].mxu0
    %v849 = vpop.f32.mrb[0].mxu0
    %v850 = vadd.f32 %v498, %v849
    %v851 = vpop.f32.mrb[0].mxu0
    %852 = vmatprep.mubr.bf16.mxu0 0
    %853 = vmatmul.mubr.bf16.gmra.mrb[0].mxu0 %v618
    %v854 = vpop.f32.mrb[0].mxu0
    %v855 = vadd.f32 %v498, %v854
    %v856 = vpop.f32.mrb[0].mxu0
    %v857 = vpop.f32.mrb[0].mxu0
    %v858 = vadd.f32 %v498, %v857
    %v859 = vpop.f32.mrb[0].mxu0
    %860 = vmatprep.mubr.bf16.mxu0 0
    %861 = vmatmul.mubr.bf16.gmra.mrb[0].mxu0 %v619
    %v862 = vpop.f32.mrb[0].mxu0
    %v863 = vadd.f32 %v498, %v862
    %v864 = vpop.f32.mrb[0].mxu0
    %v865 = vpop.f32.mrb[0].mxu0
    %v866 = vadd.f32 %v498, %v865
    %v867 = vpop.f32.mrb[0].mxu0
    %868 = vdwg.mxu0
    %v869 = vld [vmem:[#allocation9] sm:$0xff]
    %v870 = vld [vmem:[#allocation9 + $0x8] sm:$0xf]
    %v871 = vld [vmem:[#allocation9 + $0xc] sm:$0xff]
    %v872 = vld [vmem:[#allocation9 + $0x14] sm:$0xf]
    %v873 = vld [vmem:[#allocation9 + $0x18] sm:$0xff]
    %v874 = vld [vmem:[#allocation9 + $0x20] sm:$0xf]
    %v875 = vld [vmem:[#allocation9 + $0x24] sm:$0xff]
    %v876 = vld [vmem:[#allocation9 + $0x2c] sm:$0xf]
    %v877 = vld [vmem:[#allocation9 + $0x30] sm:$0xff]
    %v878 = vld [vmem:[#allocation9 + $0x38] sm:$0xf]
    %v879 = vld [vmem:[#allocation9 + $0x3c] sm:$0xff]
    %v880 = vld [vmem:[#allocation9 + $0x44] sm:$0xf]
    %v881 = vld [vmem:[#allocation9 + $0x48] sm:$0xff]
    %v882 = vld [vmem:[#allocation9 + $0x50] sm:$0xf]
    %v883 = vld [vmem:[#allocation9 + $0x54] sm:$0xff]
    %v884 = vld [vmem:[#allocation9 + $0x5c] sm:$0xf]
    %v885 = vld [vmem:[#allocation9 + $0x60] sm:$0xff]
    %v886 = vld [vmem:[#allocation9 + $0x68] sm:$0xf]
    %v887 = vld [vmem:[#allocation9 + $0x6c] sm:$0xff]
    %v888 = vld [vmem:[#allocation9 + $0x74] sm:$0xf]
    %v889 = vld [vmem:[#allocation9 + $0x78] sm:$0xff]
    %v890 = vld [vmem:[#allocation9 + $0x80] sm:$0xf]
    %v891 = vld [vmem:[#allocation9 + $0x84] sm:$0xff]
    %v892 = vld [vmem:[#allocation9 + $0x8c] sm:$0xf]
    %v893 = vld [vmem:[#allocation9 + $0x90] sm:$0xff]
    %v894 = vld [vmem:[#allocation9 + $0x98] sm:$0xf]
    %v895 = vld [vmem:[#allocation9 + $0x9c] sm:$0xff]
    %v896 = vld [vmem:[#allocation9 + $0xa4] sm:$0xf]
    %v897 = vld [vmem:[#allocation9 + $0xa8] sm:$0xff]
    %v898 = vld [vmem:[#allocation9 + $0xb0] sm:$0xf]
    %v899 = vld [vmem:[#allocation9 + $0xb4] sm:$0xff]
    %v900 = vld [vmem:[#allocation9 + $0xbc] sm:$0xf]
    %v901 = vld [vmem:[#allocation9 + $0xc0] sm:$0xff]
    %v902 = vld [vmem:[#allocation9 + $0xc8] sm:$0xf]
    %v903 = vld [vmem:[#allocation9 + $0xcc] sm:$0xff]
    %v904 = vld [vmem:[#allocation9 + $0xd4] sm:$0xf]
    %v905 = vld [vmem:[#allocation9 + $0xd8] sm:$0xff]
    %v906 = vld [vmem:[#allocation9 + $0xe0] sm:$0xf]
    %v907 = vld [vmem:[#allocation9 + $0xe4] sm:$0xff]
    %v908 = vld [vmem:[#allocation9 + $0xec] sm:$0xf]
    %v909 = vld [vmem:[#allocation9 + $0xf0] sm:$0xff]
    %v910 = vld [vmem:[#allocation9 + $0xf8] sm:$0xf]
    %v911 = vld [vmem:[#allocation9 + $0xfc] sm:$0xff]
    %v912 = vld [vmem:[#allocation9 + $0x104] sm:$0xf]
    %v913 = vld [vmem:[#allocation9 + $0x108] sm:$0xff]
    %v914 = vld [vmem:[#allocation9 + $0x110] sm:$0xf]
    %v915 = vld [vmem:[#allocation9 + $0x114] sm:$0xff]
    %v916 = vld [vmem:[#allocation9 + $0x11c] sm:$0xf]
    %v917 = vld [vmem:[#allocation9 + $0x120] sm:$0xff]
    %v918 = vld [vmem:[#allocation9 + $0x128] sm:$0xf]
    %v919 = vld [vmem:[#allocation9 + $0x12c] sm:$0xff]
    %v920 = vld [vmem:[#allocation9 + $0x134] sm:$0xf]
    %v921 = vld [vmem:[#allocation9 + $0x138] sm:$0xff]
    %v922 = vld [vmem:[#allocation9 + $0x140] sm:$0xf]
    %v923 = vld [vmem:[#allocation9 + $0x144] sm:$0xff]
    %v924 = vld [vmem:[#allocation9 + $0x14c] sm:$0xf]
    %v925 = vld [vmem:[#allocation9 + $0x150] sm:$0xff]
    %v926 = vld [vmem:[#allocation9 + $0x158] sm:$0xf]
    %v927 = vld [vmem:[#allocation9 + $0x15c] sm:$0xff]
    %v928 = vld [vmem:[#allocation9 + $0x164] sm:$0xf]
    %v929 = vld [vmem:[#allocation9 + $0x168] sm:$0xff]
    %v930 = vld [vmem:[#allocation9 + $0x170] sm:$0xf]
    %v931 = vld [vmem:[#allocation9 + $0x174] sm:$0xff]
    %v932 = vld [vmem:[#allocation9 + $0x17c] sm:$0xf]
    %v933 = vld [vmem:[#allocation9 + $0x180] sm:$0xff]
    %v934 = vld [vmem:[#allocation9 + $0x188] sm:$0xf]
    %v935 = vld [vmem:[#allocation9 + $0x18c] sm:$0xff]
    %v936 = vld [vmem:[#allocation9 + $0x194] sm:$0xf]
    %v937 = vld [vmem:[#allocation9 + $0x198] sm:$0xff]
    %v938 = vld [vmem:[#allocation9 + $0x1a0] sm:$0xf]
    %v939 = vld [vmem:[#allocation9 + $0x1a4] sm:$0xff]
    %v940 = vld [vmem:[#allocation9 + $0x1ac] sm:$0xf]
    %v941 = vld [vmem:[#allocation9 + $0x1b0] sm:$0xff]
    %v942 = vld [vmem:[#allocation9 + $0x1b8] sm:$0xf]
    %v943 = vld [vmem:[#allocation9 + $0x1bc] sm:$0xff]
    %v944 = vld [vmem:[#allocation9 + $0x1c4] sm:$0xf]
    %v945 = vld [vmem:[#allocation9 + $0x1c8] sm:$0xff]
    %v946 = vld [vmem:[#allocation9 + $0x1d0] sm:$0xf]
    %v947 = vld [vmem:[#allocation9 + $0x1d4] sm:$0xff]
    %v948 = vld [vmem:[#allocation9 + $0x1dc] sm:$0xf]
    %v949 = vld [vmem:[#allocation9 + $0x1e0] sm:$0xff]
    %v950 = vld [vmem:[#allocation9 + $0x1e8] sm:$0xf]
    %v951 = vld [vmem:[#allocation9 + $0x1ec] sm:$0xff]
    %v952 = vld [vmem:[#allocation9 + $0x1f4] sm:$0xf]
    %v953 = vld [vmem:[#allocation9 + $0x1f8] sm:$0xff]
    %v954 = vld [vmem:[#allocation9 + $0x200] sm:$0xf]
    %v955 = vld [vmem:[#allocation9 + $0x204] sm:$0xff]
    %v956 = vld [vmem:[#allocation9 + $0x20c] sm:$0xf]
    %v957 = vld [vmem:[#allocation9 + $0x210] sm:$0xff]
    %v958 = vld [vmem:[#allocation9 + $0x218] sm:$0xf]
    %v959 = vld [vmem:[#allocation9 + $0x21c] sm:$0xff]
    %v960 = vld [vmem:[#allocation9 + $0x224] sm:$0xf]
    %v961 = vld [vmem:[#allocation9 + $0x228] sm:$0xff]
    %v962 = vld [vmem:[#allocation9 + $0x230] sm:$0xf]
    %v963 = vld [vmem:[#allocation9 + $0x234] sm:$0xff]
    %v964 = vld [vmem:[#allocation9 + $0x23c] sm:$0xf]
    %v965 = vld [vmem:[#allocation15] sm:$0xff]
    %v966 = vld [vmem:[#allocation15 + $0x8] sm:$0xff]
    %v967 = vld [vmem:[#allocation15 + $0x10] sm:$0xff]
    %v968 = vld [vmem:[#allocation15 + $0x18] sm:$0xff]
    %v969 = vld [vmem:[#allocation15 + $0x20] sm:$0xff]
    %v970 = vld [vmem:[#allocation15 + $0x28] sm:$0xff]
    %v971 = vld [vmem:[#allocation15 + $0x30] sm:$0xff]
    %v972 = vld [vmem:[#allocation15 + $0x38] sm:$0xff]
    %v973 = vld [vmem:[#allocation15 + $0x40] sm:$0xff]
    %v974 = vld [vmem:[#allocation15 + $0x48] sm:$0xff]
    %v975 = vld [vmem:[#allocation15 + $0x50] sm:$0xff]
    %v976 = vld [vmem:[#allocation15 + $0x58] sm:$0xff]
    %v977 = vld [vmem:[#allocation15 + $0x60] sm:$0xff]
    %v978 = vld [vmem:[#allocation15 + $0x68] sm:$0xff]
    %v979 = vld [vmem:[#allocation15 + $0x70] sm:$0xff]
    %v980 = vld [vmem:[#allocation15 + $0x78] sm:$0xff]
    %v981 = vpack.c.bf16 %v682, %v679
    %v982 = vpack.c.bf16 %v690, %v687
    %v983 = vpack.c.bf16 %v698, %v695
    %v984 = vpack.c.bf16 %v706, %v703
    %v985 = vpack.c.bf16 %v714, %v711
    %v986 = vpack.c.bf16 %v722, %v719
    %v987 = vpack.c.bf16 %v730, %v727
    %v988 = vpack.c.bf16 %v738, %v735
    %v989 = vpack.c.bf16 %v746, %v743
    %v990 = vpack.c.bf16 %v754, %v751
    %v991 = vpack.c.bf16 %v762, %v759
    %v992 = vpack.c.bf16 %v770, %v767
    %v993 = vpack.c.bf16 %v778, %v775
    %v994 = vpack.c.bf16 %v786, %v783
    %v995 = vpack.c.bf16 %v794, %v791
    %v996 = vpack.c.bf16 %v802, %v799
    %v997 = vpack.c.bf16 %v810, %v807
    %v998 = vpack.c.bf16 %v818, %v815
    %v999 = vpack.c.bf16 %v826, %v823
    %v1000 = vpack.c.bf16 %v834, %v831
    %v1001 = vpack.c.bf16 %v842, %v839
    %v1002 = vpack.c.bf16 %v850, %v847
    %v1003 = vpack.c.bf16 %v858, %v855
    %v1004 = vpack.c.bf16 %v866, %v863
    %v1005 = vpack.c.bf16 %v966, %v965
    %v1006 = vpack.c.bf16 %v968, %v967
    %v1007 = vpack.c.bf16 %v970, %v969
    %v1008 = vpack.c.bf16 %v972, %v971
    %v1009 = vpack.c.bf16 %v974, %v973
    %v1010 = vpack.c.bf16 %v976, %v975
    %v1011 = vpack.c.bf16 %v978, %v977
    %v1012 = vpack.c.bf16 %v980, %v979
    %1013 = vmatprep.subr.bf16.mxu0 0
    %1014 = vmatpush1.bf16.msra.mxu0 %v1005
    %1015 = vmatprep.subr.bf16.mxu0 0
    %1016 = vmatpush1.bf16.msra.mxu0 %v1006
    %1017 = vmatprep.subr.bf16.mxu0 0
    %1018 = vmatpush1.bf16.msra.mxu0 %v1007
    %1019 = vmatprep.subr.bf16.mxu0 0
    %1020 = vmatpush1.bf16.msra.mxu0 %v1008
    %1021 = vmatprep.subr.bf16.mxu0 0
    %1022 = vmatpush1.bf16.msra.mxu0 %v1009
    %1023 = vmatprep.subr.bf16.mxu0 0
    %1024 = vmatpush1.bf16.msra.mxu0 %v1010
    %1025 = vmatprep.subr.bf16.mxu0 0
    %1026 = vmatpush1.bf16.msra.mxu0 %v1011
    %1027 = vmatprep.subr.bf16.mxu0 0
    %1028 = vmatpush1.bf16.msra.mxu0 %v1012
    %1029 = vmatprep.subr.bf16.mxu0 0
    %1030 = vmatpush1.bf16.msra.mxu0 0
    %1031 = vmatprep.subr.bf16.mxu0 0
    %1032 = vmatpush1.bf16.msra.mxu0 0
    %1033 = vmatprep.subr.bf16.mxu0 0
    %1034 = vmatpush1.bf16.msra.mxu0 0
    %1035 = vmatprep.subr.bf16.mxu0 0
    %1036 = vmatpush1.bf16.msra.mxu0 0
    %1037 = vmatprep.subr.bf16.mxu0 0
    %1038 = vmatpush1.bf16.msra.mxu0 0
    %1039 = vmatprep.subr.bf16.mxu0 0
    %1040 = vmatpush1.bf16.msra.mxu0 0
    %1041 = vmatprep.subr.bf16.mxu0 0
    %1042 = vmatpush1.bf16.msra.mxu0 0
    %1043 = vmatprep.subr.bf16.mxu0 0
    %1044 = vmatpush1.bf16.msra.mxu0 0
    %1045 = vmatprep.mubr.bf16.mxu0 0
    %1046 = vmatmul.mubr.bf16.gmra.mrb[0].mxu0 %v981
    %v1047 = vpop.f32.mrb[0].mxu0
    %v1048 = vadd.f32 0.0, %v1047
    %v1049 = vpop.f32.mrb[0].mxu0
    %v1050 = vpop.f32.mrb[0].mxu0
    %v1051 = vadd.f32 0.0, %v1050
    %v1052 = vpop.f32.mrb[0].mxu0
    %1053 = vmatprep.mubr.bf16.mxu0 0
    %1054 = vmatmul.mubr.bf16.gmra.mrb[0].mxu0 %v982
    %v1055 = vpop.f32.mrb[0].mxu0
    %v1056 = vadd.f32 0.0, %v1055
    %v1057 = vpop.f32.mrb[0].mxu0
    %v1058 = vpop.f32.mrb[0].mxu0
    %v1059 = vadd.f32 0.0, %v1058
    %v1060 = vpop.f32.mrb[0].mxu0
    %1061 = vmatprep.mubr.bf16.mxu0 0
    %1062 = vmatmul.mubr.bf16.gmra.mrb[0].mxu0 %v983
    %v1063 = vpop.f32.mrb[0].mxu0
    %v1064 = vadd.f32 0.0, %v1063
    %v1065 = vpop.f32.mrb[0].mxu0
    %v1066 = vpop.f32.mrb[0].mxu0
    %v1067 = vadd.f32 0.0, %v1066
    %v1068 = vpop.f32.mrb[0].mxu0
    %1069 = vmatprep.mubr.bf16.mxu0 0
    %1070 = vmatmul.mubr.bf16.gmra.mrb[0].mxu0 %v984
    %v1071 = vpop.f32.mrb[0].mxu0
    %v1072 = vadd.f32 0.0, %v1071
    %v1073 = vpop.f32.mrb[0].mxu0
    %v1074 = vpop.f32.mrb[0].mxu0
    %v1075 = vadd.f32 0.0, %v1074
    %v1076 = vpop.f32.mrb[0].mxu0
    %1077 = vmatprep.mubr.bf16.mxu0 0
    %1078 = vmatmul.mubr.bf16.gmra.mrb[0].mxu0 %v985
    %v1079 = vpop.f32.mrb[0].mxu0
    %v1080 = vadd.f32 0.0, %v1079
    %v1081 = vpop.f32.mrb[0].mxu0
    %v1082 = vpop.f32.mrb[0].mxu0
    %v1083 = vadd.f32 0.0, %v1082
    %v1084 = vpop.f32.mrb[0].mxu0
    %1085 = vmatprep.mubr.bf16.mxu0 0
    %1086 = vmatmul.mubr.bf16.gmra.mrb[0].mxu0 %v986
    %v1087 = vpop.f32.mrb[0].mxu0
    %v1088 = vadd.f32 0.0, %v1087
    %v1089 = vpop.f32.mrb[0].mxu0
    %v1090 = vpop.f32.mrb[0].mxu0
    %v1091 = vadd.f32 0.0, %v1090
    %v1092 = vpop.f32.mrb[0].mxu0
    %1093 = vmatprep.mubr.bf16.mxu0 0
    %1094 = vmatmul.mubr.bf16.gmra.mrb[0].mxu0 %v987
    %v1095 = vpop.f32.mrb[0].mxu0
    %v1096 = vadd.f32 0.0, %v1095
    %v1097 = vpop.f32.mrb[0].mxu0
    %v1098 = vpop.f32.mrb[0].mxu0
    %v1099 = vadd.f32 0.0, %v1098
    %v1100 = vpop.f32.mrb[0].mxu0
    %1101 = vmatprep.mubr.bf16.mxu0 0
    %1102 = vmatmul.mubr.bf16.gmra.mrb[0].mxu0 %v988
    %v1103 = vpop.f32.mrb[0].mxu0
    %v1104 = vadd.f32 0.0, %v1103
    %v1105 = vpop.f32.mrb[0].mxu0
    %v1106 = vpop.f32.mrb[0].mxu0
    %v1107 = vadd.f32 0.0, %v1106
    %v1108 = vpop.f32.mrb[0].mxu0
    %1109 = vmatprep.mubr.bf16.mxu0 0
    %1110 = vmatmul.mubr.bf16.gmra.mrb[0].mxu0 %v989
    %v1111 = vpop.f32.mrb[0].mxu0
    %v1112 = vadd.f32 0.0, %v1111
    %v1113 = vpop.f32.mrb[0].mxu0
    %v1114 = vpop.f32.mrb[0].mxu0
    %v1115 = vadd.f32 0.0, %v1114
    %v1116 = vpop.f32.mrb[0].mxu0
    %1117 = vmatprep.mubr.bf16.mxu0 0
    %1118 = vmatmul.mubr.bf16.gmra.mrb[0].mxu0 %v990
    %v1119 = vpop.f32.mrb[0].mxu0
    %v1120 = vadd.f32 0.0, %v1119
    %v1121 = vpop.f32.mrb[0].mxu0
    %v1122 = vpop.f32.mrb[0].mxu0
    %v1123 = vadd.f32 0.0, %v1122
    %v1124 = vpop.f32.mrb[0].mxu0
    %1125 = vmatprep.mubr.bf16.mxu0 0
    %1126 = vmatmul.mubr.bf16.gmra.mrb[0].mxu0 %v991
    %v1127 = vpop.f32.mrb[0].mxu0
    %v1128 = vadd.f32 0.0, %v1127
    %v1129 = vpop.f32.mrb[0].mxu0
    %v1130 = vpop.f32.mrb[0].mxu0
    %v1131 = vadd.f32 0.0, %v1130
    %v1132 = vpop.f32.mrb[0].mxu0
    %1133 = vmatprep.mubr.bf16.mxu0 0
    %1134 = vmatmul.mubr.bf16.gmra.mrb[0].mxu0 %v992
    %v1135 = vpop.f32.mrb[0].mxu0
    %v1136 = vadd.f32 0.0, %v1135
    %v1137 = vpop.f32.mrb[0].mxu0
    %v1138 = vpop.f32.mrb[0].mxu0
    %v1139 = vadd.f32 0.0, %v1138
    %v1140 = vpop.f32.mrb[0].mxu0
    %1141 = vmatprep.mubr.bf16.mxu0 0
    %1142 = vmatmul.mubr.bf16.gmra.mrb[0].mxu0 %v993
    %v1143 = vpop.f32.mrb[0].mxu0
    %v1144 = vadd.f32 0.0, %v1143
    %v1145 = vpop.f32.mrb[0].mxu0
    %v1146 = vpop.f32.mrb[0].mxu0
    %v1147 = vadd.f32 0.0, %v1146
    %v1148 = vpop.f32.mrb[0].mxu0
    %1149 = vmatprep.mubr.bf16.mxu0 0
    %1150 = vmatmul.mubr.bf16.gmra.mrb[0].mxu0 %v994
    %v1151 = vpop.f32.mrb[0].mxu0
    %v1152 = vadd.f32 0.0, %v1151
    %v1153 = vpop.f32.mrb[0].mxu0
    %v1154 = vpop.f32.mrb[0].mxu0
    %v1155 = vadd.f32 0.0, %v1154
    %v1156 = vpop.f32.mrb[0].mxu0
    %1157 = vmatprep.mubr.bf16.mxu0 0
    %1158 = vmatmul.mubr.bf16.gmra.mrb[0].mxu0 %v995
    %v1159 = vpop.f32.mrb[0].mxu0
    %v1160 = vadd.f32 0.0, %v1159
    %v1161 = vpop.f32.mrb[0].mxu0
    %v1162 = vpop.f32.mrb[0].mxu0
    %v1163 = vadd.f32 0.0, %v1162
    %v1164 = vpop.f32.mrb[0].mxu0
    %1165 = vmatprep.mubr.bf16.mxu0 0
    %1166 = vmatmul.mubr.bf16.gmra.mrb[0].mxu0 %v996
    %v1167 = vpop.f32.mrb[0].mxu0
    %v1168 = vadd.f32 0.0, %v1167
    %v1169 = vpop.f32.mrb[0].mxu0
    %v1170 = vpop.f32.mrb[0].mxu0
    %v1171 = vadd.f32 0.0, %v1170
    %v1172 = vpop.f32.mrb[0].mxu0
    %1173 = vmatprep.mubr.bf16.mxu0 0
    %1174 = vmatmul.mubr.bf16.gmra.mrb[0].mxu0 %v997
    %v1175 = vpop.f32.mrb[0].mxu0
    %v1176 = vadd.f32 0.0, %v1175
    %v1177 = vpop.f32.mrb[0].mxu0
    %v1178 = vpop.f32.mrb[0].mxu0
    %v1179 = vadd.f32 0.0, %v1178
    %v1180 = vpop.f32.mrb[0].mxu0
    %1181 = vmatprep.mubr.bf16.mxu0 0
    %1182 = vmatmul.mubr.bf16.gmra.mrb[0].mxu0 %v998
    %v1183 = vpop.f32.mrb[0].mxu0
    %v1184 = vadd.f32 0.0, %v1183
    %v1185 = vpop.f32.mrb[0].mxu0
    %v1186 = vpop.f32.mrb[0].mxu0
    %v1187 = vadd.f32 0.0, %v1186
    %v1188 = vpop.f32.mrb[0].mxu0
    %1189 = vmatprep.mubr.bf16.mxu0 0
    %1190 = vmatmul.mubr.bf16.gmra.mrb[0].mxu0 %v999
    %v1191 = vpop.f32.mrb[0].mxu0
    %v1192 = vadd.f32 0.0, %v1191
    %v1193 = vpop.f32.mrb[0].mxu0
    %v1194 = vpop.f32.mrb[0].mxu0
    %v1195 = vadd.f32 0.0, %v1194
    %v1196 = vpop.f32.mrb[0].mxu0
    %1197 = vmatprep.mubr.bf16.mxu0 0
    %1198 = vmatmul.mubr.bf16.gmra.mrb[0].mxu0 %v1000
    %v1199 = vpop.f32.mrb[0].mxu0
    %v1200 = vadd.f32 0.0, %v1199
    %v1201 = vpop.f32.mrb[0].mxu0
    %v1202 = vpop.f32.mrb[0].mxu0
    %v1203 = vadd.f32 0.0, %v1202
    %v1204 = vpop.f32.mrb[0].mxu0
    %1205 = vmatprep.mubr.bf16.mxu0 0
    %1206 = vmatmul.mubr.bf16.gmra.mrb[0].mxu0 %v1001
    %v1207 = vpop.f32.mrb[0].mxu0
    %v1208 = vadd.f32 0.0, %v1207
    %v1209 = vpop.f32.mrb[0].mxu0
    %v1210 = vpop.f32.mrb[0].mxu0
    %v1211 = vadd.f32 0.0, %v1210
    %v1212 = vpop.f32.mrb[0].mxu0
    %1213 = vmatprep.mubr.bf16.mxu0 0
    %1214 = vmatmul.mubr.bf16.gmra.mrb[0].mxu0 %v1002
    %v1215 = vpop.f32.mrb[0].mxu0
    %v1216 = vadd.f32 0.0, %v1215
    %v1217 = vpop.f32.mrb[0].mxu0
    %v1218 = vpop.f32.mrb[0].mxu0
    %v1219 = vadd.f32 0.0, %v1218
    %v1220 = vpop.f32.mrb[0].mxu0
    %1221 = vmatprep.mubr.bf16.mxu0 0
    %1222 = vmatmul.mubr.bf16.gmra.mrb[0].mxu0 %v1003
    %v1223 = vpop.f32.mrb[0].mxu0
    %v1224 = vadd.f32 0.0, %v1223
    %v1225 = vpop.f32.mrb[0].mxu0
    %v1226 = vpop.f32.mrb[0].mxu0
    %v1227 = vadd.f32 0.0, %v1226
    %v1228 = vpop.f32.mrb[0].mxu0
    %1229 = vmatprep.mubr.bf16.mxu0 0
    %1230 = vmatmul.mubr.bf16.gmra.mrb[0].mxu0 %v1004
    %v1231 = vpop.f32.mrb[0].mxu0
    %v1232 = vadd.f32 0.0, %v1231
    %v1233 = vpop.f32.mrb[0].mxu0
    %v1234 = vpop.f32.mrb[0].mxu0
    %v1235 = vadd.f32 0.0, %v1234
    %v1236 = vpop.f32.mrb[0].mxu0
    %1237 = vdwg.mxu0
    %v1238 = vpack.c.bf16 %v1051, %v1048
    %v1239 = vpack.c.bf16 %v1059, %v1056
    %v1240 = vpack.c.bf16 %v1067, %v1064
    %v1241 = vpack.c.bf16 %v1075, %v1072
    %v1242 = vpack.c.bf16 %v1083, %v1080
    %v1243 = vpack.c.bf16 %v1091, %v1088
    %v1244 = vpack.c.bf16 %v1099, %v1096
    %v1245 = vpack.c.bf16 %v1107, %v1104
    %v1246 = vpack.c.bf16 %v1115, %v1112
    %v1247 = vpack.c.bf16 %v1123, %v1120
    %v1248 = vpack.c.bf16 %v1131, %v1128
    %v1249 = vpack.c.bf16 %v1139, %v1136
    %v1250 = vpack.c.bf16 %v1147, %v1144
    %v1251 = vpack.c.bf16 %v1155, %v1152
    %v1252 = vpack.c.bf16 %v1163, %v1160
    %v1253 = vpack.c.bf16 %v1171, %v1168
    %v1254 = vpack.c.bf16 %v1179, %v1176
    %v1255 = vpack.c.bf16 %v1187, %v1184
    %v1256 = vpack.c.bf16 %v1195, %v1192
    %v1257 = vpack.c.bf16 %v1203, %v1200
    %v1258 = vpack.c.bf16 %v1211, %v1208
    %v1259 = vpack.c.bf16 %v1219, %v1216
    %v1260 = vpack.c.bf16 %v1227, %v1224
    %v1261 = vpack.c.bf16 %v1235, %v1232
    %v1262 = vld [vmem:[%s7] sm:$0x1]
    %v1264 = vlaneseq
    %v1265 = vshrl.u32 %v1264, 7
    %v1266 = vsub.s32 0, %v1265
    %v1267 = vrot.slane %v1262, %v1266
    %v1365 = vunpack.c.l.b16 %v869
    %v1366 = vunpack.c.h.b16 %v869
    %v1367 = vunpack.c.l.b16 %v870
    %v1368 = vunpack.c.l.b16 %v871
    %v1369 = vunpack.c.h.b16 %v871
    %v1370 = vunpack.c.l.b16 %v872
    %v1371 = vunpack.c.l.b16 %v873
    %v1372 = vunpack.c.h.b16 %v873
    %v1373 = vunpack.c.l.b16 %v874
    %v1374 = vunpack.c.l.b16 %v875
    %v1375 = vunpack.c.h.b16 %v875
    %v1376 = vunpack.c.l.b16 %v876
    %v1377 = vunpack.c.l.b16 %v877
    %v1378 = vunpack.c.h.b16 %v877
    %v1379 = vunpack.c.l.b16 %v878
    %v1380 = vunpack.c.l.b16 %v879
    %v1381 = vunpack.c.h.b16 %v879
    %v1382 = vunpack.c.l.b16 %v880
    %v1383 = vunpack.c.l.b16 %v881
    %v1384 = vunpack.c.h.b16 %v881
    %v1385 = vunpack.c.l.b16 %v882
    %v1386 = vunpack.c.l.b16 %v883
    %v1387 = vunpack.c.h.b16 %v883
    %v1388 = vunpack.c.l.b16 %v884
    %v1389 = vunpack.c.l.b16 %v885
    %v1390 = vunpack.c.h.b16 %v885
    %v1391 = vunpack.c.l.b16 %v886
    %v1392 = vunpack.c.l.b16 %v887
    %v1393 = vunpack.c.h.b16 %v887
    %v1394 = vunpack.c.l.b16 %v888
    %v1395 = vunpack.c.l.b16 %v889
    %v1396 = vunpack.c.h.b16 %v889
    %v1397 = vunpack.c.l.b16 %v890
    %v1398 = vunpack.c.l.b16 %v891
    %v1399 = vunpack.c.h.b16 %v891
    %v1400 = vunpack.c.l.b16 %v892
    %v1401 = vunpack.c.l.b16 %v893
    %v1402 = vunpack.c.h.b16 %v893
    %v1403 = vunpack.c.l.b16 %v894
    %v1404 = vunpack.c.l.b16 %v895
    %v1405 = vunpack.c.h.b16 %v895
    %v1406 = vunpack.c.l.b16 %v896
    %v1407 = vunpack.c.l.b16 %v897
    %v1408 = vunpack.c.h.b16 %v897
    %v1409 = vunpack.c.l.b16 %v898
    %v1410 = vunpack.c.l.b16 %v899
    %v1411 = vunpack.c.h.b16 %v899
    %v1412 = vunpack.c.l.b16 %v900
    %v1413 = vunpack.c.l.b16 %v901
    %v1414 = vunpack.c.h.b16 %v901
    %v1415 = vunpack.c.l.b16 %v902
    %v1416 = vunpack.c.l.b16 %v903
    %v1417 = vunpack.c.h.b16 %v903
    %v1418 = vunpack.c.l.b16 %v904
    %v1419 = vunpack.c.l.b16 %v905
    %v1420 = vunpack.c.h.b16 %v905
    %v1421 = vunpack.c.l.b16 %v906
    %v1422 = vunpack.c.l.b16 %v907
    %v1423 = vunpack.c.h.b16 %v907
    %v1424 = vunpack.c.l.b16 %v908
    %v1425 = vunpack.c.l.b16 %v909
    %v1426 = vunpack.c.h.b16 %v909
    %v1427 = vunpack.c.l.b16 %v910
    %v1428 = vunpack.c.l.b16 %v911
    %v1429 = vunpack.c.h.b16 %v911
    %v1430 = vunpack.c.l.b16 %v912
    %v1431 = vunpack.c.l.b16 %v913
    %v1432 = vunpack.c.h.b16 %v913
    %v1433 = vunpack.c.l.b16 %v914
    %v1434 = vunpack.c.l.b16 %v915
    %v1435 = vunpack.c.h.b16 %v915
    %v1436 = vunpack.c.l.b16 %v916
    %v1437 = vunpack.c.l.b16 %v917
    %v1438 = vunpack.c.h.b16 %v917
    %v1439 = vunpack.c.l.b16 %v918
    %v1440 = vunpack.c.l.b16 %v919
    %v1441 = vunpack.c.h.b16 %v919
    %v1442 = vunpack.c.l.b16 %v920
    %v1443 = vunpack.c.l.b16 %v921
    %v1444 = vunpack.c.h.b16 %v921
    %v1445 = vunpack.c.l.b16 %v922
    %v1446 = vunpack.c.l.b16 %v923
    %v1447 = vunpack.c.h.b16 %v923
    %v1448 = vunpack.c.l.b16 %v924
    %v1449 = vunpack.c.l.b16 %v925
    %v1450 = vunpack.c.h.b16 %v925
    %v1451 = vunpack.c.l.b16 %v926
    %v1452 = vunpack.c.l.b16 %v927
    %v1453 = vunpack.c.h.b16 %v927
    %v1454 = vunpack.c.l.b16 %v928
    %v1455 = vunpack.c.l.b16 %v929
    %v1456 = vunpack.c.h.b16 %v929
    %v1457 = vunpack.c.l.b16 %v930
    %v1458 = vunpack.c.l.b16 %v931
    %v1459 = vunpack.c.h.b16 %v931
    %v1460 = vunpack.c.l.b16 %v932
    %v1461 = vunpack.c.l.b16 %v933
    %v1462 = vunpack.c.h.b16 %v933
    %v1463 = vunpack.c.l.b16 %v934
    %v1464 = vunpack.c.l.b16 %v935
    %v1465 = vunpack.c.h.b16 %v935
    %v1466 = vunpack.c.l.b16 %v936
    %v1467 = vunpack.c.l.b16 %v937
    %v1468 = vunpack.c.h.b16 %v937
    %v1469 = vunpack.c.l.b16 %v938
    %v1470 = vunpack.c.l.b16 %v939
    %v1471 = vunpack.c.h.b16 %v939
    %v1472 = vunpack.c.l.b16 %v940
    %v1473 = vunpack.c.l.b16 %v941
    %v1474 = vunpack.c.h.b16 %v941
    %v1475 = vunpack.c.l.b16 %v942
    %v1476 = vunpack.c.l.b16 %v943
    %v1477 = vunpack.c.h.b16 %v943
    %v1478 = vunpack.c.l.b16 %v944
    %v1479 = vunpack.c.l.b16 %v945
    %v1480 = vunpack.c.h.b16 %v945
    %v1481 = vunpack.c.l.b16 %v946
    %v1482 = vunpack.c.l.b16 %v947
    %v1483 = vunpack.c.h.b16 %v947
    %v1484 = vunpack.c.l.b16 %v948
    %v1485 = vunpack.c.l.b16 %v949
    %v1486 = vunpack.c.h.b16 %v949
    %v1487 = vunpack.c.l.b16 %v950
    %v1488 = vunpack.c.l.b16 %v951
    %v1489 = vunpack.c.h.b16 %v951
    %v1490 = vunpack.c.l.b16 %v952
    %v1491 = vunpack.c.l.b16 %v953
    %v1492 = vunpack.c.h.b16 %v953
    %v1493 = vunpack.c.l.b16 %v954
    %v1494 = vunpack.c.l.b16 %v955
    %v1495 = vunpack.c.h.b16 %v955
    %v1496 = vunpack.c.l.b16 %v956
    %v1497 = vunpack.c.l.b16 %v957
    %v1498 = vunpack.c.h.b16 %v957
    %v1499 = vunpack.c.l.b16 %v958
    %v1500 = vunpack.c.l.b16 %v959
    %v1501 = vunpack.c.h.b16 %v959
    %v1502 = vunpack.c.l.b16 %v960
    %v1503 = vunpack.c.l.b16 %v961
    %v1504 = vunpack.c.h.b16 %v961
    %v1505 = vunpack.c.l.b16 %v962
    %v1506 = vunpack.c.l.b16 %v963
    %v1507 = vunpack.c.h.b16 %v963
    %v1508 = vunpack.c.l.b16 %v964
    %v1509 = vpack.c.b16 %v1368, %v1365
    %v1510 = vpack.c.b16 %v1369, %v1366
    %v1511 = vpack.c.b16 %v1370, %v1367
    %v1512 = vpack.c.b16 %v1374, %v1371
    %v1513 = vpack.c.b16 %v1375, %v1372
    %v1514 = vpack.c.b16 %v1376, %v1373
    %v1515 = vpack.c.b16 %v1380, %v1377
    %v1516 = vpack.c.b16 %v1381, %v1378
    %v1517 = vpack.c.b16 %v1382, %v1379
    %v1518 = vpack.c.b16 %v1386, %v1383
    %v1519 = vpack.c.b16 %v1387, %v1384
    %v1520 = vpack.c.b16 %v1388, %v1385
    %v1521 = vpack.c.b16 %v1392, %v1389
    %v1522 = vpack.c.b16 %v1393, %v1390
    %v1523 = vpack.c.b16 %v1394, %v1391
    %v1524 = vpack.c.b16 %v1398, %v1395
    %v1525 = vpack.c.b16 %v1399, %v1396
    %v1526 = vpack.c.b16 %v1400, %v1397
    %v1527 = vpack.c.b16 %v1404, %v1401
    %v1528 = vpack.c.b16 %v1405, %v1402
    %v1529 = vpack.c.b16 %v1406, %v1403
    %v1530 = vpack.c.b16 %v1410, %v1407
    %v1531 = vpack.c.b16 %v1411, %v1408
    %v1532 = vpack.c.b16 %v1412, %v1409
    %v1533 = vpack.c.b16 %v1416, %v1413
    %v1534 = vpack.c.b16 %v1417, %v1414
    %v1535 = vpack.c.b16 %v1418, %v1415
    %v1536 = vpack.c.b16 %v1422, %v1419
    %v1537 = vpack.c.b16 %v1423, %v1420
    %v1538 = vpack.c.b16 %v1424, %v1421
    %v1539 = vpack.c.b16 %v1428, %v1425
    %v1540 = vpack.c.b16 %v1429, %v1426
    %v1541 = vpack.c.b16 %v1430, %v1427
    %v1542 = vpack.c.b16 %v1434, %v1431
    %v1543 = vpack.c.b16 %v1435, %v1432
    %v1544 = vpack.c.b16 %v1436, %v1433
    %v1545 = vpack.c.b16 %v1440, %v1437
    %v1546 = vpack.c.b16 %v1441, %v1438
    %v1547 = vpack.c.b16 %v1442, %v1439
    %v1548 = vpack.c.b16 %v1446, %v1443
    %v1549 = vpack.c.b16 %v1447, %v1444
    %v1550 = vpack.c.b16 %v1448, %v1445
    %v1551 = vpack.c.b16 %v1452, %v1449
    %v1552 = vpack.c.b16 %v1453, %v1450
    %v1553 = vpack.c.b16 %v1454, %v1451
    %v1554 = vpack.c.b16 %v1458, %v1455
    %v1555 = vpack.c.b16 %v1459, %v1456
    %v1556 = vpack.c.b16 %v1460, %v1457
    %v1557 = vpack.c.b16 %v1464, %v1461
    %v1558 = vpack.c.b16 %v1465, %v1462
    %v1559 = vpack.c.b16 %v1466, %v1463
    %v1560 = vpack.c.b16 %v1470, %v1467
    %v1561 = vpack.c.b16 %v1471, %v1468
    %v1562 = vpack.c.b16 %v1472, %v1469
    %v1563 = vpack.c.b16 %v1476, %v1473
    %v1564 = vpack.c.b16 %v1477, %v1474
    %v1565 = vpack.c.b16 %v1478, %v1475
    %v1566 = vpack.c.b16 %v1482, %v1479
    %v1567 = vpack.c.b16 %v1483, %v1480
    %v1568 = vpack.c.b16 %v1484, %v1481
    %v1569 = vpack.c.b16 %v1488, %v1485
    %v1570 = vpack.c.b16 %v1489, %v1486
    %v1571 = vpack.c.b16 %v1490, %v1487
    %v1572 = vpack.c.b16 %v1494, %v1491
    %v1573 = vpack.c.b16 %v1495, %v1492
    %v1574 = vpack.c.b16 %v1496, %v1493
    %v1575 = vpack.c.b16 %v1500, %v1497
    %v1576 = vpack.c.b16 %v1501, %v1498
    %v1577 = vpack.c.b16 %v1502, %v1499
    %v1578 = vpack.c.b16 %v1506, %v1503
    %v1579 = vpack.c.b16 %v1507, %v1504
    %v1580 = vpack.c.b16 %v1508, %v1505
    %1653 = vmatprep.subr.bf16.mxu0 0
    %1654 = vmatpush1.bf16.msra.mxu0 %v1238
    %1655 = vmatprep.subr.bf16.mxu0 0
    %1656 = vmatpush1.bf16.msra.mxu0 %v1239
    %1657 = vmatprep.subr.bf16.mxu0 0
    %1658 = vmatpush1.bf16.msra.mxu0 %v1240
    %1659 = vmatprep.subr.bf16.mxu0 0
    %1660 = vmatpush1.bf16.msra.mxu0 %v1241
    %1661 = vmatprep.subr.bf16.mxu0 0
    %1662 = vmatpush1.bf16.msra.mxu0 %v1242
    %1663 = vmatprep.subr.bf16.mxu0 0
    %1664 = vmatpush1.bf16.msra.mxu0 %v1243
    %1665 = vmatprep.subr.bf16.mxu0 0
    %1666 = vmatpush1.bf16.msra.mxu0 %v1244
    %1667 = vmatprep.subr.bf16.mxu0 0
    %1668 = vmatpush1.bf16.msra.mxu0 %v1245
    %1669 = vmatprep.subr.bf16.mxu0 0
    %1670 = vmatpush1.bf16.msra.mxu0 %v1246
    %1671 = vmatprep.subr.bf16.mxu0 0
    %1672 = vmatpush1.bf16.msra.mxu0 %v1247
    %1673 = vmatprep.subr.bf16.mxu0 0
    %1674 = vmatpush1.bf16.msra.mxu0 %v1248
    %1675 = vmatprep.subr.bf16.mxu0 0
    %1676 = vmatpush1.bf16.msra.mxu0 %v1249
    %1677 = vmatprep.subr.bf16.mxu0 0
    %1678 = vmatpush1.bf16.msra.mxu0 %v1250
    %1679 = vmatprep.subr.bf16.mxu0 0
    %1680 = vmatpush1.bf16.msra.mxu0 %v1251
    %1681 = vmatprep.subr.bf16.mxu0 0
    %1682 = vmatpush1.bf16.msra.mxu0 %v1252
    %1683 = vmatprep.subr.bf16.mxu0 0
    %1684 = vmatpush1.bf16.msra.mxu0 %v1253
    %1685 = vmatprep.mubr.bf16.mxu0 %v1510
    %1686 = vmatmul.mubr.bf16.gmra.mrb[0].mxu0 %v1509
    %v1687 = vpop.f32.mrb[0].mxu0
    %v1688 = vadd.f32 %v1267, %v1687
    %v1689 = vpop.f32.mrb[0].mxu0
    %v1690 = vpop.f32.mrb[0].mxu0
    %v1691 = vadd.f32 %v1267, %v1690
    %v1692 = vpop.f32.mrb[0].mxu0
    %1693 = vmatprep.mubr.bf16.mxu0 %v1513
    %1694 = vmatmul.mubr.bf16.gmra.mrb[0].mxu0 %v1512
    %v1695 = vpop.f32.mrb[0].mxu0
    %v1696 = vadd.f32 %v1267, %v1695
    %v1697 = vpop.f32.mrb[0].mxu0
    %v1698 = vpop.f32.mrb[0].mxu0
    %v1699 = vadd.f32 %v1267, %v1698
    %v1700 = vpop.f32.mrb[0].mxu0
    %1701 = vmatprep.mubr.bf16.mxu0 %v1516
    %1702 = vmatmul.mubr.bf16.gmra.mrb[0].mxu0 %v1515
    %v1703 = vpop.f32.mrb[0].mxu0
    %v1704 = vadd.f32 %v1267, %v1703
    %v1705 = vpop.f32.mrb[0].mxu0
    %v1706 = vpop.f32.mrb[0].mxu0
    %v1707 = vadd.f32 %v1267, %v1706
    %v1708 = vpop.f32.mrb[0].mxu0
    %1709 = vmatprep.mubr.bf16.mxu0 %v1519
    %1710 = vmatmul.mubr.bf16.gmra.mrb[0].mxu0 %v1518
    %v1711 = vpop.f32.mrb[0].mxu0
    %v1712 = vadd.f32 %v1267, %v1711
    %v1713 = vpop.f32.mrb[0].mxu0
    %v1714 = vpop.f32.mrb[0].mxu0
    %v1715 = vadd.f32 %v1267, %v1714
    %v1716 = vpop.f32.mrb[0].mxu0
    %1717 = vmatprep.mubr.bf16.mxu0 %v1522
    %1718 = vmatmul.mubr.bf16.gmra.mrb[0].mxu0 %v1521
    %v1719 = vpop.f32.mrb[0].mxu0
    %v1720 = vadd.f32 %v1267, %v1719
    %v1721 = vpop.f32.mrb[0].mxu0
    %v1722 = vpop.f32.mrb[0].mxu0
    %v1723 = vadd.f32 %v1267, %v1722
    %v1724 = vpop.f32.mrb[0].mxu0
    %1725 = vmatprep.mubr.bf16.mxu0 %v1525
    %1726 = vmatmul.mubr.bf16.gmra.mrb[0].mxu0 %v1524
    %v1727 = vpop.f32.mrb[0].mxu0
    %v1728 = vadd.f32 %v1267, %v1727
    %v1729 = vpop.f32.mrb[0].mxu0
    %v1730 = vpop.f32.mrb[0].mxu0
    %v1731 = vadd.f32 %v1267, %v1730
    %v1732 = vpop.f32.mrb[0].mxu0
    %1733 = vmatprep.mubr.bf16.mxu0 %v1528
    %1734 = vmatmul.mubr.bf16.gmra.mrb[0].mxu0 %v1527
    %v1735 = vpop.f32.mrb[0].mxu0
    %v1736 = vadd.f32 %v1267, %v1735
    %v1737 = vpop.f32.mrb[0].mxu0
    %v1738 = vpop.f32.mrb[0].mxu0
    %v1739 = vadd.f32 %v1267, %v1738
    %v1740 = vpop.f32.mrb[0].mxu0
    %1741 = vmatprep.mubr.bf16.mxu0 %v1531
    %1742 = vmatmul.mubr.bf16.gmra.mrb[0].mxu0 %v1530
    %v1743 = vpop.f32.mrb[0].mxu0
    %v1744 = vadd.f32 %v1267, %v1743
    %v1745 = vpop.f32.mrb[0].mxu0
    %v1746 = vpop.f32.mrb[0].mxu0
    %v1747 = vadd.f32 %v1267, %v1746
    %v1748 = vpop.f32.mrb[0].mxu0
    %1749 = vmatprep.mubr.bf16.mxu0 %v1534
    %1750 = vmatmul.mubr.bf16.gmra.mrb[0].mxu0 %v1533
    %v1751 = vpop.f32.mrb[0].mxu0
    %v1752 = vadd.f32 %v1267, %v1751
    %v1753 = vpop.f32.mrb[0].mxu0
    %v1754 = vpop.f32.mrb[0].mxu0
    %v1755 = vadd.f32 %v1267, %v1754
    %v1756 = vpop.f32.mrb[0].mxu0
    %1757 = vmatprep.mubr.bf16.mxu0 %v1537
    %1758 = vmatmul.mubr.bf16.gmra.mrb[0].mxu0 %v1536
    %v1759 = vpop.f32.mrb[0].mxu0
    %v1760 = vadd.f32 %v1267, %v1759
    %v1761 = vpop.f32.mrb[0].mxu0
    %v1762 = vpop.f32.mrb[0].mxu0
    %v1763 = vadd.f32 %v1267, %v1762
    %v1764 = vpop.f32.mrb[0].mxu0
    %1765 = vmatprep.mubr.bf16.mxu0 %v1540
    %1766 = vmatmul.mubr.bf16.gmra.mrb[0].mxu0 %v1539
    %v1767 = vpop.f32.mrb[0].mxu0
    %v1768 = vadd.f32 %v1267, %v1767
    %v1769 = vpop.f32.mrb[0].mxu0
    %v1770 = vpop.f32.mrb[0].mxu0
    %v1771 = vadd.f32 %v1267, %v1770
    %v1772 = vpop.f32.mrb[0].mxu0
    %1773 = vmatprep.mubr.bf16.mxu0 %v1543
    %1774 = vmatmul.mubr.bf16.gmra.mrb[0].mxu0 %v1542
    %v1775 = vpop.f32.mrb[0].mxu0
    %v1776 = vadd.f32 %v1267, %v1775
    %v1777 = vpop.f32.mrb[0].mxu0
    %v1778 = vpop.f32.mrb[0].mxu0
    %v1779 = vadd.f32 %v1267, %v1778
    %v1780 = vpop.f32.mrb[0].mxu0
    %1781 = vmatprep.mubr.bf16.mxu0 %v1546
    %1782 = vmatmul.mubr.bf16.gmra.mrb[0].mxu0 %v1545
    %v1783 = vpop.f32.mrb[0].mxu0
    %v1784 = vadd.f32 %v1267, %v1783
    %v1785 = vpop.f32.mrb[0].mxu0
    %v1786 = vpop.f32.mrb[0].mxu0
    %v1787 = vadd.f32 %v1267, %v1786
    %v1788 = vpop.f32.mrb[0].mxu0
    %1789 = vmatprep.mubr.bf16.mxu0 %v1549
    %1790 = vmatmul.mubr.bf16.gmra.mrb[0].mxu0 %v1548
    %v1791 = vpop.f32.mrb[0].mxu0
    %v1792 = vadd.f32 %v1267, %v1791
    %v1793 = vpop.f32.mrb[0].mxu0
    %v1794 = vpop.f32.mrb[0].mxu0
    %v1795 = vadd.f32 %v1267, %v1794
    %v1796 = vpop.f32.mrb[0].mxu0
    %1797 = vmatprep.mubr.bf16.mxu0 %v1552
    %1798 = vmatmul.mubr.bf16.gmra.mrb[0].mxu0 %v1551
    %v1799 = vpop.f32.mrb[0].mxu0
    %v1800 = vadd.f32 %v1267, %v1799
    %v1801 = vpop.f32.mrb[0].mxu0
    %v1802 = vpop.f32.mrb[0].mxu0
    %v1803 = vadd.f32 %v1267, %v1802
    %v1804 = vpop.f32.mrb[0].mxu0
    %1805 = vmatprep.mubr.bf16.mxu0 %v1555
    %1806 = vmatmul.mubr.bf16.gmra.mrb[0].mxu0 %v1554
    %v1807 = vpop.f32.mrb[0].mxu0
    %v1808 = vadd.f32 %v1267, %v1807
    %v1809 = vpop.f32.mrb[0].mxu0
    %v1810 = vpop.f32.mrb[0].mxu0
    %v1811 = vadd.f32 %v1267, %v1810
    %v1812 = vpop.f32.mrb[0].mxu0
    %1813 = vmatprep.mubr.bf16.mxu0 %v1558
    %1814 = vmatmul.mubr.bf16.gmra.mrb[0].mxu0 %v1557
    %v1815 = vpop.f32.mrb[0].mxu0
    %v1816 = vadd.f32 %v1267, %v1815
    %v1817 = vpop.f32.mrb[0].mxu0
    %v1818 = vpop.f32.mrb[0].mxu0
    %v1819 = vadd.f32 %v1267, %v1818
    %v1820 = vpop.f32.mrb[0].mxu0
    %1821 = vmatprep.mubr.bf16.mxu0 %v1561
    %1822 = vmatmul.mubr.bf16.gmra.mrb[0].mxu0 %v1560
    %v1823 = vpop.f32.mrb[0].mxu0
    %v1824 = vadd.f32 %v1267, %v1823
    %v1825 = vpop.f32.mrb[0].mxu0
    %v1826 = vpop.f32.mrb[0].mxu0
    %v1827 = vadd.f32 %v1267, %v1826
    %v1828 = vpop.f32.mrb[0].mxu0
    %1829 = vmatprep.mubr.bf16.mxu0 %v1564
    %1830 = vmatmul.mubr.bf16.gmra.mrb[0].mxu0 %v1563
    %v1831 = vpop.f32.mrb[0].mxu0
    %v1832 = vadd.f32 %v1267, %v1831
    %v1833 = vpop.f32.mrb[0].mxu0
    %v1834 = vpop.f32.mrb[0].mxu0
    %v1835 = vadd.f32 %v1267, %v1834
    %v1836 = vpop.f32.mrb[0].mxu0
    %1837 = vmatprep.mubr.bf16.mxu0 %v1567
    %1838 = vmatmul.mubr.bf16.gmra.mrb[0].mxu0 %v1566
    %v1839 = vpop.f32.mrb[0].mxu0
    %v1840 = vadd.f32 %v1267, %v1839
    %v1841 = vpop.f32.mrb[0].mxu0
    %v1842 = vpop.f32.mrb[0].mxu0
    %v1843 = vadd.f32 %v1267, %v1842
    %v1844 = vpop.f32.mrb[0].mxu0
    %1845 = vmatprep.mubr.bf16.mxu0 %v1570
    %1846 = vmatmul.mubr.bf16.gmra.mrb[0].mxu0 %v1569
    %v1847 = vpop.f32.mrb[0].mxu0
    %v1848 = vadd.f32 %v1267, %v1847
    %v1849 = vpop.f32.mrb[0].mxu0
    %v1850 = vpop.f32.mrb[0].mxu0
    %v1851 = vadd.f32 %v1267, %v1850
    %v1852 = vpop.f32.mrb[0].mxu0
    %1853 = vmatprep.mubr.bf16.mxu0 %v1573
    %1854 = vmatmul.mubr.bf16.gmra.mrb[0].mxu0 %v1572
    %v1855 = vpop.f32.mrb[0].mxu0
    %v1856 = vadd.f32 %v1267, %v1855
    %v1857 = vpop.f32.mrb[0].mxu0
    %v1858 = vpop.f32.mrb[0].mxu0
    %v1859 = vadd.f32 %v1267, %v1858
    %v1860 = vpop.f32.mrb[0].mxu0
    %1861 = vmatprep.mubr.bf16.mxu0 %v1576
    %1862 = vmatmul.mubr.bf16.gmra.mrb[0].mxu0 %v1575
    %v1863 = vpop.f32.mrb[0].mxu0
    %v1864 = vadd.f32 %v1267, %v1863
    %v1865 = vpop.f32.mrb[0].mxu0
    %v1866 = vpop.f32.mrb[0].mxu0
    %v1867 = vadd.f32 %v1267, %v1866
    %v1868 = vpop.f32.mrb[0].mxu0
    %1869 = vmatprep.mubr.bf16.mxu0 %v1579
    %1870 = vmatmul.mubr.bf16.gmra.mrb[0].mxu0 %v1578
    %v1871 = vpop.f32.mrb[0].mxu0
    %v1872 = vadd.f32 %v1267, %v1871
    %v1873 = vpop.f32.mrb[0].mxu0
    %v1874 = vpop.f32.mrb[0].mxu0
    %v1875 = vadd.f32 %v1267, %v1874
    %v1876 = vpop.f32.mrb[0].mxu0
    %1877 = vdwg.mxu0
    %1878 = vmatprep.subr.bf16.mxu0 0
    %1879 = vmatpush1.bf16.msra.mxu0 %v1254
    %1880 = vmatprep.subr.bf16.mxu0 0
    %1881 = vmatpush1.bf16.msra.mxu0 %v1255
    %1882 = vmatprep.subr.bf16.mxu0 0
    %1883 = vmatpush1.bf16.msra.mxu0 %v1256
    %1884 = vmatprep.subr.bf16.mxu0 0
    %1885 = vmatpush1.bf16.msra.mxu0 %v1257
    %1886 = vmatprep.subr.bf16.mxu0 0
    %1887 = vmatpush1.bf16.msra.mxu0 %v1258
    %1888 = vmatprep.subr.bf16.mxu0 0
    %1889 = vmatpush1.bf16.msra.mxu0 %v1259
    %1890 = vmatprep.subr.bf16.mxu0 0
    %1891 = vmatpush1.bf16.msra.mxu0 %v1260
    %1892 = vmatprep.subr.bf16.mxu0 0
    %1893 = vmatpush1.bf16.msra.mxu0 %v1261
    %1894 = vmatprep.subr.bf16.mxu0 0
    %1895 = vmatpush1.bf16.msra.mxu0 0
    %1896 = vmatprep.subr.bf16.mxu0 0
    %1897 = vmatpush1.bf16.msra.mxu0 0
    %1898 = vmatprep.subr.bf16.mxu0 0
    %1899 = vmatpush1.bf16.msra.mxu0 0
    %1900 = vmatprep.subr.bf16.mxu0 0
    %1901 = vmatpush1.bf16.msra.mxu0 0
    %1902 = vmatprep.subr.bf16.mxu0 0
    %1903 = vmatpush1.bf16.msra.mxu0 0
    %1904 = vmatprep.subr.bf16.mxu0 0
    %1905 = vmatpush1.bf16.msra.mxu0 0
    %1906 = vmatprep.subr.bf16.mxu0 0
    %1907 = vmatpush1.bf16.msra.mxu0 0
    %1908 = vmatprep.subr.bf16.mxu0 0
    %1909 = vmatpush1.bf16.msra.mxu0 0
    %1910 = vmatprep.mubr.bf16.mxu0 0
    %1911 = vmatmul.mubr.bf16.gmra.mrb[0].mxu0 %v1511
    %v1912 = vpop.f32.mrb[0].mxu0
    %v1913 = vadd.f32 %v1688, %v1912
    %v1914 = vpop.f32.mrb[0].mxu0
    %v1915 = vpop.f32.mrb[0].mxu0
    %v1916 = vadd.f32 %v1691, %v1915
    %v1917 = vpop.f32.mrb[0].mxu0
    %1918 = vmatprep.mubr.bf16.mxu0 0
    %1919 = vmatmul.mubr.bf16.gmra.mrb[0].mxu0 %v1514
    %v1920 = vpop.f32.mrb[0].mxu0
    %v1921 = vadd.f32 %v1696, %v1920
    %v1922 = vpop.f32.mrb[0].mxu0
    %v1923 = vpop.f32.mrb[0].mxu0
    %v1924 = vadd.f32 %v1699, %v1923
    %v1925 = vpop.f32.mrb[0].mxu0
    %1926 = vmatprep.mubr.bf16.mxu0 0
    %1927 = vmatmul.mubr.bf16.gmra.mrb[0].mxu0 %v1517
    %v1928 = vpop.f32.mrb[0].mxu0
    %v1929 = vadd.f32 %v1704, %v1928
    %v1930 = vpop.f32.mrb[0].mxu0
    %v1931 = vpop.f32.mrb[0].mxu0
    %v1932 = vadd.f32 %v1707, %v1931
    %v1933 = vpop.f32.mrb[0].mxu0
    %1934 = vmatprep.mubr.bf16.mxu0 0
    %1935 = vmatmul.mubr.bf16.gmra.mrb[0].mxu0 %v1520
    %v1936 = vpop.f32.mrb[0].mxu0
    %v1937 = vadd.f32 %v1712, %v1936
    %v1938 = vpop.f32.mrb[0].mxu0
    %v1939 = vpop.f32.mrb[0].mxu0
    %v1940 = vadd.f32 %v1715, %v1939
    %v1941 = vpop.f32.mrb[0].mxu0
    %1942 = vmatprep.mubr.bf16.mxu0 0
    %1943 = vmatmul.mubr.bf16.gmra.mrb[0].mxu0 %v1523
    %v1944 = vpop.f32.mrb[0].mxu0
    %v1945 = vadd.f32 %v1720, %v1944
    %v1946 = vpop.f32.mrb[0].mxu0
    %v1947 = vpop.f32.mrb[0].mxu0
    %v1948 = vadd.f32 %v1723, %v1947
    %v1949 = vpop.f32.mrb[0].mxu0
    %1950 = vmatprep.mubr.bf16.mxu0 0
    %1951 = vmatmul.mubr.bf16.gmra.mrb[0].mxu0 %v1526
    %v1952 = vpop.f32.mrb[0].mxu0
    %v1953 = vadd.f32 %v1728, %v1952
    %v1954 = vpop.f32.mrb[0].mxu0
    %v1955 = vpop.f32.mrb[0].mxu0
    %v1956 = vadd.f32 %v1731, %v1955
    %v1957 = vpop.f32.mrb[0].mxu0
    %1958 = vmatprep.mubr.bf16.mxu0 0
    %1959 = vmatmul.mubr.bf16.gmra.mrb[0].mxu0 %v1529
    %v1960 = vpop.f32.mrb[0].mxu0
    %v1961 = vadd.f32 %v1736, %v1960
    %v1962 = vpop.f32.mrb[0].mxu0
    %v1963 = vpop.f32.mrb[0].mxu0
    %v1964 = vadd.f32 %v1739, %v1963
    %v1965 = vpop.f32.mrb[0].mxu0
    %1966 = vmatprep.mubr.bf16.mxu0 0
    %1967 = vmatmul.mubr.bf16.gmra.mrb[0].mxu0 %v1532
    %v1968 = vpop.f32.mrb[0].mxu0
    %v1969 = vadd.f32 %v1744, %v1968
    %v1970 = vpop.f32.mrb[0].mxu0
    %v1971 = vpop.f32.mrb[0].mxu0
    %v1972 = vadd.f32 %v1747, %v1971
    %v1973 = vpop.f32.mrb[0].mxu0
    %1974 = vmatprep.mubr.bf16.mxu0 0
    %1975 = vmatmul.mubr.bf16.gmra.mrb[0].mxu0 %v1535
    %v1976 = vpop.f32.mrb[0].mxu0
    %v1977 = vadd.f32 %v1752, %v1976
    %v1978 = vpop.f32.mrb[0].mxu0
    %v1979 = vpop.f32.mrb[0].mxu0
    %v1980 = vadd.f32 %v1755, %v1979
    %v1981 = vpop.f32.mrb[0].mxu0
    %1982 = vmatprep.mubr.bf16.mxu0 0
    %1983 = vmatmul.mubr.bf16.gmra.mrb[0].mxu0 %v1538
    %v1984 = vpop.f32.mrb[0].mxu0
    %v1985 = vadd.f32 %v1760, %v1984
    %v1986 = vpop.f32.mrb[0].mxu0
    %v1987 = vpop.f32.mrb[0].mxu0
    %v1988 = vadd.f32 %v1763, %v1987
    %v1989 = vpop.f32.mrb[0].mxu0
    %1990 = vmatprep.mubr.bf16.mxu0 0
    %1991 = vmatmul.mubr.bf16.gmra.mrb[0].mxu0 %v1541
    %v1992 = vpop.f32.mrb[0].mxu0
    %v1993 = vadd.f32 %v1768, %v1992
    %v1994 = vpop.f32.mrb[0].mxu0
    %v1995 = vpop.f32.mrb[0].mxu0
    %v1996 = vadd.f32 %v1771, %v1995
    %v1997 = vpop.f32.mrb[0].mxu0
    %1998 = vmatprep.mubr.bf16.mxu0 0
    %1999 = vmatmul.mubr.bf16.gmra.mrb[0].mxu0 %v1544
    %v2000 = vpop.f32.mrb[0].mxu0
    %v2001 = vadd.f32 %v1776, %v2000
    %v2002 = vpop.f32.mrb[0].mxu0
    %v2003 = vpop.f32.mrb[0].mxu0
    %v2004 = vadd.f32 %v1779, %v2003
    %v2005 = vpop.f32.mrb[0].mxu0
    %2006 = vmatprep.mubr.bf16.mxu0 0
    %2007 = vmatmul.mubr.bf16.gmra.mrb[0].mxu0 %v1547
    %v2008 = vpop.f32.mrb[0].mxu0
    %v2009 = vadd.f32 %v1784, %v2008
    %v2010 = vpop.f32.mrb[0].mxu0
    %v2011 = vpop.f32.mrb[0].mxu0
    %v2012 = vadd.f32 %v1787, %v2011
    %v2013 = vpop.f32.mrb[0].mxu0
    %2014 = vmatprep.mubr.bf16.mxu0 0
    %2015 = vmatmul.mubr.bf16.gmra.mrb[0].mxu0 %v1550
    %v2016 = vpop.f32.mrb[0].mxu0
    %v2017 = vadd.f32 %v1792, %v2016
    %v2018 = vpop.f32.mrb[0].mxu0
    %v2019 = vpop.f32.mrb[0].mxu0
    %v2020 = vadd.f32 %v1795, %v2019
    %v2021 = vpop.f32.mrb[0].mxu0
    %2022 = vmatprep.mubr.bf16.mxu0 0
    %2023 = vmatmul.mubr.bf16.gmra.mrb[0].mxu0 %v1553
    %v2024 = vpop.f32.mrb[0].mxu0
    %v2025 = vadd.f32 %v1800, %v2024
    %v2026 = vpop.f32.mrb[0].mxu0
    %v2027 = vpop.f32.mrb[0].mxu0
    %v2028 = vadd.f32 %v1803, %v2027
    %v2029 = vpop.f32.mrb[0].mxu0
    %2030 = vmatprep.mubr.bf16.mxu0 0
    %2031 = vmatmul.mubr.bf16.gmra.mrb[0].mxu0 %v1556
    %v2032 = vpop.f32.mrb[0].mxu0
    %v2033 = vadd.f32 %v1808, %v2032
    %v2034 = vpop.f32.mrb[0].mxu0
    %v2035 = vpop.f32.mrb[0].mxu0
    %v2036 = vadd.f32 %v1811, %v2035
    %v2037 = vpop.f32.mrb[0].mxu0
    %2038 = vmatprep.mubr.bf16.mxu0 0
    %2039 = vmatmul.mubr.bf16.gmra.mrb[0].mxu0 %v1559
    %v2040 = vpop.f32.mrb[0].mxu0
    %v2041 = vadd.f32 %v1816, %v2040
    %v2042 = vpop.f32.mrb[0].mxu0
    %v2043 = vpop.f32.mrb[0].mxu0
    %v2044 = vadd.f32 %v1819, %v2043
    %v2045 = vpop.f32.mrb[0].mxu0
    %2046 = vmatprep.mubr.bf16.mxu0 0
    %2047 = vmatmul.mubr.bf16.gmra.mrb[0].mxu0 %v1562
    %v2048 = vpop.f32.mrb[0].mxu0
    %v2049 = vadd.f32 %v1824, %v2048
    %v2050 = vpop.f32.mrb[0].mxu0
    %v2051 = vpop.f32.mrb[0].mxu0
    %v2052 = vadd.f32 %v1827, %v2051
    %v2053 = vpop.f32.mrb[0].mxu0
    %2054 = vmatprep.mubr.bf16.mxu0 0
    %2055 = vmatmul.mubr.bf16.gmra.mrb[0].mxu0 %v1565
    %v2056 = vpop.f32.mrb[0].mxu0
    %v2057 = vadd.f32 %v1832, %v2056
    %v2058 = vpop.f32.mrb[0].mxu0
    %v2059 = vpop.f32.mrb[0].mxu0
    %v2060 = vadd.f32 %v1835, %v2059
    %v2061 = vpop.f32.mrb[0].mxu0
    %2062 = vmatprep.mubr.bf16.mxu0 0
    %2063 = vmatmul.mubr.bf16.gmra.mrb[0].mxu0 %v1568
    %v2064 = vpop.f32.mrb[0].mxu0
    %v2065 = vadd.f32 %v1840, %v2064
    %v2066 = vpop.f32.mrb[0].mxu0
    %v2067 = vpop.f32.mrb[0].mxu0
    %v2068 = vadd.f32 %v1843, %v2067
    %v2069 = vpop.f32.mrb[0].mxu0
    %2070 = vmatprep.mubr.bf16.mxu0 0
    %2071 = vmatmul.mubr.bf16.gmra.mrb[0].mxu0 %v1571
    %v2072 = vpop.f32.mrb[0].mxu0
    %v2073 = vadd.f32 %v1848, %v2072
    %v2074 = vpop.f32.mrb[0].mxu0
    %v2075 = vpop.f32.mrb[0].mxu0
    %v2076 = vadd.f32 %v1851, %v2075
    %v2077 = vpop.f32.mrb[0].mxu0
    %2078 = vmatprep.mubr.bf16.mxu0 0
    %2079 = vmatmul.mubr.bf16.gmra.mrb[0].mxu0 %v1574
    %v2080 = vpop.f32.mrb[0].mxu0
    %v2081 = vadd.f32 %v1856, %v2080
    %v2082 = vpop.f32.mrb[0].mxu0
    %v2083 = vpop.f32.mrb[0].mxu0
    %v2084 = vadd.f32 %v1859, %v2083
    %v2085 = vpop.f32.mrb[0].mxu0
    %2086 = vmatprep.mubr.bf16.mxu0 0
    %2087 = vmatmul.mubr.bf16.gmra.mrb[0].mxu0 %v1577
    %v2088 = vpop.f32.mrb[0].mxu0
    %v2089 = vadd.f32 %v1864, %v2088
    %v2090 = vpop.f32.mrb[0].mxu0
    %v2091 = vpop.f32.mrb[0].mxu0
    %v2092 = vadd.f32 %v1867, %v2091
    %v2093 = vpop.f32.mrb[0].mxu0
    %2094 = vmatprep.mubr.bf16.mxu0 0
    %2095 = vmatmul.mubr.bf16.gmra.mrb[0].mxu0 %v1580
    %v2096 = vpop.f32.mrb[0].mxu0
    %v2097 = vadd.f32 %v1872, %v2096
    %v2098 = vpop.f32.mrb[0].mxu0
    %v2099 = vpop.f32.mrb[0].mxu0
    %v2100 = vadd.f32 %v1875, %v2099
    %v2101 = vpop.f32.mrb[0].mxu0
    %2102 = vdwg.mxu0
    %v2103 = vld [vmem:[%s10] sm:$0x1]
    %v2104 = vld [vmem:[%s11] sm:$0x1]
    %v2105 = vmul.f32 %v1913, %v364
    %v2106 = vmul.f32 %v1916, %v365
    %v2107 = vmul.f32 %v1921, %v366
    %v2108 = vmul.f32 %v1924, %v367
    %v2109 = vmul.f32 %v1929, %v368
    %v2110 = vmul.f32 %v1932, %v369
    %v2111 = vmul.f32 %v1937, %v370
    %v2112 = vmul.f32 %v1940, %v371
    %v2113 = vmul.f32 %v1945, %v372
    %v2114 = vmul.f32 %v1948, %v373
    %v2115 = vmul.f32 %v1953, %v374
    %v2116 = vmul.f32 %v1956, %v375
    %v2117 = vmul.f32 %v1961, %v376
    %v2118 = vmul.f32 %v1964, %v377
    %v2119 = vmul.f32 %v1969, %v378
    %v2120 = vmul.f32 %v1972, %v379
    %v2121 = vmul.f32 %v1977, %v380
    %v2122 = vmul.f32 %v1980, %v381
    %v2123 = vmul.f32 %v1985, %v382
    %v2124 = vmul.f32 %v1988, %v383
    %v2125 = vmul.f32 %v1993, %v384
    %v2126 = vmul.f32 %v1996, %v385
    %v2127 = vmul.f32 %v2001, %v386
    %v2128 = vmul.f32 %v2004, %v387
    %v2129 = vmul.f32 %v2009, %v388
    %v2130 = vmul.f32 %v2012, %v389
    %v2131 = vmul.f32 %v2017, %v390
    %v2132 = vmul.f32 %v2020, %v391
    %v2133 = vmul.f32 %v2025, %v392
    %v2134 = vmul.f32 %v2028, %v393
    %v2135 = vmul.f32 %v2033, %v394
    %v2136 = vmul.f32 %v2036, %v395
    %v2137 = vmul.f32 %v2041, %v396
    %v2138 = vmul.f32 %v2044, %v397
    %v2139 = vmul.f32 %v2049, %v398
    %v2140 = vmul.f32 %v2052, %v399
    %v2141 = vmul.f32 %v2057, %v400
    %v2142 = vmul.f32 %v2060, %v401
    %v2143 = vmul.f32 %v2065, %v402
    %v2144 = vmul.f32 %v2068, %v403
    %v2145 = vmul.f32 %v2073, %v404
    %v2146 = vmul.f32 %v2076, %v405
    %v2147 = vmul.f32 %v2081, %v406
    %v2148 = vmul.f32 %v2084, %v407
    %v2149 = vmul.f32 %v2089, %v408
    %v2150 = vmul.f32 %v2092, %v409
    %v2151 = vmul.f32 %v2097, %v410
    %v2152 = vmul.f32 %v2100, %v411
    %v2153 = vadd.f32 %v2105, %v2106
    %v2154 = vadd.f32 %v2153, %v2107
    %v2155 = vadd.f32 %v2154, %v2108
    %v2156 = vadd.f32 %v2155, %v2109
    %v2157 = vadd.f32 %v2156, %v2110
    %v2158 = vadd.f32 %v2157, %v2111
    %v2159 = vadd.f32 %v2158, %v2112
    %v2160 = vadd.f32 %v2159, %v2113
    %v2161 = vadd.f32 %v2160, %v2114
    %v2162 = vadd.f32 %v2161, %v2115
    %v2163 = vadd.f32 %v2162, %v2116
    %v2164 = vadd.f32 %v2163, %v2117
    %v2165 = vadd.f32 %v2164, %v2118
    %v2166 = vadd.f32 %v2165, %v2119
    %v2167 = vadd.f32 %v2166, %v2120
    %v2168 = vadd.f32 %v2167, %v2121
    %v2169 = vadd.f32 %v2168, %v2122
    %v2170 = vadd.f32 %v2169, %v2123
    %v2171 = vadd.f32 %v2170, %v2124
    %v2172 = vadd.f32 %v2171, %v2125
    %v2173 = vadd.f32 %v2172, %v2126
    %v2174 = vadd.f32 %v2173, %v2127
    %v2175 = vadd.f32 %v2174, %v2128
    %v2176 = vadd.f32 %v2175, %v2129
    %v2177 = vadd.f32 %v2176, %v2130
    %v2178 = vadd.f32 %v2177, %v2131
    %v2179 = vadd.f32 %v2178, %v2132
    %v2180 = vadd.f32 %v2179, %v2133
    %v2181 = vadd.f32 %v2180, %v2134
    %v2182 = vadd.f32 %v2181, %v2135
    %v2183 = vadd.f32 %v2182, %v2136
    %v2184 = vadd.f32 %v2183, %v2137
    %v2185 = vadd.f32 %v2184, %v2138
    %v2186 = vadd.f32 %v2185, %v2139
    %v2187 = vadd.f32 %v2186, %v2140
    %v2188 = vadd.f32 %v2187, %v2141
    %v2189 = vadd.f32 %v2188, %v2142
    %v2190 = vadd.f32 %v2189, %v2143
    %v2191 = vadd.f32 %v2190, %v2144
    %v2192 = vadd.f32 %v2191, %v2145
    %v2193 = vadd.f32 %v2192, %v2146
    %v2194 = vadd.f32 %v2193, %v2147
    %v2195 = vadd.f32 %v2194, %v2148
    %v2196 = vadd.f32 %v2195, %v2149
    %v2197 = vadd.f32 %v2196, %v2150
    %v2198 = vadd.f32 %v2197, %v2151
    %v2199 = vadd.f32 %v2198, %v2152
    %v2200 = vrot.slane %v2199, 4
    %v2201 = vadd.f32 %v2199, %v2200
    %v2202 = vrot.slane %v2201, 2
    %v2203 = vadd.f32 %v2201, %v2202
    %v2204 = vrot.slane %v2203, 1
    %v2205 = vadd.f32 %v2203, %v2204
    %v2206 = vmul.f32 %v2205, 0.003125
    %v2207 = vsub.f32 %v1913, %v2206
    %v2208 = vsub.f32 %v1916, %v2206
    %v2209 = vsub.f32 %v1921, %v2206
    %v2210 = vsub.f32 %v1924, %v2206
    %v2211 = vsub.f32 %v1929, %v2206
    %v2212 = vsub.f32 %v1932, %v2206
    %v2213 = vsub.f32 %v1937, %v2206
    %v2214 = vsub.f32 %v1940, %v2206
    %v2215 = vsub.f32 %v1945, %v2206
    %v2216 = vsub.f32 %v1948, %v2206
    %v2217 = vsub.f32 %v1953, %v2206
    %v2218 = vsub.f32 %v1956, %v2206
    %v2219 = vsub.f32 %v1961, %v2206
    %v2220 = vsub.f32 %v1964, %v2206
    %v2221 = vsub.f32 %v1969, %v2206
    %v2222 = vsub.f32 %v1972, %v2206
    %v2223 = vsub.f32 %v1977, %v2206
    %v2224 = vsub.f32 %v1980, %v2206
    %v2225 = vsub.f32 %v1985, %v2206
    %v2226 = vsub.f32 %v1988, %v2206
    %v2227 = vsub.f32 %v1993, %v2206
    %v2228 = vsub.f32 %v1996, %v2206
    %v2229 = vsub.f32 %v2001, %v2206
    %v2230 = vsub.f32 %v2004, %v2206
    %v2231 = vsub.f32 %v2009, %v2206
    %v2232 = vsub.f32 %v2012, %v2206
    %v2233 = vsub.f32 %v2017, %v2206
    %v2234 = vsub.f32 %v2020, %v2206
    %v2235 = vsub.f32 %v2025, %v2206
    %v2236 = vsub.f32 %v2028, %v2206
    %v2237 = vsub.f32 %v2033, %v2206
    %v2238 = vsub.f32 %v2036, %v2206
    %v2239 = vsub.f32 %v2041, %v2206
    %v2240 = vsub.f32 %v2044, %v2206
    %v2241 = vsub.f32 %v2049, %v2206
    %v2242 = vsub.f32 %v2052, %v2206
    %v2243 = vsub.f32 %v2057, %v2206
    %v2244 = vsub.f32 %v2060, %v2206
    %v2245 = vsub.f32 %v2065, %v2206
    %v2246 = vsub.f32 %v2068, %v2206
    %v2247 = vsub.f32 %v2073, %v2206
    %v2248 = vsub.f32 %v2076, %v2206
    %v2249 = vsub.f32 %v2081, %v2206
    %v2250 = vsub.f32 %v2084, %v2206
    %v2251 = vsub.f32 %v2089, %v2206
    %v2252 = vsub.f32 %v2092, %v2206
    %v2253 = vsub.f32 %v2097, %v2206
    %v2254 = vsub.f32 %v2100, %v2206
    %v2255 = vmul.f32 %v2207, %v364
    %v2256 = vmul.f32 %v2208, %v365
    %v2257 = vmul.f32 %v2209, %v366
    %v2258 = vmul.f32 %v2210, %v367
    %v2259 = vmul.f32 %v2211, %v368
    %v2260 = vmul.f32 %v2212, %v369
    %v2261 = vmul.f32 %v2213, %v370
    %v2262 = vmul.f32 %v2214, %v371
    %v2263 = vmul.f32 %v2215, %v372
    %v2264 = vmul.f32 %v2216, %v373
    %v2265 = vmul.f32 %v2217, %v374
    %v2266 = vmul.f32 %v2218, %v375
    %v2267 = vmul.f32 %v2219, %v376
    %v2268 = vmul.f32 %v2220, %v377
    %v2269 = vmul.f32 %v2221, %v378
    %v2270 = vmul.f32 %v2222, %v379
    %v2271 = vmul.f32 %v2223, %v380
    %v2272 = vmul.f32 %v2224, %v381
    %v2273 = vmul.f32 %v2225, %v382
    %v2274 = vmul.f32 %v2226, %v383
    %v2275 = vmul.f32 %v2227, %v384
    %v2276 = vmul.f32 %v2228, %v385
    %v2277 = vmul.f32 %v2229, %v386
    %v2278 = vmul.f32 %v2230, %v387
    %v2279 = vmul.f32 %v2231, %v388
    %v2280 = vmul.f32 %v2232, %v389
    %v2281 = vmul.f32 %v2233, %v390
    %v2282 = vmul.f32 %v2234, %v391
    %v2283 = vmul.f32 %v2235, %v392
    %v2284 = vmul.f32 %v2236, %v393
    %v2285 = vmul.f32 %v2237, %v394
    %v2286 = vmul.f32 %v2238, %v395
    %v2287 = vmul.f32 %v2239, %v396
    %v2288 = vmul.f32 %v2240, %v397
    %v2289 = vmul.f32 %v2241, %v398
    %v2290 = vmul.f32 %v2242, %v399
    %v2291 = vmul.f32 %v2243, %v400
    %v2292 = vmul.f32 %v2244, %v401
    %v2293 = vmul.f32 %v2245, %v402
    %v2294 = vmul.f32 %v2246, %v403
    %v2295 = vmul.f32 %v2247, %v404
    %v2296 = vmul.f32 %v2248, %v405
    %v2297 = vmul.f32 %v2249, %v406
    %v2298 = vmul.f32 %v2250, %v407
    %v2299 = vmul.f32 %v2251, %v408
    %v2300 = vmul.f32 %v2252, %v409
    %v2301 = vmul.f32 %v2253, %v410
    %v2302 = vmul.f32 %v2254, %v411
    %v2303 = vmul.f32 %v2255, %v2255
    %v2304 = vmul.f32 %v2256, %v2256
    %v2305 = vmul.f32 %v2257, %v2257
    %v2306 = vmul.f32 %v2258, %v2258
    %v2307 = vmul.f32 %v2259, %v2259
    %v2308 = vmul.f32 %v2260, %v2260
    %v2309 = vmul.f32 %v2261, %v2261
    %v2310 = vmul.f32 %v2262, %v2262
    %v2311 = vmul.f32 %v2263, %v2263
    %v2312 = vmul.f32 %v2264, %v2264
    %v2313 = vmul.f32 %v2265, %v2265
    %v2314 = vmul.f32 %v2266, %v2266
    %v2315 = vmul.f32 %v2267, %v2267
    %v2316 = vmul.f32 %v2268, %v2268
    %v2317 = vmul.f32 %v2269, %v2269
    %v2318 = vmul.f32 %v2270, %v2270
    %v2319 = vmul.f32 %v2271, %v2271
    %v2320 = vmul.f32 %v2272, %v2272
    %v2321 = vmul.f32 %v2273, %v2273
    %v2322 = vmul.f32 %v2274, %v2274
    %v2323 = vmul.f32 %v2275, %v2275
    %v2324 = vmul.f32 %v2276, %v2276
    %v2325 = vmul.f32 %v2277, %v2277
    %v2326 = vmul.f32 %v2278, %v2278
    %v2327 = vmul.f32 %v2279, %v2279
    %v2328 = vmul.f32 %v2280, %v2280
    %v2329 = vmul.f32 %v2281, %v2281
    %v2330 = vmul.f32 %v2282, %v2282
    %v2331 = vmul.f32 %v2283, %v2283
    %v2332 = vmul.f32 %v2284, %v2284
    %v2333 = vmul.f32 %v2285, %v2285
    %v2334 = vmul.f32 %v2286, %v2286
    %v2335 = vmul.f32 %v2287, %v2287
    %v2336 = vmul.f32 %v2288, %v2288
    %v2337 = vmul.f32 %v2289, %v2289
    %v2338 = vmul.f32 %v2290, %v2290
    %v2339 = vmul.f32 %v2291, %v2291
    %v2340 = vmul.f32 %v2292, %v2292
    %v2341 = vmul.f32 %v2293, %v2293
    %v2342 = vmul.f32 %v2294, %v2294
    %v2343 = vmul.f32 %v2295, %v2295
    %v2344 = vmul.f32 %v2296, %v2296
    %v2345 = vmul.f32 %v2297, %v2297
    %v2346 = vmul.f32 %v2298, %v2298
    %v2347 = vmul.f32 %v2299, %v2299
    %v2348 = vmul.f32 %v2300, %v2300
    %v2349 = vmul.f32 %v2301, %v2301
    %v2350 = vmul.f32 %v2302, %v2302
    %v2351 = vadd.f32 %v2303, %v2304
    %v2352 = vadd.f32 %v2351, %v2305
    %v2353 = vadd.f32 %v2352, %v2306
    %v2354 = vadd.f32 %v2353, %v2307
    %v2355 = vadd.f32 %v2354, %v2308
    %v2356 = vadd.f32 %v2355, %v2309
    %v2357 = vadd.f32 %v2356, %v2310
    %v2358 = vadd.f32 %v2357, %v2311
    %v2359 = vadd.f32 %v2358, %v2312
    %v2360 = vadd.f32 %v2359, %v2313
    %v2361 = vadd.f32 %v2360, %v2314
    %v2362 = vadd.f32 %v2361, %v2315
    %v2363 = vadd.f32 %v2362, %v2316
    %v2364 = vadd.f32 %v2363, %v2317
    %v2365 = vadd.f32 %v2364, %v2318
    %v2366 = vadd.f32 %v2365, %v2319
    %v2367 = vadd.f32 %v2366, %v2320
    %v2368 = vadd.f32 %v2367, %v2321
    %v2369 = vadd.f32 %v2368, %v2322
    %v2370 = vadd.f32 %v2369, %v2323
    %v2371 = vadd.f32 %v2370, %v2324
    %v2372 = vadd.f32 %v2371, %v2325
    %v2373 = vadd.f32 %v2372, %v2326
    %v2374 = vadd.f32 %v2373, %v2327
    %v2375 = vadd.f32 %v2374, %v2328
    %v2376 = vadd.f32 %v2375, %v2329
    %v2377 = vadd.f32 %v2376, %v2330
    %v2378 = vadd.f32 %v2377, %v2331
    %v2379 = vadd.f32 %v2378, %v2332
    %v2380 = vadd.f32 %v2379, %v2333
    %v2381 = vadd.f32 %v2380, %v2334
    %v2382 = vadd.f32 %v2381, %v2335
    %v2383 = vadd.f32 %v2382, %v2336
    %v2384 = vadd.f32 %v2383, %v2337
    %v2385 = vadd.f32 %v2384, %v2338
    %v2386 = vadd.f32 %v2385, %v2339
    %v2387 = vadd.f32 %v2386, %v2340
    %v2388 = vadd.f32 %v2387, %v2341
    %v2389 = vadd.f32 %v2388, %v2342
    %v2390 = vadd.f32 %v2389, %v2343
    %v2391 = vadd.f32 %v2390, %v2344
    %v2392 = vadd.f32 %v2391, %v2345
    %v2393 = vadd.f32 %v2392, %v2346
    %v2394 = vadd.f32 %v2393, %v2347
    %v2395 = vadd.f32 %v2394, %v2348
    %v2396 = vadd.f32 %v2395, %v2349
    %v2397 = vadd.f32 %v2396, %v2350
    %v2398 = vrot.slane %v2397, 4
    %v2399 = vadd.f32 %v2397, %v2398
    %v2400 = vrot.slane %v2399, 2
    %v2401 = vadd.f32 %v2399, %v2400
    %v2402 = vrot.slane %v2401, 1
    %v2403 = vadd.f32 %v2401, %v2402
    %v2404 = vmul.f32 %v2403, 0.003125
    %v2405 = vadd.f32 %v2404, 1e-05
    %v2406 = vrsqrt.pop %v2405
    %v2407 = vmul.f32 %v2207, %v2406
    %v2408 = vmul.f32 %v2208, %v2406
    %v2409 = vmul.f32 %v2209, %v2406
    %v2410 = vmul.f32 %v2210, %v2406
    %v2411 = vmul.f32 %v2211, %v2406
    %v2412 = vmul.f32 %v2212, %v2406
    %v2413 = vmul.f32 %v2213, %v2406
    %v2414 = vmul.f32 %v2214, %v2406
    %v2415 = vmul.f32 %v2215, %v2406
    %v2416 = vmul.f32 %v2216, %v2406
    %v2417 = vmul.f32 %v2217, %v2406
    %v2418 = vmul.f32 %v2218, %v2406
    %v2419 = vmul.f32 %v2219, %v2406
    %v2420 = vmul.f32 %v2220, %v2406
    %v2421 = vmul.f32 %v2221, %v2406
    %v2422 = vmul.f32 %v2222, %v2406
    %v2423 = vmul.f32 %v2223, %v2406
    %v2424 = vmul.f32 %v2224, %v2406
    %v2425 = vmul.f32 %v2225, %v2406
    %v2426 = vmul.f32 %v2226, %v2406
    %v2427 = vmul.f32 %v2227, %v2406
    %v2428 = vmul.f32 %v2228, %v2406
    %v2429 = vmul.f32 %v2229, %v2406
    %v2430 = vmul.f32 %v2230, %v2406
    %v2431 = vmul.f32 %v2231, %v2406
    %v2432 = vmul.f32 %v2232, %v2406
    %v2433 = vmul.f32 %v2233, %v2406
    %v2434 = vmul.f32 %v2234, %v2406
    %v2435 = vmul.f32 %v2235, %v2406
    %v2436 = vmul.f32 %v2236, %v2406
    %v2437 = vmul.f32 %v2237, %v2406
    %v2438 = vmul.f32 %v2238, %v2406
    %v2439 = vmul.f32 %v2239, %v2406
    %v2440 = vmul.f32 %v2240, %v2406
    %v2441 = vmul.f32 %v2241, %v2406
    %v2442 = vmul.f32 %v2242, %v2406
    %v2443 = vmul.f32 %v2243, %v2406
    %v2444 = vmul.f32 %v2244, %v2406
    %v2445 = vmul.f32 %v2245, %v2406
    %v2446 = vmul.f32 %v2246, %v2406
    %v2447 = vmul.f32 %v2247, %v2406
    %v2448 = vmul.f32 %v2248, %v2406
    %v2449 = vmul.f32 %v2249, %v2406
    %v2450 = vmul.f32 %v2250, %v2406
    %v2451 = vmul.f32 %v2251, %v2406
    %v2452 = vmul.f32 %v2252, %v2406
    %v2453 = vmul.f32 %v2253, %v2406
    %v2454 = vmul.f32 %v2254, %v2406
    %v2456 = vlaneseq
    %v2457 = vshrl.u32 %v2456, 7
    %v2458 = vsub.s32 0, %v2457
    %v2459 = vrot.slane %v2103, %v2458
    %v2461 = vmul.f32 %v2407, %v2459
    %v2462 = vmul.f32 %v2408, %v2459
    %v2463 = vmul.f32 %v2409, %v2459
    %v2464 = vmul.f32 %v2410, %v2459
    %v2465 = vmul.f32 %v2411, %v2459
    %v2466 = vmul.f32 %v2412, %v2459
    %v2467 = vmul.f32 %v2413, %v2459
    %v2468 = vmul.f32 %v2414, %v2459
    %v2469 = vmul.f32 %v2415, %v2459
    %v2470 = vmul.f32 %v2416, %v2459
    %v2471 = vmul.f32 %v2417, %v2459
    %v2472 = vmul.f32 %v2418, %v2459
    %v2473 = vmul.f32 %v2419, %v2459
    %v2474 = vmul.f32 %v2420, %v2459
    %v2475 = vmul.f32 %v2421, %v2459
    %v2476 = vmul.f32 %v2422, %v2459
    %v2477 = vmul.f32 %v2423, %v2459
    %v2478 = vmul.f32 %v2424, %v2459
    %v2479 = vmul.f32 %v2425, %v2459
    %v2480 = vmul.f32 %v2426, %v2459
    %v2481 = vmul.f32 %v2427, %v2459
    %v2482 = vmul.f32 %v2428, %v2459
    %v2483 = vmul.f32 %v2429, %v2459
    %v2484 = vmul.f32 %v2430, %v2459
    %v2485 = vmul.f32 %v2431, %v2459
    %v2486 = vmul.f32 %v2432, %v2459
    %v2487 = vmul.f32 %v2433, %v2459
    %v2488 = vmul.f32 %v2434, %v2459
    %v2489 = vmul.f32 %v2435, %v2459
    %v2490 = vmul.f32 %v2436, %v2459
    %v2491 = vmul.f32 %v2437, %v2459
    %v2492 = vmul.f32 %v2438, %v2459
    %v2493 = vmul.f32 %v2439, %v2459
    %v2494 = vmul.f32 %v2440, %v2459
    %v2495 = vmul.f32 %v2441, %v2459
    %v2496 = vmul.f32 %v2442, %v2459
    %v2497 = vmul.f32 %v2443, %v2459
    %v2498 = vmul.f32 %v2444, %v2459
    %v2499 = vmul.f32 %v2445, %v2459
    %v2500 = vmul.f32 %v2446, %v2459
    %v2501 = vmul.f32 %v2447, %v2459
    %v2502 = vmul.f32 %v2448, %v2459
    %v2503 = vmul.f32 %v2449, %v2459
    %v2504 = vmul.f32 %v2450, %v2459
    %v2505 = vmul.f32 %v2451, %v2459
    %v2506 = vmul.f32 %v2452, %v2459
    %v2507 = vmul.f32 %v2453, %v2459
    %v2508 = vmul.f32 %v2454, %v2459
    %v2510 = vlaneseq
    %v2511 = vshrl.u32 %v2510, 7
    %v2512 = vsub.s32 0, %v2511
    %v2513 = vrot.slane %v2104, %v2512
    %v2515 = vadd.f32 %v2461, %v2513
    %v2516 = vadd.f32 %v2462, %v2513
    %v2517 = vadd.f32 %v2463, %v2513
    %v2518 = vadd.f32 %v2464, %v2513
    %v2519 = vadd.f32 %v2465, %v2513
    %v2520 = vadd.f32 %v2466, %v2513
    %v2521 = vadd.f32 %v2467, %v2513
    %v2522 = vadd.f32 %v2468, %v2513
    %v2523 = vadd.f32 %v2469, %v2513
    %v2524 = vadd.f32 %v2470, %v2513
    %v2525 = vadd.f32 %v2471, %v2513
    %v2526 = vadd.f32 %v2472, %v2513
    %v2527 = vadd.f32 %v2473, %v2513
    %v2528 = vadd.f32 %v2474, %v2513
    %v2529 = vadd.f32 %v2475, %v2513
    %v2530 = vadd.f32 %v2476, %v2513
    %v2531 = vadd.f32 %v2477, %v2513
    %v2532 = vadd.f32 %v2478, %v2513
    %v2533 = vadd.f32 %v2479, %v2513
    %v2534 = vadd.f32 %v2480, %v2513
    %v2535 = vadd.f32 %v2481, %v2513
    %v2536 = vadd.f32 %v2482, %v2513
    %v2537 = vadd.f32 %v2483, %v2513
    %v2538 = vadd.f32 %v2484, %v2513
    %v2539 = vadd.f32 %v2485, %v2513
    %v2540 = vadd.f32 %v2486, %v2513
    %v2541 = vadd.f32 %v2487, %v2513
    %v2542 = vadd.f32 %v2488, %v2513
    %v2543 = vadd.f32 %v2489, %v2513
    %v2544 = vadd.f32 %v2490, %v2513
    %v2545 = vadd.f32 %v2491, %v2513
    %v2546 = vadd.f32 %v2492, %v2513
    %v2547 = vadd.f32 %v2493, %v2513
    %v2548 = vadd.f32 %v2494, %v2513
    %v2549 = vadd.f32 %v2495, %v2513
    %v2550 = vadd.f32 %v2496, %v2513
    %v2551 = vadd.f32 %v2497, %v2513
    %v2552 = vadd.f32 %v2498, %v2513
    %v2553 = vadd.f32 %v2499, %v2513
    %v2554 = vadd.f32 %v2500, %v2513
    %v2555 = vadd.f32 %v2501, %v2513
    %v2556 = vadd.f32 %v2502, %v2513
    %v2557 = vadd.f32 %v2503, %v2513
    %v2558 = vadd.f32 %v2504, %v2513
    %v2559 = vadd.f32 %v2505, %v2513
    %v2560 = vadd.f32 %v2506, %v2513
    %v2561 = vadd.f32 %v2507, %v2513
    %v2562 = vadd.f32 %v2508, %v2513
    %v2563 = vmax.f32 %v2515, 0.0
    %v2564 = vmax.f32 %v2516, 0.0
    %v2565 = vmax.f32 %v2517, 0.0
    %v2566 = vmax.f32 %v2518, 0.0
    %v2567 = vmax.f32 %v2519, 0.0
    %v2568 = vmax.f32 %v2520, 0.0
    %v2569 = vmax.f32 %v2521, 0.0
    %v2570 = vmax.f32 %v2522, 0.0
    %v2571 = vmax.f32 %v2523, 0.0
    %v2572 = vmax.f32 %v2524, 0.0
    %v2573 = vmax.f32 %v2525, 0.0
    %v2574 = vmax.f32 %v2526, 0.0
    %v2575 = vmax.f32 %v2527, 0.0
    %v2576 = vmax.f32 %v2528, 0.0
    %v2577 = vmax.f32 %v2529, 0.0
    %v2578 = vmax.f32 %v2530, 0.0
    %v2579 = vmax.f32 %v2531, 0.0
    %v2580 = vmax.f32 %v2532, 0.0
    %v2581 = vmax.f32 %v2533, 0.0
    %v2582 = vmax.f32 %v2534, 0.0
    %v2583 = vmax.f32 %v2535, 0.0
    %v2584 = vmax.f32 %v2536, 0.0
    %v2585 = vmax.f32 %v2537, 0.0
    %v2586 = vmax.f32 %v2538, 0.0
    %v2587 = vmax.f32 %v2539, 0.0
    %v2588 = vmax.f32 %v2540, 0.0
    %v2589 = vmax.f32 %v2541, 0.0
    %v2590 = vmax.f32 %v2542, 0.0
    %v2591 = vmax.f32 %v2543, 0.0
    %v2592 = vmax.f32 %v2544, 0.0
    %v2593 = vmax.f32 %v2545, 0.0
    %v2594 = vmax.f32 %v2546, 0.0
    %v2595 = vmax.f32 %v2547, 0.0
    %v2596 = vmax.f32 %v2548, 0.0
    %v2597 = vmax.f32 %v2549, 0.0
    %v2598 = vmax.f32 %v2550, 0.0
    %v2599 = vmax.f32 %v2551, 0.0
    %v2600 = vmax.f32 %v2552, 0.0
    %v2601 = vmax.f32 %v2553, 0.0
    %v2602 = vmax.f32 %v2554, 0.0
    %v2603 = vmax.f32 %v2555, 0.0
    %v2604 = vmax.f32 %v2556, 0.0
    %v2605 = vmax.f32 %v2557, 0.0
    %v2606 = vmax.f32 %v2558, 0.0
    %v2607 = vmax.f32 %v2559, 0.0
    %v2608 = vmax.f32 %v2560, 0.0
    %v2609 = vmax.f32 %v2561, 0.0
    %v2610 = vmax.f32 %v2562, 0.0
    %v2611 = vadd.f32 %v2563, %v679
    %v2612 = vadd.f32 %v2564, %v682
    %v2613 = vadd.f32 %v2565, %v687
    %v2614 = vadd.f32 %v2566, %v690
    %v2615 = vadd.f32 %v2567, %v695
    %v2616 = vadd.f32 %v2568, %v698
    %v2617 = vadd.f32 %v2569, %v703
    %v2618 = vadd.f32 %v2570, %v706
    %v2619 = vadd.f32 %v2571, %v711
    %v2620 = vadd.f32 %v2572, %v714
    %v2621 = vadd.f32 %v2573, %v719
    %v2622 = vadd.f32 %v2574, %v722
    %v2623 = vadd.f32 %v2575, %v727
    %v2624 = vadd.f32 %v2576, %v730
    %v2625 = vadd.f32 %v2577, %v735
    %v2626 = vadd.f32 %v2578, %v738
    %v2627 = vadd.f32 %v2579, %v743
    %v2628 = vadd.f32 %v2580, %v746
    %v2629 = vadd.f32 %v2581, %v751
    %v2630 = vadd.f32 %v2582, %v754
    %v2631 = vadd.f32 %v2583, %v759
    %v2632 = vadd.f32 %v2584, %v762
    %v2633 = vadd.f32 %v2585, %v767
    %v2634 = vadd.f32 %v2586, %v770
    %v2635 = vadd.f32 %v2587, %v775
    %v2636 = vadd.f32 %v2588, %v778
    %v2637 = vadd.f32 %v2589, %v783
    %v2638 = vadd.f32 %v2590, %v786
    %v2639 = vadd.f32 %v2591, %v791
    %v2640 = vadd.f32 %v2592, %v794
    %v2641 = vadd.f32 %v2593, %v799
    %v2642 = vadd.f32 %v2594, %v802
    %v2643 = vadd.f32 %v2595, %v807
    %v2644 = vadd.f32 %v2596, %v810
    %v2645 = vadd.f32 %v2597, %v815
    %v2646 = vadd.f32 %v2598, %v818
    %v2647 = vadd.f32 %v2599, %v823
    %v2648 = vadd.f32 %v2600, %v826
    %v2649 = vadd.f32 %v2601, %v831
    %v2650 = vadd.f32 %v2602, %v834
    %v2651 = vadd.f32 %v2603, %v839
    %v2652 = vadd.f32 %v2604, %v842
    %v2653 = vadd.f32 %v2605, %v847
    %v2654 = vadd.f32 %v2606, %v850
    %v2655 = vadd.f32 %v2607, %v855
    %v2656 = vadd.f32 %v2608, %v858
    %v2657 = vadd.f32 %v2609, %v863
    %v2658 = vadd.f32 %v2610, %v866
    %s2659 = scalar_lea.vmem [#allocation15], 128
    %v2660 = vld [vmem:[%s2659] sm:$0xff]
    %v2661 = vld [vmem:[%s2659 + $0x8] sm:$0xff]
    %v2662 = vld [vmem:[%s2659 + $0x10] sm:$0xff]
    %v2663 = vld [vmem:[%s2659 + $0x18] sm:$0xff]
    %v2664 = vld [vmem:[%s2659 + $0x20] sm:$0xff]
    %v2665 = vld [vmem:[%s2659 + $0x28] sm:$0xff]
    %v2666 = vld [vmem:[%s2659 + $0x30] sm:$0xff]
    %v2667 = vld [vmem:[%s2659 + $0x38] sm:$0xff]
    %v2668 = vld [vmem:[%s2659 + $0x40] sm:$0xff]
    %v2669 = vld [vmem:[%s2659 + $0x48] sm:$0xff]
    %v2670 = vld [vmem:[%s2659 + $0x50] sm:$0xff]
    %v2671 = vld [vmem:[%s2659 + $0x58] sm:$0xff]
    %v2672 = vld [vmem:[%s2659 + $0x60] sm:$0xff]
    %v2673 = vld [vmem:[%s2659 + $0x68] sm:$0xff]
    %v2674 = vld [vmem:[%s2659 + $0x70] sm:$0xff]
    %v2675 = vld [vmem:[%s2659 + $0x78] sm:$0xff]
    %v2676 = vpack.c.bf16 %v2612, %v2611
    %v2677 = vpack.c.bf16 %v2614, %v2613
    %v2678 = vpack.c.bf16 %v2616, %v2615
    %v2679 = vpack.c.bf16 %v2618, %v2617
    %v2680 = vpack.c.bf16 %v2620, %v2619
    %v2681 = vpack.c.bf16 %v2622, %v2621
    %v2682 = vpack.c.bf16 %v2624, %v2623
    %v2683 = vpack.c.bf16 %v2626, %v2625
    %v2684 = vpack.c.bf16 %v2628, %v2627
    %v2685 = vpack.c.bf16 %v2630, %v2629
    %v2686 = vpack.c.bf16 %v2632, %v2631
    %v2687 = vpack.c.bf16 %v2634, %v2633
    %v2688 = vpack.c.bf16 %v2636, %v2635
    %v2689 = vpack.c.bf16 %v2638, %v2637
    %v2690 = vpack.c.bf16 %v2640, %v2639
    %v2691 = vpack.c.bf16 %v2642, %v2641
    %v2692 = vpack.c.bf16 %v2644, %v2643
    %v2693 = vpack.c.bf16 %v2646, %v2645
    %v2694 = vpack.c.bf16 %v2648, %v2647
    %v2695 = vpack.c.bf16 %v2650, %v2649
    %v2696 = vpack.c.bf16 %v2652, %v2651
    %v2697 = vpack.c.bf16 %v2654, %v2653
    %v2698 = vpack.c.bf16 %v2656, %v2655
    %v2699 = vpack.c.bf16 %v2658, %v2657
    %v2700 = vpack.c.bf16 %v2661, %v2660
    %v2701 = vpack.c.bf16 %v2663, %v2662
    %v2702 = vpack.c.bf16 %v2665, %v2664
    %v2703 = vpack.c.bf16 %v2667, %v2666
    %v2704 = vpack.c.bf16 %v2669, %v2668
    %v2705 = vpack.c.bf16 %v2671, %v2670
    %v2706 = vpack.c.bf16 %v2673, %v2672
    %v2707 = vpack.c.bf16 %v2675, %v2674
    %2708 = vmatprep.subr.bf16.mxu0 0
    %2709 = vmatpush1.bf16.msra.mxu0 %v2700
    %2710 = vmatprep.subr.bf16.mxu0 0
    %2711 = vmatpush1.bf16.msra.mxu0 %v2701
    %2712 = vmatprep.subr.bf16.mxu0 0
    %2713 = vmatpush1.bf16.msra.mxu0 %v2702
    %2714 = vmatprep.subr.bf16.mxu0 0
    %2715 = vmatpush1.bf16.msra.mxu0 %v2703
    %2716 = vmatprep.subr.bf16.mxu0 0
    %2717 = vmatpush1.bf16.msra.mxu0 %v2704
    %2718 = vmatprep.subr.bf16.mxu0 0
    %2719 = vmatpush1.bf16.msra.mxu0 %v2705
    %2720 = vmatprep.subr.bf16.mxu0 0
    %2721 = vmatpush1.bf16.msra.mxu0 %v2706
    %2722 = vmatprep.subr.bf16.mxu0 0
    %2723 = vmatpush1.bf16.msra.mxu0 %v2707
    %2724 = vmatprep.subr.bf16.mxu0 0
    %2725 = vmatpush1.bf16.msra.mxu0 0
    %2726 = vmatprep.subr.bf16.mxu0 0
    %2727 = vmatpush1.bf16.msra.mxu0 0
    %2728 = vmatprep.subr.bf16.mxu0 0
    %2729 = vmatpush1.bf16.msra.mxu0 0
    %2730 = vmatprep.subr.bf16.mxu0 0
    %2731 = vmatpush1.bf16.msra.mxu0 0
    %2732 = vmatprep.subr.bf16.mxu0 0
    %2733 = vmatpush1.bf16.msra.mxu0 0
    %2734 = vmatprep.subr.bf16.mxu0 0
    %2735 = vmatpush1.bf16.msra.mxu0 0
    %2736 = vmatprep.subr.bf16.mxu0 0
    %2737 = vmatpush1.bf16.msra.mxu0 0
    %2738 = vmatprep.subr.bf16.mxu0 0
    %2739 = vmatpush1.bf16.msra.mxu0 0
    %2740 = vmatprep.mubr.bf16.mxu0 0
    %2741 = vmatmul.mubr.bf16.gmra.mrb[0].mxu0 %v2676
    %v2742 = vpop.f32.mrb[0].mxu0
    %v2743 = vadd.f32 0.0, %v2742
    %v2744 = vpop.f32.mrb[0].mxu0
    %v2745 = vpop.f32.mrb[0].mxu0
    %v2746 = vadd.f32 0.0, %v2745
    %v2747 = vpop.f32.mrb[0].mxu0
    %2748 = vmatprep.mubr.bf16.mxu0 0
    %2749 = vmatmul.mubr.bf16.gmra.mrb[0].mxu0 %v2677
    %v2750 = vpop.f32.mrb[0].mxu0
    %v2751 = vadd.f32 0.0, %v2750
    %v2752 = vpop.f32.mrb[0].mxu0
    %v2753 = vpop.f32.mrb[0].mxu0
    %v2754 = vadd.f32 0.0, %v2753
    %v2755 = vpop.f32.mrb[0].mxu0
    %2756 = vmatprep.mubr.bf16.mxu0 0
    %2757 = vmatmul.mubr.bf16.gmra.mrb[0].mxu0 %v2678
    %v2758 = vpop.f32.mrb[0].mxu0
    %v2759 = vadd.f32 0.0, %v2758
    %v2760 = vpop.f32.mrb[0].mxu0
    %v2761 = vpop.f32.mrb[0].mxu0
    %v2762 = vadd.f32 0.0, %v2761
    %v2763 = vpop.f32.mrb[0].mxu0
    %2764 = vmatprep.mubr.bf16.mxu0 0
    %2765 = vmatmul.mubr.bf16.gmra.mrb[0].mxu0 %v2679
    %v2766 = vpop.f32.mrb[0].mxu0
    %v2767 = vadd.f32 0.0, %v2766
    %v2768 = vpop.f32.mrb[0].mxu0
    %v2769 = vpop.f32.mrb[0].mxu0
    %v2770 = vadd.f32 0.0, %v2769
    %v2771 = vpop.f32.mrb[0].mxu0
    %2772 = vmatprep.mubr.bf16.mxu0 0
    %2773 = vmatmul.mubr.bf16.gmra.mrb[0].mxu0 %v2680
    %v2774 = vpop.f32.mrb[0].mxu0
    %v2775 = vadd.f32 0.0, %v2774
    %v2776 = vpop.f32.mrb[0].mxu0
    %v2777 = vpop.f32.mrb[0].mxu0
    %v2778 = vadd.f32 0.0, %v2777
    %v2779 = vpop.f32.mrb[0].mxu0
    %2780 = vmatprep.mubr.bf16.mxu0 0
    %2781 = vmatmul.mubr.bf16.gmra.mrb[0].mxu0 %v2681
    %v2782 = vpop.f32.mrb[0].mxu0
    %v2783 = vadd.f32 0.0, %v2782
    %v2784 = vpop.f32.mrb[0].mxu0
    %v2785 = vpop.f32.mrb[0].mxu0
    %v2786 = vadd.f32 0.0, %v2785
    %v2787 = vpop.f32.mrb[0].mxu0
    %2788 = vmatprep.mubr.bf16.mxu0 0
    %2789 = vmatmul.mubr.bf16.gmra.mrb[0].mxu0 %v2682
    %v2790 = vpop.f32.mrb[0].mxu0
    %v2791 = vadd.f32 0.0, %v2790
    %v2792 = vpop.f32.mrb[0].mxu0
    %v2793 = vpop.f32.mrb[0].mxu0
    %v2794 = vadd.f32 0.0, %v2793
    %v2795 = vpop.f32.mrb[0].mxu0
    %2796 = vmatprep.mubr.bf16.mxu0 0
    %2797 = vmatmul.mubr.bf16.gmra.mrb[0].mxu0 %v2683
    %v2798 = vpop.f32.mrb[0].mxu0
    %v2799 = vadd.f32 0.0, %v2798
    %v2800 = vpop.f32.mrb[0].mxu0
    %v2801 = vpop.f32.mrb[0].mxu0
    %v2802 = vadd.f32 0.0, %v2801
    %v2803 = vpop.f32.mrb[0].mxu0
    %2804 = vmatprep.mubr.bf16.mxu0 0
    %2805 = vmatmul.mubr.bf16.gmra.mrb[0].mxu0 %v2684
    %v2806 = vpop.f32.mrb[0].mxu0
    %v2807 = vadd.f32 0.0, %v2806
    %v2808 = vpop.f32.mrb[0].mxu0
    %v2809 = vpop.f32.mrb[0].mxu0
    %v2810 = vadd.f32 0.0, %v2809
    %v2811 = vpop.f32.mrb[0].mxu0
    %2812 = vmatprep.mubr.bf16.mxu0 0
    %2813 = vmatmul.mubr.bf16.gmra.mrb[0].mxu0 %v2685
    %v2814 = vpop.f32.mrb[0].mxu0
    %v2815 = vadd.f32 0.0, %v2814
    %v2816 = vpop.f32.mrb[0].mxu0
    %v2817 = vpop.f32.mrb[0].mxu0
    %v2818 = vadd.f32 0.0, %v2817
    %v2819 = vpop.f32.mrb[0].mxu0
    %2820 = vmatprep.mubr.bf16.mxu0 0
    %2821 = vmatmul.mubr.bf16.gmra.mrb[0].mxu0 %v2686
    %v2822 = vpop.f32.mrb[0].mxu0
    %v2823 = vadd.f32 0.0, %v2822
    %v2824 = vpop.f32.mrb[0].mxu0
    %v2825 = vpop.f32.mrb[0].mxu0
    %v2826 = vadd.f32 0.0, %v2825
    %v2827 = vpop.f32.mrb[0].mxu0
    %2828 = vmatprep.mubr.bf16.mxu0 0
    %2829 = vmatmul.mubr.bf16.gmra.mrb[0].mxu0 %v2687
    %v2830 = vpop.f32.mrb[0].mxu0
    %v2831 = vadd.f32 0.0, %v2830
    %v2832 = vpop.f32.mrb[0].mxu0
    %v2833 = vpop.f32.mrb[0].mxu0
    %v2834 = vadd.f32 0.0, %v2833
    %v2835 = vpop.f32.mrb[0].mxu0
    %2836 = vmatprep.mubr.bf16.mxu0 0
    %2837 = vmatmul.mubr.bf16.gmra.mrb[0].mxu0 %v2688
    %v2838 = vpop.f32.mrb[0].mxu0
    %v2839 = vadd.f32 0.0, %v2838
    %v2840 = vpop.f32.mrb[0].mxu0
    %v2841 = vpop.f32.mrb[0].mxu0
    %v2842 = vadd.f32 0.0, %v2841
    %v2843 = vpop.f32.mrb[0].mxu0
    %2844 = vmatprep.mubr.bf16.mxu0 0
    %2845 = vmatmul.mubr.bf16.gmra.mrb[0].mxu0 %v2689
    %v2846 = vpop.f32.mrb[0].mxu0
    %v2847 = vadd.f32 0.0, %v2846
    %v2848 = vpop.f32.mrb[0].mxu0
    %v2849 = vpop.f32.mrb[0].mxu0
    %v2850 = vadd.f32 0.0, %v2849
    %v2851 = vpop.f32.mrb[0].mxu0
    %2852 = vmatprep.mubr.bf16.mxu0 0
    %2853 = vmatmul.mubr.bf16.gmra.mrb[0].mxu0 %v2690
    %v2854 = vpop.f32.mrb[0].mxu0
    %v2855 = vadd.f32 0.0, %v2854
    %v2856 = vpop.f32.mrb[0].mxu0
    %v2857 = vpop.f32.mrb[0].mxu0
    %v2858 = vadd.f32 0.0, %v2857
    %v2859 = vpop.f32.mrb[0].mxu0
    %2860 = vmatprep.mubr.bf16.mxu0 0
    %2861 = vmatmul.mubr.bf16.gmra.mrb[0].mxu0 %v2691
    %v2862 = vpop.f32.mrb[0].mxu0
    %v2863 = vadd.f32 0.0, %v2862
    %v2864 = vpop.f32.mrb[0].mxu0
    %v2865 = vpop.f32.mrb[0].mxu0
    %v2866 = vadd.f32 0.0, %v2865
    %v2867 = vpop.f32.mrb[0].mxu0
    %2868 = vmatprep.mubr.bf16.mxu0 0
    %2869 = vmatmul.mubr.bf16.gmra.mrb[0].mxu0 %v2692
    %v2870 = vpop.f32.mrb[0].mxu0
    %v2871 = vadd.f32 0.0, %v2870
    %v2872 = vpop.f32.mrb[0].mxu0
    %v2873 = vpop.f32.mrb[0].mxu0
    %v2874 = vadd.f32 0.0, %v2873
    %v2875 = vpop.f32.mrb[0].mxu0
    %2876 = vmatprep.mubr.bf16.mxu0 0
    %2877 = vmatmul.mubr.bf16.gmra.mrb[0].mxu0 %v2693
    %v2878 = vpop.f32.mrb[0].mxu0
    %v2879 = vadd.f32 0.0, %v2878
    %v2880 = vpop.f32.mrb[0].mxu0
    %v2881 = vpop.f32.mrb[0].mxu0
    %v2882 = vadd.f32 0.0, %v2881
    %v2883 = vpop.f32.mrb[0].mxu0
    %2884 = vmatprep.mubr.bf16.mxu0 0
    %2885 = vmatmul.mubr.bf16.gmra.mrb[0].mxu0 %v2694
    %v2886 = vpop.f32.mrb[0].mxu0
    %v2887 = vadd.f32 0.0, %v2886
    %v2888 = vpop.f32.mrb[0].mxu0
    %v2889 = vpop.f32.mrb[0].mxu0
    %v2890 = vadd.f32 0.0, %v2889
    %v2891 = vpop.f32.mrb[0].mxu0
    %2892 = vmatprep.mubr.bf16.mxu0 0
    %2893 = vmatmul.mubr.bf16.gmra.mrb[0].mxu0 %v2695
    %v2894 = vpop.f32.mrb[0].mxu0
    %v2895 = vadd.f32 0.0, %v2894
    %v2896 = vpop.f32.mrb[0].mxu0
    %v2897 = vpop.f32.mrb[0].mxu0
    %v2898 = vadd.f32 0.0, %v2897
    %v2899 = vpop.f32.mrb[0].mxu0
    %2900 = vmatprep.mubr.bf16.mxu0 0
    %2901 = vmatmul.mubr.bf16.gmra.mrb[0].mxu0 %v2696
    %v2902 = vpop.f32.mrb[0].mxu0
    %v2903 = vadd.f32 0.0, %v2902
    %v2904 = vpop.f32.mrb[0].mxu0
    %v2905 = vpop.f32.mrb[0].mxu0
    %v2906 = vadd.f32 0.0, %v2905
    %v2907 = vpop.f32.mrb[0].mxu0
    %2908 = vmatprep.mubr.bf16.mxu0 0
    %2909 = vmatmul.mubr.bf16.gmra.mrb[0].mxu0 %v2697
    %v2910 = vpop.f32.mrb[0].mxu0
    %v2911 = vadd.f32 0.0, %v2910
    %v2912 = vpop.f32.mrb[0].mxu0
    %v2913 = vpop.f32.mrb[0].mxu0
    %v2914 = vadd.f32 0.0, %v2913
    %v2915 = vpop.f32.mrb[0].mxu0
    %2916 = vmatprep.mubr.bf16.mxu0 0
    %2917 = vmatmul.mubr.bf16.gmra.mrb[0].mxu0 %v2698
    %v2918 = vpop.f32.mrb[0].mxu0
    %v2919 = vadd.f32 0.0, %v2918
    %v2920 = vpop.f32.mrb[0].mxu0
    %v2921 = vpop.f32.mrb[0].mxu0
    %v2922 = vadd.f32 0.0, %v2921
    %v2923 = vpop.f32.mrb[0].mxu0
    %2924 = vmatprep.mubr.bf16.mxu0 0
    %2925 = vmatmul.mubr.bf16.gmra.mrb[0].mxu0 %v2699
    %v2926 = vpop.f32.mrb[0].mxu0
    %v2927 = vadd.f32 0.0, %v2926
    %v2928 = vpop.f32.mrb[0].mxu0
    %v2929 = vpop.f32.mrb[0].mxu0
    %v2930 = vadd.f32 0.0, %v2929
    %v2931 = vpop.f32.mrb[0].mxu0
    %2932 = vdwg.mxu0
    %v2933 = vpack.c.bf16 %v2746, %v2743
    %v2934 = vpack.c.bf16 %v2754, %v2751
    %v2935 = vpack.c.bf16 %v2762, %v2759
    %v2936 = vpack.c.bf16 %v2770, %v2767
    %v2937 = vpack.c.bf16 %v2778, %v2775
    %v2938 = vpack.c.bf16 %v2786, %v2783
    %v2939 = vpack.c.bf16 %v2794, %v2791
    %v2940 = vpack.c.bf16 %v2802, %v2799
    %v2941 = vpack.c.bf16 %v2810, %v2807
    %v2942 = vpack.c.bf16 %v2818, %v2815
    %v2943 = vpack.c.bf16 %v2826, %v2823
    %v2944 = vpack.c.bf16 %v2834, %v2831
    %v2945 = vpack.c.bf16 %v2842, %v2839
    %v2946 = vpack.c.bf16 %v2850, %v2847
    %v2947 = vpack.c.bf16 %v2858, %v2855
    %v2948 = vpack.c.bf16 %v2866, %v2863
    %v2949 = vpack.c.bf16 %v2874, %v2871
    %v2950 = vpack.c.bf16 %v2882, %v2879
    %v2951 = vpack.c.bf16 %v2890, %v2887
    %v2952 = vpack.c.bf16 %v2898, %v2895
    %v2953 = vpack.c.bf16 %v2906, %v2903
    %v2954 = vpack.c.bf16 %v2914, %v2911
    %v2955 = vpack.c.bf16 %v2922, %v2919
    %v2956 = vpack.c.bf16 %v2930, %v2927
    %s2957 = scalar_lea.vmem %s7, 1
    %v2958 = vld [vmem:[%s2957] sm:$0x1]
    %v2960 = vlaneseq
    %v2961 = vshrl.u32 %v2960, 7
    %v2962 = vsub.s32 0, %v2961
    %v2963 = vrot.slane %v2958, %v2962
    %2965 = vmatprep.subr.bf16.mxu0 0
    %2966 = vmatpush1.bf16.msra.mxu0 %v2933
    %2967 = vmatprep.subr.bf16.mxu0 0
    %2968 = vmatpush1.bf16.msra.mxu0 %v2934
    %2969 = vmatprep.subr.bf16.mxu0 0
    %2970 = vmatpush1.bf16.msra.mxu0 %v2935
    %2971 = vmatprep.subr.bf16.mxu0 0
    %2972 = vmatpush1.bf16.msra.mxu0 %v2936
    %2973 = vmatprep.subr.bf16.mxu0 0
    %2974 = vmatpush1.bf16.msra.mxu0 %v2937
    %2975 = vmatprep.subr.bf16.mxu0 0
    %2976 = vmatpush1.bf16.msra.mxu0 %v2938
    %2977 = vmatprep.subr.bf16.mxu0 0
    %2978 = vmatpush1.bf16.msra.mxu0 %v2939
    %2979 = vmatprep.subr.bf16.mxu0 0
    %2980 = vmatpush1.bf16.msra.mxu0 %v2940
    %2981 = vmatprep.subr.bf16.mxu0 0
    %2982 = vmatpush1.bf16.msra.mxu0 %v2941
    %2983 = vmatprep.subr.bf16.mxu0 0
    %2984 = vmatpush1.bf16.msra.mxu0 %v2942
    %2985 = vmatprep.subr.bf16.mxu0 0
    %2986 = vmatpush1.bf16.msra.mxu0 %v2943
    %2987 = vmatprep.subr.bf16.mxu0 0
    %2988 = vmatpush1.bf16.msra.mxu0 %v2944
    %2989 = vmatprep.subr.bf16.mxu0 0
    %2990 = vmatpush1.bf16.msra.mxu0 %v2945
    %2991 = vmatprep.subr.bf16.mxu0 0
    %2992 = vmatpush1.bf16.msra.mxu0 %v2946
    %2993 = vmatprep.subr.bf16.mxu0 0
    %2994 = vmatpush1.bf16.msra.mxu0 %v2947
    %2995 = vmatprep.subr.bf16.mxu0 0
    %2996 = vmatpush1.bf16.msra.mxu0 %v2948
    %2997 = vmatprep.mubr.bf16.mxu0 %v1510
    %2998 = vmatmul.mubr.bf16.gmra.mrb[0].mxu0 %v1509
    %v2999 = vpop.f32.mrb[0].mxu0
    %v3000 = vadd.f32 %v2963, %v2999
    %v3001 = vpop.f32.mrb[0].mxu0
    %v3002 = vpop.f32.mrb[0].mxu0
    %v3003 = vadd.f32 %v2963, %v3002
    %v3004 = vpop.f32.mrb[0].mxu0
    %3005 = vmatprep.mubr.bf16.mxu0 %v1513
    %3006 = vmatmul.mubr.bf16.gmra.mrb[0].mxu0 %v1512
    %v3007 = vpop.f32.mrb[0].mxu0
    %v3008 = vadd.f32 %v2963, %v3007
    %v3009 = vpop.f32.mrb[0].mxu0
    %v3010 = vpop.f32.mrb[0].mxu0
    %v3011 = vadd.f32 %v2963, %v3010
    %v3012 = vpop.f32.mrb[0].mxu0
    %3013 = vmatprep.mubr.bf16.mxu0 %v1516
    %3014 = vmatmul.mubr.bf16.gmra.mrb[0].mxu0 %v1515
    %v3015 = vpop.f32.mrb[0].mxu0
    %v3016 = vadd.f32 %v2963, %v3015
    %v3017 = vpop.f32.mrb[0].mxu0
    %v3018 = vpop.f32.mrb[0].mxu0
    %v3019 = vadd.f32 %v2963, %v3018
    %v3020 = vpop.f32.mrb[0].mxu0
    %3021 = vmatprep.mubr.bf16.mxu0 %v1519
    %3022 = vmatmul.mubr.bf16.gmra.mrb[0].mxu0 %v1518
    %v3023 = vpop.f32.mrb[0].mxu0
    %v3024 = vadd.f32 %v2963, %v3023
    %v3025 = vpop.f32.mrb[0].mxu0
    %v3026 = vpop.f32.mrb[0].mxu0
    %v3027 = vadd.f32 %v2963, %v3026
    %v3028 = vpop.f32.mrb[0].mxu0
    %3029 = vmatprep.mubr.bf16.mxu0 %v1522
    %3030 = vmatmul.mubr.bf16.gmra.mrb[0].mxu0 %v1521
    %v3031 = vpop.f32.mrb[0].mxu0
    %v3032 = vadd.f32 %v2963, %v3031
    %v3033 = vpop.f32.mrb[0].mxu0
    %v3034 = vpop.f32.mrb[0].mxu0
    %v3035 = vadd.f32 %v2963, %v3034
    %v3036 = vpop.f32.mrb[0].mxu0
    %3037 = vmatprep.mubr.bf16.mxu0 %v1525
    %3038 = vmatmul.mubr.bf16.gmra.mrb[0].mxu0 %v1524
    %v3039 = vpop.f32.mrb[0].mxu0
    %v3040 = vadd.f32 %v2963, %v3039
    %v3041 = vpop.f32.mrb[0].mxu0
    %v3042 = vpop.f32.mrb[0].mxu0
    %v3043 = vadd.f32 %v2963, %v3042
    %v3044 = vpop.f32.mrb[0].mxu0
    %3045 = vmatprep.mubr.bf16.mxu0 %v1528
    %3046 = vmatmul.mubr.bf16.gmra.mrb[0].mxu0 %v1527
    %v3047 = vpop.f32.mrb[0].mxu0
    %v3048 = vadd.f32 %v2963, %v3047
    %v3049 = vpop.f32.mrb[0].mxu0
    %v3050 = vpop.f32.mrb[0].mxu0
    %v3051 = vadd.f32 %v2963, %v3050
    %v3052 = vpop.f32.mrb[0].mxu0
    %3053 = vmatprep.mubr.bf16.mxu0 %v1531
    %3054 = vmatmul.mubr.bf16.gmra.mrb[0].mxu0 %v1530
    %v3055 = vpop.f32.mrb[0].mxu0
    %v3056 = vadd.f32 %v2963, %v3055
    %v3057 = vpop.f32.mrb[0].mxu0
    %v3058 = vpop.f32.mrb[0].mxu0
    %v3059 = vadd.f32 %v2963, %v3058
    %v3060 = vpop.f32.mrb[0].mxu0
    %3061 = vmatprep.mubr.bf16.mxu0 %v1534
    %3062 = vmatmul.mubr.bf16.gmra.mrb[0].mxu0 %v1533
    %v3063 = vpop.f32.mrb[0].mxu0
    %v3064 = vadd.f32 %v2963, %v3063
    %v3065 = vpop.f32.mrb[0].mxu0
    %v3066 = vpop.f32.mrb[0].mxu0
    %v3067 = vadd.f32 %v2963, %v3066
    %v3068 = vpop.f32.mrb[0].mxu0
    %3069 = vmatprep.mubr.bf16.mxu0 %v1537
    %3070 = vmatmul.mubr.bf16.gmra.mrb[0].mxu0 %v1536
    %v3071 = vpop.f32.mrb[0].mxu0
    %v3072 = vadd.f32 %v2963, %v3071
    %v3073 = vpop.f32.mrb[0].mxu0
    %v3074 = vpop.f32.mrb[0].mxu0
    %v3075 = vadd.f32 %v2963, %v3074
    %v3076 = vpop.f32.mrb[0].mxu0
    %3077 = vmatprep.mubr.bf16.mxu0 %v1540
    %3078 = vmatmul.mubr.bf16.gmra.mrb[0].mxu0 %v1539
    %v3079 = vpop.f32.mrb[0].mxu0
    %v3080 = vadd.f32 %v2963, %v3079
    %v3081 = vpop.f32.mrb[0].mxu0
    %v3082 = vpop.f32.mrb[0].mxu0
    %v3083 = vadd.f32 %v2963, %v3082
    %v3084 = vpop.f32.mrb[0].mxu0
    %3085 = vmatprep.mubr.bf16.mxu0 %v1543
    %3086 = vmatmul.mubr.bf16.gmra.mrb[0].mxu0 %v1542
    %v3087 = vpop.f32.mrb[0].mxu0
    %v3088 = vadd.f32 %v2963, %v3087
    %v3089 = vpop.f32.mrb[0].mxu0
    %v3090 = vpop.f32.mrb[0].mxu0
    %v3091 = vadd.f32 %v2963, %v3090
    %v3092 = vpop.f32.mrb[0].mxu0
    %3093 = vmatprep.mubr.bf16.mxu0 %v1546
    %3094 = vmatmul.mubr.bf16.gmra.mrb[0].mxu0 %v1545
    %v3095 = vpop.f32.mrb[0].mxu0
    %v3096 = vadd.f32 %v2963, %v3095
    %v3097 = vpop.f32.mrb[0].mxu0
    %v3098 = vpop.f32.mrb[0].mxu0
    %v3099 = vadd.f32 %v2963, %v3098
    %v3100 = vpop.f32.mrb[0].mxu0
    %3101 = vmatprep.mubr.bf16.mxu0 %v1549
    %3102 = vmatmul.mubr.bf16.gmra.mrb[0].mxu0 %v1548
    %v3103 = vpop.f32.mrb[0].mxu0
    %v3104 = vadd.f32 %v2963, %v3103
    %v3105 = vpop.f32.mrb[0].mxu0
    %v3106 = vpop.f32.mrb[0].mxu0
    %v3107 = vadd.f32 %v2963, %v3106
    %v3108 = vpop.f32.mrb[0].mxu0
    %3109 = vmatprep.mubr.bf16.mxu0 %v1552
    %3110 = vmatmul.mubr.bf16.gmra.mrb[0].mxu0 %v1551
    %v3111 = vpop.f32.mrb[0].mxu0
    %v3112 = vadd.f32 %v2963, %v3111
    %v3113 = vpop.f32.mrb[0].mxu0
    %v3114 = vpop.f32.mrb[0].mxu0
    %v3115 = vadd.f32 %v2963, %v3114
    %v3116 = vpop.f32.mrb[0].mxu0
    %3117 = vmatprep.mubr.bf16.mxu0 %v1555
    %3118 = vmatmul.mubr.bf16.gmra.mrb[0].mxu0 %v1554
    %v3119 = vpop.f32.mrb[0].mxu0
    %v3120 = vadd.f32 %v2963, %v3119
    %v3121 = vpop.f32.mrb[0].mxu0
    %v3122 = vpop.f32.mrb[0].mxu0
    %v3123 = vadd.f32 %v2963, %v3122
    %v3124 = vpop.f32.mrb[0].mxu0
    %3125 = vmatprep.mubr.bf16.mxu0 %v1558
    %3126 = vmatmul.mubr.bf16.gmra.mrb[0].mxu0 %v1557
    %v3127 = vpop.f32.mrb[0].mxu0
    %v3128 = vadd.f32 %v2963, %v3127
    %v3129 = vpop.f32.mrb[0].mxu0
    %v3130 = vpop.f32.mrb[0].mxu0
    %v3131 = vadd.f32 %v2963, %v3130
    %v3132 = vpop.f32.mrb[0].mxu0
    %3133 = vmatprep.mubr.bf16.mxu0 %v1561
    %3134 = vmatmul.mubr.bf16.gmra.mrb[0].mxu0 %v1560
    %v3135 = vpop.f32.mrb[0].mxu0
    %v3136 = vadd.f32 %v2963, %v3135
    %v3137 = vpop.f32.mrb[0].mxu0
    %v3138 = vpop.f32.mrb[0].mxu0
    %v3139 = vadd.f32 %v2963, %v3138
    %v3140 = vpop.f32.mrb[0].mxu0
    %3141 = vmatprep.mubr.bf16.mxu0 %v1564
    %3142 = vmatmul.mubr.bf16.gmra.mrb[0].mxu0 %v1563
    %v3143 = vpop.f32.mrb[0].mxu0
    %v3144 = vadd.f32 %v2963, %v3143
    %v3145 = vpop.f32.mrb[0].mxu0
    %v3146 = vpop.f32.mrb[0].mxu0
    %v3147 = vadd.f32 %v2963, %v3146
    %v3148 = vpop.f32.mrb[0].mxu0
    %3149 = vmatprep.mubr.bf16.mxu0 %v1567
    %3150 = vmatmul.mubr.bf16.gmra.mrb[0].mxu0 %v1566
    %v3151 = vpop.f32.mrb[0].mxu0
    %v3152 = vadd.f32 %v2963, %v3151
    %v3153 = vpop.f32.mrb[0].mxu0
    %v3154 = vpop.f32.mrb[0].mxu0
    %v3155 = vadd.f32 %v2963, %v3154
    %v3156 = vpop.f32.mrb[0].mxu0
    %3157 = vmatprep.mubr.bf16.mxu0 %v1570
    %3158 = vmatmul.mubr.bf16.gmra.mrb[0].mxu0 %v1569
    %v3159 = vpop.f32.mrb[0].mxu0
    %v3160 = vadd.f32 %v2963, %v3159
    %v3161 = vpop.f32.mrb[0].mxu0
    %v3162 = vpop.f32.mrb[0].mxu0
    %v3163 = vadd.f32 %v2963, %v3162
    %v3164 = vpop.f32.mrb[0].mxu0
    %3165 = vmatprep.mubr.bf16.mxu0 %v1573
    %3166 = vmatmul.mubr.bf16.gmra.mrb[0].mxu0 %v1572
    %v3167 = vpop.f32.mrb[0].mxu0
    %v3168 = vadd.f32 %v2963, %v3167
    %v3169 = vpop.f32.mrb[0].mxu0
    %v3170 = vpop.f32.mrb[0].mxu0
    %v3171 = vadd.f32 %v2963, %v3170
    %v3172 = vpop.f32.mrb[0].mxu0
    %3173 = vmatprep.mubr.bf16.mxu0 %v1576
    %3174 = vmatmul.mubr.bf16.gmra.mrb[0].mxu0 %v1575
    %v3175 = vpop.f32.mrb[0].mxu0
    %v3176 = vadd.f32 %v2963, %v3175
    %v3177 = vpop.f32.mrb[0].mxu0
    %v3178 = vpop.f32.mrb[0].mxu0
    %v3179 = vadd.f32 %v2963, %v3178
    %v3180 = vpop.f32.mrb[0].mxu0
    %3181 = vmatprep.mubr.bf16.mxu0 %v1579
    %3182 = vmatmul.mubr.bf16.gmra.mrb[0].mxu0 %v1578
    %v3183 = vpop.f32.mrb[0].mxu0
    %v3184 = vadd.f32 %v2963, %v3183
    %v3185 = vpop.f32.mrb[0].mxu0
    %v3186 = vpop.f32.mrb[0].mxu0
    %v3187 = vadd.f32 %v2963, %v3186
    %v3188 = vpop.f32.mrb[0].mxu0
    %3189 = vdwg.mxu0
    %3190 = vmatprep.subr.bf16.mxu0 0
    %3191 = vmatpush1.bf16.msra.mxu0 %v2949
    %3192 = vmatprep.subr.bf16.mxu0 0
    %3193 = vmatpush1.bf16.msra.mxu0 %v2950
    %3194 = vmatprep.subr.bf16.mxu0 0
    %3195 = vmatpush1.bf16.msra.mxu0 %v2951
    %3196 = vmatprep.subr.bf16.mxu0 0
    %3197 = vmatpush1.bf16.msra.mxu0 %v2952
    %3198 = vmatprep.subr.bf16.mxu0 0
    %3199 = vmatpush1.bf16.msra.mxu0 %v2953
    %3200 = vmatprep.subr.bf16.mxu0 0
    %3201 = vmatpush1.bf16.msra.mxu0 %v2954
    %3202 = vmatprep.subr.bf16.mxu0 0
    %3203 = vmatpush1.bf16.msra.mxu0 %v2955
    %3204 = vmatprep.subr.bf16.mxu0 0
    %3205 = vmatpush1.bf16.msra.mxu0 %v2956
    %3206 = vmatprep.subr.bf16.mxu0 0
    %3207 = vmatpush1.bf16.msra.mxu0 0
    %3208 = vmatprep.subr.bf16.mxu0 0
    %3209 = vmatpush1.bf16.msra.mxu0 0
    %3210 = vmatprep.subr.bf16.mxu0 0
    %3211 = vmatpush1.bf16.msra.mxu0 0
    %3212 = vmatprep.subr.bf16.mxu0 0
    %3213 = vmatpush1.bf16.msra.mxu0 0
    %3214 = vmatprep.subr.bf16.mxu0 0
    %3215 = vmatpush1.bf16.msra.mxu0 0
    %3216 = vmatprep.subr.bf16.mxu0 0
    %3217 = vmatpush1.bf16.msra.mxu0 0
    %3218 = vmatprep.subr.bf16.mxu0 0
    %3219 = vmatpush1.bf16.msra.mxu0 0
    %3220 = vmatprep.subr.bf16.mxu0 0
    %3221 = vmatpush1.bf16.msra.mxu0 0
    %3222 = vmatprep.mubr.bf16.mxu0 0
    %3223 = vmatmul.mubr.bf16.gmra.mrb[0].mxu0 %v1511
    %v3224 = vpop.f32.mrb[0].mxu0
    %v3225 = vadd.f32 %v3000, %v3224
    %v3226 = vpop.f32.mrb[0].mxu0
    %v3227 = vpop.f32.mrb[0].mxu0
    %v3228 = vadd.f32 %v3003, %v3227
    %v3229 = vpop.f32.mrb[0].mxu0
    %3230 = vmatprep.mubr.bf16.mxu0 0
    %3231 = vmatmul.mubr.bf16.gmra.mrb[0].mxu0 %v1514
    %v3232 = vpop.f32.mrb[0].mxu0
    %v3233 = vadd.f32 %v3008, %v3232
    %v3234 = vpop.f32.mrb[0].mxu0
    %v3235 = vpop.f32.mrb[0].mxu0
    %v3236 = vadd.f32 %v3011, %v3235
    %v3237 = vpop.f32.mrb[0].mxu0
    %3238 = vmatprep.mubr.bf16.mxu0 0
    %3239 = vmatmul.mubr.bf16.gmra.mrb[0].mxu0 %v1517
    %v3240 = vpop.f32.mrb[0].mxu0
    %v3241 = vadd.f32 %v3016, %v3240
    %v3242 = vpop.f32.mrb[0].mxu0
    %v3243 = vpop.f32.mrb[0].mxu0
    %v3244 = vadd.f32 %v3019, %v3243
    %v3245 = vpop.f32.mrb[0].mxu0
    %3246 = vmatprep.mubr.bf16.mxu0 0
    %3247 = vmatmul.mubr.bf16.gmra.mrb[0].mxu0 %v1520
    %v3248 = vpop.f32.mrb[0].mxu0
    %v3249 = vadd.f32 %v3024, %v3248
    %v3250 = vpop.f32.mrb[0].mxu0
    %v3251 = vpop.f32.mrb[0].mxu0
    %v3252 = vadd.f32 %v3027, %v3251
    %v3253 = vpop.f32.mrb[0].mxu0
    %3254 = vmatprep.mubr.bf16.mxu0 0
    %3255 = vmatmul.mubr.bf16.gmra.mrb[0].mxu0 %v1523
    %v3256 = vpop.f32.mrb[0].mxu0
    %v3257 = vadd.f32 %v3032, %v3256
    %v3258 = vpop.f32.mrb[0].mxu0
    %v3259 = vpop.f32.mrb[0].mxu0
    %v3260 = vadd.f32 %v3035, %v3259
    %v3261 = vpop.f32.mrb[0].mxu0
    %3262 = vmatprep.mubr.bf16.mxu0 0
    %3263 = vmatmul.mubr.bf16.gmra.mrb[0].mxu0 %v1526
    %v3264 = vpop.f32.mrb[0].mxu0
    %v3265 = vadd.f32 %v3040, %v3264
    %v3266 = vpop.f32.mrb[0].mxu0
    %v3267 = vpop.f32.mrb[0].mxu0
    %v3268 = vadd.f32 %v3043, %v3267
    %v3269 = vpop.f32.mrb[0].mxu0
    %3270 = vmatprep.mubr.bf16.mxu0 0
    %3271 = vmatmul.mubr.bf16.gmra.mrb[0].mxu0 %v1529
    %v3272 = vpop.f32.mrb[0].mxu0
    %v3273 = vadd.f32 %v3048, %v3272
    %v3274 = vpop.f32.mrb[0].mxu0
    %v3275 = vpop.f32.mrb[0].mxu0
    %v3276 = vadd.f32 %v3051, %v3275
    %v3277 = vpop.f32.mrb[0].mxu0
    %3278 = vmatprep.mubr.bf16.mxu0 0
    %3279 = vmatmul.mubr.bf16.gmra.mrb[0].mxu0 %v1532
    %v3280 = vpop.f32.mrb[0].mxu0
    %v3281 = vadd.f32 %v3056, %v3280
    %v3282 = vpop.f32.mrb[0].mxu0
    %v3283 = vpop.f32.mrb[0].mxu0
    %v3284 = vadd.f32 %v3059, %v3283
    %v3285 = vpop.f32.mrb[0].mxu0
    %3286 = vmatprep.mubr.bf16.mxu0 0
    %3287 = vmatmul.mubr.bf16.gmra.mrb[0].mxu0 %v1535
    %v3288 = vpop.f32.mrb[0].mxu0
    %v3289 = vadd.f32 %v3064, %v3288
    %v3290 = vpop.f32.mrb[0].mxu0
    %v3291 = vpop.f32.mrb[0].mxu0
    %v3292 = vadd.f32 %v3067, %v3291
    %v3293 = vpop.f32.mrb[0].mxu0
    %3294 = vmatprep.mubr.bf16.mxu0 0
    %3295 = vmatmul.mubr.bf16.gmra.mrb[0].mxu0 %v1538
    %v3296 = vpop.f32.mrb[0].mxu0
    %v3297 = vadd.f32 %v3072, %v3296
    %v3298 = vpop.f32.mrb[0].mxu0
    %v3299 = vpop.f32.mrb[0].mxu0
    %v3300 = vadd.f32 %v3075, %v3299
    %v3301 = vpop.f32.mrb[0].mxu0
    %3302 = vmatprep.mubr.bf16.mxu0 0
    %3303 = vmatmul.mubr.bf16.gmra.mrb[0].mxu0 %v1541
    %v3304 = vpop.f32.mrb[0].mxu0
    %v3305 = vadd.f32 %v3080, %v3304
    %v3306 = vpop.f32.mrb[0].mxu0
    %v3307 = vpop.f32.mrb[0].mxu0
    %v3308 = vadd.f32 %v3083, %v3307
    %v3309 = vpop.f32.mrb[0].mxu0
    %3310 = vmatprep.mubr.bf16.mxu0 0
    %3311 = vmatmul.mubr.bf16.gmra.mrb[0].mxu0 %v1544
    %v3312 = vpop.f32.mrb[0].mxu0
    %v3313 = vadd.f32 %v3088, %v3312
    %v3314 = vpop.f32.mrb[0].mxu0
    %v3315 = vpop.f32.mrb[0].mxu0
    %v3316 = vadd.f32 %v3091, %v3315
    %v3317 = vpop.f32.mrb[0].mxu0
    %3318 = vmatprep.mubr.bf16.mxu0 0
    %3319 = vmatmul.mubr.bf16.gmra.mrb[0].mxu0 %v1547
    %v3320 = vpop.f32.mrb[0].mxu0
    %v3321 = vadd.f32 %v3096, %v3320
    %v3322 = vpop.f32.mrb[0].mxu0
    %v3323 = vpop.f32.mrb[0].mxu0
    %v3324 = vadd.f32 %v3099, %v3323
    %v3325 = vpop.f32.mrb[0].mxu0
    %3326 = vmatprep.mubr.bf16.mxu0 0
    %3327 = vmatmul.mubr.bf16.gmra.mrb[0].mxu0 %v1550
    %v3328 = vpop.f32.mrb[0].mxu0
    %v3329 = vadd.f32 %v3104, %v3328
    %v3330 = vpop.f32.mrb[0].mxu0
    %v3331 = vpop.f32.mrb[0].mxu0
    %v3332 = vadd.f32 %v3107, %v3331
    %v3333 = vpop.f32.mrb[0].mxu0
    %3334 = vmatprep.mubr.bf16.mxu0 0
    %3335 = vmatmul.mubr.bf16.gmra.mrb[0].mxu0 %v1553
    %v3336 = vpop.f32.mrb[0].mxu0
    %v3337 = vadd.f32 %v3112, %v3336
    %v3338 = vpop.f32.mrb[0].mxu0
    %v3339 = vpop.f32.mrb[0].mxu0
    %v3340 = vadd.f32 %v3115, %v3339
    %v3341 = vpop.f32.mrb[0].mxu0
    %3342 = vmatprep.mubr.bf16.mxu0 0
    %3343 = vmatmul.mubr.bf16.gmra.mrb[0].mxu0 %v1556
    %v3344 = vpop.f32.mrb[0].mxu0
    %v3345 = vadd.f32 %v3120, %v3344
    %v3346 = vpop.f32.mrb[0].mxu0
    %v3347 = vpop.f32.mrb[0].mxu0
    %v3348 = vadd.f32 %v3123, %v3347
    %v3349 = vpop.f32.mrb[0].mxu0
    %3350 = vmatprep.mubr.bf16.mxu0 0
    %3351 = vmatmul.mubr.bf16.gmra.mrb[0].mxu0 %v1559
    %v3352 = vpop.f32.mrb[0].mxu0
    %v3353 = vadd.f32 %v3128, %v3352
    %v3354 = vpop.f32.mrb[0].mxu0
    %v3355 = vpop.f32.mrb[0].mxu0
    %v3356 = vadd.f32 %v3131, %v3355
    %v3357 = vpop.f32.mrb[0].mxu0
    %3358 = vmatprep.mubr.bf16.mxu0 0
    %3359 = vmatmul.mubr.bf16.gmra.mrb[0].mxu0 %v1562
    %v3360 = vpop.f32.mrb[0].mxu0
    %v3361 = vadd.f32 %v3136, %v3360
    %v3362 = vpop.f32.mrb[0].mxu0
    %v3363 = vpop.f32.mrb[0].mxu0
    %v3364 = vadd.f32 %v3139, %v3363
    %v3365 = vpop.f32.mrb[0].mxu0
    %3366 = vmatprep.mubr.bf16.mxu0 0
    %3367 = vmatmul.mubr.bf16.gmra.mrb[0].mxu0 %v1565
    %v3368 = vpop.f32.mrb[0].mxu0
    %v3369 = vadd.f32 %v3144, %v3368
    %v3370 = vpop.f32.mrb[0].mxu0
    %v3371 = vpop.f32.mrb[0].mxu0
    %v3372 = vadd.f32 %v3147, %v3371
    %v3373 = vpop.f32.mrb[0].mxu0
    %3374 = vmatprep.mubr.bf16.mxu0 0
    %3375 = vmatmul.mubr.bf16.gmra.mrb[0].mxu0 %v1568
    %v3376 = vpop.f32.mrb[0].mxu0
    %v3377 = vadd.f32 %v3152, %v3376
    %v3378 = vpop.f32.mrb[0].mxu0
    %v3379 = vpop.f32.mrb[0].mxu0
    %v3380 = vadd.f32 %v3155, %v3379
    %v3381 = vpop.f32.mrb[0].mxu0
    %3382 = vmatprep.mubr.bf16.mxu0 0
    %3383 = vmatmul.mubr.bf16.gmra.mrb[0].mxu0 %v1571
    %v3384 = vpop.f32.mrb[0].mxu0
    %v3385 = vadd.f32 %v3160, %v3384
    %v3386 = vpop.f32.mrb[0].mxu0
    %v3387 = vpop.f32.mrb[0].mxu0
    %v3388 = vadd.f32 %v3163, %v3387
    %v3389 = vpop.f32.mrb[0].mxu0
    %3390 = vmatprep.mubr.bf16.mxu0 0
    %3391 = vmatmul.mubr.bf16.gmra.mrb[0].mxu0 %v1574
    %v3392 = vpop.f32.mrb[0].mxu0
    %v3393 = vadd.f32 %v3168, %v3392
    %v3394 = vpop.f32.mrb[0].mxu0
    %v3395 = vpop.f32.mrb[0].mxu0
    %v3396 = vadd.f32 %v3171, %v3395
    %v3397 = vpop.f32.mrb[0].mxu0
    %3398 = vmatprep.mubr.bf16.mxu0 0
    %3399 = vmatmul.mubr.bf16.gmra.mrb[0].mxu0 %v1577
    %v3400 = vpop.f32.mrb[0].mxu0
    %v3401 = vadd.f32 %v3176, %v3400
    %v3402 = vpop.f32.mrb[0].mxu0
    %v3403 = vpop.f32.mrb[0].mxu0
    %v3404 = vadd.f32 %v3179, %v3403
    %v3405 = vpop.f32.mrb[0].mxu0
    %3406 = vmatprep.mubr.bf16.mxu0 0
    %3407 = vmatmul.mubr.bf16.gmra.mrb[0].mxu0 %v1580
    %v3408 = vpop.f32.mrb[0].mxu0
    %v3409 = vadd.f32 %v3184, %v3408
    %v3410 = vpop.f32.mrb[0].mxu0
    %v3411 = vpop.f32.mrb[0].mxu0
    %v3412 = vadd.f32 %v3187, %v3411
    %v3413 = vpop.f32.mrb[0].mxu0
    %3414 = vdwg.mxu0
    %s3415 = scalar_lea.vmem %s10, 1
    %v3416 = vld [vmem:[%s3415] sm:$0x1]
    %s3417 = scalar_lea.vmem %s11, 1
    %v3418 = vld [vmem:[%s3417] sm:$0x1]
    %v3419 = vmul.f32 %v3225, %v364
    %v3420 = vmul.f32 %v3228, %v365
    %v3421 = vmul.f32 %v3233, %v366
    %v3422 = vmul.f32 %v3236, %v367
    %v3423 = vmul.f32 %v3241, %v368
    %v3424 = vmul.f32 %v3244, %v369
    %v3425 = vmul.f32 %v3249, %v370
    %v3426 = vmul.f32 %v3252, %v371
    %v3427 = vmul.f32 %v3257, %v372
    %v3428 = vmul.f32 %v3260, %v373
    %v3429 = vmul.f32 %v3265, %v374
    %v3430 = vmul.f32 %v3268, %v375
    %v3431 = vmul.f32 %v3273, %v376
    %v3432 = vmul.f32 %v3276, %v377
    %v3433 = vmul.f32 %v3281, %v378
    %v3434 = vmul.f32 %v3284, %v379
    %v3435 = vmul.f32 %v3289, %v380
    %v3436 = vmul.f32 %v3292, %v381
    %v3437 = vmul.f32 %v3297, %v382
    %v3438 = vmul.f32 %v3300, %v383
    %v3439 = vmul.f32 %v3305, %v384
    %v3440 = vmul.f32 %v3308, %v385
    %v3441 = vmul.f32 %v3313, %v386
    %v3442 = vmul.f32 %v3316, %v387
    %v3443 = vmul.f32 %v3321, %v388
    %v3444 = vmul.f32 %v3324, %v389
    %v3445 = vmul.f32 %v3329, %v390
    %v3446 = vmul.f32 %v3332, %v391
    %v3447 = vmul.f32 %v3337, %v392
    %v3448 = vmul.f32 %v3340, %v393
    %v3449 = vmul.f32 %v3345, %v394
    %v3450 = vmul.f32 %v3348, %v395
    %v3451 = vmul.f32 %v3353, %v396
    %v3452 = vmul.f32 %v3356, %v397
    %v3453 = vmul.f32 %v3361, %v398
    %v3454 = vmul.f32 %v3364, %v399
    %v3455 = vmul.f32 %v3369, %v400
    %v3456 = vmul.f32 %v3372, %v401
    %v3457 = vmul.f32 %v3377, %v402
    %v3458 = vmul.f32 %v3380, %v403
    %v3459 = vmul.f32 %v3385, %v404
    %v3460 = vmul.f32 %v3388, %v405
    %v3461 = vmul.f32 %v3393, %v406
    %v3462 = vmul.f32 %v3396, %v407
    %v3463 = vmul.f32 %v3401, %v408
    %v3464 = vmul.f32 %v3404, %v409
    %v3465 = vmul.f32 %v3409, %v410
    %v3466 = vmul.f32 %v3412, %v411
    %v3467 = vadd.f32 %v3419, %v3420
    %v3468 = vadd.f32 %v3467, %v3421
    %v3469 = vadd.f32 %v3468, %v3422
    %v3470 = vadd.f32 %v3469, %v3423
    %v3471 = vadd.f32 %v3470, %v3424
    %v3472 = vadd.f32 %v3471, %v3425
    %v3473 = vadd.f32 %v3472, %v3426
    %v3474 = vadd.f32 %v3473, %v3427
    %v3475 = vadd.f32 %v3474, %v3428
    %v3476 = vadd.f32 %v3475, %v3429
    %v3477 = vadd.f32 %v3476, %v3430
    %v3478 = vadd.f32 %v3477, %v3431
    %v3479 = vadd.f32 %v3478, %v3432
    %v3480 = vadd.f32 %v3479, %v3433
    %v3481 = vadd.f32 %v3480, %v3434
    %v3482 = vadd.f32 %v3481, %v3435
    %v3483 = vadd.f32 %v3482, %v3436
    %v3484 = vadd.f32 %v3483, %v3437
    %v3485 = vadd.f32 %v3484, %v3438
    %v3486 = vadd.f32 %v3485, %v3439
    %v3487 = vadd.f32 %v3486, %v3440
    %v3488 = vadd.f32 %v3487, %v3441
    %v3489 = vadd.f32 %v3488, %v3442
    %v3490 = vadd.f32 %v3489, %v3443
    %v3491 = vadd.f32 %v3490, %v3444
    %v3492 = vadd.f32 %v3491, %v3445
    %v3493 = vadd.f32 %v3492, %v3446
    %v3494 = vadd.f32 %v3493, %v3447
    %v3495 = vadd.f32 %v3494, %v3448
    %v3496 = vadd.f32 %v3495, %v3449
    %v3497 = vadd.f32 %v3496, %v3450
    %v3498 = vadd.f32 %v3497, %v3451
    %v3499 = vadd.f32 %v3498, %v3452
    %v3500 = vadd.f32 %v3499, %v3453
    %v3501 = vadd.f32 %v3500, %v3454
    %v3502 = vadd.f32 %v3501, %v3455
    %v3503 = vadd.f32 %v3502, %v3456
    %v3504 = vadd.f32 %v3503, %v3457
    %v3505 = vadd.f32 %v3504, %v3458
    %v3506 = vadd.f32 %v3505, %v3459
    %v3507 = vadd.f32 %v3506, %v3460
    %v3508 = vadd.f32 %v3507, %v3461
    %v3509 = vadd.f32 %v3508, %v3462
    %v3510 = vadd.f32 %v3509, %v3463
    %v3511 = vadd.f32 %v3510, %v3464
    %v3512 = vadd.f32 %v3511, %v3465
    %v3513 = vadd.f32 %v3512, %v3466
    %v3514 = vrot.slane %v3513, 4
    %v3515 = vadd.f32 %v3513, %v3514
    %v3516 = vrot.slane %v3515, 2
    %v3517 = vadd.f32 %v3515, %v3516
    %v3518 = vrot.slane %v3517, 1
    %v3519 = vadd.f32 %v3517, %v3518
    %v3520 = vmul.f32 %v3519, 0.003125
    %v3521 = vsub.f32 %v3225, %v3520
    %v3522 = vsub.f32 %v3228, %v3520
    %v3523 = vsub.f32 %v3233, %v3520
    %v3524 = vsub.f32 %v3236, %v3520
    %v3525 = vsub.f32 %v3241, %v3520
    %v3526 = vsub.f32 %v3244, %v3520
    %v3527 = vsub.f32 %v3249, %v3520
    %v3528 = vsub.f32 %v3252, %v3520
    %v3529 = vsub.f32 %v3257, %v3520
    %v3530 = vsub.f32 %v3260, %v3520
    %v3531 = vsub.f32 %v3265, %v3520
    %v3532 = vsub.f32 %v3268, %v3520
    %v3533 = vsub.f32 %v3273, %v3520
    %v3534 = vsub.f32 %v3276, %v3520
    %v3535 = vsub.f32 %v3281, %v3520
    %v3536 = vsub.f32 %v3284, %v3520
    %v3537 = vsub.f32 %v3289, %v3520
    %v3538 = vsub.f32 %v3292, %v3520
    %v3539 = vsub.f32 %v3297, %v3520
    %v3540 = vsub.f32 %v3300, %v3520
    %v3541 = vsub.f32 %v3305, %v3520
    %v3542 = vsub.f32 %v3308, %v3520
    %v3543 = vsub.f32 %v3313, %v3520
    %v3544 = vsub.f32 %v3316, %v3520
    %v3545 = vsub.f32 %v3321, %v3520
    %v3546 = vsub.f32 %v3324, %v3520
    %v3547 = vsub.f32 %v3329, %v3520
    %v3548 = vsub.f32 %v3332, %v3520
    %v3549 = vsub.f32 %v3337, %v3520
    %v3550 = vsub.f32 %v3340, %v3520
    %v3551 = vsub.f32 %v3345, %v3520
    %v3552 = vsub.f32 %v3348, %v3520
    %v3553 = vsub.f32 %v3353, %v3520
    %v3554 = vsub.f32 %v3356, %v3520
    %v3555 = vsub.f32 %v3361, %v3520
    %v3556 = vsub.f32 %v3364, %v3520
    %v3557 = vsub.f32 %v3369, %v3520
    %v3558 = vsub.f32 %v3372, %v3520
    %v3559 = vsub.f32 %v3377, %v3520
    %v3560 = vsub.f32 %v3380, %v3520
    %v3561 = vsub.f32 %v3385, %v3520
    %v3562 = vsub.f32 %v3388, %v3520
    %v3563 = vsub.f32 %v3393, %v3520
    %v3564 = vsub.f32 %v3396, %v3520
    %v3565 = vsub.f32 %v3401, %v3520
    %v3566 = vsub.f32 %v3404, %v3520
    %v3567 = vsub.f32 %v3409, %v3520
    %v3568 = vsub.f32 %v3412, %v3520
    %v3569 = vmul.f32 %v3521, %v364
    %v3570 = vmul.f32 %v3522, %v365
    %v3571 = vmul.f32 %v3523, %v366
    %v3572 = vmul.f32 %v3524, %v367
    %v3573 = vmul.f32 %v3525, %v368
    %v3574 = vmul.f32 %v3526, %v369
    %v3575 = vmul.f32 %v3527, %v370
    %v3576 = vmul.f32 %v3528, %v371
    %v3577 = vmul.f32 %v3529, %v372
    %v3578 = vmul.f32 %v3530, %v373
    %v3579 = vmul.f32 %v3531, %v374
    %v3580 = vmul.f32 %v3532, %v375
    %v3581 = vmul.f32 %v3533, %v376
    %v3582 = vmul.f32 %v3534, %v377
    %v3583 = vmul.f32 %v3535, %v378
    %v3584 = vmul.f32 %v3536, %v379
    %v3585 = vmul.f32 %v3537, %v380
    %v3586 = vmul.f32 %v3538, %v381
    %v3587 = vmul.f32 %v3539, %v382
    %v3588 = vmul.f32 %v3540, %v383
    %v3589 = vmul.f32 %v3541, %v384
    %v3590 = vmul.f32 %v3542, %v385
    %v3591 = vmul.f32 %v3543, %v386
    %v3592 = vmul.f32 %v3544, %v387
    %v3593 = vmul.f32 %v3545, %v388
    %v3594 = vmul.f32 %v3546, %v389
    %v3595 = vmul.f32 %v3547, %v390
    %v3596 = vmul.f32 %v3548, %v391
    %v3597 = vmul.f32 %v3549, %v392
    %v3598 = vmul.f32 %v3550, %v393
    %v3599 = vmul.f32 %v3551, %v394
    %v3600 = vmul.f32 %v3552, %v395
    %v3601 = vmul.f32 %v3553, %v396
    %v3602 = vmul.f32 %v3554, %v397
    %v3603 = vmul.f32 %v3555, %v398
    %v3604 = vmul.f32 %v3556, %v399
    %v3605 = vmul.f32 %v3557, %v400
    %v3606 = vmul.f32 %v3558, %v401
    %v3607 = vmul.f32 %v3559, %v402
    %v3608 = vmul.f32 %v3560, %v403
    %v3609 = vmul.f32 %v3561, %v404
    %v3610 = vmul.f32 %v3562, %v405
    %v3611 = vmul.f32 %v3563, %v406
    %v3612 = vmul.f32 %v3564, %v407
    %v3613 = vmul.f32 %v3565, %v408
    %v3614 = vmul.f32 %v3566, %v409
    %v3615 = vmul.f32 %v3567, %v410
    %v3616 = vmul.f32 %v3568, %v411
    %v3617 = vmul.f32 %v3569, %v3569
    %v3618 = vmul.f32 %v3570, %v3570
    %v3619 = vmul.f32 %v3571, %v3571
    %v3620 = vmul.f32 %v3572, %v3572
    %v3621 = vmul.f32 %v3573, %v3573
    %v3622 = vmul.f32 %v3574, %v3574
    %v3623 = vmul.f32 %v3575, %v3575
    %v3624 = vmul.f32 %v3576, %v3576
    %v3625 = vmul.f32 %v3577, %v3577
    %v3626 = vmul.f32 %v3578, %v3578
    %v3627 = vmul.f32 %v3579, %v3579
    %v3628 = vmul.f32 %v3580, %v3580
    %v3629 = vmul.f32 %v3581, %v3581
    %v3630 = vmul.f32 %v3582, %v3582
    %v3631 = vmul.f32 %v3583, %v3583
    %v3632 = vmul.f32 %v3584, %v3584
    %v3633 = vmul.f32 %v3585, %v3585
    %v3634 = vmul.f32 %v3586, %v3586
    %v3635 = vmul.f32 %v3587, %v3587
    %v3636 = vmul.f32 %v3588, %v3588
    %v3637 = vmul.f32 %v3589, %v3589
    %v3638 = vmul.f32 %v3590, %v3590
    %v3639 = vmul.f32 %v3591, %v3591
    %v3640 = vmul.f32 %v3592, %v3592
    %v3641 = vmul.f32 %v3593, %v3593
    %v3642 = vmul.f32 %v3594, %v3594
    %v3643 = vmul.f32 %v3595, %v3595
    %v3644 = vmul.f32 %v3596, %v3596
    %v3645 = vmul.f32 %v3597, %v3597
    %v3646 = vmul.f32 %v3598, %v3598
    %v3647 = vmul.f32 %v3599, %v3599
    %v3648 = vmul.f32 %v3600, %v3600
    %v3649 = vmul.f32 %v3601, %v3601
    %v3650 = vmul.f32 %v3602, %v3602
    %v3651 = vmul.f32 %v3603, %v3603
    %v3652 = vmul.f32 %v3604, %v3604
    %v3653 = vmul.f32 %v3605, %v3605
    %v3654 = vmul.f32 %v3606, %v3606
    %v3655 = vmul.f32 %v3607, %v3607
    %v3656 = vmul.f32 %v3608, %v3608
    %v3657 = vmul.f32 %v3609, %v3609
    %v3658 = vmul.f32 %v3610, %v3610
    %v3659 = vmul.f32 %v3611, %v3611
    %v3660 = vmul.f32 %v3612, %v3612
    %v3661 = vmul.f32 %v3613, %v3613
    %v3662 = vmul.f32 %v3614, %v3614
    %v3663 = vmul.f32 %v3615, %v3615
    %v3664 = vmul.f32 %v3616, %v3616
    %v3665 = vadd.f32 %v3617, %v3618
    %v3666 = vadd.f32 %v3665, %v3619
    %v3667 = vadd.f32 %v3666, %v3620
    %v3668 = vadd.f32 %v3667, %v3621
    %v3669 = vadd.f32 %v3668, %v3622
    %v3670 = vadd.f32 %v3669, %v3623
    %v3671 = vadd.f32 %v3670, %v3624
    %v3672 = vadd.f32 %v3671, %v3625
    %v3673 = vadd.f32 %v3672, %v3626
    %v3674 = vadd.f32 %v3673, %v3627
    %v3675 = vadd.f32 %v3674, %v3628
    %v3676 = vadd.f32 %v3675, %v3629
    %v3677 = vadd.f32 %v3676, %v3630
    %v3678 = vadd.f32 %v3677, %v3631
    %v3679 = vadd.f32 %v3678, %v3632
    %v3680 = vadd.f32 %v3679, %v3633
    %v3681 = vadd.f32 %v3680, %v3634
    %v3682 = vadd.f32 %v3681, %v3635
    %v3683 = vadd.f32 %v3682, %v3636
    %v3684 = vadd.f32 %v3683, %v3637
    %v3685 = vadd.f32 %v3684, %v3638
    %v3686 = vadd.f32 %v3685, %v3639
    %v3687 = vadd.f32 %v3686, %v3640
    %v3688 = vadd.f32 %v3687, %v3641
    %v3689 = vadd.f32 %v3688, %v3642
    %v3690 = vadd.f32 %v3689, %v3643
    %v3691 = vadd.f32 %v3690, %v3644
    %v3692 = vadd.f32 %v3691, %v3645
    %v3693 = vadd.f32 %v3692, %v3646
    %v3694 = vadd.f32 %v3693, %v3647
    %v3695 = vadd.f32 %v3694, %v3648
    %v3696 = vadd.f32 %v3695, %v3649
    %v3697 = vadd.f32 %v3696, %v3650
    %v3698 = vadd.f32 %v3697, %v3651
    %v3699 = vadd.f32 %v3698, %v3652
    %v3700 = vadd.f32 %v3699, %v3653
    %v3701 = vadd.f32 %v3700, %v3654
    %v3702 = vadd.f32 %v3701, %v3655
    %v3703 = vadd.f32 %v3702, %v3656
    %v3704 = vadd.f32 %v3703, %v3657
    %v3705 = vadd.f32 %v3704, %v3658
    %v3706 = vadd.f32 %v3705, %v3659
    %v3707 = vadd.f32 %v3706, %v3660
    %v3708 = vadd.f32 %v3707, %v3661
    %v3709 = vadd.f32 %v3708, %v3662
    %v3710 = vadd.f32 %v3709, %v3663
    %v3711 = vadd.f32 %v3710, %v3664
    %v3712 = vrot.slane %v3711, 4
    %v3713 = vadd.f32 %v3711, %v3712
    %v3714 = vrot.slane %v3713, 2
    %v3715 = vadd.f32 %v3713, %v3714
    %v3716 = vrot.slane %v3715, 1
    %v3717 = vadd.f32 %v3715, %v3716
    %v3718 = vmul.f32 %v3717, 0.003125
    %v3719 = vadd.f32 %v3718, 1e-05
    %v3720 = vrsqrt.pop %v3719
    %v3721 = vmul.f32 %v3521, %v3720
    %v3722 = vmul.f32 %v3522, %v3720
    %v3723 = vmul.f32 %v3523, %v3720
    %v3724 = vmul.f32 %v3524, %v3720
    %v3725 = vmul.f32 %v3525, %v3720
    %v3726 = vmul.f32 %v3526, %v3720
    %v3727 = vmul.f32 %v3527, %v3720
    %v3728 = vmul.f32 %v3528, %v3720
    %v3729 = vmul.f32 %v3529, %v3720
    %v3730 = vmul.f32 %v3530, %v3720
    %v3731 = vmul.f32 %v3531, %v3720
    %v3732 = vmul.f32 %v3532, %v3720
    %v3733 = vmul.f32 %v3533, %v3720
    %v3734 = vmul.f32 %v3534, %v3720
    %v3735 = vmul.f32 %v3535, %v3720
    %v3736 = vmul.f32 %v3536, %v3720
    %v3737 = vmul.f32 %v3537, %v3720
    %v3738 = vmul.f32 %v3538, %v3720
    %v3739 = vmul.f32 %v3539, %v3720
    %v3740 = vmul.f32 %v3540, %v3720
    %v3741 = vmul.f32 %v3541, %v3720
    %v3742 = vmul.f32 %v3542, %v3720
    %v3743 = vmul.f32 %v3543, %v3720
    %v3744 = vmul.f32 %v3544, %v3720
    %v3745 = vmul.f32 %v3545, %v3720
    %v3746 = vmul.f32 %v3546, %v3720
    %v3747 = vmul.f32 %v3547, %v3720
    %v3748 = vmul.f32 %v3548, %v3720
    %v3749 = vmul.f32 %v3549, %v3720
    %v3750 = vmul.f32 %v3550, %v3720
    %v3751 = vmul.f32 %v3551, %v3720
    %v3752 = vmul.f32 %v3552, %v3720
    %v3753 = vmul.f32 %v3553, %v3720
    %v3754 = vmul.f32 %v3554, %v3720
    %v3755 = vmul.f32 %v3555, %v3720
    %v3756 = vmul.f32 %v3556, %v3720
    %v3757 = vmul.f32 %v3557, %v3720
    %v3758 = vmul.f32 %v3558, %v3720
    %v3759 = vmul.f32 %v3559, %v3720
    %v3760 = vmul.f32 %v3560, %v3720
    %v3761 = vmul.f32 %v3561, %v3720
    %v3762 = vmul.f32 %v3562, %v3720
    %v3763 = vmul.f32 %v3563, %v3720
    %v3764 = vmul.f32 %v3564, %v3720
    %v3765 = vmul.f32 %v3565, %v3720
    %v3766 = vmul.f32 %v3566, %v3720
    %v3767 = vmul.f32 %v3567, %v3720
    %v3768 = vmul.f32 %v3568, %v3720
    %v3770 = vlaneseq
    %v3771 = vshrl.u32 %v3770, 7
    %v3772 = vsub.s32 0, %v3771
    %v3773 = vrot.slane %v3416, %v3772
    %v3775 = vmul.f32 %v3721, %v3773
    %v3776 = vmul.f32 %v3722, %v3773
    %v3777 = vmul.f32 %v3723, %v3773
    %v3778 = vmul.f32 %v3724, %v3773
    %v3779 = vmul.f32 %v3725, %v3773
    %v3780 = vmul.f32 %v3726, %v3773
    %v3781 = vmul.f32 %v3727, %v3773
    %v3782 = vmul.f32 %v3728, %v3773
    %v3783 = vmul.f32 %v3729, %v3773
    %v3784 = vmul.f32 %v3730, %v3773
    %v3785 = vmul.f32 %v3731, %v3773
    %v3786 = vmul.f32 %v3732, %v3773
    %v3787 = vmul.f32 %v3733, %v3773
    %v3788 = vmul.f32 %v3734, %v3773
    %v3789 = vmul.f32 %v3735, %v3773
    %v3790 = vmul.f32 %v3736, %v3773
    %v3791 = vmul.f32 %v3737, %v3773
    %v3792 = vmul.f32 %v3738, %v3773
    %v3793 = vmul.f32 %v3739, %v3773
    %v3794 = vmul.f32 %v3740, %v3773
    %v3795 = vmul.f32 %v3741, %v3773
    %v3796 = vmul.f32 %v3742, %v3773
    %v3797 = vmul.f32 %v3743, %v3773
    %v3798 = vmul.f32 %v3744, %v3773
    %v3799 = vmul.f32 %v3745, %v3773
    %v3800 = vmul.f32 %v3746, %v3773
    %v3801 = vmul.f32 %v3747, %v3773
    %v3802 = vmul.f32 %v3748, %v3773
    %v3803 = vmul.f32 %v3749, %v3773
    %v3804 = vmul.f32 %v3750, %v3773
    %v3805 = vmul.f32 %v3751, %v3773
    %v3806 = vmul.f32 %v3752, %v3773
    %v3807 = vmul.f32 %v3753, %v3773
    %v3808 = vmul.f32 %v3754, %v3773
    %v3809 = vmul.f32 %v3755, %v3773
    %v3810 = vmul.f32 %v3756, %v3773
    %v3811 = vmul.f32 %v3757, %v3773
    %v3812 = vmul.f32 %v3758, %v3773
    %v3813 = vmul.f32 %v3759, %v3773
    %v3814 = vmul.f32 %v3760, %v3773
    %v3815 = vmul.f32 %v3761, %v3773
    %v3816 = vmul.f32 %v3762, %v3773
    %v3817 = vmul.f32 %v3763, %v3773
    %v3818 = vmul.f32 %v3764, %v3773
    %v3819 = vmul.f32 %v3765, %v3773
    %v3820 = vmul.f32 %v3766, %v3773
    %v3821 = vmul.f32 %v3767, %v3773
    %v3822 = vmul.f32 %v3768, %v3773
    %v3824 = vlaneseq
    %v3825 = vshrl.u32 %v3824, 7
    %v3826 = vsub.s32 0, %v3825
    %v3827 = vrot.slane %v3418, %v3826
    %v3829 = vadd.f32 %v3775, %v3827
    %v3830 = vadd.f32 %v3776, %v3827
    %v3831 = vadd.f32 %v3777, %v3827
    %v3832 = vadd.f32 %v3778, %v3827
    %v3833 = vadd.f32 %v3779, %v3827
    %v3834 = vadd.f32 %v3780, %v3827
    %v3835 = vadd.f32 %v3781, %v3827
    %v3836 = vadd.f32 %v3782, %v3827
    %v3837 = vadd.f32 %v3783, %v3827
    %v3838 = vadd.f32 %v3784, %v3827
    %v3839 = vadd.f32 %v3785, %v3827
    %v3840 = vadd.f32 %v3786, %v3827
    %v3841 = vadd.f32 %v3787, %v3827
    %v3842 = vadd.f32 %v3788, %v3827
    %v3843 = vadd.f32 %v3789, %v3827
    %v3844 = vadd.f32 %v3790, %v3827
    %v3845 = vadd.f32 %v3791, %v3827
    %v3846 = vadd.f32 %v3792, %v3827
    %v3847 = vadd.f32 %v3793, %v3827
    %v3848 = vadd.f32 %v3794, %v3827
    %v3849 = vadd.f32 %v3795, %v3827
    %v3850 = vadd.f32 %v3796, %v3827
    %v3851 = vadd.f32 %v3797, %v3827
    %v3852 = vadd.f32 %v3798, %v3827
    %v3853 = vadd.f32 %v3799, %v3827
    %v3854 = vadd.f32 %v3800, %v3827
    %v3855 = vadd.f32 %v3801, %v3827
    %v3856 = vadd.f32 %v3802, %v3827
    %v3857 = vadd.f32 %v3803, %v3827
    %v3858 = vadd.f32 %v3804, %v3827
    %v3859 = vadd.f32 %v3805, %v3827
    %v3860 = vadd.f32 %v3806, %v3827
    %v3861 = vadd.f32 %v3807, %v3827
    %v3862 = vadd.f32 %v3808, %v3827
    %v3863 = vadd.f32 %v3809, %v3827
    %v3864 = vadd.f32 %v3810, %v3827
    %v3865 = vadd.f32 %v3811, %v3827
    %v3866 = vadd.f32 %v3812, %v3827
    %v3867 = vadd.f32 %v3813, %v3827
    %v3868 = vadd.f32 %v3814, %v3827
    %v3869 = vadd.f32 %v3815, %v3827
    %v3870 = vadd.f32 %v3816, %v3827
    %v3871 = vadd.f32 %v3817, %v3827
    %v3872 = vadd.f32 %v3818, %v3827
    %v3873 = vadd.f32 %v3819, %v3827
    %v3874 = vadd.f32 %v3820, %v3827
    %v3875 = vadd.f32 %v3821, %v3827
    %v3876 = vadd.f32 %v3822, %v3827
    %v3877 = vmax.f32 %v3829, 0.0
    %v3878 = vmax.f32 %v3830, 0.0
    %v3879 = vmax.f32 %v3831, 0.0
    %v3880 = vmax.f32 %v3832, 0.0
    %v3881 = vmax.f32 %v3833, 0.0
    %v3882 = vmax.f32 %v3834, 0.0
    %v3883 = vmax.f32 %v3835, 0.0
    %v3884 = vmax.f32 %v3836, 0.0
    %v3885 = vmax.f32 %v3837, 0.0
    %v3886 = vmax.f32 %v3838, 0.0
    %v3887 = vmax.f32 %v3839, 0.0
    %v3888 = vmax.f32 %v3840, 0.0
    %v3889 = vmax.f32 %v3841, 0.0
    %v3890 = vmax.f32 %v3842, 0.0
    %v3891 = vmax.f32 %v3843, 0.0
    %v3892 = vmax.f32 %v3844, 0.0
    %v3893 = vmax.f32 %v3845, 0.0
    %v3894 = vmax.f32 %v3846, 0.0
    %v3895 = vmax.f32 %v3847, 0.0
    %v3896 = vmax.f32 %v3848, 0.0
    %v3897 = vmax.f32 %v3849, 0.0
    %v3898 = vmax.f32 %v3850, 0.0
    %v3899 = vmax.f32 %v3851, 0.0
    %v3900 = vmax.f32 %v3852, 0.0
    %v3901 = vmax.f32 %v3853, 0.0
    %v3902 = vmax.f32 %v3854, 0.0
    %v3903 = vmax.f32 %v3855, 0.0
    %v3904 = vmax.f32 %v3856, 0.0
    %v3905 = vmax.f32 %v3857, 0.0
    %v3906 = vmax.f32 %v3858, 0.0
    %v3907 = vmax.f32 %v3859, 0.0
    %v3908 = vmax.f32 %v3860, 0.0
    %v3909 = vmax.f32 %v3861, 0.0
    %v3910 = vmax.f32 %v3862, 0.0
    %v3911 = vmax.f32 %v3863, 0.0
    %v3912 = vmax.f32 %v3864, 0.0
    %v3913 = vmax.f32 %v3865, 0.0
    %v3914 = vmax.f32 %v3866, 0.0
    %v3915 = vmax.f32 %v3867, 0.0
    %v3916 = vmax.f32 %v3868, 0.0
    %v3917 = vmax.f32 %v3869, 0.0
    %v3918 = vmax.f32 %v3870, 0.0
    %v3919 = vmax.f32 %v3871, 0.0
    %v3920 = vmax.f32 %v3872, 0.0
    %v3921 = vmax.f32 %v3873, 0.0
    %v3922 = vmax.f32 %v3874, 0.0
    %v3923 = vmax.f32 %v3875, 0.0
    %v3924 = vmax.f32 %v3876, 0.0
    %v3925 = vadd.f32 %v3877, %v2611
    %v3926 = vadd.f32 %v3878, %v2612
    %v3927 = vadd.f32 %v3879, %v2613
    %v3928 = vadd.f32 %v3880, %v2614
    %v3929 = vadd.f32 %v3881, %v2615
    %v3930 = vadd.f32 %v3882, %v2616
    %v3931 = vadd.f32 %v3883, %v2617
    %v3932 = vadd.f32 %v3884, %v2618
    %v3933 = vadd.f32 %v3885, %v2619
    %v3934 = vadd.f32 %v3886, %v2620
    %v3935 = vadd.f32 %v3887, %v2621
    %v3936 = vadd.f32 %v3888, %v2622
    %v3937 = vadd.f32 %v3889, %v2623
    %v3938 = vadd.f32 %v3890, %v2624
    %v3939 = vadd.f32 %v3891, %v2625
    %v3940 = vadd.f32 %v3892, %v2626
    %v3941 = vadd.f32 %v3893, %v2627
    %v3942 = vadd.f32 %v3894, %v2628
    %v3943 = vadd.f32 %v3895, %v2629
    %v3944 = vadd.f32 %v3896, %v2630
    %v3945 = vadd.f32 %v3897, %v2631
    %v3946 = vadd.f32 %v3898, %v2632
    %v3947 = vadd.f32 %v3899, %v2633
    %v3948 = vadd.f32 %v3900, %v2634
    %v3949 = vadd.f32 %v3901, %v2635
    %v3950 = vadd.f32 %v3902, %v2636
    %v3951 = vadd.f32 %v3903, %v2637
    %v3952 = vadd.f32 %v3904, %v2638
    %v3953 = vadd.f32 %v3905, %v2639
    %v3954 = vadd.f32 %v3906, %v2640
    %v3955 = vadd.f32 %v3907, %v2641
    %v3956 = vadd.f32 %v3908, %v2642
    %v3957 = vadd.f32 %v3909, %v2643
    %v3958 = vadd.f32 %v3910, %v2644
    %v3959 = vadd.f32 %v3911, %v2645
    %v3960 = vadd.f32 %v3912, %v2646
    %v3961 = vadd.f32 %v3913, %v2647
    %v3962 = vadd.f32 %v3914, %v2648
    %v3963 = vadd.f32 %v3915, %v2649
    %v3964 = vadd.f32 %v3916, %v2650
    %v3965 = vadd.f32 %v3917, %v2651
    %v3966 = vadd.f32 %v3918, %v2652
    %v3967 = vadd.f32 %v3919, %v2653
    %v3968 = vadd.f32 %v3920, %v2654
    %v3969 = vadd.f32 %v3921, %v2655
    %v3970 = vadd.f32 %v3922, %v2656
    %v3971 = vadd.f32 %v3923, %v2657
    %v3972 = vadd.f32 %v3924, %v2658
    %s3973 = scalar_lea.vmem [#allocation15], 256
    %v3974 = vld [vmem:[%s3973] sm:$0xff]
    %v3975 = vld [vmem:[%s3973 + $0x8] sm:$0xff]
    %v3976 = vld [vmem:[%s3973 + $0x10] sm:$0xff]
    %v3977 = vld [vmem:[%s3973 + $0x18] sm:$0xff]
    %v3978 = vld [vmem:[%s3973 + $0x20] sm:$0xff]
    %v3979 = vld [vmem:[%s3973 + $0x28] sm:$0xff]
    %v3980 = vld [vmem:[%s3973 + $0x30] sm:$0xff]
    %v3981 = vld [vmem:[%s3973 + $0x38] sm:$0xff]
    %v3982 = vld [vmem:[%s3973 + $0x40] sm:$0xff]
    %v3983 = vld [vmem:[%s3973 + $0x48] sm:$0xff]
    %v3984 = vld [vmem:[%s3973 + $0x50] sm:$0xff]
    %v3985 = vld [vmem:[%s3973 + $0x58] sm:$0xff]
    %v3986 = vld [vmem:[%s3973 + $0x60] sm:$0xff]
    %v3987 = vld [vmem:[%s3973 + $0x68] sm:$0xff]
    %v3988 = vld [vmem:[%s3973 + $0x70] sm:$0xff]
    %v3989 = vld [vmem:[%s3973 + $0x78] sm:$0xff]
    %v3990 = vpack.c.bf16 %v3926, %v3925
    %v3991 = vpack.c.bf16 %v3928, %v3927
    %v3992 = vpack.c.bf16 %v3930, %v3929
    %v3993 = vpack.c.bf16 %v3932, %v3931
    %v3994 = vpack.c.bf16 %v3934, %v3933
    %v3995 = vpack.c.bf16 %v3936, %v3935
    %v3996 = vpack.c.bf16 %v3938, %v3937
    %v3997 = vpack.c.bf16 %v3940, %v3939
    %v3998 = vpack.c.bf16 %v3942, %v3941
    %v3999 = vpack.c.bf16 %v3944, %v3943
    %v4000 = vpack.c.bf16 %v3946, %v3945
    %v4001 = vpack.c.bf16 %v3948, %v3947
    %v4002 = vpack.c.bf16 %v3950, %v3949
    %v4003 = vpack.c.bf16 %v3952, %v3951
    %v4004 = vpack.c.bf16 %v3954, %v3953
    %v4005 = vpack.c.bf16 %v3956, %v3955
    %v4006 = vpack.c.bf16 %v3958, %v3957
    %v4007 = vpack.c.bf16 %v3960, %v3959
    %v4008 = vpack.c.bf16 %v3962, %v3961
    %v4009 = vpack.c.bf16 %v3964, %v3963
    %v4010 = vpack.c.bf16 %v3966, %v3965
    %v4011 = vpack.c.bf16 %v3968, %v3967
    %v4012 = vpack.c.bf16 %v3970, %v3969
    %v4013 = vpack.c.bf16 %v3972, %v3971
    %v4014 = vpack.c.bf16 %v3975, %v3974
    %v4015 = vpack.c.bf16 %v3977, %v3976
    %v4016 = vpack.c.bf16 %v3979, %v3978
    %v4017 = vpack.c.bf16 %v3981, %v3980
    %v4018 = vpack.c.bf16 %v3983, %v3982
    %v4019 = vpack.c.bf16 %v3985, %v3984
    %v4020 = vpack.c.bf16 %v3987, %v3986
    %v4021 = vpack.c.bf16 %v3989, %v3988
    %4022 = vmatprep.subr.bf16.mxu0 0
    %4023 = vmatpush1.bf16.msra.mxu0 %v4014
    %4024 = vmatprep.subr.bf16.mxu0 0
    %4025 = vmatpush1.bf16.msra.mxu0 %v4015
    %4026 = vmatprep.subr.bf16.mxu0 0
    %4027 = vmatpush1.bf16.msra.mxu0 %v4016
    %4028 = vmatprep.subr.bf16.mxu0 0
    %4029 = vmatpush1.bf16.msra.mxu0 %v4017
    %4030 = vmatprep.subr.bf16.mxu0 0
    %4031 = vmatpush1.bf16.msra.mxu0 %v4018
    %4032 = vmatprep.subr.bf16.mxu0 0
    %4033 = vmatpush1.bf16.msra.mxu0 %v4019
    %4034 = vmatprep.subr.bf16.mxu0 0
    %4035 = vmatpush1.bf16.msra.mxu0 %v4020
    %4036 = vmatprep.subr.bf16.mxu0 0
    %4037 = vmatpush1.bf16.msra.mxu0 %v4021
    %4038 = vmatprep.subr.bf16.mxu0 0
    %4039 = vmatpush1.bf16.msra.mxu0 0
    %4040 = vmatprep.subr.bf16.mxu0 0
    %4041 = vmatpush1.bf16.msra.mxu0 0
    %4042 = vmatprep.subr.bf16.mxu0 0
    %4043 = vmatpush1.bf16.msra.mxu0 0
    %4044 = vmatprep.subr.bf16.mxu0 0
    %4045 = vmatpush1.bf16.msra.mxu0 0
    %4046 = vmatprep.subr.bf16.mxu0 0
    %4047 = vmatpush1.bf16.msra.mxu0 0
    %4048 = vmatprep.subr.bf16.mxu0 0
    %4049 = vmatpush1.bf16.msra.mxu0 0
    %4050 = vmatprep.subr.bf16.mxu0 0
    %4051 = vmatpush1.bf16.msra.mxu0 0
    %4052 = vmatprep.subr.bf16.mxu0 0
    %4053 = vmatpush1.bf16.msra.mxu0 0
    %4054 = vmatprep.mubr.bf16.mxu0 0
    %4055 = vmatmul.mubr.bf16.gmra.mrb[0].mxu0 %v3990
    %v4056 = vpop.f32.mrb[0].mxu0
    %v4057 = vadd.f32 0.0, %v4056
    %v4058 = vpop.f32.mrb[0].mxu0
    %v4059 = vpop.f32.mrb[0].mxu0
    %v4060 = vadd.f32 0.0, %v4059
    %v4061 = vpop.f32.mrb[0].mxu0
    %4062 = vmatprep.mubr.bf16.mxu0 0
    %4063 = vmatmul.mubr.bf16.gmra.mrb[0].mxu0 %v3991
    %v4064 = vpop.f32.mrb[0].mxu0
    %v4065 = vadd.f32 0.0, %v4064
    %v4066 = vpop.f32.mrb[0].mxu0
    %v4067 = vpop.f32.mrb[0].mxu0
    %v4068 = vadd.f32 0.0, %v4067
    %v4069 = vpop.f32.mrb[0].mxu0
    %4070 = vmatprep.mubr.bf16.mxu0 0
    %4071 = vmatmul.mubr.bf16.gmra.mrb[0].mxu0 %v3992
    %v4072 = vpop.f32.mrb[0].mxu0
    %v4073 = vadd.f32 0.0, %v4072
    %v4074 = vpop.f32.mrb[0].mxu0
    %v4075 = vpop.f32.mrb[0].mxu0
    %v4076 = vadd.f32 0.0, %v4075
    %v4077 = vpop.f32.mrb[0].mxu0
    %4078 = vmatprep.mubr.bf16.mxu0 0
    %4079 = vmatmul.mubr.bf16.gmra.mrb[0].mxu0 %v3993
    %v4080 = vpop.f32.mrb[0].mxu0
    %v4081 = vadd.f32 0.0, %v4080
    %v4082 = vpop.f32.mrb[0].mxu0
    %v4083 = vpop.f32.mrb[0].mxu0
    %v4084 = vadd.f32 0.0, %v4083
    %v4085 = vpop.f32.mrb[0].mxu0
    %4086 = vmatprep.mubr.bf16.mxu0 0
    %4087 = vmatmul.mubr.bf16.gmra.mrb[0].mxu0 %v3994
    %v4088 = vpop.f32.mrb[0].mxu0
    %v4089 = vadd.f32 0.0, %v4088
    %v4090 = vpop.f32.mrb[0].mxu0
    %v4091 = vpop.f32.mrb[0].mxu0
    %v4092 = vadd.f32 0.0, %v4091
    %v4093 = vpop.f32.mrb[0].mxu0
    %4094 = vmatprep.mubr.bf16.mxu0 0
    %4095 = vmatmul.mubr.bf16.gmra.mrb[0].mxu0 %v3995
    %v4096 = vpop.f32.mrb[0].mxu0
    %v4097 = vadd.f32 0.0, %v4096
    %v4098 = vpop.f32.mrb[0].mxu0
    %v4099 = vpop.f32.mrb[0].mxu0
    %v4100 = vadd.f32 0.0, %v4099
    %v4101 = vpop.f32.mrb[0].mxu0
    %4102 = vmatprep.mubr.bf16.mxu0 0
    %4103 = vmatmul.mubr.bf16.gmra.mrb[0].mxu0 %v3996
    %v4104 = vpop.f32.mrb[0].mxu0
    %v4105 = vadd.f32 0.0, %v4104
    %v4106 = vpop.f32.mrb[0].mxu0
    %v4107 = vpop.f32.mrb[0].mxu0
    %v4108 = vadd.f32 0.0, %v4107
    %v4109 = vpop.f32.mrb[0].mxu0
    %4110 = vmatprep.mubr.bf16.mxu0 0
    %4111 = vmatmul.mubr.bf16.gmra.mrb[0].mxu0 %v3997
    %v4112 = vpop.f32.mrb[0].mxu0
    %v4113 = vadd.f32 0.0, %v4112
    %v4114 = vpop.f32.mrb[0].mxu0
    %v4115 = vpop.f32.mrb[0].mxu0
    %v4116 = vadd.f32 0.0, %v4115
    %v4117 = vpop.f32.mrb[0].mxu0
    %4118 = vmatprep.mubr.bf16.mxu0 0
    %4119 = vmatmul.mubr.bf16.gmra.mrb[0].mxu0 %v3998
    %v4120 = vpop.f32.mrb[0].mxu0
    %v4121 = vadd.f32 0.0, %v4120
    %v4122 = vpop.f32.mrb[0].mxu0
    %v4123 = vpop.f32.mrb[0].mxu0
    %v4124 = vadd.f32 0.0, %v4123
    %v4125 = vpop.f32.mrb[0].mxu0
    %4126 = vmatprep.mubr.bf16.mxu0 0
    %4127 = vmatmul.mubr.bf16.gmra.mrb[0].mxu0 %v3999
    %v4128 = vpop.f32.mrb[0].mxu0
    %v4129 = vadd.f32 0.0, %v4128
    %v4130 = vpop.f32.mrb[0].mxu0
    %v4131 = vpop.f32.mrb[0].mxu0
    %v4132 = vadd.f32 0.0, %v4131
    %v4133 = vpop.f32.mrb[0].mxu0
    %4134 = vmatprep.mubr.bf16.mxu0 0
    %4135 = vmatmul.mubr.bf16.gmra.mrb[0].mxu0 %v4000
    %v4136 = vpop.f32.mrb[0].mxu0
    %v4137 = vadd.f32 0.0, %v4136
    %v4138 = vpop.f32.mrb[0].mxu0
    %v4139 = vpop.f32.mrb[0].mxu0
    %v4140 = vadd.f32 0.0, %v4139
    %v4141 = vpop.f32.mrb[0].mxu0
    %4142 = vmatprep.mubr.bf16.mxu0 0
    %4143 = vmatmul.mubr.bf16.gmra.mrb[0].mxu0 %v4001
    %v4144 = vpop.f32.mrb[0].mxu0
    %v4145 = vadd.f32 0.0, %v4144
    %v4146 = vpop.f32.mrb[0].mxu0
    %v4147 = vpop.f32.mrb[0].mxu0
    %v4148 = vadd.f32 0.0, %v4147
    %v4149 = vpop.f32.mrb[0].mxu0
    %4150 = vmatprep.mubr.bf16.mxu0 0
    %4151 = vmatmul.mubr.bf16.gmra.mrb[0].mxu0 %v4002
    %v4152 = vpop.f32.mrb[0].mxu0
    %v4153 = vadd.f32 0.0, %v4152
    %v4154 = vpop.f32.mrb[0].mxu0
    %v4155 = vpop.f32.mrb[0].mxu0
    %v4156 = vadd.f32 0.0, %v4155
    %v4157 = vpop.f32.mrb[0].mxu0
    %4158 = vmatprep.mubr.bf16.mxu0 0
    %4159 = vmatmul.mubr.bf16.gmra.mrb[0].mxu0 %v4003
    %v4160 = vpop.f32.mrb[0].mxu0
    %v4161 = vadd.f32 0.0, %v4160
    %v4162 = vpop.f32.mrb[0].mxu0
    %v4163 = vpop.f32.mrb[0].mxu0
    %v4164 = vadd.f32 0.0, %v4163
    %v4165 = vpop.f32.mrb[0].mxu0
    %4166 = vmatprep.mubr.bf16.mxu0 0
    %4167 = vmatmul.mubr.bf16.gmra.mrb[0].mxu0 %v4004
    %v4168 = vpop.f32.mrb[0].mxu0
    %v4169 = vadd.f32 0.0, %v4168
    %v4170 = vpop.f32.mrb[0].mxu0
    %v4171 = vpop.f32.mrb[0].mxu0
    %v4172 = vadd.f32 0.0, %v4171
    %v4173 = vpop.f32.mrb[0].mxu0
    %4174 = vmatprep.mubr.bf16.mxu0 0
    %4175 = vmatmul.mubr.bf16.gmra.mrb[0].mxu0 %v4005
    %v4176 = vpop.f32.mrb[0].mxu0
    %v4177 = vadd.f32 0.0, %v4176
    %v4178 = vpop.f32.mrb[0].mxu0
    %v4179 = vpop.f32.mrb[0].mxu0
    %v4180 = vadd.f32 0.0, %v4179
    %v4181 = vpop.f32.mrb[0].mxu0
    %4182 = vmatprep.mubr.bf16.mxu0 0
    %4183 = vmatmul.mubr.bf16.gmra.mrb[0].mxu0 %v4006
    %v4184 = vpop.f32.mrb[0].mxu0
    %v4185 = vadd.f32 0.0, %v4184
    %v4186 = vpop.f32.mrb[0].mxu0
    %v4187 = vpop.f32.mrb[0].mxu0
    %v4188 = vadd.f32 0.0, %v4187
    %v4189 = vpop.f32.mrb[0].mxu0
    %4190 = vmatprep.mubr.bf16.mxu0 0
    %4191 = vmatmul.mubr.bf16.gmra.mrb[0].mxu0 %v4007
    %v4192 = vpop.f32.mrb[0].mxu0
    %v4193 = vadd.f32 0.0, %v4192
    %v4194 = vpop.f32.mrb[0].mxu0
    %v4195 = vpop.f32.mrb[0].mxu0
    %v4196 = vadd.f32 0.0, %v4195
    %v4197 = vpop.f32.mrb[0].mxu0
    %4198 = vmatprep.mubr.bf16.mxu0 0
    %4199 = vmatmul.mubr.bf16.gmra.mrb[0].mxu0 %v4008
    %v4200 = vpop.f32.mrb[0].mxu0
    %v4201 = vadd.f32 0.0, %v4200
    %v4202 = vpop.f32.mrb[0].mxu0
    %v4203 = vpop.f32.mrb[0].mxu0
    %v4204 = vadd.f32 0.0, %v4203
    %v4205 = vpop.f32.mrb[0].mxu0
    %4206 = vmatprep.mubr.bf16.mxu0 0
    %4207 = vmatmul.mubr.bf16.gmra.mrb[0].mxu0 %v4009
    %v4208 = vpop.f32.mrb[0].mxu0
    %v4209 = vadd.f32 0.0, %v4208
    %v4210 = vpop.f32.mrb[0].mxu0
    %v4211 = vpop.f32.mrb[0].mxu0
    %v4212 = vadd.f32 0.0, %v4211
    %v4213 = vpop.f32.mrb[0].mxu0
    %4214 = vmatprep.mubr.bf16.mxu0 0
    %4215 = vmatmul.mubr.bf16.gmra.mrb[0].mxu0 %v4010
    %v4216 = vpop.f32.mrb[0].mxu0
    %v4217 = vadd.f32 0.0, %v4216
    %v4218 = vpop.f32.mrb[0].mxu0
    %v4219 = vpop.f32.mrb[0].mxu0
    %v4220 = vadd.f32 0.0, %v4219
    %v4221 = vpop.f32.mrb[0].mxu0
    %4222 = vmatprep.mubr.bf16.mxu0 0
    %4223 = vmatmul.mubr.bf16.gmra.mrb[0].mxu0 %v4011
    %v4224 = vpop.f32.mrb[0].mxu0
    %v4225 = vadd.f32 0.0, %v4224
    %v4226 = vpop.f32.mrb[0].mxu0
    %v4227 = vpop.f32.mrb[0].mxu0
    %v4228 = vadd.f32 0.0, %v4227
    %v4229 = vpop.f32.mrb[0].mxu0
    %4230 = vmatprep.mubr.bf16.mxu0 0
    %4231 = vmatmul.mubr.bf16.gmra.mrb[0].mxu0 %v4012
    %v4232 = vpop.f32.mrb[0].mxu0
    %v4233 = vadd.f32 0.0, %v4232
    %v4234 = vpop.f32.mrb[0].mxu0
    %v4235 = vpop.f32.mrb[0].mxu0
    %v4236 = vadd.f32 0.0, %v4235
    %v4237 = vpop.f32.mrb[0].mxu0
    %4238 = vmatprep.mubr.bf16.mxu0 0
    %4239 = vmatmul.mubr.bf16.gmra.mrb[0].mxu0 %v4013
    %v4240 = vpop.f32.mrb[0].mxu0
    %v4241 = vadd.f32 0.0, %v4240
    %v4242 = vpop.f32.mrb[0].mxu0
    %v4243 = vpop.f32.mrb[0].mxu0
    %v4244 = vadd.f32 0.0, %v4243
    %v4245 = vpop.f32.mrb[0].mxu0
    %4246 = vdwg.mxu0
    %v4247 = vpack.c.bf16 %v4060, %v4057
    %v4248 = vpack.c.bf16 %v4068, %v4065
    %v4249 = vpack.c.bf16 %v4076, %v4073
    %v4250 = vpack.c.bf16 %v4084, %v4081
    %v4251 = vpack.c.bf16 %v4092, %v4089
    %v4252 = vpack.c.bf16 %v4100, %v4097
    %v4253 = vpack.c.bf16 %v4108, %v4105
    %v4254 = vpack.c.bf16 %v4116, %v4113
    %v4255 = vpack.c.bf16 %v4124, %v4121
    %v4256 = vpack.c.bf16 %v4132, %v4129
    %v4257 = vpack.c.bf16 %v4140, %v4137
    %v4258 = vpack.c.bf16 %v4148, %v4145
    %v4259 = vpack.c.bf16 %v4156, %v4153
    %v4260 = vpack.c.bf16 %v4164, %v4161
    %v4261 = vpack.c.bf16 %v4172, %v4169
    %v4262 = vpack.c.bf16 %v4180, %v4177
    %v4263 = vpack.c.bf16 %v4188, %v4185
    %v4264 = vpack.c.bf16 %v4196, %v4193
    %v4265 = vpack.c.bf16 %v4204, %v4201
    %v4266 = vpack.c.bf16 %v4212, %v4209
    %v4267 = vpack.c.bf16 %v4220, %v4217
    %v4268 = vpack.c.bf16 %v4228, %v4225
    %v4269 = vpack.c.bf16 %v4236, %v4233
    %v4270 = vpack.c.bf16 %v4244, %v4241
    %s4271 = scalar_lea.vmem %s7, 2
    %v4272 = vld [vmem:[%s4271] sm:$0x1]
    %v4274 = vlaneseq
    %v4275 = vshrl.u32 %v4274, 7
    %v4276 = vsub.s32 0, %v4275
    %v4277 = vrot.slane %v4272, %v4276
    %4279 = vmatprep.subr.bf16.mxu0 0
    %4280 = vmatpush1.bf16.msra.mxu0 %v4247
    %4281 = vmatprep.subr.bf16.mxu0 0
    %4282 = vmatpush1.bf16.msra.mxu0 %v4248
    %4283 = vmatprep.subr.bf16.mxu0 0
    %4284 = vmatpush1.bf16.msra.mxu0 %v4249
    %4285 = vmatprep.subr.bf16.mxu0 0
    %4286 = vmatpush1.bf16.msra.mxu0 %v4250
    %4287 = vmatprep.subr.bf16.mxu0 0
    %4288 = vmatpush1.bf16.msra.mxu0 %v4251
    %4289 = vmatprep.subr.bf16.mxu0 0
    %4290 = vmatpush1.bf16.msra.mxu0 %v4252
    %4291 = vmatprep.subr.bf16.mxu0 0
    %4292 = vmatpush1.bf16.msra.mxu0 %v4253
    %4293 = vmatprep.subr.bf16.mxu0 0
    %4294 = vmatpush1.bf16.msra.mxu0 %v4254
    %4295 = vmatprep.subr.bf16.mxu0 0
    %4296 = vmatpush1.bf16.msra.mxu0 %v4255
    %4297 = vmatprep.subr.bf16.mxu0 0
    %4298 = vmatpush1.bf16.msra.mxu0 %v4256
    %4299 = vmatprep.subr.bf16.mxu0 0
    %4300 = vmatpush1.bf16.msra.mxu0 %v4257
    %4301 = vmatprep.subr.bf16.mxu0 0
    %4302 = vmatpush1.bf16.msra.mxu0 %v4258
    %4303 = vmatprep.subr.bf16.mxu0 0
    %4304 = vmatpush1.bf16.msra.mxu0 %v4259
    %4305 = vmatprep.subr.bf16.mxu0 0
    %4306 = vmatpush1.bf16.msra.mxu0 %v4260
    %4307 = vmatprep.subr.bf16.mxu0 0
    %4308 = vmatpush1.bf16.msra.mxu0 %v4261
    %4309 = vmatprep.subr.bf16.mxu0 0
    %4310 = vmatpush1.bf16.msra.mxu0 %v4262
    %4311 = vmatprep.mubr.bf16.mxu0 %v1510
    %4312 = vmatmul.mubr.bf16.gmra.mrb[0].mxu0 %v1509
    %v4313 = vpop.f32.mrb[0].mxu0
    %v4314 = vadd.f32 %v4277, %v4313
    %v4315 = vpop.f32.mrb[0].mxu0
    %v4316 = vpop.f32.mrb[0].mxu0
    %v4317 = vadd.f32 %v4277, %v4316
    %v4318 = vpop.f32.mrb[0].mxu0
    %4319 = vmatprep.mubr.bf16.mxu0 %v1513
    %4320 = vmatmul.mubr.bf16.gmra.mrb[0].mxu0 %v1512
    %v4321 = vpop.f32.mrb[0].mxu0
    %v4322 = vadd.f32 %v4277, %v4321
    %v4323 = vpop.f32.mrb[0].mxu0
    %v4324 = vpop.f32.mrb[0].mxu0
    %v4325 = vadd.f32 %v4277, %v4324
    %v4326 = vpop.f32.mrb[0].mxu0
    %4327 = vmatprep.mubr.bf16.mxu0 %v1516
    %4328 = vmatmul.mubr.bf16.gmra.mrb[0].mxu0 %v1515
    %v4329 = vpop.f32.mrb[0].mxu0
    %v4330 = vadd.f32 %v4277, %v4329
    %v4331 = vpop.f32.mrb[0].mxu0
    %v4332 = vpop.f32.mrb[0].mxu0
    %v4333 = vadd.f32 %v4277, %v4332
    %v4334 = vpop.f32.mrb[0].mxu0
    %4335 = vmatprep.mubr.bf16.mxu0 %v1519
    %4336 = vmatmul.mubr.bf16.gmra.mrb[0].mxu0 %v1518
    %v4337 = vpop.f32.mrb[0].mxu0
    %v4338 = vadd.f32 %v4277, %v4337
    %v4339 = vpop.f32.mrb[0].mxu0
    %v4340 = vpop.f32.mrb[0].mxu0
    %v4341 = vadd.f32 %v4277, %v4340
    %v4342 = vpop.f32.mrb[0].mxu0
    %4343 = vmatprep.mubr.bf16.mxu0 %v1522
    %4344 = vmatmul.mubr.bf16.gmra.mrb[0].mxu0 %v1521
    %v4345 = vpop.f32.mrb[0].mxu0
    %v4346 = vadd.f32 %v4277, %v4345
    %v4347 = vpop.f32.mrb[0].mxu0
    %v4348 = vpop.f32.mrb[0].mxu0
    %v4349 = vadd.f32 %v4277, %v4348
    %v4350 = vpop.f32.mrb[0].mxu0
    %4351 = vmatprep.mubr.bf16.mxu0 %v1525
    %4352 = vmatmul.mubr.bf16.gmra.mrb[0].mxu0 %v1524
    %v4353 = vpop.f32.mrb[0].mxu0
    %v4354 = vadd.f32 %v4277, %v4353
    %v4355 = vpop.f32.mrb[0].mxu0
    %v4356 = vpop.f32.mrb[0].mxu0
    %v4357 = vadd.f32 %v4277, %v4356
    %v4358 = vpop.f32.mrb[0].mxu0
    %4359 = vmatprep.mubr.bf16.mxu0 %v1528
    %4360 = vmatmul.mubr.bf16.gmra.mrb[0].mxu0 %v1527
    %v4361 = vpop.f32.mrb[0].mxu0
    %v4362 = vadd.f32 %v4277, %v4361
    %v4363 = vpop.f32.mrb[0].mxu0
    %v4364 = vpop.f32.mrb[0].mxu0
    %v4365 = vadd.f32 %v4277, %v4364
    %v4366 = vpop.f32.mrb[0].mxu0
    %4367 = vmatprep.mubr.bf16.mxu0 %v1531
    %4368 = vmatmul.mubr.bf16.gmra.mrb[0].mxu0 %v1530
    %v4369 = vpop.f32.mrb[0].mxu0
    %v4370 = vadd.f32 %v4277, %v4369
    %v4371 = vpop.f32.mrb[0].mxu0
    %v4372 = vpop.f32.mrb[0].mxu0
    %v4373 = vadd.f32 %v4277, %v4372
    %v4374 = vpop.f32.mrb[0].mxu0
    %4375 = vmatprep.mubr.bf16.mxu0 %v1534
    %4376 = vmatmul.mubr.bf16.gmra.mrb[0].mxu0 %v1533
    %v4377 = vpop.f32.mrb[0].mxu0
    %v4378 = vadd.f32 %v4277, %v4377
    %v4379 = vpop.f32.mrb[0].mxu0
    %v4380 = vpop.f32.mrb[0].mxu0
    %v4381 = vadd.f32 %v4277, %v4380
    %v4382 = vpop.f32.mrb[0].mxu0
    %4383 = vmatprep.mubr.bf16.mxu0 %v1537
    %4384 = vmatmul.mubr.bf16.gmra.mrb[0].mxu0 %v1536
    %v4385 = vpop.f32.mrb[0].mxu0
    %v4386 = vadd.f32 %v4277, %v4385
    %v4387 = vpop.f32.mrb[0].mxu0
    %v4388 = vpop.f32.mrb[0].mxu0
    %v4389 = vadd.f32 %v4277, %v4388
    %v4390 = vpop.f32.mrb[0].mxu0
    %4391 = vmatprep.mubr.bf16.mxu0 %v1540
    %4392 = vmatmul.mubr.bf16.gmra.mrb[0].mxu0 %v1539
    %v4393 = vpop.f32.mrb[0].mxu0
    %v4394 = vadd.f32 %v4277, %v4393
    %v4395 = vpop.f32.mrb[0].mxu0
    %v4396 = vpop.f32.mrb[0].mxu0
    %v4397 = vadd.f32 %v4277, %v4396
    %v4398 = vpop.f32.mrb[0].mxu0
    %4399 = vmatprep.mubr.bf16.mxu0 %v1543
    %4400 = vmatmul.mubr.bf16.gmra.mrb[0].mxu0 %v1542
    %v4401 = vpop.f32.mrb[0].mxu0
    %v4402 = vadd.f32 %v4277, %v4401
    %v4403 = vpop.f32.mrb[0].mxu0
    %v4404 = vpop.f32.mrb[0].mxu0
    %v4405 = vadd.f32 %v4277, %v4404
    %v4406 = vpop.f32.mrb[0].mxu0
    %4407 = vmatprep.mubr.bf16.mxu0 %v1546
    %4408 = vmatmul.mubr.bf16.gmra.mrb[0].mxu0 %v1545
    %v4409 = vpop.f32.mrb[0].mxu0
    %v4410 = vadd.f32 %v4277, %v4409
    %v4411 = vpop.f32.mrb[0].mxu0
    %v4412 = vpop.f32.mrb[0].mxu0
    %v4413 = vadd.f32 %v4277, %v4412
    %v4414 = vpop.f32.mrb[0].mxu0
    %4415 = vmatprep.mubr.bf16.mxu0 %v1549
    %4416 = vmatmul.mubr.bf16.gmra.mrb[0].mxu0 %v1548
    %v4417 = vpop.f32.mrb[0].mxu0
    %v4418 = vadd.f32 %v4277, %v4417
    %v4419 = vpop.f32.mrb[0].mxu0
    %v4420 = vpop.f32.mrb[0].mxu0
    %v4421 = vadd.f32 %v4277, %v4420
    %v4422 = vpop.f32.mrb[0].mxu0
    %4423 = vmatprep.mubr.bf16.mxu0 %v1552
    %4424 = vmatmul.mubr.bf16.gmra.mrb[0].mxu0 %v1551
    %v4425 = vpop.f32.mrb[0].mxu0
    %v4426 = vadd.f32 %v4277, %v4425
    %v4427 = vpop.f32.mrb[0].mxu0
    %v4428 = vpop.f32.mrb[0].mxu0
    %v4429 = vadd.f32 %v4277, %v4428
    %v4430 = vpop.f32.mrb[0].mxu0
    %4431 = vmatprep.mubr.bf16.mxu0 %v1555
    %4432 = vmatmul.mubr.bf16.gmra.mrb[0].mxu0 %v1554
    %v4433 = vpop.f32.mrb[0].mxu0
    %v4434 = vadd.f32 %v4277, %v4433
    %v4435 = vpop.f32.mrb[0].mxu0
    %v4436 = vpop.f32.mrb[0].mxu0
    %v4437 = vadd.f32 %v4277, %v4436
    %v4438 = vpop.f32.mrb[0].mxu0
    %4439 = vmatprep.mubr.bf16.mxu0 %v1558
    %4440 = vmatmul.mubr.bf16.gmra.mrb[0].mxu0 %v1557
    %v4441 = vpop.f32.mrb[0].mxu0
    %v4442 = vadd.f32 %v4277, %v4441
    %v4443 = vpop.f32.mrb[0].mxu0
    %v4444 = vpop.f32.mrb[0].mxu0
    %v4445 = vadd.f32 %v4277, %v4444
    %v4446 = vpop.f32.mrb[0].mxu0
    %4447 = vmatprep.mubr.bf16.mxu0 %v1561
    %4448 = vmatmul.mubr.bf16.gmra.mrb[0].mxu0 %v1560
    %v4449 = vpop.f32.mrb[0].mxu0
    %v4450 = vadd.f32 %v4277, %v4449
    %v4451 = vpop.f32.mrb[0].mxu0
    %v4452 = vpop.f32.mrb[0].mxu0
    %v4453 = vadd.f32 %v4277, %v4452
    %v4454 = vpop.f32.mrb[0].mxu0
    %4455 = vmatprep.mubr.bf16.mxu0 %v1564
    %4456 = vmatmul.mubr.bf16.gmra.mrb[0].mxu0 %v1563
    %v4457 = vpop.f32.mrb[0].mxu0
    %v4458 = vadd.f32 %v4277, %v4457
    %v4459 = vpop.f32.mrb[0].mxu0
    %v4460 = vpop.f32.mrb[0].mxu0
    %v4461 = vadd.f32 %v4277, %v4460
    %v4462 = vpop.f32.mrb[0].mxu0
    %4463 = vmatprep.mubr.bf16.mxu0 %v1567
    %4464 = vmatmul.mubr.bf16.gmra.mrb[0].mxu0 %v1566
    %v4465 = vpop.f32.mrb[0].mxu0
    %v4466 = vadd.f32 %v4277, %v4465
    %v4467 = vpop.f32.mrb[0].mxu0
    %v4468 = vpop.f32.mrb[0].mxu0
    %v4469 = vadd.f32 %v4277, %v4468
    %v4470 = vpop.f32.mrb[0].mxu0
    %4471 = vmatprep.mubr.bf16.mxu0 %v1570
    %4472 = vmatmul.mubr.bf16.gmra.mrb[0].mxu0 %v1569
    %v4473 = vpop.f32.mrb[0].mxu0
    %v4474 = vadd.f32 %v4277, %v4473
    %v4475 = vpop.f32.mrb[0].mxu0
    %v4476 = vpop.f32.mrb[0].mxu0
    %v4477 = vadd.f32 %v4277, %v4476
    %v4478 = vpop.f32.mrb[0].mxu0
    %4479 = vmatprep.mubr.bf16.mxu0 %v1573
    %4480 = vmatmul.mubr.bf16.gmra.mrb[0].mxu0 %v1572
    %v4481 = vpop.f32.mrb[0].mxu0
    %v4482 = vadd.f32 %v4277, %v4481
    %v4483 = vpop.f32.mrb[0].mxu0
    %v4484 = vpop.f32.mrb[0].mxu0
    %v4485 = vadd.f32 %v4277, %v4484
    %v4486 = vpop.f32.mrb[0].mxu0
    %4487 = vmatprep.mubr.bf16.mxu0 %v1576
    %4488 = vmatmul.mubr.bf16.gmra.mrb[0].mxu0 %v1575
    %v4489 = vpop.f32.mrb[0].mxu0
    %v4490 = vadd.f32 %v4277, %v4489
    %v4491 = vpop.f32.mrb[0].mxu0
    %v4492 = vpop.f32.mrb[0].mxu0
    %v4493 = vadd.f32 %v4277, %v4492
    %v4494 = vpop.f32.mrb[0].mxu0
    %4495 = vmatprep.mubr.bf16.mxu0 %v1579
    %4496 = vmatmul.mubr.bf16.gmra.mrb[0].mxu0 %v1578
    %v4497 = vpop.f32.mrb[0].mxu0
    %v4498 = vadd.f32 %v4277, %v4497
    %v4499 = vpop.f32.mrb[0].mxu0
    %v4500 = vpop.f32.mrb[0].mxu0
    %v4501 = vadd.f32 %v4277, %v4500
    %v4502 = vpop.f32.mrb[0].mxu0
    %4503 = vdwg.mxu0
    %4504 = vmatprep.subr.bf16.mxu0 0
    %4505 = vmatpush1.bf16.msra.mxu0 %v4263
    %4506 = vmatprep.subr.bf16.mxu0 0
    %4507 = vmatpush1.bf16.msra.mxu0 %v4264
    %4508 = vmatprep.subr.bf16.mxu0 0
    %4509 = vmatpush1.bf16.msra.mxu0 %v4265
    %4510 = vmatprep.subr.bf16.mxu0 0
    %4511 = vmatpush1.bf16.msra.mxu0 %v4266
    %4512 = vmatprep.subr.bf16.mxu0 0
    %4513 = vmatpush1.bf16.msra.mxu0 %v4267
    %4514 = vmatprep.subr.bf16.mxu0 0
    %4515 = vmatpush1.bf16.msra.mxu0 %v4268
    %4516 = vmatprep.subr.bf16.mxu0 0
    %4517 = vmatpush1.bf16.msra.mxu0 %v4269
    %4518 = vmatprep.subr.bf16.mxu0 0
    %4519 = vmatpush1.bf16.msra.mxu0 %v4270
    %4520 = vmatprep.subr.bf16.mxu0 0
    %4521 = vmatpush1.bf16.msra.mxu0 0
    %4522 = vmatprep.subr.bf16.mxu0 0
    %4523 = vmatpush1.bf16.msra.mxu0 0
    %4524 = vmatprep.subr.bf16.mxu0 0
    %4525 = vmatpush1.bf16.msra.mxu0 0
    %4526 = vmatprep.subr.bf16.mxu0 0
    %4527 = vmatpush1.bf16.msra.mxu0 0
    %4528 = vmatprep.subr.bf16.mxu0 0
    %4529 = vmatpush1.bf16.msra.mxu0 0
    %4530 = vmatprep.subr.bf16.mxu0 0
    %4531 = vmatpush1.bf16.msra.mxu0 0
    %4532 = vmatprep.subr.bf16.mxu0 0
    %4533 = vmatpush1.bf16.msra.mxu0 0
    %4534 = vmatprep.subr.bf16.mxu0 0
    %4535 = vmatpush1.bf16.msra.mxu0 0
    %4536 = vmatprep.mubr.bf16.mxu0 0
    %4537 = vmatmul.mubr.bf16.gmra.mrb[0].mxu0 %v1511
    %v4538 = vpop.f32.mrb[0].mxu0
    %v4539 = vadd.f32 %v4314, %v4538
    %v4540 = vpop.f32.mrb[0].mxu0
    %v4541 = vpop.f32.mrb[0].mxu0
    %v4542 = vadd.f32 %v4317, %v4541
    %v4543 = vpop.f32.mrb[0].mxu0
    %4544 = vmatprep.mubr.bf16.mxu0 0
    %4545 = vmatmul.mubr.bf16.gmra.mrb[0].mxu0 %v1514
    %v4546 = vpop.f32.mrb[0].mxu0
    %v4547 = vadd.f32 %v4322, %v4546
    %v4548 = vpop.f32.mrb[0].mxu0
    %v4549 = vpop.f32.mrb[0].mxu0
    %v4550 = vadd.f32 %v4325, %v4549
    %v4551 = vpop.f32.mrb[0].mxu0
    %4552 = vmatprep.mubr.bf16.mxu0 0
    %4553 = vmatmul.mubr.bf16.gmra.mrb[0].mxu0 %v1517
    %v4554 = vpop.f32.mrb[0].mxu0
    %v4555 = vadd.f32 %v4330, %v4554
    %v4556 = vpop.f32.mrb[0].mxu0
    %v4557 = vpop.f32.mrb[0].mxu0
    %v4558 = vadd.f32 %v4333, %v4557
    %v4559 = vpop.f32.mrb[0].mxu0
    %4560 = vmatprep.mubr.bf16.mxu0 0
    %4561 = vmatmul.mubr.bf16.gmra.mrb[0].mxu0 %v1520
    %v4562 = vpop.f32.mrb[0].mxu0
    %v4563 = vadd.f32 %v4338, %v4562
    %v4564 = vpop.f32.mrb[0].mxu0
    %v4565 = vpop.f32.mrb[0].mxu0
    %v4566 = vadd.f32 %v4341, %v4565
    %v4567 = vpop.f32.mrb[0].mxu0
    %4568 = vmatprep.mubr.bf16.mxu0 0
    %4569 = vmatmul.mubr.bf16.gmra.mrb[0].mxu0 %v1523
    %v4570 = vpop.f32.mrb[0].mxu0
    %v4571 = vadd.f32 %v4346, %v4570
    %v4572 = vpop.f32.mrb[0].mxu0
    %v4573 = vpop.f32.mrb[0].mxu0
    %v4574 = vadd.f32 %v4349, %v4573
    %v4575 = vpop.f32.mrb[0].mxu0
    %4576 = vmatprep.mubr.bf16.mxu0 0
    %4577 = vmatmul.mubr.bf16.gmra.mrb[0].mxu0 %v1526
    %v4578 = vpop.f32.mrb[0].mxu0
    %v4579 = vadd.f32 %v4354, %v4578
    %v4580 = vpop.f32.mrb[0].mxu0
    %v4581 = vpop.f32.mrb[0].mxu0
    %v4582 = vadd.f32 %v4357, %v4581
    %v4583 = vpop.f32.mrb[0].mxu0
    %4584 = vmatprep.mubr.bf16.mxu0 0
    %4585 = vmatmul.mubr.bf16.gmra.mrb[0].mxu0 %v1529
    %v4586 = vpop.f32.mrb[0].mxu0
    %v4587 = vadd.f32 %v4362, %v4586
    %v4588 = vpop.f32.mrb[0].mxu0
    %v4589 = vpop.f32.mrb[0].mxu0
    %v4590 = vadd.f32 %v4365, %v4589
    %v4591 = vpop.f32.mrb[0].mxu0
    %4592 = vmatprep.mubr.bf16.mxu0 0
    %4593 = vmatmul.mubr.bf16.gmra.mrb[0].mxu0 %v1532
    %v4594 = vpop.f32.mrb[0].mxu0
    %v4595 = vadd.f32 %v4370, %v4594
    %v4596 = vpop.f32.mrb[0].mxu0
    %v4597 = vpop.f32.mrb[0].mxu0
    %v4598 = vadd.f32 %v4373, %v4597
    %v4599 = vpop.f32.mrb[0].mxu0
    %4600 = vmatprep.mubr.bf16.mxu0 0
    %4601 = vmatmul.mubr.bf16.gmra.mrb[0].mxu0 %v1535
    %v4602 = vpop.f32.mrb[0].mxu0
    %v4603 = vadd.f32 %v4378, %v4602
    %v4604 = vpop.f32.mrb[0].mxu0
    %v4605 = vpop.f32.mrb[0].mxu0
    %v4606 = vadd.f32 %v4381, %v4605
    %v4607 = vpop.f32.mrb[0].mxu0
    %4608 = vmatprep.mubr.bf16.mxu0 0
    %4609 = vmatmul.mubr.bf16.gmra.mrb[0].mxu0 %v1538
    %v4610 = vpop.f32.mrb[0].mxu0
    %v4611 = vadd.f32 %v4386, %v4610
    %v4612 = vpop.f32.mrb[0].mxu0
    %v4613 = vpop.f32.mrb[0].mxu0
    %v4614 = vadd.f32 %v4389, %v4613
    %v4615 = vpop.f32.mrb[0].mxu0
    %4616 = vmatprep.mubr.bf16.mxu0 0
    %4617 = vmatmul.mubr.bf16.gmra.mrb[0].mxu0 %v1541
    %v4618 = vpop.f32.mrb[0].mxu0
    %v4619 = vadd.f32 %v4394, %v4618
    %v4620 = vpop.f32.mrb[0].mxu0
    %v4621 = vpop.f32.mrb[0].mxu0
    %v4622 = vadd.f32 %v4397, %v4621
    %v4623 = vpop.f32.mrb[0].mxu0
    %4624 = vmatprep.mubr.bf16.mxu0 0
    %4625 = vmatmul.mubr.bf16.gmra.mrb[0].mxu0 %v1544
    %v4626 = vpop.f32.mrb[0].mxu0
    %v4627 = vadd.f32 %v4402, %v4626
    %v4628 = vpop.f32.mrb[0].mxu0
    %v4629 = vpop.f32.mrb[0].mxu0
    %v4630 = vadd.f32 %v4405, %v4629
    %v4631 = vpop.f32.mrb[0].mxu0
    %4632 = vmatprep.mubr.bf16.mxu0 0
    %4633 = vmatmul.mubr.bf16.gmra.mrb[0].mxu0 %v1547
    %v4634 = vpop.f32.mrb[0].mxu0
    %v4635 = vadd.f32 %v4410, %v4634
    %v4636 = vpop.f32.mrb[0].mxu0
    %v4637 = vpop.f32.mrb[0].mxu0
    %v4638 = vadd.f32 %v4413, %v4637
    %v4639 = vpop.f32.mrb[0].mxu0
    %4640 = vmatprep.mubr.bf16.mxu0 0
    %4641 = vmatmul.mubr.bf16.gmra.mrb[0].mxu0 %v1550
    %v4642 = vpop.f32.mrb[0].mxu0
    %v4643 = vadd.f32 %v4418, %v4642
    %v4644 = vpop.f32.mrb[0].mxu0
    %v4645 = vpop.f32.mrb[0].mxu0
    %v4646 = vadd.f32 %v4421, %v4645
    %v4647 = vpop.f32.mrb[0].mxu0
    %4648 = vmatprep.mubr.bf16.mxu0 0
    %4649 = vmatmul.mubr.bf16.gmra.mrb[0].mxu0 %v1553
    %v4650 = vpop.f32.mrb[0].mxu0
    %v4651 = vadd.f32 %v4426, %v4650
    %v4652 = vpop.f32.mrb[0].mxu0
    %v4653 = vpop.f32.mrb[0].mxu0
    %v4654 = vadd.f32 %v4429, %v4653
    %v4655 = vpop.f32.mrb[0].mxu0
    %4656 = vmatprep.mubr.bf16.mxu0 0
    %4657 = vmatmul.mubr.bf16.gmra.mrb[0].mxu0 %v1556
    %v4658 = vpop.f32.mrb[0].mxu0
    %v4659 = vadd.f32 %v4434, %v4658
    %v4660 = vpop.f32.mrb[0].mxu0
    %v4661 = vpop.f32.mrb[0].mxu0
    %v4662 = vadd.f32 %v4437, %v4661
    %v4663 = vpop.f32.mrb[0].mxu0
    %4664 = vmatprep.mubr.bf16.mxu0 0
    %4665 = vmatmul.mubr.bf16.gmra.mrb[0].mxu0 %v1559
    %v4666 = vpop.f32.mrb[0].mxu0
    %v4667 = vadd.f32 %v4442, %v4666
    %v4668 = vpop.f32.mrb[0].mxu0
    %v4669 = vpop.f32.mrb[0].mxu0
    %v4670 = vadd.f32 %v4445, %v4669
    %v4671 = vpop.f32.mrb[0].mxu0
    %4672 = vmatprep.mubr.bf16.mxu0 0
    %4673 = vmatmul.mubr.bf16.gmra.mrb[0].mxu0 %v1562
    %v4674 = vpop.f32.mrb[0].mxu0
    %v4675 = vadd.f32 %v4450, %v4674
    %v4676 = vpop.f32.mrb[0].mxu0
    %v4677 = vpop.f32.mrb[0].mxu0
    %v4678 = vadd.f32 %v4453, %v4677
    %v4679 = vpop.f32.mrb[0].mxu0
    %4680 = vmatprep.mubr.bf16.mxu0 0
    %4681 = vmatmul.mubr.bf16.gmra.mrb[0].mxu0 %v1565
    %v4682 = vpop.f32.mrb[0].mxu0
    %v4683 = vadd.f32 %v4458, %v4682
    %v4684 = vpop.f32.mrb[0].mxu0
    %v4685 = vpop.f32.mrb[0].mxu0
    %v4686 = vadd.f32 %v4461, %v4685
    %v4687 = vpop.f32.mrb[0].mxu0
    %4688 = vmatprep.mubr.bf16.mxu0 0
    %4689 = vmatmul.mubr.bf16.gmra.mrb[0].mxu0 %v1568
    %v4690 = vpop.f32.mrb[0].mxu0
    %v4691 = vadd.f32 %v4466, %v4690
    %v4692 = vpop.f32.mrb[0].mxu0
    %v4693 = vpop.f32.mrb[0].mxu0
    %v4694 = vadd.f32 %v4469, %v4693
    %v4695 = vpop.f32.mrb[0].mxu0
    %4696 = vmatprep.mubr.bf16.mxu0 0
    %4697 = vmatmul.mubr.bf16.gmra.mrb[0].mxu0 %v1571
    %v4698 = vpop.f32.mrb[0].mxu0
    %v4699 = vadd.f32 %v4474, %v4698
    %v4700 = vpop.f32.mrb[0].mxu0
    %v4701 = vpop.f32.mrb[0].mxu0
    %v4702 = vadd.f32 %v4477, %v4701
    %v4703 = vpop.f32.mrb[0].mxu0
    %4704 = vmatprep.mubr.bf16.mxu0 0
    %4705 = vmatmul.mubr.bf16.gmra.mrb[0].mxu0 %v1574
    %v4706 = vpop.f32.mrb[0].mxu0
    %v4707 = vadd.f32 %v4482, %v4706
    %v4708 = vpop.f32.mrb[0].mxu0
    %v4709 = vpop.f32.mrb[0].mxu0
    %v4710 = vadd.f32 %v4485, %v4709
    %v4711 = vpop.f32.mrb[0].mxu0
    %4712 = vmatprep.mubr.bf16.mxu0 0
    %4713 = vmatmul.mubr.bf16.gmra.mrb[0].mxu0 %v1577
    %v4714 = vpop.f32.mrb[0].mxu0
    %v4715 = vadd.f32 %v4490, %v4714
    %v4716 = vpop.f32.mrb[0].mxu0
    %v4717 = vpop.f32.mrb[0].mxu0
    %v4718 = vadd.f32 %v4493, %v4717
    %v4719 = vpop.f32.mrb[0].mxu0
    %4720 = vmatprep.mubr.bf16.mxu0 0
    %4721 = vmatmul.mubr.bf16.gmra.mrb[0].mxu0 %v1580
    %v4722 = vpop.f32.mrb[0].mxu0
    %v4723 = vadd.f32 %v4498, %v4722
    %v4724 = vpop.f32.mrb[0].mxu0
    %v4725 = vpop.f32.mrb[0].mxu0
    %v4726 = vadd.f32 %v4501, %v4725
    %v4727 = vpop.f32.mrb[0].mxu0
    %4728 = vdwg.mxu0
    %s4729 = scalar_lea.vmem %s10, 2
    %v4730 = vld [vmem:[%s4729] sm:$0x1]
    %s4731 = scalar_lea.vmem %s11, 2
    %v4732 = vld [vmem:[%s4731] sm:$0x1]
    %v4733 = vmul.f32 %v4539, %v364
    %v4734 = vmul.f32 %v4542, %v365
    %v4735 = vmul.f32 %v4547, %v366
    %v4736 = vmul.f32 %v4550, %v367
    %v4737 = vmul.f32 %v4555, %v368
    %v4738 = vmul.f32 %v4558, %v369
    %v4739 = vmul.f32 %v4563, %v370
    %v4740 = vmul.f32 %v4566, %v371
    %v4741 = vmul.f32 %v4571, %v372
    %v4742 = vmul.f32 %v4574, %v373
    %v4743 = vmul.f32 %v4579, %v374
    %v4744 = vmul.f32 %v4582, %v375
    %v4745 = vmul.f32 %v4587, %v376
    %v4746 = vmul.f32 %v4590, %v377
    %v4747 = vmul.f32 %v4595, %v378
    %v4748 = vmul.f32 %v4598, %v379
    %v4749 = vmul.f32 %v4603, %v380
    %v4750 = vmul.f32 %v4606, %v381
    %v4751 = vmul.f32 %v4611, %v382
    %v4752 = vmul.f32 %v4614, %v383
    %v4753 = vmul.f32 %v4619, %v384
    %v4754 = vmul.f32 %v4622, %v385
    %v4755 = vmul.f32 %v4627, %v386
    %v4756 = vmul.f32 %v4630, %v387
    %v4757 = vmul.f32 %v4635, %v388
    %v4758 = vmul.f32 %v4638, %v389
    %v4759 = vmul.f32 %v4643, %v390
    %v4760 = vmul.f32 %v4646, %v391
    %v4761 = vmul.f32 %v4651, %v392
    %v4762 = vmul.f32 %v4654, %v393
    %v4763 = vmul.f32 %v4659, %v394
    %v4764 = vmul.f32 %v4662, %v395
    %v4765 = vmul.f32 %v4667, %v396
    %v4766 = vmul.f32 %v4670, %v397
    %v4767 = vmul.f32 %v4675, %v398
    %v4768 = vmul.f32 %v4678, %v399
    %v4769 = vmul.f32 %v4683, %v400
    %v4770 = vmul.f32 %v4686, %v401
    %v4771 = vmul.f32 %v4691, %v402
    %v4772 = vmul.f32 %v4694, %v403
    %v4773 = vmul.f32 %v4699, %v404
    %v4774 = vmul.f32 %v4702, %v405
    %v4775 = vmul.f32 %v4707, %v406
    %v4776 = vmul.f32 %v4710, %v407
    %v4777 = vmul.f32 %v4715, %v408
    %v4778 = vmul.f32 %v4718, %v409
    %v4779 = vmul.f32 %v4723, %v410
    %v4780 = vmul.f32 %v4726, %v411
    %v4781 = vadd.f32 %v4733, %v4734
    %v4782 = vadd.f32 %v4781, %v4735
    %v4783 = vadd.f32 %v4782, %v4736
    %v4784 = vadd.f32 %v4783, %v4737
    %v4785 = vadd.f32 %v4784, %v4738
    %v4786 = vadd.f32 %v4785, %v4739
    %v4787 = vadd.f32 %v4786, %v4740
    %v4788 = vadd.f32 %v4787, %v4741
    %v4789 = vadd.f32 %v4788, %v4742
    %v4790 = vadd.f32 %v4789, %v4743
    %v4791 = vadd.f32 %v4790, %v4744
    %v4792 = vadd.f32 %v4791, %v4745
    %v4793 = vadd.f32 %v4792, %v4746
    %v4794 = vadd.f32 %v4793, %v4747
    %v4795 = vadd.f32 %v4794, %v4748
    %v4796 = vadd.f32 %v4795, %v4749
    %v4797 = vadd.f32 %v4796, %v4750
    %v4798 = vadd.f32 %v4797, %v4751
    %v4799 = vadd.f32 %v4798, %v4752
    %v4800 = vadd.f32 %v4799, %v4753
    %v4801 = vadd.f32 %v4800, %v4754
    %v4802 = vadd.f32 %v4801, %v4755
    %v4803 = vadd.f32 %v4802, %v4756
    %v4804 = vadd.f32 %v4803, %v4757
    %v4805 = vadd.f32 %v4804, %v4758
    %v4806 = vadd.f32 %v4805, %v4759
    %v4807 = vadd.f32 %v4806, %v4760
    %v4808 = vadd.f32 %v4807, %v4761
    %v4809 = vadd.f32 %v4808, %v4762
    %v4810 = vadd.f32 %v4809, %v4763
    %v4811 = vadd.f32 %v4810, %v4764
    %v4812 = vadd.f32 %v4811, %v4765
    %v4813 = vadd.f32 %v4812, %v4766
    %v4814 = vadd.f32 %v4813, %v4767
    %v4815 = vadd.f32 %v4814, %v4768
    %v4816 = vadd.f32 %v4815, %v4769
    %v4817 = vadd.f32 %v4816, %v4770
    %v4818 = vadd.f32 %v4817, %v4771
    %v4819 = vadd.f32 %v4818, %v4772
    %v4820 = vadd.f32 %v4819, %v4773
    %v4821 = vadd.f32 %v4820, %v4774
    %v4822 = vadd.f32 %v4821, %v4775
    %v4823 = vadd.f32 %v4822, %v4776
    %v4824 = vadd.f32 %v4823, %v4777
    %v4825 = vadd.f32 %v4824, %v4778
    %v4826 = vadd.f32 %v4825, %v4779
    %v4827 = vadd.f32 %v4826, %v4780
    %v4828 = vrot.slane %v4827, 4
    %v4829 = vadd.f32 %v4827, %v4828
    %v4830 = vrot.slane %v4829, 2
    %v4831 = vadd.f32 %v4829, %v4830
    %v4832 = vrot.slane %v4831, 1
    %v4833 = vadd.f32 %v4831, %v4832
    %v4834 = vmul.f32 %v4833, 0.003125
    %v4835 = vsub.f32 %v4539, %v4834
    %v4836 = vsub.f32 %v4542, %v4834
    %v4837 = vsub.f32 %v4547, %v4834
    %v4838 = vsub.f32 %v4550, %v4834
    %v4839 = vsub.f32 %v4555, %v4834
    %v4840 = vsub.f32 %v4558, %v4834
    %v4841 = vsub.f32 %v4563, %v4834
    %v4842 = vsub.f32 %v4566, %v4834
    %v4843 = vsub.f32 %v4571, %v4834
    %v4844 = vsub.f32 %v4574, %v4834
    %v4845 = vsub.f32 %v4579, %v4834
    %v4846 = vsub.f32 %v4582, %v4834
    %v4847 = vsub.f32 %v4587, %v4834
    %v4848 = vsub.f32 %v4590, %v4834
    %v4849 = vsub.f32 %v4595, %v4834
    %v4850 = vsub.f32 %v4598, %v4834
    %v4851 = vsub.f32 %v4603, %v4834
    %v4852 = vsub.f32 %v4606, %v4834
    %v4853 = vsub.f32 %v4611, %v4834
    %v4854 = vsub.f32 %v4614, %v4834
    %v4855 = vsub.f32 %v4619, %v4834
    %v4856 = vsub.f32 %v4622, %v4834
    %v4857 = vsub.f32 %v4627, %v4834
    %v4858 = vsub.f32 %v4630, %v4834
    %v4859 = vsub.f32 %v4635, %v4834
    %v4860 = vsub.f32 %v4638, %v4834
    %v4861 = vsub.f32 %v4643, %v4834
    %v4862 = vsub.f32 %v4646, %v4834
    %v4863 = vsub.f32 %v4651, %v4834
    %v4864 = vsub.f32 %v4654, %v4834
    %v4865 = vsub.f32 %v4659, %v4834
    %v4866 = vsub.f32 %v4662, %v4834
    %v4867 = vsub.f32 %v4667, %v4834
    %v4868 = vsub.f32 %v4670, %v4834
    %v4869 = vsub.f32 %v4675, %v4834
    %v4870 = vsub.f32 %v4678, %v4834
    %v4871 = vsub.f32 %v4683, %v4834
    %v4872 = vsub.f32 %v4686, %v4834
    %v4873 = vsub.f32 %v4691, %v4834
    %v4874 = vsub.f32 %v4694, %v4834
    %v4875 = vsub.f32 %v4699, %v4834
    %v4876 = vsub.f32 %v4702, %v4834
    %v4877 = vsub.f32 %v4707, %v4834
    %v4878 = vsub.f32 %v4710, %v4834
    %v4879 = vsub.f32 %v4715, %v4834
    %v4880 = vsub.f32 %v4718, %v4834
    %v4881 = vsub.f32 %v4723, %v4834
    %v4882 = vsub.f32 %v4726, %v4834
    %v4883 = vmul.f32 %v4835, %v364
    %v4884 = vmul.f32 %v4836, %v365
    %v4885 = vmul.f32 %v4837, %v366
    %v4886 = vmul.f32 %v4838, %v367
    %v4887 = vmul.f32 %v4839, %v368
    %v4888 = vmul.f32 %v4840, %v369
    %v4889 = vmul.f32 %v4841, %v370
    %v4890 = vmul.f32 %v4842, %v371
    %v4891 = vmul.f32 %v4843, %v372
    %v4892 = vmul.f32 %v4844, %v373
    %v4893 = vmul.f32 %v4845, %v374
    %v4894 = vmul.f32 %v4846, %v375
    %v4895 = vmul.f32 %v4847, %v376
    %v4896 = vmul.f32 %v4848, %v377
    %v4897 = vmul.f32 %v4849, %v378
    %v4898 = vmul.f32 %v4850, %v379
    %v4899 = vmul.f32 %v4851, %v380
    %v4900 = vmul.f32 %v4852, %v381
    %v4901 = vmul.f32 %v4853, %v382
    %v4902 = vmul.f32 %v4854, %v383
    %v4903 = vmul.f32 %v4855, %v384
    %v4904 = vmul.f32 %v4856, %v385
    %v4905 = vmul.f32 %v4857, %v386
    %v4906 = vmul.f32 %v4858, %v387
    %v4907 = vmul.f32 %v4859, %v388
    %v4908 = vmul.f32 %v4860, %v389
    %v4909 = vmul.f32 %v4861, %v390
    %v4910 = vmul.f32 %v4862, %v391
    %v4911 = vmul.f32 %v4863, %v392
    %v4912 = vmul.f32 %v4864, %v393
    %v4913 = vmul.f32 %v4865, %v394
    %v4914 = vmul.f32 %v4866, %v395
    %v4915 = vmul.f32 %v4867, %v396
    %v4916 = vmul.f32 %v4868, %v397
    %v4917 = vmul.f32 %v4869, %v398
    %v4918 = vmul.f32 %v4870, %v399
    %v4919 = vmul.f32 %v4871, %v400
    %v4920 = vmul.f32 %v4872, %v401
    %v4921 = vmul.f32 %v4873, %v402
    %v4922 = vmul.f32 %v4874, %v403
    %v4923 = vmul.f32 %v4875, %v404
    %v4924 = vmul.f32 %v4876, %v405
    %v4925 = vmul.f32 %v4877, %v406
    %v4926 = vmul.f32 %v4878, %v407
    %v4927 = vmul.f32 %v4879, %v408
    %v4928 = vmul.f32 %v4880, %v409
    %v4929 = vmul.f32 %v4881, %v410
    %v4930 = vmul.f32 %v4882, %v411
    %v4931 = vmul.f32 %v4883, %v4883
    %v4932 = vmul.f32 %v4884, %v4884
    %v4933 = vmul.f32 %v4885, %v4885
    %v4934 = vmul.f32 %v4886, %v4886
    %v4935 = vmul.f32 %v4887, %v4887
    %v4936 = vmul.f32 %v4888, %v4888
    %v4937 = vmul.f32 %v4889, %v4889
    %v4938 = vmul.f32 %v4890, %v4890
    %v4939 = vmul.f32 %v4891, %v4891
    %v4940 = vmul.f32 %v4892, %v4892
    %v4941 = vmul.f32 %v4893, %v4893
    %v4942 = vmul.f32 %v4894, %v4894
    %v4943 = vmul.f32 %v4895, %v4895
    %v4944 = vmul.f32 %v4896, %v4896
    %v4945 = vmul.f32 %v4897, %v4897
    %v4946 = vmul.f32 %v4898, %v4898
    %v4947 = vmul.f32 %v4899, %v4899
    %v4948 = vmul.f32 %v4900, %v4900
    %v4949 = vmul.f32 %v4901, %v4901
    %v4950 = vmul.f32 %v4902, %v4902
    %v4951 = vmul.f32 %v4903, %v4903
    %v4952 = vmul.f32 %v4904, %v4904
    %v4953 = vmul.f32 %v4905, %v4905
    %v4954 = vmul.f32 %v4906, %v4906
    %v4955 = vmul.f32 %v4907, %v4907
    %v4956 = vmul.f32 %v4908, %v4908
    %v4957 = vmul.f32 %v4909, %v4909
    %v4958 = vmul.f32 %v4910, %v4910
    %v4959 = vmul.f32 %v4911, %v4911
    %v4960 = vmul.f32 %v4912, %v4912
    %v4961 = vmul.f32 %v4913, %v4913
    %v4962 = vmul.f32 %v4914, %v4914
    %v4963 = vmul.f32 %v4915, %v4915
    %v4964 = vmul.f32 %v4916, %v4916
    %v4965 = vmul.f32 %v4917, %v4917
    %v4966 = vmul.f32 %v4918, %v4918
    %v4967 = vmul.f32 %v4919, %v4919
    %v4968 = vmul.f32 %v4920, %v4920
    %v4969 = vmul.f32 %v4921, %v4921
    %v4970 = vmul.f32 %v4922, %v4922
    %v4971 = vmul.f32 %v4923, %v4923
    %v4972 = vmul.f32 %v4924, %v4924
    %v4973 = vmul.f32 %v4925, %v4925
    %v4974 = vmul.f32 %v4926, %v4926
    %v4975 = vmul.f32 %v4927, %v4927
    %v4976 = vmul.f32 %v4928, %v4928
    %v4977 = vmul.f32 %v4929, %v4929
    %v4978 = vmul.f32 %v4930, %v4930
    %v4979 = vadd.f32 %v4931, %v4932
    %v4980 = vadd.f32 %v4979, %v4933
    %v4981 = vadd.f32 %v4980, %v4934
    %v4982 = vadd.f32 %v4981, %v4935
    %v4983 = vadd.f32 %v4982, %v4936
    %v4984 = vadd.f32 %v4983, %v4937
    %v4985 = vadd.f32 %v4984, %v4938
    %v4986 = vadd.f32 %v4985, %v4939
    %v4987 = vadd.f32 %v4986, %v4940
    %v4988 = vadd.f32 %v4987, %v4941
    %v4989 = vadd.f32 %v4988, %v4942
    %v4990 = vadd.f32 %v4989, %v4943
    %v4991 = vadd.f32 %v4990, %v4944
    %v4992 = vadd.f32 %v4991, %v4945
    %v4993 = vadd.f32 %v4992, %v4946
    %v4994 = vadd.f32 %v4993, %v4947
    %v4995 = vadd.f32 %v4994, %v4948
    %v4996 = vadd.f32 %v4995, %v4949
    %v4997 = vadd.f32 %v4996, %v4950
    %v4998 = vadd.f32 %v4997, %v4951
    %v4999 = vadd.f32 %v4998, %v4952
    %v5000 = vadd.f32 %v4999, %v4953
    %v5001 = vadd.f32 %v5000, %v4954
    %v5002 = vadd.f32 %v5001, %v4955
    %v5003 = vadd.f32 %v5002, %v4956
    %v5004 = vadd.f32 %v5003, %v4957
    %v5005 = vadd.f32 %v5004, %v4958
    %v5006 = vadd.f32 %v5005, %v4959
    %v5007 = vadd.f32 %v5006, %v4960
    %v5008 = vadd.f32 %v5007, %v4961
    %v5009 = vadd.f32 %v5008, %v4962
    %v5010 = vadd.f32 %v5009, %v4963
    %v5011 = vadd.f32 %v5010, %v4964
    %v5012 = vadd.f32 %v5011, %v4965
    %v5013 = vadd.f32 %v5012, %v4966
    %v5014 = vadd.f32 %v5013, %v4967
    %v5015 = vadd.f32 %v5014, %v4968
    %v5016 = vadd.f32 %v5015, %v4969
    %v5017 = vadd.f32 %v5016, %v4970
    %v5018 = vadd.f32 %v5017, %v4971
    %v5019 = vadd.f32 %v5018, %v4972
    %v5020 = vadd.f32 %v5019, %v4973
    %v5021 = vadd.f32 %v5020, %v4974
    %v5022 = vadd.f32 %v5021, %v4975
    %v5023 = vadd.f32 %v5022, %v4976
    %v5024 = vadd.f32 %v5023, %v4977
    %v5025 = vadd.f32 %v5024, %v4978
    %v5026 = vrot.slane %v5025, 4
    %v5027 = vadd.f32 %v5025, %v5026
    %v5028 = vrot.slane %v5027, 2
    %v5029 = vadd.f32 %v5027, %v5028
    %v5030 = vrot.slane %v5029, 1
    %v5031 = vadd.f32 %v5029, %v5030
    %v5032 = vmul.f32 %v5031, 0.003125
    %v5033 = vadd.f32 %v5032, 1e-05
    %v5034 = vrsqrt.pop %v5033
    %v5035 = vmul.f32 %v4835, %v5034
    %v5036 = vmul.f32 %v4836, %v5034
    %v5037 = vmul.f32 %v4837, %v5034
    %v5038 = vmul.f32 %v4838, %v5034
    %v5039 = vmul.f32 %v4839, %v5034
    %v5040 = vmul.f32 %v4840, %v5034
    %v5041 = vmul.f32 %v4841, %v5034
    %v5042 = vmul.f32 %v4842, %v5034
    %v5043 = vmul.f32 %v4843, %v5034
    %v5044 = vmul.f32 %v4844, %v5034
    %v5045 = vmul.f32 %v4845, %v5034
    %v5046 = vmul.f32 %v4846, %v5034
    %v5047 = vmul.f32 %v4847, %v5034
    %v5048 = vmul.f32 %v4848, %v5034
    %v5049 = vmul.f32 %v4849, %v5034
    %v5050 = vmul.f32 %v4850, %v5034
    %v5051 = vmul.f32 %v4851, %v5034
    %v5052 = vmul.f32 %v4852, %v5034
    %v5053 = vmul.f32 %v4853, %v5034
    %v5054 = vmul.f32 %v4854, %v5034
    %v5055 = vmul.f32 %v4855, %v5034
    %v5056 = vmul.f32 %v4856, %v5034
    %v5057 = vmul.f32 %v4857, %v5034
    %v5058 = vmul.f32 %v4858, %v5034
    %v5059 = vmul.f32 %v4859, %v5034
    %v5060 = vmul.f32 %v4860, %v5034
    %v5061 = vmul.f32 %v4861, %v5034
    %v5062 = vmul.f32 %v4862, %v5034
    %v5063 = vmul.f32 %v4863, %v5034
    %v5064 = vmul.f32 %v4864, %v5034
    %v5065 = vmul.f32 %v4865, %v5034
    %v5066 = vmul.f32 %v4866, %v5034
    %v5067 = vmul.f32 %v4867, %v5034
    %v5068 = vmul.f32 %v4868, %v5034
    %v5069 = vmul.f32 %v4869, %v5034
    %v5070 = vmul.f32 %v4870, %v5034
    %v5071 = vmul.f32 %v4871, %v5034
    %v5072 = vmul.f32 %v4872, %v5034
    %v5073 = vmul.f32 %v4873, %v5034
    %v5074 = vmul.f32 %v4874, %v5034
    %v5075 = vmul.f32 %v4875, %v5034
    %v5076 = vmul.f32 %v4876, %v5034
    %v5077 = vmul.f32 %v4877, %v5034
    %v5078 = vmul.f32 %v4878, %v5034
    %v5079 = vmul.f32 %v4879, %v5034
    %v5080 = vmul.f32 %v4880, %v5034
    %v5081 = vmul.f32 %v4881, %v5034
    %v5082 = vmul.f32 %v4882, %v5034
    %v5084 = vlaneseq
    %v5085 = vshrl.u32 %v5084, 7
    %v5086 = vsub.s32 0, %v5085
    %v5087 = vrot.slane %v4730, %v5086
    %v5089 = vmul.f32 %v5035, %v5087
    %v5090 = vmul.f32 %v5036, %v5087
    %v5091 = vmul.f32 %v5037, %v5087
    %v5092 = vmul.f32 %v5038, %v5087
    %v5093 = vmul.f32 %v5039, %v5087
    %v5094 = vmul.f32 %v5040, %v5087
    %v5095 = vmul.f32 %v5041, %v5087
    %v5096 = vmul.f32 %v5042, %v5087
    %v5097 = vmul.f32 %v5043, %v5087
    %v5098 = vmul.f32 %v5044, %v5087
    %v5099 = vmul.f32 %v5045, %v5087
    %v5100 = vmul.f32 %v5046, %v5087
    %v5101 = vmul.f32 %v5047, %v5087
    %v5102 = vmul.f32 %v5048, %v5087
    %v5103 = vmul.f32 %v5049, %v5087
    %v5104 = vmul.f32 %v5050, %v5087
    %v5105 = vmul.f32 %v5051, %v5087
    %v5106 = vmul.f32 %v5052, %v5087
    %v5107 = vmul.f32 %v5053, %v5087
    %v5108 = vmul.f32 %v5054, %v5087
    %v5109 = vmul.f32 %v5055, %v5087
    %v5110 = vmul.f32 %v5056, %v5087
    %v5111 = vmul.f32 %v5057, %v5087
    %v5112 = vmul.f32 %v5058, %v5087
    %v5113 = vmul.f32 %v5059, %v5087
    %v5114 = vmul.f32 %v5060, %v5087
    %v5115 = vmul.f32 %v5061, %v5087
    %v5116 = vmul.f32 %v5062, %v5087
    %v5117 = vmul.f32 %v5063, %v5087
    %v5118 = vmul.f32 %v5064, %v5087
    %v5119 = vmul.f32 %v5065, %v5087
    %v5120 = vmul.f32 %v5066, %v5087
    %v5121 = vmul.f32 %v5067, %v5087
    %v5122 = vmul.f32 %v5068, %v5087
    %v5123 = vmul.f32 %v5069, %v5087
    %v5124 = vmul.f32 %v5070, %v5087
    %v5125 = vmul.f32 %v5071, %v5087
    %v5126 = vmul.f32 %v5072, %v5087
    %v5127 = vmul.f32 %v5073, %v5087
    %v5128 = vmul.f32 %v5074, %v5087
    %v5129 = vmul.f32 %v5075, %v5087
    %v5130 = vmul.f32 %v5076, %v5087
    %v5131 = vmul.f32 %v5077, %v5087
    %v5132 = vmul.f32 %v5078, %v5087
    %v5133 = vmul.f32 %v5079, %v5087
    %v5134 = vmul.f32 %v5080, %v5087
    %v5135 = vmul.f32 %v5081, %v5087
    %v5136 = vmul.f32 %v5082, %v5087
    %v5138 = vlaneseq
    %v5139 = vshrl.u32 %v5138, 7
    %v5140 = vsub.s32 0, %v5139
    %v5141 = vrot.slane %v4732, %v5140
    %v5143 = vadd.f32 %v5089, %v5141
    %v5144 = vadd.f32 %v5090, %v5141
    %v5145 = vadd.f32 %v5091, %v5141
    %v5146 = vadd.f32 %v5092, %v5141
    %v5147 = vadd.f32 %v5093, %v5141
    %v5148 = vadd.f32 %v5094, %v5141
    %v5149 = vadd.f32 %v5095, %v5141
    %v5150 = vadd.f32 %v5096, %v5141
    %v5151 = vadd.f32 %v5097, %v5141
    %v5152 = vadd.f32 %v5098, %v5141
    %v5153 = vadd.f32 %v5099, %v5141
    %v5154 = vadd.f32 %v5100, %v5141
    %v5155 = vadd.f32 %v5101, %v5141
    %v5156 = vadd.f32 %v5102, %v5141
    %v5157 = vadd.f32 %v5103, %v5141
    %v5158 = vadd.f32 %v5104, %v5141
    %v5159 = vadd.f32 %v5105, %v5141
    %v5160 = vadd.f32 %v5106, %v5141
    %v5161 = vadd.f32 %v5107, %v5141
    %v5162 = vadd.f32 %v5108, %v5141
    %v5163 = vadd.f32 %v5109, %v5141
    %v5164 = vadd.f32 %v5110, %v5141
    %v5165 = vadd.f32 %v5111, %v5141
    %v5166 = vadd.f32 %v5112, %v5141
    %v5167 = vadd.f32 %v5113, %v5141
    %v5168 = vadd.f32 %v5114, %v5141
    %v5169 = vadd.f32 %v5115, %v5141
    %v5170 = vadd.f32 %v5116, %v5141
    %v5171 = vadd.f32 %v5117, %v5141
    %v5172 = vadd.f32 %v5118, %v5141
    %v5173 = vadd.f32 %v5119, %v5141
    %v5174 = vadd.f32 %v5120, %v5141
    %v5175 = vadd.f32 %v5121, %v5141
    %v5176 = vadd.f32 %v5122, %v5141
    %v5177 = vadd.f32 %v5123, %v5141
    %v5178 = vadd.f32 %v5124, %v5141
    %v5179 = vadd.f32 %v5125, %v5141
    %v5180 = vadd.f32 %v5126, %v5141
    %v5181 = vadd.f32 %v5127, %v5141
    %v5182 = vadd.f32 %v5128, %v5141
    %v5183 = vadd.f32 %v5129, %v5141
    %v5184 = vadd.f32 %v5130, %v5141
    %v5185 = vadd.f32 %v5131, %v5141
    %v5186 = vadd.f32 %v5132, %v5141
    %v5187 = vadd.f32 %v5133, %v5141
    %v5188 = vadd.f32 %v5134, %v5141
    %v5189 = vadd.f32 %v5135, %v5141
    %v5190 = vadd.f32 %v5136, %v5141
    %v5191 = vmax.f32 %v5143, 0.0
    %v5192 = vmax.f32 %v5144, 0.0
    %v5193 = vmax.f32 %v5145, 0.0
    %v5194 = vmax.f32 %v5146, 0.0
    %v5195 = vmax.f32 %v5147, 0.0
    %v5196 = vmax.f32 %v5148, 0.0
    %v5197 = vmax.f32 %v5149, 0.0
    %v5198 = vmax.f32 %v5150, 0.0
    %v5199 = vmax.f32 %v5151, 0.0
    %v5200 = vmax.f32 %v5152, 0.0
    %v5201 = vmax.f32 %v5153, 0.0
    %v5202 = vmax.f32 %v5154, 0.0
    %v5203 = vmax.f32 %v5155, 0.0
    %v5204 = vmax.f32 %v5156, 0.0
    %v5205 = vmax.f32 %v5157, 0.0
    %v5206 = vmax.f32 %v5158, 0.0
    %v5207 = vmax.f32 %v5159, 0.0
    %v5208 = vmax.f32 %v5160, 0.0
    %v5209 = vmax.f32 %v5161, 0.0
    %v5210 = vmax.f32 %v5162, 0.0
    %v5211 = vmax.f32 %v5163, 0.0
    %v5212 = vmax.f32 %v5164, 0.0
    %v5213 = vmax.f32 %v5165, 0.0
    %v5214 = vmax.f32 %v5166, 0.0
    %v5215 = vmax.f32 %v5167, 0.0
    %v5216 = vmax.f32 %v5168, 0.0
    %v5217 = vmax.f32 %v5169, 0.0
    %v5218 = vmax.f32 %v5170, 0.0
    %v5219 = vmax.f32 %v5171, 0.0
    %v5220 = vmax.f32 %v5172, 0.0
    %v5221 = vmax.f32 %v5173, 0.0
    %v5222 = vmax.f32 %v5174, 0.0
    %v5223 = vmax.f32 %v5175, 0.0
    %v5224 = vmax.f32 %v5176, 0.0
    %v5225 = vmax.f32 %v5177, 0.0
    %v5226 = vmax.f32 %v5178, 0.0
    %v5227 = vmax.f32 %v5179, 0.0
    %v5228 = vmax.f32 %v5180, 0.0
    %v5229 = vmax.f32 %v5181, 0.0
    %v5230 = vmax.f32 %v5182, 0.0
    %v5231 = vmax.f32 %v5183, 0.0
    %v5232 = vmax.f32 %v5184, 0.0
    %v5233 = vmax.f32 %v5185, 0.0
    %v5234 = vmax.f32 %v5186, 0.0
    %v5235 = vmax.f32 %v5187, 0.0
    %v5236 = vmax.f32 %v5188, 0.0
    %v5237 = vmax.f32 %v5189, 0.0
    %v5238 = vmax.f32 %v5190, 0.0
    %v5239 = vadd.f32 %v5191, %v3925
    %v5240 = vadd.f32 %v5192, %v3926
    %v5241 = vadd.f32 %v5193, %v3927
    %v5242 = vadd.f32 %v5194, %v3928
    %v5243 = vadd.f32 %v5195, %v3929
    %v5244 = vadd.f32 %v5196, %v3930
    %v5245 = vadd.f32 %v5197, %v3931
    %v5246 = vadd.f32 %v5198, %v3932
    %v5247 = vadd.f32 %v5199, %v3933
    %v5248 = vadd.f32 %v5200, %v3934
    %v5249 = vadd.f32 %v5201, %v3935
    %v5250 = vadd.f32 %v5202, %v3936
    %v5251 = vadd.f32 %v5203, %v3937
    %v5252 = vadd.f32 %v5204, %v3938
    %v5253 = vadd.f32 %v5205, %v3939
    %v5254 = vadd.f32 %v5206, %v3940
    %v5255 = vadd.f32 %v5207, %v3941
    %v5256 = vadd.f32 %v5208, %v3942
    %v5257 = vadd.f32 %v5209, %v3943
    %v5258 = vadd.f32 %v5210, %v3944
    %v5259 = vadd.f32 %v5211, %v3945
    %v5260 = vadd.f32 %v5212, %v3946
    %v5261 = vadd.f32 %v5213, %v3947
    %v5262 = vadd.f32 %v5214, %v3948
    %v5263 = vadd.f32 %v5215, %v3949
    %v5264 = vadd.f32 %v5216, %v3950
    %v5265 = vadd.f32 %v5217, %v3951
    %v5266 = vadd.f32 %v5218, %v3952
    %v5267 = vadd.f32 %v5219, %v3953
    %v5268 = vadd.f32 %v5220, %v3954
    %v5269 = vadd.f32 %v5221, %v3955
    %v5270 = vadd.f32 %v5222, %v3956
    %v5271 = vadd.f32 %v5223, %v3957
    %v5272 = vadd.f32 %v5224, %v3958
    %v5273 = vadd.f32 %v5225, %v3959
    %v5274 = vadd.f32 %v5226, %v3960
    %v5275 = vadd.f32 %v5227, %v3961
    %v5276 = vadd.f32 %v5228, %v3962
    %v5277 = vadd.f32 %v5229, %v3963
    %v5278 = vadd.f32 %v5230, %v3964
    %v5279 = vadd.f32 %v5231, %v3965
    %v5280 = vadd.f32 %v5232, %v3966
    %v5281 = vadd.f32 %v5233, %v3967
    %v5282 = vadd.f32 %v5234, %v3968
    %v5283 = vadd.f32 %v5235, %v3969
    %v5284 = vadd.f32 %v5236, %v3970
    %v5285 = vadd.f32 %v5237, %v3971
    %v5286 = vadd.f32 %v5238, %v3972
    %v5287 = vld [vmem:[#allocation11] sm:$0xff]
    %v5288 = vld [vmem:[#allocation11 + $0x8] sm:$0xf]
    %v5289 = vld [vmem:[#allocation11 + $0xc] sm:$0xff]
    %v5290 = vld [vmem:[#allocation11 + $0x14] sm:$0xf]
    %v5291 = vld [vmem:[#allocation11 + $0x18] sm:$0xff]
    %v5292 = vld [vmem:[#allocation11 + $0x20] sm:$0xf]
    %v5293 = vld [vmem:[#allocation11 + $0x24] sm:$0xff]
    %v5294 = vld [vmem:[#allocation11 + $0x2c] sm:$0xf]
    %v5295 = vld [vmem:[#allocation11 + $0x30] sm:$0xff]
    %v5296 = vld [vmem:[#allocation11 + $0x38] sm:$0xf]
    %v5297 = vld [vmem:[#allocation11 + $0x3c] sm:$0xff]
    %v5298 = vld [vmem:[#allocation11 + $0x44] sm:$0xf]
    %v5299 = vld [vmem:[#allocation11 + $0x48] sm:$0xff]
    %v5300 = vld [vmem:[#allocation11 + $0x50] sm:$0xf]
    %v5301 = vld [vmem:[#allocation11 + $0x54] sm:$0xff]
    %v5302 = vld [vmem:[#allocation11 + $0x5c] sm:$0xf]
    %v5303 = vld [vmem:[#allocation11 + $0x60] sm:$0xff]
    %v5304 = vld [vmem:[#allocation11 + $0x68] sm:$0xf]
    %v5305 = vld [vmem:[#allocation11 + $0x6c] sm:$0xff]
    %v5306 = vld [vmem:[#allocation11 + $0x74] sm:$0xf]
    %v5307 = vld [vmem:[#allocation11 + $0x78] sm:$0xff]
    %v5308 = vld [vmem:[#allocation11 + $0x80] sm:$0xf]
    %v5309 = vld [vmem:[#allocation11 + $0x84] sm:$0xff]
    %v5310 = vld [vmem:[#allocation11 + $0x8c] sm:$0xf]
    %v5311 = vld [vmem:[#allocation11 + $0x90] sm:$0xff]
    %v5312 = vld [vmem:[#allocation11 + $0x98] sm:$0xf]
    %v5313 = vld [vmem:[#allocation11 + $0x9c] sm:$0xff]
    %v5314 = vld [vmem:[#allocation11 + $0xa4] sm:$0xf]
    %v5315 = vld [vmem:[#allocation11 + $0xa8] sm:$0xff]
    %v5316 = vld [vmem:[#allocation11 + $0xb0] sm:$0xf]
    %v5317 = vld [vmem:[#allocation11 + $0xb4] sm:$0xff]
    %v5318 = vld [vmem:[#allocation11 + $0xbc] sm:$0xf]
    %v5319 = vld [vmem:[#allocation11 + $0xc0] sm:$0xff]
    %v5320 = vld [vmem:[#allocation11 + $0xc8] sm:$0xf]
    %v5321 = vld [vmem:[#allocation11 + $0xcc] sm:$0xff]
    %v5322 = vld [vmem:[#allocation11 + $0xd4] sm:$0xf]
    %v5323 = vld [vmem:[#allocation11 + $0xd8] sm:$0xff]
    %v5324 = vld [vmem:[#allocation11 + $0xe0] sm:$0xf]
    %v5325 = vld [vmem:[#allocation11 + $0xe4] sm:$0xff]
    %v5326 = vld [vmem:[#allocation11 + $0xec] sm:$0xf]
    %v5327 = vld [vmem:[#allocation11 + $0xf0] sm:$0xff]
    %v5328 = vld [vmem:[#allocation11 + $0xf8] sm:$0xf]
    %v5329 = vld [vmem:[#allocation11 + $0xfc] sm:$0xff]
    %v5330 = vld [vmem:[#allocation11 + $0x104] sm:$0xf]
    %v5331 = vld [vmem:[#allocation11 + $0x108] sm:$0xff]
    %v5332 = vld [vmem:[#allocation11 + $0x110] sm:$0xf]
    %v5333 = vld [vmem:[#allocation11 + $0x114] sm:$0xff]
    %v5334 = vld [vmem:[#allocation11 + $0x11c] sm:$0xf]
    %v5335 = vld [vmem:[#allocation11 + $0x120] sm:$0xff]
    %v5336 = vld [vmem:[#allocation11 + $0x128] sm:$0xf]
    %v5337 = vld [vmem:[#allocation11 + $0x12c] sm:$0xff]
    %v5338 = vld [vmem:[#allocation11 + $0x134] sm:$0xf]
    %v5339 = vld [vmem:[#allocation11 + $0x138] sm:$0xff]
    %v5340 = vld [vmem:[#allocation11 + $0x140] sm:$0xf]
    %v5341 = vld [vmem:[#allocation11 + $0x144] sm:$0xff]
    %v5342 = vld [vmem:[#allocation11 + $0x14c] sm:$0xf]
    %v5343 = vld [vmem:[#allocation11 + $0x150] sm:$0xff]
    %v5344 = vld [vmem:[#allocation11 + $0x158] sm:$0xf]
    %v5345 = vld [vmem:[#allocation11 + $0x15c] sm:$0xff]
    %v5346 = vld [vmem:[#allocation11 + $0x164] sm:$0xf]
    %v5347 = vld [vmem:[#allocation11 + $0x168] sm:$0xff]
    %v5348 = vld [vmem:[#allocation11 + $0x170] sm:$0xf]
    %v5349 = vld [vmem:[#allocation11 + $0x174] sm:$0xff]
    %v5350 = vld [vmem:[#allocation11 + $0x17c] sm:$0xf]
    %v5351 = vld [vmem:[#allocation11 + $0x180] sm:$0xff]
    %v5352 = vld [vmem:[#allocation11 + $0x188] sm:$0xf]
    %v5353 = vld [vmem:[#allocation11 + $0x18c] sm:$0xff]
    %v5354 = vld [vmem:[#allocation11 + $0x194] sm:$0xf]
    %v5355 = vld [vmem:[#allocation11 + $0x198] sm:$0xff]
    %v5356 = vld [vmem:[#allocation11 + $0x1a0] sm:$0xf]
    %v5357 = vld [vmem:[#allocation11 + $0x1a4] sm:$0xff]
    %v5358 = vld [vmem:[#allocation11 + $0x1ac] sm:$0xf]
    %v5359 = vld [vmem:[#allocation11 + $0x1b0] sm:$0xff]
    %v5360 = vld [vmem:[#allocation11 + $0x1b8] sm:$0xf]
    %v5361 = vld [vmem:[#allocation11 + $0x1bc] sm:$0xff]
    %v5362 = vld [vmem:[#allocation11 + $0x1c4] sm:$0xf]
    %v5363 = vld [vmem:[#allocation11 + $0x1c8] sm:$0xff]
    %v5364 = vld [vmem:[#allocation11 + $0x1d0] sm:$0xf]
    %v5365 = vld [vmem:[#allocation11 + $0x1d4] sm:$0xff]
    %v5366 = vld [vmem:[#allocation11 + $0x1dc] sm:$0xf]
    %v5367 = vld [vmem:[#allocation11 + $0x1e0] sm:$0xff]
    %v5368 = vld [vmem:[#allocation11 + $0x1e8] sm:$0xf]
    %v5369 = vld [vmem:[#allocation11 + $0x1ec] sm:$0xff]
    %v5370 = vld [vmem:[#allocation11 + $0x1f4] sm:$0xf]
    %v5371 = vld [vmem:[#allocation11 + $0x1f8] sm:$0xff]
    %v5372 = vld [vmem:[#allocation11 + $0x200] sm:$0xf]
    %v5373 = vld [vmem:[#allocation11 + $0x204] sm:$0xff]
    %v5374 = vld [vmem:[#allocation11 + $0x20c] sm:$0xf]
    %v5375 = vld [vmem:[#allocation11 + $0x210] sm:$0xff]
    %v5376 = vld [vmem:[#allocation11 + $0x218] sm:$0xf]
    %v5377 = vld [vmem:[#allocation11 + $0x21c] sm:$0xff]
    %v5378 = vld [vmem:[#allocation11 + $0x224] sm:$0xf]
    %v5379 = vld [vmem:[#allocation11 + $0x228] sm:$0xff]
    %v5380 = vld [vmem:[#allocation11 + $0x230] sm:$0xf]
    %v5381 = vld [vmem:[#allocation11 + $0x234] sm:$0xff]
    %v5382 = vld [vmem:[#allocation11 + $0x23c] sm:$0xf]
    %v5383 = vld [vmem:[#allocation17] sm:$0xff]
    %v5384 = vld [vmem:[#allocation17 + $0x8] sm:$0xff]
    %v5385 = vld [vmem:[#allocation17 + $0x10] sm:$0xff]
    %v5386 = vld [vmem:[#allocation17 + $0x18] sm:$0xff]
    %v5387 = vld [vmem:[#allocation17 + $0x20] sm:$0xff]
    %v5388 = vld [vmem:[#allocation17 + $0x28] sm:$0xff]
    %v5389 = vld [vmem:[#allocation17 + $0x30] sm:$0xff]
    %v5390 = vld [vmem:[#allocation17 + $0x38] sm:$0xff]
    %v5391 = vld [vmem:[#allocation17 + $0x40] sm:$0xff]
    %v5392 = vld [vmem:[#allocation17 + $0x48] sm:$0xff]
    %v5393 = vld [vmem:[#allocation17 + $0x50] sm:$0xff]
    %v5394 = vld [vmem:[#allocation17 + $0x58] sm:$0xff]
    %v5395 = vld [vmem:[#allocation17 + $0x60] sm:$0xff]
    %v5396 = vld [vmem:[#allocation17 + $0x68] sm:$0xff]
    %v5397 = vld [vmem:[#allocation17 + $0x70] sm:$0xff]
    %v5398 = vld [vmem:[#allocation17 + $0x78] sm:$0xff]
    %v5399 = vpack.c.bf16 %v5384, %v5383
    %v5400 = vpack.c.bf16 %v5386, %v5385
    %v5401 = vpack.c.bf16 %v5388, %v5387
    %v5402 = vpack.c.bf16 %v5390, %v5389
    %v5403 = vpack.c.bf16 %v5392, %v5391
    %v5404 = vpack.c.bf16 %v5394, %v5393
    %v5405 = vpack.c.bf16 %v5396, %v5395
    %v5406 = vpack.c.bf16 %v5398, %v5397
    %5407 = vmatprep.subr.bf16.mxu0 0
    %5408 = vmatpush1.bf16.msra.mxu0 %v5399
    %5409 = vmatprep.subr.bf16.mxu0 0
    %5410 = vmatpush1.bf16.msra.mxu0 %v5400
    %5411 = vmatprep.subr.bf16.mxu0 0
    %5412 = vmatpush1.bf16.msra.mxu0 %v5401
    %5413 = vmatprep.subr.bf16.mxu0 0
    %5414 = vmatpush1.bf16.msra.mxu0 %v5402
    %5415 = vmatprep.subr.bf16.mxu0 0
    %5416 = vmatpush1.bf16.msra.mxu0 %v5403
    %5417 = vmatprep.subr.bf16.mxu0 0
    %5418 = vmatpush1.bf16.msra.mxu0 %v5404
    %5419 = vmatprep.subr.bf16.mxu0 0
    %5420 = vmatpush1.bf16.msra.mxu0 %v5405
    %5421 = vmatprep.subr.bf16.mxu0 0
    %5422 = vmatpush1.bf16.msra.mxu0 %v5406
    %5423 = vmatprep.subr.bf16.mxu0 0
    %5424 = vmatpush1.bf16.msra.mxu0 0
    %5425 = vmatprep.subr.bf16.mxu0 0
    %5426 = vmatpush1.bf16.msra.mxu0 0
    %5427 = vmatprep.subr.bf16.mxu0 0
    %5428 = vmatpush1.bf16.msra.mxu0 0
    %5429 = vmatprep.subr.bf16.mxu0 0
    %5430 = vmatpush1.bf16.msra.mxu0 0
    %5431 = vmatprep.subr.bf16.mxu0 0
    %5432 = vmatpush1.bf16.msra.mxu0 0
    %5433 = vmatprep.subr.bf16.mxu0 0
    %5434 = vmatpush1.bf16.msra.mxu0 0
    %5435 = vmatprep.subr.bf16.mxu0 0
    %5436 = vmatpush1.bf16.msra.mxu0 0
    %5437 = vmatprep.subr.bf16.mxu0 0
    %5438 = vmatpush1.bf16.msra.mxu0 0
    %5439 = vmatprep.mubr.bf16.mxu0 0
    %5440 = vmatmul.mubr.bf16.gmra.mrb[0].mxu0 %v981
    %v5441 = vpop.f32.mrb[0].mxu0
    %v5442 = vadd.f32 0.0, %v5441
    %v5443 = vpop.f32.mrb[0].mxu0
    %v5444 = vpop.f32.mrb[0].mxu0
    %v5445 = vadd.f32 0.0, %v5444
    %v5446 = vpop.f32.mrb[0].mxu0
    %5447 = vmatprep.mubr.bf16.mxu0 0
    %5448 = vmatmul.mubr.bf16.gmra.mrb[0].mxu0 %v982
    %v5449 = vpop.f32.mrb[0].mxu0
    %v5450 = vadd.f32 0.0, %v5449
    %v5451 = vpop.f32.mrb[0].mxu0
    %v5452 = vpop.f32.mrb[0].mxu0
    %v5453 = vadd.f32 0.0, %v5452
    %v5454 = vpop.f32.mrb[0].mxu0
    %5455 = vmatprep.mubr.bf16.mxu0 0
    %5456 = vmatmul.mubr.bf16.gmra.mrb[0].mxu0 %v983
    %v5457 = vpop.f32.mrb[0].mxu0
    %v5458 = vadd.f32 0.0, %v5457
    %v5459 = vpop.f32.mrb[0].mxu0
    %v5460 = vpop.f32.mrb[0].mxu0
    %v5461 = vadd.f32 0.0, %v5460
    %v5462 = vpop.f32.mrb[0].mxu0
    %5463 = vmatprep.mubr.bf16.mxu0 0
    %5464 = vmatmul.mubr.bf16.gmra.mrb[0].mxu0 %v984
    %v5465 = vpop.f32.mrb[0].mxu0
    %v5466 = vadd.f32 0.0, %v5465
    %v5467 = vpop.f32.mrb[0].mxu0
    %v5468 = vpop.f32.mrb[0].mxu0
    %v5469 = vadd.f32 0.0, %v5468
    %v5470 = vpop.f32.mrb[0].mxu0
    %5471 = vmatprep.mubr.bf16.mxu0 0
    %5472 = vmatmul.mubr.bf16.gmra.mrb[0].mxu0 %v985
    %v5473 = vpop.f32.mrb[0].mxu0
    %v5474 = vadd.f32 0.0, %v5473
    %v5475 = vpop.f32.mrb[0].mxu0
    %v5476 = vpop.f32.mrb[0].mxu0
    %v5477 = vadd.f32 0.0, %v5476
    %v5478 = vpop.f32.mrb[0].mxu0
    %5479 = vmatprep.mubr.bf16.mxu0 0
    %5480 = vmatmul.mubr.bf16.gmra.mrb[0].mxu0 %v986
    %v5481 = vpop.f32.mrb[0].mxu0
    %v5482 = vadd.f32 0.0, %v5481
    %v5483 = vpop.f32.mrb[0].mxu0
    %v5484 = vpop.f32.mrb[0].mxu0
    %v5485 = vadd.f32 0.0, %v5484
    %v5486 = vpop.f32.mrb[0].mxu0
    %5487 = vmatprep.mubr.bf16.mxu0 0
    %5488 = vmatmul.mubr.bf16.gmra.mrb[0].mxu0 %v987
    %v5489 = vpop.f32.mrb[0].mxu0
    %v5490 = vadd.f32 0.0, %v5489
    %v5491 = vpop.f32.mrb[0].mxu0
    %v5492 = vpop.f32.mrb[0].mxu0
    %v5493 = vadd.f32 0.0, %v5492
    %v5494 = vpop.f32.mrb[0].mxu0
    %5495 = vmatprep.mubr.bf16.mxu0 0
    %5496 = vmatmul.mubr.bf16.gmra.mrb[0].mxu0 %v988
    %v5497 = vpop.f32.mrb[0].mxu0
    %v5498 = vadd.f32 0.0, %v5497
    %v5499 = vpop.f32.mrb[0].mxu0
    %v5500 = vpop.f32.mrb[0].mxu0
    %v5501 = vadd.f32 0.0, %v5500
    %v5502 = vpop.f32.mrb[0].mxu0
    %5503 = vmatprep.mubr.bf16.mxu0 0
    %5504 = vmatmul.mubr.bf16.gmra.mrb[0].mxu0 %v989
    %v5505 = vpop.f32.mrb[0].mxu0
    %v5506 = vadd.f32 0.0, %v5505
    %v5507 = vpop.f32.mrb[0].mxu0
    %v5508 = vpop.f32.mrb[0].mxu0
    %v5509 = vadd.f32 0.0, %v5508
    %v5510 = vpop.f32.mrb[0].mxu0
    %5511 = vmatprep.mubr.bf16.mxu0 0
    %5512 = vmatmul.mubr.bf16.gmra.mrb[0].mxu0 %v990
    %v5513 = vpop.f32.mrb[0].mxu0
    %v5514 = vadd.f32 0.0, %v5513
    %v5515 = vpop.f32.mrb[0].mxu0
    %v5516 = vpop.f32.mrb[0].mxu0
    %v5517 = vadd.f32 0.0, %v5516
    %v5518 = vpop.f32.mrb[0].mxu0
    %5519 = vmatprep.mubr.bf16.mxu0 0
    %5520 = vmatmul.mubr.bf16.gmra.mrb[0].mxu0 %v991
    %v5521 = vpop.f32.mrb[0].mxu0
    %v5522 = vadd.f32 0.0, %v5521
    %v5523 = vpop.f32.mrb[0].mxu0
    %v5524 = vpop.f32.mrb[0].mxu0
    %v5525 = vadd.f32 0.0, %v5524
    %v5526 = vpop.f32.mrb[0].mxu0
    %5527 = vmatprep.mubr.bf16.mxu0 0
    %5528 = vmatmul.mubr.bf16.gmra.mrb[0].mxu0 %v992
    %v5529 = vpop.f32.mrb[0].mxu0
    %v5530 = vadd.f32 0.0, %v5529
    %v5531 = vpop.f32.mrb[0].mxu0
    %v5532 = vpop.f32.mrb[0].mxu0
    %v5533 = vadd.f32 0.0, %v5532
    %v5534 = vpop.f32.mrb[0].mxu0
    %5535 = vmatprep.mubr.bf16.mxu0 0
    %5536 = vmatmul.mubr.bf16.gmra.mrb[0].mxu0 %v993
    %v5537 = vpop.f32.mrb[0].mxu0
    %v5538 = vadd.f32 0.0, %v5537
    %v5539 = vpop.f32.mrb[0].mxu0
    %v5540 = vpop.f32.mrb[0].mxu0
    %v5541 = vadd.f32 0.0, %v5540
    %v5542 = vpop.f32.mrb[0].mxu0
    %5543 = vmatprep.mubr.bf16.mxu0 0
    %5544 = vmatmul.mubr.bf16.gmra.mrb[0].mxu0 %v994
    %v5545 = vpop.f32.mrb[0].mxu0
    %v5546 = vadd.f32 0.0, %v5545
    %v5547 = vpop.f32.mrb[0].mxu0
    %v5548 = vpop.f32.mrb[0].mxu0
    %v5549 = vadd.f32 0.0, %v5548
    %v5550 = vpop.f32.mrb[0].mxu0
    %5551 = vmatprep.mubr.bf16.mxu0 0
    %5552 = vmatmul.mubr.bf16.gmra.mrb[0].mxu0 %v995
    %v5553 = vpop.f32.mrb[0].mxu0
    %v5554 = vadd.f32 0.0, %v5553
    %v5555 = vpop.f32.mrb[0].mxu0
    %v5556 = vpop.f32.mrb[0].mxu0
    %v5557 = vadd.f32 0.0, %v5556
    %v5558 = vpop.f32.mrb[0].mxu0
    %5559 = vmatprep.mubr.bf16.mxu0 0
    %5560 = vmatmul.mubr.bf16.gmra.mrb[0].mxu0 %v996
    %v5561 = vpop.f32.mrb[0].mxu0
    %v5562 = vadd.f32 0.0, %v5561
    %v5563 = vpop.f32.mrb[0].mxu0
    %v5564 = vpop.f32.mrb[0].mxu0
    %v5565 = vadd.f32 0.0, %v5564
    %v5566 = vpop.f32.mrb[0].mxu0
    %5567 = vmatprep.mubr.bf16.mxu0 0
    %5568 = vmatmul.mubr.bf16.gmra.mrb[0].mxu0 %v997
    %v5569 = vpop.f32.mrb[0].mxu0
    %v5570 = vadd.f32 0.0, %v5569
    %v5571 = vpop.f32.mrb[0].mxu0
    %v5572 = vpop.f32.mrb[0].mxu0
    %v5573 = vadd.f32 0.0, %v5572
    %v5574 = vpop.f32.mrb[0].mxu0
    %5575 = vmatprep.mubr.bf16.mxu0 0
    %5576 = vmatmul.mubr.bf16.gmra.mrb[0].mxu0 %v998
    %v5577 = vpop.f32.mrb[0].mxu0
    %v5578 = vadd.f32 0.0, %v5577
    %v5579 = vpop.f32.mrb[0].mxu0
    %v5580 = vpop.f32.mrb[0].mxu0
    %v5581 = vadd.f32 0.0, %v5580
    %v5582 = vpop.f32.mrb[0].mxu0
    %5583 = vmatprep.mubr.bf16.mxu0 0
    %5584 = vmatmul.mubr.bf16.gmra.mrb[0].mxu0 %v999
    %v5585 = vpop.f32.mrb[0].mxu0
    %v5586 = vadd.f32 0.0, %v5585
    %v5587 = vpop.f32.mrb[0].mxu0
    %v5588 = vpop.f32.mrb[0].mxu0
    %v5589 = vadd.f32 0.0, %v5588
    %v5590 = vpop.f32.mrb[0].mxu0
    %5591 = vmatprep.mubr.bf16.mxu0 0
    %5592 = vmatmul.mubr.bf16.gmra.mrb[0].mxu0 %v1000
    %v5593 = vpop.f32.mrb[0].mxu0
    %v5594 = vadd.f32 0.0, %v5593
    %v5595 = vpop.f32.mrb[0].mxu0
    %v5596 = vpop.f32.mrb[0].mxu0
    %v5597 = vadd.f32 0.0, %v5596
    %v5598 = vpop.f32.mrb[0].mxu0
    %5599 = vmatprep.mubr.bf16.mxu0 0
    %5600 = vmatmul.mubr.bf16.gmra.mrb[0].mxu0 %v1001
    %v5601 = vpop.f32.mrb[0].mxu0
    %v5602 = vadd.f32 0.0, %v5601
    %v5603 = vpop.f32.mrb[0].mxu0
    %v5604 = vpop.f32.mrb[0].mxu0
    %v5605 = vadd.f32 0.0, %v5604
    %v5606 = vpop.f32.mrb[0].mxu0
    %5607 = vmatprep.mubr.bf16.mxu0 0
    %5608 = vmatmul.mubr.bf16.gmra.mrb[0].mxu0 %v1002
    %v5609 = vpop.f32.mrb[0].mxu0
    %v5610 = vadd.f32 0.0, %v5609
    %v5611 = vpop.f32.mrb[0].mxu0
    %v5612 = vpop.f32.mrb[0].mxu0
    %v5613 = vadd.f32 0.0, %v5612
    %v5614 = vpop.f32.mrb[0].mxu0
    %5615 = vmatprep.mubr.bf16.mxu0 0
    %5616 = vmatmul.mubr.bf16.gmra.mrb[0].mxu0 %v1003
    %v5617 = vpop.f32.mrb[0].mxu0
    %v5618 = vadd.f32 0.0, %v5617
    %v5619 = vpop.f32.mrb[0].mxu0
    %v5620 = vpop.f32.mrb[0].mxu0
    %v5621 = vadd.f32 0.0, %v5620
    %v5622 = vpop.f32.mrb[0].mxu0
    %5623 = vmatprep.mubr.bf16.mxu0 0
    %5624 = vmatmul.mubr.bf16.gmra.mrb[0].mxu0 %v1004
    %v5625 = vpop.f32.mrb[0].mxu0
    %v5626 = vadd.f32 0.0, %v5625
    %v5627 = vpop.f32.mrb[0].mxu0
    %v5628 = vpop.f32.mrb[0].mxu0
    %v5629 = vadd.f32 0.0, %v5628
    %v5630 = vpop.f32.mrb[0].mxu0
    %5631 = vdwg.mxu0
    %v5632 = vpack.c.bf16 %v5445, %v5442
    %v5633 = vpack.c.bf16 %v5453, %v5450
    %v5634 = vpack.c.bf16 %v5461, %v5458
    %v5635 = vpack.c.bf16 %v5469, %v5466
    %v5636 = vpack.c.bf16 %v5477, %v5474
    %v5637 = vpack.c.bf16 %v5485, %v5482
    %v5638 = vpack.c.bf16 %v5493, %v5490
    %v5639 = vpack.c.bf16 %v5501, %v5498
    %v5640 = vpack.c.bf16 %v5509, %v5506
    %v5641 = vpack.c.bf16 %v5517, %v5514
    %v5642 = vpack.c.bf16 %v5525, %v5522
    %v5643 = vpack.c.bf16 %v5533, %v5530
    %v5644 = vpack.c.bf16 %v5541, %v5538
    %v5645 = vpack.c.bf16 %v5549, %v5546
    %v5646 = vpack.c.bf16 %v5557, %v5554
    %v5647 = vpack.c.bf16 %v5565, %v5562
    %v5648 = vpack.c.bf16 %v5573, %v5570
    %v5649 = vpack.c.bf16 %v5581, %v5578
    %v5650 = vpack.c.bf16 %v5589, %v5586
    %v5651 = vpack.c.bf16 %v5597, %v5594
    %v5652 = vpack.c.bf16 %v5605, %v5602
    %v5653 = vpack.c.bf16 %v5613, %v5610
    %v5654 = vpack.c.bf16 %v5621, %v5618
    %v5655 = vpack.c.bf16 %v5629, %v5626
    %v5656 = vld [vmem:[%s9] sm:$0x1]
    %v5658 = vlaneseq
    %v5659 = vshrl.u32 %v5658, 7
    %v5660 = vsub.s32 0, %v5659
    %v5661 = vrot.slane %v5656, %v5660
    %v5759 = vunpack.c.l.b16 %v5287
    %v5760 = vunpack.c.h.b16 %v5287
    %v5761 = vunpack.c.l.b16 %v5288
    %v5762 = vunpack.c.l.b16 %v5289
    %v5763 = vunpack.c.h.b16 %v5289
    %v5764 = vunpack.c.l.b16 %v5290
    %v5765 = vunpack.c.l.b16 %v5291
    %v5766 = vunpack.c.h.b16 %v5291
    %v5767 = vunpack.c.l.b16 %v5292
    %v5768 = vunpack.c.l.b16 %v5293
    %v5769 = vunpack.c.h.b16 %v5293
    %v5770 = vunpack.c.l.b16 %v5294
    %v5771 = vunpack.c.l.b16 %v5295
    %v5772 = vunpack.c.h.b16 %v5295
    %v5773 = vunpack.c.l.b16 %v5296
    %v5774 = vunpack.c.l.b16 %v5297
    %v5775 = vunpack.c.h.b16 %v5297
    %v5776 = vunpack.c.l.b16 %v5298
    %v5777 = vunpack.c.l.b16 %v5299
    %v5778 = vunpack.c.h.b16 %v5299
    %v5779 = vunpack.c.l.b16 %v5300
    %v5780 = vunpack.c.l.b16 %v5301
    %v5781 = vunpack.c.h.b16 %v5301
    %v5782 = vunpack.c.l.b16 %v5302
    %v5783 = vunpack.c.l.b16 %v5303
    %v5784 = vunpack.c.h.b16 %v5303
    %v5785 = vunpack.c.l.b16 %v5304
    %v5786 = vunpack.c.l.b16 %v5305
    %v5787 = vunpack.c.h.b16 %v5305
    %v5788 = vunpack.c.l.b16 %v5306
    %v5789 = vunpack.c.l.b16 %v5307
    %v5790 = vunpack.c.h.b16 %v5307
    %v5791 = vunpack.c.l.b16 %v5308
    %v5792 = vunpack.c.l.b16 %v5309
    %v5793 = vunpack.c.h.b16 %v5309
    %v5794 = vunpack.c.l.b16 %v5310
    %v5795 = vunpack.c.l.b16 %v5311
    %v5796 = vunpack.c.h.b16 %v5311
    %v5797 = vunpack.c.l.b16 %v5312
    %v5798 = vunpack.c.l.b16 %v5313
    %v5799 = vunpack.c.h.b16 %v5313
    %v5800 = vunpack.c.l.b16 %v5314
    %v5801 = vunpack.c.l.b16 %v5315
    %v5802 = vunpack.c.h.b16 %v5315
    %v5803 = vunpack.c.l.b16 %v5316
    %v5804 = vunpack.c.l.b16 %v5317
    %v5805 = vunpack.c.h.b16 %v5317
    %v5806 = vunpack.c.l.b16 %v5318
    %v5807 = vunpack.c.l.b16 %v5319
    %v5808 = vunpack.c.h.b16 %v5319
    %v5809 = vunpack.c.l.b16 %v5320
    %v5810 = vunpack.c.l.b16 %v5321
    %v5811 = vunpack.c.h.b16 %v5321
    %v5812 = vunpack.c.l.b16 %v5322
    %v5813 = vunpack.c.l.b16 %v5323
    %v5814 = vunpack.c.h.b16 %v5323
    %v5815 = vunpack.c.l.b16 %v5324
    %v5816 = vunpack.c.l.b16 %v5325
    %v5817 = vunpack.c.h.b16 %v5325
    %v5818 = vunpack.c.l.b16 %v5326
    %v5819 = vunpack.c.l.b16 %v5327
    %v5820 = vunpack.c.h.b16 %v5327
    %v5821 = vunpack.c.l.b16 %v5328
    %v5822 = vunpack.c.l.b16 %v5329
    %v5823 = vunpack.c.h.b16 %v5329
    %v5824 = vunpack.c.l.b16 %v5330
    %v5825 = vunpack.c.l.b16 %v5331
    %v5826 = vunpack.c.h.b16 %v5331
    %v5827 = vunpack.c.l.b16 %v5332
    %v5828 = vunpack.c.l.b16 %v5333
    %v5829 = vunpack.c.h.b16 %v5333
    %v5830 = vunpack.c.l.b16 %v5334
    %v5831 = vunpack.c.l.b16 %v5335
    %v5832 = vunpack.c.h.b16 %v5335
    %v5833 = vunpack.c.l.b16 %v5336
    %v5834 = vunpack.c.l.b16 %v5337
    %v5835 = vunpack.c.h.b16 %v5337
    %v5836 = vunpack.c.l.b16 %v5338
    %v5837 = vunpack.c.l.b16 %v5339
    %v5838 = vunpack.c.h.b16 %v5339
    %v5839 = vunpack.c.l.b16 %v5340
    %v5840 = vunpack.c.l.b16 %v5341
    %v5841 = vunpack.c.h.b16 %v5341
    %v5842 = vunpack.c.l.b16 %v5342
    %v5843 = vunpack.c.l.b16 %v5343
    %v5844 = vunpack.c.h.b16 %v5343
    %v5845 = vunpack.c.l.b16 %v5344
    %v5846 = vunpack.c.l.b16 %v5345
    %v5847 = vunpack.c.h.b16 %v5345
    %v5848 = vunpack.c.l.b16 %v5346
    %v5849 = vunpack.c.l.b16 %v5347
    %v5850 = vunpack.c.h.b16 %v5347
    %v5851 = vunpack.c.l.b16 %v5348
    %v5852 = vunpack.c.l.b16 %v5349
    %v5853 = vunpack.c.h.b16 %v5349
    %v5854 = vunpack.c.l.b16 %v5350
    %v5855 = vunpack.c.l.b16 %v5351
    %v5856 = vunpack.c.h.b16 %v5351
    %v5857 = vunpack.c.l.b16 %v5352
    %v5858 = vunpack.c.l.b16 %v5353
    %v5859 = vunpack.c.h.b16 %v5353
    %v5860 = vunpack.c.l.b16 %v5354
    %v5861 = vunpack.c.l.b16 %v5355
    %v5862 = vunpack.c.h.b16 %v5355
    %v5863 = vunpack.c.l.b16 %v5356
    %v5864 = vunpack.c.l.b16 %v5357
    %v5865 = vunpack.c.h.b16 %v5357
    %v5866 = vunpack.c.l.b16 %v5358
    %v5867 = vunpack.c.l.b16 %v5359
    %v5868 = vunpack.c.h.b16 %v5359
    %v5869 = vunpack.c.l.b16 %v5360
    %v5870 = vunpack.c.l.b16 %v5361
    %v5871 = vunpack.c.h.b16 %v5361
    %v5872 = vunpack.c.l.b16 %v5362
    %v5873 = vunpack.c.l.b16 %v5363
    %v5874 = vunpack.c.h.b16 %v5363
    %v5875 = vunpack.c.l.b16 %v5364
    %v5876 = vunpack.c.l.b16 %v5365
    %v5877 = vunpack.c.h.b16 %v5365
    %v5878 = vunpack.c.l.b16 %v5366
    %v5879 = vunpack.c.l.b16 %v5367
    %v5880 = vunpack.c.h.b16 %v5367
    %v5881 = vunpack.c.l.b16 %v5368
    %v5882 = vunpack.c.l.b16 %v5369
    %v5883 = vunpack.c.h.b16 %v5369
    %v5884 = vunpack.c.l.b16 %v5370
    %v5885 = vunpack.c.l.b16 %v5371
    %v5886 = vunpack.c.h.b16 %v5371
    %v5887 = vunpack.c.l.b16 %v5372
    %v5888 = vunpack.c.l.b16 %v5373
    %v5889 = vunpack.c.h.b16 %v5373
    %v5890 = vunpack.c.l.b16 %v5374
    %v5891 = vunpack.c.l.b16 %v5375
    %v5892 = vunpack.c.h.b16 %v5375
    %v5893 = vunpack.c.l.b16 %v5376
    %v5894 = vunpack.c.l.b16 %v5377
    %v5895 = vunpack.c.h.b16 %v5377
    %v5896 = vunpack.c.l.b16 %v5378
    %v5897 = vunpack.c.l.b16 %v5379
    %v5898 = vunpack.c.h.b16 %v5379
    %v5899 = vunpack.c.l.b16 %v5380
    %v5900 = vunpack.c.l.b16 %v5381
    %v5901 = vunpack.c.h.b16 %v5381
    %v5902 = vunpack.c.l.b16 %v5382
    %v5903 = vpack.c.b16 %v5762, %v5759
    %v5904 = vpack.c.b16 %v5763, %v5760
    %v5905 = vpack.c.b16 %v5764, %v5761
    %v5906 = vpack.c.b16 %v5768, %v5765
    %v5907 = vpack.c.b16 %v5769, %v5766
    %v5908 = vpack.c.b16 %v5770, %v5767
    %v5909 = vpack.c.b16 %v5774, %v5771
    %v5910 = vpack.c.b16 %v5775, %v5772
    %v5911 = vpack.c.b16 %v5776, %v5773
    %v5912 = vpack.c.b16 %v5780, %v5777
    %v5913 = vpack.c.b16 %v5781, %v5778
    %v5914 = vpack.c.b16 %v5782, %v5779
    %v5915 = vpack.c.b16 %v5786, %v5783
    %v5916 = vpack.c.b16 %v5787, %v5784
    %v5917 = vpack.c.b16 %v5788, %v5785
    %v5918 = vpack.c.b16 %v5792, %v5789
    %v5919 = vpack.c.b16 %v5793, %v5790
    %v5920 = vpack.c.b16 %v5794, %v5791
    %v5921 = vpack.c.b16 %v5798, %v5795
    %v5922 = vpack.c.b16 %v5799, %v5796
    %v5923 = vpack.c.b16 %v5800, %v5797
    %v5924 = vpack.c.b16 %v5804, %v5801
    %v5925 = vpack.c.b16 %v5805, %v5802
    %v5926 = vpack.c.b16 %v5806, %v5803
    %v5927 = vpack.c.b16 %v5810, %v5807
    %v5928 = vpack.c.b16 %v5811, %v5808
    %v5929 = vpack.c.b16 %v5812, %v5809
    %v5930 = vpack.c.b16 %v5816, %v5813
    %v5931 = vpack.c.b16 %v5817, %v5814
    %v5932 = vpack.c.b16 %v5818, %v5815
    %v5933 = vpack.c.b16 %v5822, %v5819
    %v5934 = vpack.c.b16 %v5823, %v5820
    %v5935 = vpack.c.b16 %v5824, %v5821
    %v5936 = vpack.c.b16 %v5828, %v5825
    %v5937 = vpack.c.b16 %v5829, %v5826
    %v5938 = vpack.c.b16 %v5830, %v5827
    %v5939 = vpack.c.b16 %v5834, %v5831
    %v5940 = vpack.c.b16 %v5835, %v5832
    %v5941 = vpack.c.b16 %v5836, %v5833
    %v5942 = vpack.c.b16 %v5840, %v5837
    %v5943 = vpack.c.b16 %v5841, %v5838
    %v5944 = vpack.c.b16 %v5842, %v5839
    %v5945 = vpack.c.b16 %v5846, %v5843
    %v5946 = vpack.c.b16 %v5847, %v5844
    %v5947 = vpack.c.b16 %v5848, %v5845
    %v5948 = vpack.c.b16 %v5852, %v5849
    %v5949 = vpack.c.b16 %v5853, %v5850
    %v5950 = vpack.c.b16 %v5854, %v5851
    %v5951 = vpack.c.b16 %v5858, %v5855
    %v5952 = vpack.c.b16 %v5859, %v5856
    %v5953 = vpack.c.b16 %v5860, %v5857
    %v5954 = vpack.c.b16 %v5864, %v5861
    %v5955 = vpack.c.b16 %v5865, %v5862
    %v5956 = vpack.c.b16 %v5866, %v5863
    %v5957 = vpack.c.b16 %v5870, %v5867
    %v5958 = vpack.c.b16 %v5871, %v5868
    %v5959 = vpack.c.b16 %v5872, %v5869
    %v5960 = vpack.c.b16 %v5876, %v5873
    %v5961 = vpack.c.b16 %v5877, %v5874
    %v5962 = vpack.c.b16 %v5878, %v5875
    %v5963 = vpack.c.b16 %v5882, %v5879
    %v5964 = vpack.c.b16 %v5883, %v5880
    %v5965 = vpack.c.b16 %v5884, %v5881
    %v5966 = vpack.c.b16 %v5888, %v5885
    %v5967 = vpack.c.b16 %v5889, %v5886
    %v5968 = vpack.c.b16 %v5890, %v5887
    %v5969 = vpack.c.b16 %v5894, %v5891
    %v5970 = vpack.c.b16 %v5895, %v5892
    %v5971 = vpack.c.b16 %v5896, %v5893
    %v5972 = vpack.c.b16 %v5900, %v5897
    %v5973 = vpack.c.b16 %v5901, %v5898
    %v5974 = vpack.c.b16 %v5902, %v5899
    %6047 = vmatprep.subr.bf16.mxu0 0
    %6048 = vmatpush1.bf16.msra.mxu0 %v5632
    %6049 = vmatprep.subr.bf16.mxu0 0
    %6050 = vmatpush1.bf16.msra.mxu0 %v5633
    %6051 = vmatprep.subr.bf16.mxu0 0
    %6052 = vmatpush1.bf16.msra.mxu0 %v5634
    %6053 = vmatprep.subr.bf16.mxu0 0
    %6054 = vmatpush1.bf16.msra.mxu0 %v5635
    %6055 = vmatprep.subr.bf16.mxu0 0
    %6056 = vmatpush1.bf16.msra.mxu0 %v5636
    %6057 = vmatprep.subr.bf16.mxu0 0
    %6058 = vmatpush1.bf16.msra.mxu0 %v5637
    %6059 = vmatprep.subr.bf16.mxu0 0
    %6060 = vmatpush1.bf16.msra.mxu0 %v5638
    %6061 = vmatprep.subr.bf16.mxu0 0
    %6062 = vmatpush1.bf16.msra.mxu0 %v5639
    %6063 = vmatprep.subr.bf16.mxu0 0
    %6064 = vmatpush1.bf16.msra.mxu0 %v5640
    %6065 = vmatprep.subr.bf16.mxu0 0
    %6066 = vmatpush1.bf16.msra.mxu0 %v5641
    %6067 = vmatprep.subr.bf16.mxu0 0
    %6068 = vmatpush1.bf16.msra.mxu0 %v5642
    %6069 = vmatprep.subr.bf16.mxu0 0
    %6070 = vmatpush1.bf16.msra.mxu0 %v5643
    %6071 = vmatprep.subr.bf16.mxu0 0
    %6072 = vmatpush1.bf16.msra.mxu0 %v5644
    %6073 = vmatprep.subr.bf16.mxu0 0
    %6074 = vmatpush1.bf16.msra.mxu0 %v5645
    %6075 = vmatprep.subr.bf16.mxu0 0
    %6076 = vmatpush1.bf16.msra.mxu0 %v5646
    %6077 = vmatprep.subr.bf16.mxu0 0
    %6078 = vmatpush1.bf16.msra.mxu0 %v5647
    %6079 = vmatprep.mubr.bf16.mxu0 %v5904
    %6080 = vmatmul.mubr.bf16.gmra.mrb[0].mxu0 %v5903
    %v6081 = vpop.f32.mrb[0].mxu0
    %v6082 = vadd.f32 %v5661, %v6081
    %v6083 = vpop.f32.mrb[0].mxu0
    %v6084 = vpop.f32.mrb[0].mxu0
    %v6085 = vadd.f32 %v5661, %v6084
    %v6086 = vpop.f32.mrb[0].mxu0
    %6087 = vmatprep.mubr.bf16.mxu0 %v5907
    %6088 = vmatmul.mubr.bf16.gmra.mrb[0].mxu0 %v5906
    %v6089 = vpop.f32.mrb[0].mxu0
    %v6090 = vadd.f32 %v5661, %v6089
    %v6091 = vpop.f32.mrb[0].mxu0
    %v6092 = vpop.f32.mrb[0].mxu0
    %v6093 = vadd.f32 %v5661, %v6092
    %v6094 = vpop.f32.mrb[0].mxu0
    %6095 = vmatprep.mubr.bf16.mxu0 %v5910
    %6096 = vmatmul.mubr.bf16.gmra.mrb[0].mxu0 %v5909
    %v6097 = vpop.f32.mrb[0].mxu0
    %v6098 = vadd.f32 %v5661, %v6097
    %v6099 = vpop.f32.mrb[0].mxu0
    %v6100 = vpop.f32.mrb[0].mxu0
    %v6101 = vadd.f32 %v5661, %v6100
    %v6102 = vpop.f32.mrb[0].mxu0
    %6103 = vmatprep.mubr.bf16.mxu0 %v5913
    %6104 = vmatmul.mubr.bf16.gmra.mrb[0].mxu0 %v5912
    %v6105 = vpop.f32.mrb[0].mxu0
    %v6106 = vadd.f32 %v5661, %v6105
    %v6107 = vpop.f32.mrb[0].mxu0
    %v6108 = vpop.f32.mrb[0].mxu0
    %v6109 = vadd.f32 %v5661, %v6108
    %v6110 = vpop.f32.mrb[0].mxu0
    %6111 = vmatprep.mubr.bf16.mxu0 %v5916
    %6112 = vmatmul.mubr.bf16.gmra.mrb[0].mxu0 %v5915
    %v6113 = vpop.f32.mrb[0].mxu0
    %v6114 = vadd.f32 %v5661, %v6113
    %v6115 = vpop.f32.mrb[0].mxu0
    %v6116 = vpop.f32.mrb[0].mxu0
    %v6117 = vadd.f32 %v5661, %v6116
    %v6118 = vpop.f32.mrb[0].mxu0
    %6119 = vmatprep.mubr.bf16.mxu0 %v5919
    %6120 = vmatmul.mubr.bf16.gmra.mrb[0].mxu0 %v5918
    %v6121 = vpop.f32.mrb[0].mxu0
    %v6122 = vadd.f32 %v5661, %v6121
    %v6123 = vpop.f32.mrb[0].mxu0
    %v6124 = vpop.f32.mrb[0].mxu0
    %v6125 = vadd.f32 %v5661, %v6124
    %v6126 = vpop.f32.mrb[0].mxu0
    %6127 = vmatprep.mubr.bf16.mxu0 %v5922
    %6128 = vmatmul.mubr.bf16.gmra.mrb[0].mxu0 %v5921
    %v6129 = vpop.f32.mrb[0].mxu0
    %v6130 = vadd.f32 %v5661, %v6129
    %v6131 = vpop.f32.mrb[0].mxu0
    %v6132 = vpop.f32.mrb[0].mxu0
    %v6133 = vadd.f32 %v5661, %v6132
    %v6134 = vpop.f32.mrb[0].mxu0
    %6135 = vmatprep.mubr.bf16.mxu0 %v5925
    %6136 = vmatmul.mubr.bf16.gmra.mrb[0].mxu0 %v5924
    %v6137 = vpop.f32.mrb[0].mxu0
    %v6138 = vadd.f32 %v5661, %v6137
    %v6139 = vpop.f32.mrb[0].mxu0
    %v6140 = vpop.f32.mrb[0].mxu0
    %v6141 = vadd.f32 %v5661, %v6140
    %v6142 = vpop.f32.mrb[0].mxu0
    %6143 = vmatprep.mubr.bf16.mxu0 %v5928
    %6144 = vmatmul.mubr.bf16.gmra.mrb[0].mxu0 %v5927
    %v6145 = vpop.f32.mrb[0].mxu0
    %v6146 = vadd.f32 %v5661, %v6145
    %v6147 = vpop.f32.mrb[0].mxu0
    %v6148 = vpop.f32.mrb[0].mxu0
    %v6149 = vadd.f32 %v5661, %v6148
    %v6150 = vpop.f32.mrb[0].mxu0
    %6151 = vmatprep.mubr.bf16.mxu0 %v5931
    %6152 = vmatmul.mubr.bf16.gmra.mrb[0].mxu0 %v5930
    %v6153 = vpop.f32.mrb[0].mxu0
    %v6154 = vadd.f32 %v5661, %v6153
    %v6155 = vpop.f32.mrb[0].mxu0
    %v6156 = vpop.f32.mrb[0].mxu0
    %v6157 = vadd.f32 %v5661, %v6156
    %v6158 = vpop.f32.mrb[0].mxu0
    %6159 = vmatprep.mubr.bf16.mxu0 %v5934
    %6160 = vmatmul.mubr.bf16.gmra.mrb[0].mxu0 %v5933
    %v6161 = vpop.f32.mrb[0].mxu0
    %v6162 = vadd.f32 %v5661, %v6161
    %v6163 = vpop.f32.mrb[0].mxu0
    %v6164 = vpop.f32.mrb[0].mxu0
    %v6165 = vadd.f32 %v5661, %v6164
    %v6166 = vpop.f32.mrb[0].mxu0
    %6167 = vmatprep.mubr.bf16.mxu0 %v5937
    %6168 = vmatmul.mubr.bf16.gmra.mrb[0].mxu0 %v5936
    %v6169 = vpop.f32.mrb[0].mxu0
    %v6170 = vadd.f32 %v5661, %v6169
    %v6171 = vpop.f32.mrb[0].mxu0
    %v6172 = vpop.f32.mrb[0].mxu0
    %v6173 = vadd.f32 %v5661, %v6172
    %v6174 = vpop.f32.mrb[0].mxu0
    %6175 = vmatprep.mubr.bf16.mxu0 %v5940
    %6176 = vmatmul.mubr.bf16.gmra.mrb[0].mxu0 %v5939
    %v6177 = vpop.f32.mrb[0].mxu0
    %v6178 = vadd.f32 %v5661, %v6177
    %v6179 = vpop.f32.mrb[0].mxu0
    %v6180 = vpop.f32.mrb[0].mxu0
    %v6181 = vadd.f32 %v5661, %v6180
    %v6182 = vpop.f32.mrb[0].mxu0
    %6183 = vmatprep.mubr.bf16.mxu0 %v5943
    %6184 = vmatmul.mubr.bf16.gmra.mrb[0].mxu0 %v5942
    %v6185 = vpop.f32.mrb[0].mxu0
    %v6186 = vadd.f32 %v5661, %v6185
    %v6187 = vpop.f32.mrb[0].mxu0
    %v6188 = vpop.f32.mrb[0].mxu0
    %v6189 = vadd.f32 %v5661, %v6188
    %v6190 = vpop.f32.mrb[0].mxu0
    %6191 = vmatprep.mubr.bf16.mxu0 %v5946
    %6192 = vmatmul.mubr.bf16.gmra.mrb[0].mxu0 %v5945
    %v6193 = vpop.f32.mrb[0].mxu0
    %v6194 = vadd.f32 %v5661, %v6193
    %v6195 = vpop.f32.mrb[0].mxu0
    %v6196 = vpop.f32.mrb[0].mxu0
    %v6197 = vadd.f32 %v5661, %v6196
    %v6198 = vpop.f32.mrb[0].mxu0
    %6199 = vmatprep.mubr.bf16.mxu0 %v5949
    %6200 = vmatmul.mubr.bf16.gmra.mrb[0].mxu0 %v5948
    %v6201 = vpop.f32.mrb[0].mxu0
    %v6202 = vadd.f32 %v5661, %v6201
    %v6203 = vpop.f32.mrb[0].mxu0
    %v6204 = vpop.f32.mrb[0].mxu0
    %v6205 = vadd.f32 %v5661, %v6204
    %v6206 = vpop.f32.mrb[0].mxu0
    %6207 = vmatprep.mubr.bf16.mxu0 %v5952
    %6208 = vmatmul.mubr.bf16.gmra.mrb[0].mxu0 %v5951
    %v6209 = vpop.f32.mrb[0].mxu0
    %v6210 = vadd.f32 %v5661, %v6209
    %v6211 = vpop.f32.mrb[0].mxu0
    %v6212 = vpop.f32.mrb[0].mxu0
    %v6213 = vadd.f32 %v5661, %v6212
    %v6214 = vpop.f32.mrb[0].mxu0
    %6215 = vmatprep.mubr.bf16.mxu0 %v5955
    %6216 = vmatmul.mubr.bf16.gmra.mrb[0].mxu0 %v5954
    %v6217 = vpop.f32.mrb[0].mxu0
    %v6218 = vadd.f32 %v5661, %v6217
    %v6219 = vpop.f32.mrb[0].mxu0
    %v6220 = vpop.f32.mrb[0].mxu0
    %v6221 = vadd.f32 %v5661, %v6220
    %v6222 = vpop.f32.mrb[0].mxu0
    %6223 = vmatprep.mubr.bf16.mxu0 %v5958
    %6224 = vmatmul.mubr.bf16.gmra.mrb[0].mxu0 %v5957
    %v6225 = vpop.f32.mrb[0].mxu0
    %v6226 = vadd.f32 %v5661, %v6225
    %v6227 = vpop.f32.mrb[0].mxu0
    %v6228 = vpop.f32.mrb[0].mxu0
    %v6229 = vadd.f32 %v5661, %v6228
    %v6230 = vpop.f32.mrb[0].mxu0
    %6231 = vmatprep.mubr.bf16.mxu0 %v5961
    %6232 = vmatmul.mubr.bf16.gmra.mrb[0].mxu0 %v5960
    %v6233 = vpop.f32.mrb[0].mxu0
    %v6234 = vadd.f32 %v5661, %v6233
    %v6235 = vpop.f32.mrb[0].mxu0
    %v6236 = vpop.f32.mrb[0].mxu0
    %v6237 = vadd.f32 %v5661, %v6236
    %v6238 = vpop.f32.mrb[0].mxu0
    %6239 = vmatprep.mubr.bf16.mxu0 %v5964
    %6240 = vmatmul.mubr.bf16.gmra.mrb[0].mxu0 %v5963
    %v6241 = vpop.f32.mrb[0].mxu0
    %v6242 = vadd.f32 %v5661, %v6241
    %v6243 = vpop.f32.mrb[0].mxu0
    %v6244 = vpop.f32.mrb[0].mxu0
    %v6245 = vadd.f32 %v5661, %v6244
    %v6246 = vpop.f32.mrb[0].mxu0
    %6247 = vmatprep.mubr.bf16.mxu0 %v5967
    %6248 = vmatmul.mubr.bf16.gmra.mrb[0].mxu0 %v5966
    %v6249 = vpop.f32.mrb[0].mxu0
    %v6250 = vadd.f32 %v5661, %v6249
    %v6251 = vpop.f32.mrb[0].mxu0
    %v6252 = vpop.f32.mrb[0].mxu0
    %v6253 = vadd.f32 %v5661, %v6252
    %v6254 = vpop.f32.mrb[0].mxu0
    %6255 = vmatprep.mubr.bf16.mxu0 %v5970
    %6256 = vmatmul.mubr.bf16.gmra.mrb[0].mxu0 %v5969
    %v6257 = vpop.f32.mrb[0].mxu0
    %v6258 = vadd.f32 %v5661, %v6257
    %v6259 = vpop.f32.mrb[0].mxu0
    %v6260 = vpop.f32.mrb[0].mxu0
    %v6261 = vadd.f32 %v5661, %v6260
    %v6262 = vpop.f32.mrb[0].mxu0
    %6263 = vmatprep.mubr.bf16.mxu0 %v5973
    %6264 = vmatmul.mubr.bf16.gmra.mrb[0].mxu0 %v5972
    %v6265 = vpop.f32.mrb[0].mxu0
    %v6266 = vadd.f32 %v5661, %v6265
    %v6267 = vpop.f32.mrb[0].mxu0
    %v6268 = vpop.f32.mrb[0].mxu0
    %v6269 = vadd.f32 %v5661, %v6268
    %v6270 = vpop.f32.mrb[0].mxu0
    %6271 = vdwg.mxu0
    %6272 = vmatprep.subr.bf16.mxu0 0
    %6273 = vmatpush1.bf16.msra.mxu0 %v5648
    %6274 = vmatprep.subr.bf16.mxu0 0
    %6275 = vmatpush1.bf16.msra.mxu0 %v5649
    %6276 = vmatprep.subr.bf16.mxu0 0
    %6277 = vmatpush1.bf16.msra.mxu0 %v5650
    %6278 = vmatprep.subr.bf16.mxu0 0
    %6279 = vmatpush1.bf16.msra.mxu0 %v5651
    %6280 = vmatprep.subr.bf16.mxu0 0
    %6281 = vmatpush1.bf16.msra.mxu0 %v5652
    %6282 = vmatprep.subr.bf16.mxu0 0
    %6283 = vmatpush1.bf16.msra.mxu0 %v5653
    %6284 = vmatprep.subr.bf16.mxu0 0
    %6285 = vmatpush1.bf16.msra.mxu0 %v5654
    %6286 = vmatprep.subr.bf16.mxu0 0
    %6287 = vmatpush1.bf16.msra.mxu0 %v5655
    %6288 = vmatprep.subr.bf16.mxu0 0
    %6289 = vmatpush1.bf16.msra.mxu0 0
    %6290 = vmatprep.subr.bf16.mxu0 0
    %6291 = vmatpush1.bf16.msra.mxu0 0
    %6292 = vmatprep.subr.bf16.mxu0 0
    %6293 = vmatpush1.bf16.msra.mxu0 0
    %6294 = vmatprep.subr.bf16.mxu0 0
    %6295 = vmatpush1.bf16.msra.mxu0 0
    %6296 = vmatprep.subr.bf16.mxu0 0
    %6297 = vmatpush1.bf16.msra.mxu0 0
    %6298 = vmatprep.subr.bf16.mxu0 0
    %6299 = vmatpush1.bf16.msra.mxu0 0
    %6300 = vmatprep.subr.bf16.mxu0 0
    %6301 = vmatpush1.bf16.msra.mxu0 0
    %6302 = vmatprep.subr.bf16.mxu0 0
    %6303 = vmatpush1.bf16.msra.mxu0 0
    %6304 = vmatprep.mubr.bf16.mxu0 0
    %6305 = vmatmul.mubr.bf16.gmra.mrb[0].mxu0 %v5905
    %v6306 = vpop.f32.mrb[0].mxu0
    %v6307 = vadd.f32 %v6082, %v6306
    %v6308 = vpop.f32.mrb[0].mxu0
    %v6309 = vpop.f32.mrb[0].mxu0
    %v6310 = vadd.f32 %v6085, %v6309
    %v6311 = vpop.f32.mrb[0].mxu0
    %6312 = vmatprep.mubr.bf16.mxu0 0
    %6313 = vmatmul.mubr.bf16.gmra.mrb[0].mxu0 %v5908
    %v6314 = vpop.f32.mrb[0].mxu0
    %v6315 = vadd.f32 %v6090, %v6314
    %v6316 = vpop.f32.mrb[0].mxu0
    %v6317 = vpop.f32.mrb[0].mxu0
    %v6318 = vadd.f32 %v6093, %v6317
    %v6319 = vpop.f32.mrb[0].mxu0
    %6320 = vmatprep.mubr.bf16.mxu0 0
    %6321 = vmatmul.mubr.bf16.gmra.mrb[0].mxu0 %v5911
    %v6322 = vpop.f32.mrb[0].mxu0
    %v6323 = vadd.f32 %v6098, %v6322
    %v6324 = vpop.f32.mrb[0].mxu0
    %v6325 = vpop.f32.mrb[0].mxu0
    %v6326 = vadd.f32 %v6101, %v6325
    %v6327 = vpop.f32.mrb[0].mxu0
    %6328 = vmatprep.mubr.bf16.mxu0 0
    %6329 = vmatmul.mubr.bf16.gmra.mrb[0].mxu0 %v5914
    %v6330 = vpop.f32.mrb[0].mxu0
    %v6331 = vadd.f32 %v6106, %v6330
    %v6332 = vpop.f32.mrb[0].mxu0
    %v6333 = vpop.f32.mrb[0].mxu0
    %v6334 = vadd.f32 %v6109, %v6333
    %v6335 = vpop.f32.mrb[0].mxu0
    %6336 = vmatprep.mubr.bf16.mxu0 0
    %6337 = vmatmul.mubr.bf16.gmra.mrb[0].mxu0 %v5917
    %v6338 = vpop.f32.mrb[0].mxu0
    %v6339 = vadd.f32 %v6114, %v6338
    %v6340 = vpop.f32.mrb[0].mxu0
    %v6341 = vpop.f32.mrb[0].mxu0
    %v6342 = vadd.f32 %v6117, %v6341
    %v6343 = vpop.f32.mrb[0].mxu0
    %6344 = vmatprep.mubr.bf16.mxu0 0
    %6345 = vmatmul.mubr.bf16.gmra.mrb[0].mxu0 %v5920
    %v6346 = vpop.f32.mrb[0].mxu0
    %v6347 = vadd.f32 %v6122, %v6346
    %v6348 = vpop.f32.mrb[0].mxu0
    %v6349 = vpop.f32.mrb[0].mxu0
    %v6350 = vadd.f32 %v6125, %v6349
    %v6351 = vpop.f32.mrb[0].mxu0
    %6352 = vmatprep.mubr.bf16.mxu0 0
    %6353 = vmatmul.mubr.bf16.gmra.mrb[0].mxu0 %v5923
    %v6354 = vpop.f32.mrb[0].mxu0
    %v6355 = vadd.f32 %v6130, %v6354
    %v6356 = vpop.f32.mrb[0].mxu0
    %v6357 = vpop.f32.mrb[0].mxu0
    %v6358 = vadd.f32 %v6133, %v6357
    %v6359 = vpop.f32.mrb[0].mxu0
    %6360 = vmatprep.mubr.bf16.mxu0 0
    %6361 = vmatmul.mubr.bf16.gmra.mrb[0].mxu0 %v5926
    %v6362 = vpop.f32.mrb[0].mxu0
    %v6363 = vadd.f32 %v6138, %v6362
    %v6364 = vpop.f32.mrb[0].mxu0
    %v6365 = vpop.f32.mrb[0].mxu0
    %v6366 = vadd.f32 %v6141, %v6365
    %v6367 = vpop.f32.mrb[0].mxu0
    %6368 = vmatprep.mubr.bf16.mxu0 0
    %6369 = vmatmul.mubr.bf16.gmra.mrb[0].mxu0 %v5929
    %v6370 = vpop.f32.mrb[0].mxu0
    %v6371 = vadd.f32 %v6146, %v6370
    %v6372 = vpop.f32.mrb[0].mxu0
    %v6373 = vpop.f32.mrb[0].mxu0
    %v6374 = vadd.f32 %v6149, %v6373
    %v6375 = vpop.f32.mrb[0].mxu0
    %6376 = vmatprep.mubr.bf16.mxu0 0
    %6377 = vmatmul.mubr.bf16.gmra.mrb[0].mxu0 %v5932
    %v6378 = vpop.f32.mrb[0].mxu0
    %v6379 = vadd.f32 %v6154, %v6378
    %v6380 = vpop.f32.mrb[0].mxu0
    %v6381 = vpop.f32.mrb[0].mxu0
    %v6382 = vadd.f32 %v6157, %v6381
    %v6383 = vpop.f32.mrb[0].mxu0
    %6384 = vmatprep.mubr.bf16.mxu0 0
    %6385 = vmatmul.mubr.bf16.gmra.mrb[0].mxu0 %v5935
    %v6386 = vpop.f32.mrb[0].mxu0
    %v6387 = vadd.f32 %v6162, %v6386
    %v6388 = vpop.f32.mrb[0].mxu0
    %v6389 = vpop.f32.mrb[0].mxu0
    %v6390 = vadd.f32 %v6165, %v6389
    %v6391 = vpop.f32.mrb[0].mxu0
    %6392 = vmatprep.mubr.bf16.mxu0 0
    %6393 = vmatmul.mubr.bf16.gmra.mrb[0].mxu0 %v5938
    %v6394 = vpop.f32.mrb[0].mxu0
    %v6395 = vadd.f32 %v6170, %v6394
    %v6396 = vpop.f32.mrb[0].mxu0
    %v6397 = vpop.f32.mrb[0].mxu0
    %v6398 = vadd.f32 %v6173, %v6397
    %v6399 = vpop.f32.mrb[0].mxu0
    %6400 = vmatprep.mubr.bf16.mxu0 0
    %6401 = vmatmul.mubr.bf16.gmra.mrb[0].mxu0 %v5941
    %v6402 = vpop.f32.mrb[0].mxu0
    %v6403 = vadd.f32 %v6178, %v6402
    %v6404 = vpop.f32.mrb[0].mxu0
    %v6405 = vpop.f32.mrb[0].mxu0
    %v6406 = vadd.f32 %v6181, %v6405
    %v6407 = vpop.f32.mrb[0].mxu0
    %6408 = vmatprep.mubr.bf16.mxu0 0
    %6409 = vmatmul.mubr.bf16.gmra.mrb[0].mxu0 %v5944
    %v6410 = vpop.f32.mrb[0].mxu0
    %v6411 = vadd.f32 %v6186, %v6410
    %v6412 = vpop.f32.mrb[0].mxu0
    %v6413 = vpop.f32.mrb[0].mxu0
    %v6414 = vadd.f32 %v6189, %v6413
    %v6415 = vpop.f32.mrb[0].mxu0
    %6416 = vmatprep.mubr.bf16.mxu0 0
    %6417 = vmatmul.mubr.bf16.gmra.mrb[0].mxu0 %v5947
    %v6418 = vpop.f32.mrb[0].mxu0
    %v6419 = vadd.f32 %v6194, %v6418
    %v6420 = vpop.f32.mrb[0].mxu0
    %v6421 = vpop.f32.mrb[0].mxu0
    %v6422 = vadd.f32 %v6197, %v6421
    %v6423 = vpop.f32.mrb[0].mxu0
    %6424 = vmatprep.mubr.bf16.mxu0 0
    %6425 = vmatmul.mubr.bf16.gmra.mrb[0].mxu0 %v5950
    %v6426 = vpop.f32.mrb[0].mxu0
    %v6427 = vadd.f32 %v6202, %v6426
    %v6428 = vpop.f32.mrb[0].mxu0
    %v6429 = vpop.f32.mrb[0].mxu0
    %v6430 = vadd.f32 %v6205, %v6429
    %v6431 = vpop.f32.mrb[0].mxu0
    %6432 = vmatprep.mubr.bf16.mxu0 0
    %6433 = vmatmul.mubr.bf16.gmra.mrb[0].mxu0 %v5953
    %v6434 = vpop.f32.mrb[0].mxu0
    %v6435 = vadd.f32 %v6210, %v6434
    %v6436 = vpop.f32.mrb[0].mxu0
    %v6437 = vpop.f32.mrb[0].mxu0
    %v6438 = vadd.f32 %v6213, %v6437
    %v6439 = vpop.f32.mrb[0].mxu0
    %6440 = vmatprep.mubr.bf16.mxu0 0
    %6441 = vmatmul.mubr.bf16.gmra.mrb[0].mxu0 %v5956
    %v6442 = vpop.f32.mrb[0].mxu0
    %v6443 = vadd.f32 %v6218, %v6442
    %v6444 = vpop.f32.mrb[0].mxu0
    %v6445 = vpop.f32.mrb[0].mxu0
    %v6446 = vadd.f32 %v6221, %v6445
    %v6447 = vpop.f32.mrb[0].mxu0
    %6448 = vmatprep.mubr.bf16.mxu0 0
    %6449 = vmatmul.mubr.bf16.gmra.mrb[0].mxu0 %v5959
    %v6450 = vpop.f32.mrb[0].mxu0
    %v6451 = vadd.f32 %v6226, %v6450
    %v6452 = vpop.f32.mrb[0].mxu0
    %v6453 = vpop.f32.mrb[0].mxu0
    %v6454 = vadd.f32 %v6229, %v6453
    %v6455 = vpop.f32.mrb[0].mxu0
    %6456 = vmatprep.mubr.bf16.mxu0 0
    %6457 = vmatmul.mubr.bf16.gmra.mrb[0].mxu0 %v5962
    %v6458 = vpop.f32.mrb[0].mxu0
    %v6459 = vadd.f32 %v6234, %v6458
    %v6460 = vpop.f32.mrb[0].mxu0
    %v6461 = vpop.f32.mrb[0].mxu0
    %v6462 = vadd.f32 %v6237, %v6461
    %v6463 = vpop.f32.mrb[0].mxu0
    %6464 = vmatprep.mubr.bf16.mxu0 0
    %6465 = vmatmul.mubr.bf16.gmra.mrb[0].mxu0 %v5965
    %v6466 = vpop.f32.mrb[0].mxu0
    %v6467 = vadd.f32 %v6242, %v6466
    %v6468 = vpop.f32.mrb[0].mxu0
    %v6469 = vpop.f32.mrb[0].mxu0
    %v6470 = vadd.f32 %v6245, %v6469
    %v6471 = vpop.f32.mrb[0].mxu0
    %6472 = vmatprep.mubr.bf16.mxu0 0
    %6473 = vmatmul.mubr.bf16.gmra.mrb[0].mxu0 %v5968
    %v6474 = vpop.f32.mrb[0].mxu0
    %v6475 = vadd.f32 %v6250, %v6474
    %v6476 = vpop.f32.mrb[0].mxu0
    %v6477 = vpop.f32.mrb[0].mxu0
    %v6478 = vadd.f32 %v6253, %v6477
    %v6479 = vpop.f32.mrb[0].mxu0
    %6480 = vmatprep.mubr.bf16.mxu0 0
    %6481 = vmatmul.mubr.bf16.gmra.mrb[0].mxu0 %v5971
    %v6482 = vpop.f32.mrb[0].mxu0
    %v6483 = vadd.f32 %v6258, %v6482
    %v6484 = vpop.f32.mrb[0].mxu0
    %v6485 = vpop.f32.mrb[0].mxu0
    %v6486 = vadd.f32 %v6261, %v6485
    %v6487 = vpop.f32.mrb[0].mxu0
    %6488 = vmatprep.mubr.bf16.mxu0 0
    %6489 = vmatmul.mubr.bf16.gmra.mrb[0].mxu0 %v5974
    %v6490 = vpop.f32.mrb[0].mxu0
    %v6491 = vadd.f32 %v6266, %v6490
    %v6492 = vpop.f32.mrb[0].mxu0
    %v6493 = vpop.f32.mrb[0].mxu0
    %v6494 = vadd.f32 %v6269, %v6493
    %v6495 = vpop.f32.mrb[0].mxu0
    %6496 = vdwg.mxu0
    %v6497 = vld [vmem:[%s12] sm:$0x1]
    %v6498 = vld [vmem:[%s13] sm:$0x1]
    %v6499 = vmul.f32 %v6307, %v364
    %v6500 = vmul.f32 %v6310, %v365
    %v6501 = vmul.f32 %v6315, %v366
    %v6502 = vmul.f32 %v6318, %v367
    %v6503 = vmul.f32 %v6323, %v368
    %v6504 = vmul.f32 %v6326, %v369
    %v6505 = vmul.f32 %v6331, %v370
    %v6506 = vmul.f32 %v6334, %v371
    %v6507 = vmul.f32 %v6339, %v372
    %v6508 = vmul.f32 %v6342, %v373
    %v6509 = vmul.f32 %v6347, %v374
    %v6510 = vmul.f32 %v6350, %v375
    %v6511 = vmul.f32 %v6355, %v376
    %v6512 = vmul.f32 %v6358, %v377
    %v6513 = vmul.f32 %v6363, %v378
    %v6514 = vmul.f32 %v6366, %v379
    %v6515 = vmul.f32 %v6371, %v380
    %v6516 = vmul.f32 %v6374, %v381
    %v6517 = vmul.f32 %v6379, %v382
    %v6518 = vmul.f32 %v6382, %v383
    %v6519 = vmul.f32 %v6387, %v384
    %v6520 = vmul.f32 %v6390, %v385
    %v6521 = vmul.f32 %v6395, %v386
    %v6522 = vmul.f32 %v6398, %v387
    %v6523 = vmul.f32 %v6403, %v388
    %v6524 = vmul.f32 %v6406, %v389
    %v6525 = vmul.f32 %v6411, %v390
    %v6526 = vmul.f32 %v6414, %v391
    %v6527 = vmul.f32 %v6419, %v392
    %v6528 = vmul.f32 %v6422, %v393
    %v6529 = vmul.f32 %v6427, %v394
    %v6530 = vmul.f32 %v6430, %v395
    %v6531 = vmul.f32 %v6435, %v396
    %v6532 = vmul.f32 %v6438, %v397
    %v6533 = vmul.f32 %v6443, %v398
    %v6534 = vmul.f32 %v6446, %v399
    %v6535 = vmul.f32 %v6451, %v400
    %v6536 = vmul.f32 %v6454, %v401
    %v6537 = vmul.f32 %v6459, %v402
    %v6538 = vmul.f32 %v6462, %v403
    %v6539 = vmul.f32 %v6467, %v404
    %v6540 = vmul.f32 %v6470, %v405
    %v6541 = vmul.f32 %v6475, %v406
    %v6542 = vmul.f32 %v6478, %v407
    %v6543 = vmul.f32 %v6483, %v408
    %v6544 = vmul.f32 %v6486, %v409
    %v6545 = vmul.f32 %v6491, %v410
    %v6546 = vmul.f32 %v6494, %v411
    %v6547 = vadd.f32 %v6499, %v6500
    %v6548 = vadd.f32 %v6547, %v6501
    %v6549 = vadd.f32 %v6548, %v6502
    %v6550 = vadd.f32 %v6549, %v6503
    %v6551 = vadd.f32 %v6550, %v6504
    %v6552 = vadd.f32 %v6551, %v6505
    %v6553 = vadd.f32 %v6552, %v6506
    %v6554 = vadd.f32 %v6553, %v6507
    %v6555 = vadd.f32 %v6554, %v6508
    %v6556 = vadd.f32 %v6555, %v6509
    %v6557 = vadd.f32 %v6556, %v6510
    %v6558 = vadd.f32 %v6557, %v6511
    %v6559 = vadd.f32 %v6558, %v6512
    %v6560 = vadd.f32 %v6559, %v6513
    %v6561 = vadd.f32 %v6560, %v6514
    %v6562 = vadd.f32 %v6561, %v6515
    %v6563 = vadd.f32 %v6562, %v6516
    %v6564 = vadd.f32 %v6563, %v6517
    %v6565 = vadd.f32 %v6564, %v6518
    %v6566 = vadd.f32 %v6565, %v6519
    %v6567 = vadd.f32 %v6566, %v6520
    %v6568 = vadd.f32 %v6567, %v6521
    %v6569 = vadd.f32 %v6568, %v6522
    %v6570 = vadd.f32 %v6569, %v6523
    %v6571 = vadd.f32 %v6570, %v6524
    %v6572 = vadd.f32 %v6571, %v6525
    %v6573 = vadd.f32 %v6572, %v6526
    %v6574 = vadd.f32 %v6573, %v6527
    %v6575 = vadd.f32 %v6574, %v6528
    %v6576 = vadd.f32 %v6575, %v6529
    %v6577 = vadd.f32 %v6576, %v6530
    %v6578 = vadd.f32 %v6577, %v6531
    %v6579 = vadd.f32 %v6578, %v6532
    %v6580 = vadd.f32 %v6579, %v6533
    %v6581 = vadd.f32 %v6580, %v6534
    %v6582 = vadd.f32 %v6581, %v6535
    %v6583 = vadd.f32 %v6582, %v6536
    %v6584 = vadd.f32 %v6583, %v6537
    %v6585 = vadd.f32 %v6584, %v6538
    %v6586 = vadd.f32 %v6585, %v6539
    %v6587 = vadd.f32 %v6586, %v6540
    %v6588 = vadd.f32 %v6587, %v6541
    %v6589 = vadd.f32 %v6588, %v6542
    %v6590 = vadd.f32 %v6589, %v6543
    %v6591 = vadd.f32 %v6590, %v6544
    %v6592 = vadd.f32 %v6591, %v6545
    %v6593 = vadd.f32 %v6592, %v6546
    %v6594 = vrot.slane %v6593, 4
    %v6595 = vadd.f32 %v6593, %v6594
    %v6596 = vrot.slane %v6595, 2
    %v6597 = vadd.f32 %v6595, %v6596
    %v6598 = vrot.slane %v6597, 1
    %v6599 = vadd.f32 %v6597, %v6598
    %v6600 = vmul.f32 %v6599, 0.003125
    %v6601 = vsub.f32 %v6307, %v6600
    %v6602 = vsub.f32 %v6310, %v6600
    %v6603 = vsub.f32 %v6315, %v6600
    %v6604 = vsub.f32 %v6318, %v6600
    %v6605 = vsub.f32 %v6323, %v6600
    %v6606 = vsub.f32 %v6326, %v6600
    %v6607 = vsub.f32 %v6331, %v6600
    %v6608 = vsub.f32 %v6334, %v6600
    %v6609 = vsub.f32 %v6339, %v6600
    %v6610 = vsub.f32 %v6342, %v6600
    %v6611 = vsub.f32 %v6347, %v6600
    %v6612 = vsub.f32 %v6350, %v6600
    %v6613 = vsub.f32 %v6355, %v6600
    %v6614 = vsub.f32 %v6358, %v6600
    %v6615 = vsub.f32 %v6363, %v6600
    %v6616 = vsub.f32 %v6366, %v6600
    %v6617 = vsub.f32 %v6371, %v6600
    %v6618 = vsub.f32 %v6374, %v6600
    %v6619 = vsub.f32 %v6379, %v6600
    %v6620 = vsub.f32 %v6382, %v6600
    %v6621 = vsub.f32 %v6387, %v6600
    %v6622 = vsub.f32 %v6390, %v6600
    %v6623 = vsub.f32 %v6395, %v6600
    %v6624 = vsub.f32 %v6398, %v6600
    %v6625 = vsub.f32 %v6403, %v6600
    %v6626 = vsub.f32 %v6406, %v6600
    %v6627 = vsub.f32 %v6411, %v6600
    %v6628 = vsub.f32 %v6414, %v6600
    %v6629 = vsub.f32 %v6419, %v6600
    %v6630 = vsub.f32 %v6422, %v6600
    %v6631 = vsub.f32 %v6427, %v6600
    %v6632 = vsub.f32 %v6430, %v6600
    %v6633 = vsub.f32 %v6435, %v6600
    %v6634 = vsub.f32 %v6438, %v6600
    %v6635 = vsub.f32 %v6443, %v6600
    %v6636 = vsub.f32 %v6446, %v6600
    %v6637 = vsub.f32 %v6451, %v6600
    %v6638 = vsub.f32 %v6454, %v6600
    %v6639 = vsub.f32 %v6459, %v6600
    %v6640 = vsub.f32 %v6462, %v6600
    %v6641 = vsub.f32 %v6467, %v6600
    %v6642 = vsub.f32 %v6470, %v6600
    %v6643 = vsub.f32 %v6475, %v6600
    %v6644 = vsub.f32 %v6478, %v6600
    %v6645 = vsub.f32 %v6483, %v6600
    %v6646 = vsub.f32 %v6486, %v6600
    %v6647 = vsub.f32 %v6491, %v6600
    %v6648 = vsub.f32 %v6494, %v6600
    %v6649 = vmul.f32 %v6601, %v364
    %v6650 = vmul.f32 %v6602, %v365
    %v6651 = vmul.f32 %v6603, %v366
    %v6652 = vmul.f32 %v6604, %v367
    %v6653 = vmul.f32 %v6605, %v368
    %v6654 = vmul.f32 %v6606, %v369
    %v6655 = vmul.f32 %v6607, %v370
    %v6656 = vmul.f32 %v6608, %v371
    %v6657 = vmul.f32 %v6609, %v372
    %v6658 = vmul.f32 %v6610, %v373
    %v6659 = vmul.f32 %v6611, %v374
    %v6660 = vmul.f32 %v6612, %v375
    %v6661 = vmul.f32 %v6613, %v376
    %v6662 = vmul.f32 %v6614, %v377
    %v6663 = vmul.f32 %v6615, %v378
    %v6664 = vmul.f32 %v6616, %v379
    %v6665 = vmul.f32 %v6617, %v380
    %v6666 = vmul.f32 %v6618, %v381
    %v6667 = vmul.f32 %v6619, %v382
    %v6668 = vmul.f32 %v6620, %v383
    %v6669 = vmul.f32 %v6621, %v384
    %v6670 = vmul.f32 %v6622, %v385
    %v6671 = vmul.f32 %v6623, %v386
    %v6672 = vmul.f32 %v6624, %v387
    %v6673 = vmul.f32 %v6625, %v388
    %v6674 = vmul.f32 %v6626, %v389
    %v6675 = vmul.f32 %v6627, %v390
    %v6676 = vmul.f32 %v6628, %v391
    %v6677 = vmul.f32 %v6629, %v392
    %v6678 = vmul.f32 %v6630, %v393
    %v6679 = vmul.f32 %v6631, %v394
    %v6680 = vmul.f32 %v6632, %v395
    %v6681 = vmul.f32 %v6633, %v396
    %v6682 = vmul.f32 %v6634, %v397
    %v6683 = vmul.f32 %v6635, %v398
    %v6684 = vmul.f32 %v6636, %v399
    %v6685 = vmul.f32 %v6637, %v400
    %v6686 = vmul.f32 %v6638, %v401
    %v6687 = vmul.f32 %v6639, %v402
    %v6688 = vmul.f32 %v6640, %v403
    %v6689 = vmul.f32 %v6641, %v404
    %v6690 = vmul.f32 %v6642, %v405
    %v6691 = vmul.f32 %v6643, %v406
    %v6692 = vmul.f32 %v6644, %v407
    %v6693 = vmul.f32 %v6645, %v408
    %v6694 = vmul.f32 %v6646, %v409
    %v6695 = vmul.f32 %v6647, %v410
    %v6696 = vmul.f32 %v6648, %v411
    %v6697 = vmul.f32 %v6649, %v6649
    %v6698 = vmul.f32 %v6650, %v6650
    %v6699 = vmul.f32 %v6651, %v6651
    %v6700 = vmul.f32 %v6652, %v6652
    %v6701 = vmul.f32 %v6653, %v6653
    %v6702 = vmul.f32 %v6654, %v6654
    %v6703 = vmul.f32 %v6655, %v6655
    %v6704 = vmul.f32 %v6656, %v6656
    %v6705 = vmul.f32 %v6657, %v6657
    %v6706 = vmul.f32 %v6658, %v6658
    %v6707 = vmul.f32 %v6659, %v6659
    %v6708 = vmul.f32 %v6660, %v6660
    %v6709 = vmul.f32 %v6661, %v6661
    %v6710 = vmul.f32 %v6662, %v6662
    %v6711 = vmul.f32 %v6663, %v6663
    %v6712 = vmul.f32 %v6664, %v6664
    %v6713 = vmul.f32 %v6665, %v6665
    %v6714 = vmul.f32 %v6666, %v6666
    %v6715 = vmul.f32 %v6667, %v6667
    %v6716 = vmul.f32 %v6668, %v6668
    %v6717 = vmul.f32 %v6669, %v6669
    %v6718 = vmul.f32 %v6670, %v6670
    %v6719 = vmul.f32 %v6671, %v6671
    %v6720 = vmul.f32 %v6672, %v6672
    %v6721 = vmul.f32 %v6673, %v6673
    %v6722 = vmul.f32 %v6674, %v6674
    %v6723 = vmul.f32 %v6675, %v6675
    %v6724 = vmul.f32 %v6676, %v6676
    %v6725 = vmul.f32 %v6677, %v6677
    %v6726 = vmul.f32 %v6678, %v6678
    %v6727 = vmul.f32 %v6679, %v6679
    %v6728 = vmul.f32 %v6680, %v6680
    %v6729 = vmul.f32 %v6681, %v6681
    %v6730 = vmul.f32 %v6682, %v6682
    %v6731 = vmul.f32 %v6683, %v6683
    %v6732 = vmul.f32 %v6684, %v6684
    %v6733 = vmul.f32 %v6685, %v6685
    %v6734 = vmul.f32 %v6686, %v6686
    %v6735 = vmul.f32 %v6687, %v6687
    %v6736 = vmul.f32 %v6688, %v6688
    %v6737 = vmul.f32 %v6689, %v6689
    %v6738 = vmul.f32 %v6690, %v6690
    %v6739 = vmul.f32 %v6691, %v6691
    %v6740 = vmul.f32 %v6692, %v6692
    %v6741 = vmul.f32 %v6693, %v6693
    %v6742 = vmul.f32 %v6694, %v6694
    %v6743 = vmul.f32 %v6695, %v6695
    %v6744 = vmul.f32 %v6696, %v6696
    %v6745 = vadd.f32 %v6697, %v6698
    %v6746 = vadd.f32 %v6745, %v6699
    %v6747 = vadd.f32 %v6746, %v6700
    %v6748 = vadd.f32 %v6747, %v6701
    %v6749 = vadd.f32 %v6748, %v6702
    %v6750 = vadd.f32 %v6749, %v6703
    %v6751 = vadd.f32 %v6750, %v6704
    %v6752 = vadd.f32 %v6751, %v6705
    %v6753 = vadd.f32 %v6752, %v6706
    %v6754 = vadd.f32 %v6753, %v6707
    %v6755 = vadd.f32 %v6754, %v6708
    %v6756 = vadd.f32 %v6755, %v6709
    %v6757 = vadd.f32 %v6756, %v6710
    %v6758 = vadd.f32 %v6757, %v6711
    %v6759 = vadd.f32 %v6758, %v6712
    %v6760 = vadd.f32 %v6759, %v6713
    %v6761 = vadd.f32 %v6760, %v6714
    %v6762 = vadd.f32 %v6761, %v6715
    %v6763 = vadd.f32 %v6762, %v6716
    %v6764 = vadd.f32 %v6763, %v6717
    %v6765 = vadd.f32 %v6764, %v6718
    %v6766 = vadd.f32 %v6765, %v6719
    %v6767 = vadd.f32 %v6766, %v6720
    %v6768 = vadd.f32 %v6767, %v6721
    %v6769 = vadd.f32 %v6768, %v6722
    %v6770 = vadd.f32 %v6769, %v6723
    %v6771 = vadd.f32 %v6770, %v6724
    %v6772 = vadd.f32 %v6771, %v6725
    %v6773 = vadd.f32 %v6772, %v6726
    %v6774 = vadd.f32 %v6773, %v6727
    %v6775 = vadd.f32 %v6774, %v6728
    %v6776 = vadd.f32 %v6775, %v6729
    %v6777 = vadd.f32 %v6776, %v6730
    %v6778 = vadd.f32 %v6777, %v6731
    %v6779 = vadd.f32 %v6778, %v6732
    %v6780 = vadd.f32 %v6779, %v6733
    %v6781 = vadd.f32 %v6780, %v6734
    %v6782 = vadd.f32 %v6781, %v6735
    %v6783 = vadd.f32 %v6782, %v6736
    %v6784 = vadd.f32 %v6783, %v6737
    %v6785 = vadd.f32 %v6784, %v6738
    %v6786 = vadd.f32 %v6785, %v6739
    %v6787 = vadd.f32 %v6786, %v6740
    %v6788 = vadd.f32 %v6787, %v6741
    %v6789 = vadd.f32 %v6788, %v6742
    %v6790 = vadd.f32 %v6789, %v6743
    %v6791 = vadd.f32 %v6790, %v6744
    %v6792 = vrot.slane %v6791, 4
    %v6793 = vadd.f32 %v6791, %v6792
    %v6794 = vrot.slane %v6793, 2
    %v6795 = vadd.f32 %v6793, %v6794
    %v6796 = vrot.slane %v6795, 1
    %v6797 = vadd.f32 %v6795, %v6796
    %v6798 = vmul.f32 %v6797, 0.003125
    %v6799 = vadd.f32 %v6798, 1e-05
    %v6800 = vrsqrt.pop %v6799
    %v6801 = vmul.f32 %v6601, %v6800
    %v6802 = vmul.f32 %v6602, %v6800
    %v6803 = vmul.f32 %v6603, %v6800
    %v6804 = vmul.f32 %v6604, %v6800
    %v6805 = vmul.f32 %v6605, %v6800
    %v6806 = vmul.f32 %v6606, %v6800
    %v6807 = vmul.f32 %v6607, %v6800
    %v6808 = vmul.f32 %v6608, %v6800
    %v6809 = vmul.f32 %v6609, %v6800
    %v6810 = vmul.f32 %v6610, %v6800
    %v6811 = vmul.f32 %v6611, %v6800
    %v6812 = vmul.f32 %v6612, %v6800
    %v6813 = vmul.f32 %v6613, %v6800
    %v6814 = vmul.f32 %v6614, %v6800
    %v6815 = vmul.f32 %v6615, %v6800
    %v6816 = vmul.f32 %v6616, %v6800
    %v6817 = vmul.f32 %v6617, %v6800
    %v6818 = vmul.f32 %v6618, %v6800
    %v6819 = vmul.f32 %v6619, %v6800
    %v6820 = vmul.f32 %v6620, %v6800
    %v6821 = vmul.f32 %v6621, %v6800
    %v6822 = vmul.f32 %v6622, %v6800
    %v6823 = vmul.f32 %v6623, %v6800
    %v6824 = vmul.f32 %v6624, %v6800
    %v6825 = vmul.f32 %v6625, %v6800
    %v6826 = vmul.f32 %v6626, %v6800
    %v6827 = vmul.f32 %v6627, %v6800
    %v6828 = vmul.f32 %v6628, %v6800
    %v6829 = vmul.f32 %v6629, %v6800
    %v6830 = vmul.f32 %v6630, %v6800
    %v6831 = vmul.f32 %v6631, %v6800
    %v6832 = vmul.f32 %v6632, %v6800
    %v6833 = vmul.f32 %v6633, %v6800
    %v6834 = vmul.f32 %v6634, %v6800
    %v6835 = vmul.f32 %v6635, %v6800
    %v6836 = vmul.f32 %v6636, %v6800
    %v6837 = vmul.f32 %v6637, %v6800
    %v6838 = vmul.f32 %v6638, %v6800
    %v6839 = vmul.f32 %v6639, %v6800
    %v6840 = vmul.f32 %v6640, %v6800
    %v6841 = vmul.f32 %v6641, %v6800
    %v6842 = vmul.f32 %v6642, %v6800
    %v6843 = vmul.f32 %v6643, %v6800
    %v6844 = vmul.f32 %v6644, %v6800
    %v6845 = vmul.f32 %v6645, %v6800
    %v6846 = vmul.f32 %v6646, %v6800
    %v6847 = vmul.f32 %v6647, %v6800
    %v6848 = vmul.f32 %v6648, %v6800
    %v6850 = vlaneseq
    %v6851 = vshrl.u32 %v6850, 7
    %v6852 = vsub.s32 0, %v6851
    %v6853 = vrot.slane %v6497, %v6852
    %v6855 = vmul.f32 %v6801, %v6853
    %v6856 = vmul.f32 %v6802, %v6853
    %v6857 = vmul.f32 %v6803, %v6853
    %v6858 = vmul.f32 %v6804, %v6853
    %v6859 = vmul.f32 %v6805, %v6853
    %v6860 = vmul.f32 %v6806, %v6853
    %v6861 = vmul.f32 %v6807, %v6853
    %v6862 = vmul.f32 %v6808, %v6853
    %v6863 = vmul.f32 %v6809, %v6853
    %v6864 = vmul.f32 %v6810, %v6853
    %v6865 = vmul.f32 %v6811, %v6853
    %v6866 = vmul.f32 %v6812, %v6853
    %v6867 = vmul.f32 %v6813, %v6853
    %v6868 = vmul.f32 %v6814, %v6853
    %v6869 = vmul.f32 %v6815, %v6853
    %v6870 = vmul.f32 %v6816, %v6853
    %v6871 = vmul.f32 %v6817, %v6853
    %v6872 = vmul.f32 %v6818, %v6853
    %v6873 = vmul.f32 %v6819, %v6853
    %v6874 = vmul.f32 %v6820, %v6853
    %v6875 = vmul.f32 %v6821, %v6853
    %v6876 = vmul.f32 %v6822, %v6853
    %v6877 = vmul.f32 %v6823, %v6853
    %v6878 = vmul.f32 %v6824, %v6853
    %v6879 = vmul.f32 %v6825, %v6853
    %v6880 = vmul.f32 %v6826, %v6853
    %v6881 = vmul.f32 %v6827, %v6853
    %v6882 = vmul.f32 %v6828, %v6853
    %v6883 = vmul.f32 %v6829, %v6853
    %v6884 = vmul.f32 %v6830, %v6853
    %v6885 = vmul.f32 %v6831, %v6853
    %v6886 = vmul.f32 %v6832, %v6853
    %v6887 = vmul.f32 %v6833, %v6853
    %v6888 = vmul.f32 %v6834, %v6853
    %v6889 = vmul.f32 %v6835, %v6853
    %v6890 = vmul.f32 %v6836, %v6853
    %v6891 = vmul.f32 %v6837, %v6853
    %v6892 = vmul.f32 %v6838, %v6853
    %v6893 = vmul.f32 %v6839, %v6853
    %v6894 = vmul.f32 %v6840, %v6853
    %v6895 = vmul.f32 %v6841, %v6853
    %v6896 = vmul.f32 %v6842, %v6853
    %v6897 = vmul.f32 %v6843, %v6853
    %v6898 = vmul.f32 %v6844, %v6853
    %v6899 = vmul.f32 %v6845, %v6853
    %v6900 = vmul.f32 %v6846, %v6853
    %v6901 = vmul.f32 %v6847, %v6853
    %v6902 = vmul.f32 %v6848, %v6853
    %v6904 = vlaneseq
    %v6905 = vshrl.u32 %v6904, 7
    %v6906 = vsub.s32 0, %v6905
    %v6907 = vrot.slane %v6498, %v6906
    %v6909 = vadd.f32 %v6855, %v6907
    %v6910 = vadd.f32 %v6856, %v6907
    %v6911 = vadd.f32 %v6857, %v6907
    %v6912 = vadd.f32 %v6858, %v6907
    %v6913 = vadd.f32 %v6859, %v6907
    %v6914 = vadd.f32 %v6860, %v6907
    %v6915 = vadd.f32 %v6861, %v6907
    %v6916 = vadd.f32 %v6862, %v6907
    %v6917 = vadd.f32 %v6863, %v6907
    %v6918 = vadd.f32 %v6864, %v6907
    %v6919 = vadd.f32 %v6865, %v6907
    %v6920 = vadd.f32 %v6866, %v6907
    %v6921 = vadd.f32 %v6867, %v6907
    %v6922 = vadd.f32 %v6868, %v6907
    %v6923 = vadd.f32 %v6869, %v6907
    %v6924 = vadd.f32 %v6870, %v6907
    %v6925 = vadd.f32 %v6871, %v6907
    %v6926 = vadd.f32 %v6872, %v6907
    %v6927 = vadd.f32 %v6873, %v6907
    %v6928 = vadd.f32 %v6874, %v6907
    %v6929 = vadd.f32 %v6875, %v6907
    %v6930 = vadd.f32 %v6876, %v6907
    %v6931 = vadd.f32 %v6877, %v6907
    %v6932 = vadd.f32 %v6878, %v6907
    %v6933 = vadd.f32 %v6879, %v6907
    %v6934 = vadd.f32 %v6880, %v6907
    %v6935 = vadd.f32 %v6881, %v6907
    %v6936 = vadd.f32 %v6882, %v6907
    %v6937 = vadd.f32 %v6883, %v6907
    %v6938 = vadd.f32 %v6884, %v6907
    %v6939 = vadd.f32 %v6885, %v6907
    %v6940 = vadd.f32 %v6886, %v6907
    %v6941 = vadd.f32 %v6887, %v6907
    %v6942 = vadd.f32 %v6888, %v6907
    %v6943 = vadd.f32 %v6889, %v6907
    %v6944 = vadd.f32 %v6890, %v6907
    %v6945 = vadd.f32 %v6891, %v6907
    %v6946 = vadd.f32 %v6892, %v6907
    %v6947 = vadd.f32 %v6893, %v6907
    %v6948 = vadd.f32 %v6894, %v6907
    %v6949 = vadd.f32 %v6895, %v6907
    %v6950 = vadd.f32 %v6896, %v6907
    %v6951 = vadd.f32 %v6897, %v6907
    %v6952 = vadd.f32 %v6898, %v6907
    %v6953 = vadd.f32 %v6899, %v6907
    %v6954 = vadd.f32 %v6900, %v6907
    %v6955 = vadd.f32 %v6901, %v6907
    %v6956 = vadd.f32 %v6902, %v6907
    %v6957 = vmax.f32 %v6909, 0.0
    %v6958 = vmax.f32 %v6910, 0.0
    %v6959 = vmax.f32 %v6911, 0.0
    %v6960 = vmax.f32 %v6912, 0.0
    %v6961 = vmax.f32 %v6913, 0.0
    %v6962 = vmax.f32 %v6914, 0.0
    %v6963 = vmax.f32 %v6915, 0.0
    %v6964 = vmax.f32 %v6916, 0.0
    %v6965 = vmax.f32 %v6917, 0.0
    %v6966 = vmax.f32 %v6918, 0.0
    %v6967 = vmax.f32 %v6919, 0.0
    %v6968 = vmax.f32 %v6920, 0.0
    %v6969 = vmax.f32 %v6921, 0.0
    %v6970 = vmax.f32 %v6922, 0.0
    %v6971 = vmax.f32 %v6923, 0.0
    %v6972 = vmax.f32 %v6924, 0.0
    %v6973 = vmax.f32 %v6925, 0.0
    %v6974 = vmax.f32 %v6926, 0.0
    %v6975 = vmax.f32 %v6927, 0.0
    %v6976 = vmax.f32 %v6928, 0.0
    %v6977 = vmax.f32 %v6929, 0.0
    %v6978 = vmax.f32 %v6930, 0.0
    %v6979 = vmax.f32 %v6931, 0.0
    %v6980 = vmax.f32 %v6932, 0.0
    %v6981 = vmax.f32 %v6933, 0.0
    %v6982 = vmax.f32 %v6934, 0.0
    %v6983 = vmax.f32 %v6935, 0.0
    %v6984 = vmax.f32 %v6936, 0.0
    %v6985 = vmax.f32 %v6937, 0.0
    %v6986 = vmax.f32 %v6938, 0.0
    %v6987 = vmax.f32 %v6939, 0.0
    %v6988 = vmax.f32 %v6940, 0.0
    %v6989 = vmax.f32 %v6941, 0.0
    %v6990 = vmax.f32 %v6942, 0.0
    %v6991 = vmax.f32 %v6943, 0.0
    %v6992 = vmax.f32 %v6944, 0.0
    %v6993 = vmax.f32 %v6945, 0.0
    %v6994 = vmax.f32 %v6946, 0.0
    %v6995 = vmax.f32 %v6947, 0.0
    %v6996 = vmax.f32 %v6948, 0.0
    %v6997 = vmax.f32 %v6949, 0.0
    %v6998 = vmax.f32 %v6950, 0.0
    %v6999 = vmax.f32 %v6951, 0.0
    %v7000 = vmax.f32 %v6952, 0.0
    %v7001 = vmax.f32 %v6953, 0.0
    %v7002 = vmax.f32 %v6954, 0.0
    %v7003 = vmax.f32 %v6955, 0.0
    %v7004 = vmax.f32 %v6956, 0.0
    %v7005 = vadd.f32 %v6957, %v679
    %v7006 = vadd.f32 %v6958, %v682
    %v7007 = vadd.f32 %v6959, %v687
    %v7008 = vadd.f32 %v6960, %v690
    %v7009 = vadd.f32 %v6961, %v695
    %v7010 = vadd.f32 %v6962, %v698
    %v7011 = vadd.f32 %v6963, %v703
    %v7012 = vadd.f32 %v6964, %v706
    %v7013 = vadd.f32 %v6965, %v711
    %v7014 = vadd.f32 %v6966, %v714
    %v7015 = vadd.f32 %v6967, %v719
    %v7016 = vadd.f32 %v6968, %v722
    %v7017 = vadd.f32 %v6969, %v727
    %v7018 = vadd.f32 %v6970, %v730
    %v7019 = vadd.f32 %v6971, %v735
    %v7020 = vadd.f32 %v6972, %v738
    %v7021 = vadd.f32 %v6973, %v743
    %v7022 = vadd.f32 %v6974, %v746
    %v7023 = vadd.f32 %v6975, %v751
    %v7024 = vadd.f32 %v6976, %v754
    %v7025 = vadd.f32 %v6977, %v759
    %v7026 = vadd.f32 %v6978, %v762
    %v7027 = vadd.f32 %v6979, %v767
    %v7028 = vadd.f32 %v6980, %v770
    %v7029 = vadd.f32 %v6981, %v775
    %v7030 = vadd.f32 %v6982, %v778
    %v7031 = vadd.f32 %v6983, %v783
    %v7032 = vadd.f32 %v6984, %v786
    %v7033 = vadd.f32 %v6985, %v791
    %v7034 = vadd.f32 %v6986, %v794
    %v7035 = vadd.f32 %v6987, %v799
    %v7036 = vadd.f32 %v6988, %v802
    %v7037 = vadd.f32 %v6989, %v807
    %v7038 = vadd.f32 %v6990, %v810
    %v7039 = vadd.f32 %v6991, %v815
    %v7040 = vadd.f32 %v6992, %v818
    %v7041 = vadd.f32 %v6993, %v823
    %v7042 = vadd.f32 %v6994, %v826
    %v7043 = vadd.f32 %v6995, %v831
    %v7044 = vadd.f32 %v6996, %v834
    %v7045 = vadd.f32 %v6997, %v839
    %v7046 = vadd.f32 %v6998, %v842
    %v7047 = vadd.f32 %v6999, %v847
    %v7048 = vadd.f32 %v7000, %v850
    %v7049 = vadd.f32 %v7001, %v855
    %v7050 = vadd.f32 %v7002, %v858
    %v7051 = vadd.f32 %v7003, %v863
    %v7052 = vadd.f32 %v7004, %v866
    %v7053 = vpack.c.bf16 %v463, %v460
    %v7054 = vpack.c.bf16 %v464, %v461
    %v7055 = vpack.c.bf16 %v465, %v462
    %v7056 = vpack.c.bf16 %v466, %v466
    %v7057 = vpack.c.bf16 %v467, %v467
    %v7058 = vpack.c.bf16 %v468, %v468
    %v7059 = vpack.c.bf16 %v5240, %v5239
    %v7060 = vpack.c.bf16 %v5242, %v5241
    %v7061 = vpack.c.bf16 %v5244, %v5243
    %v7062 = vpack.c.bf16 %v5246, %v5245
    %v7063 = vpack.c.bf16 %v5248, %v5247
    %v7064 = vpack.c.bf16 %v5250, %v5249
    %v7065 = vpack.c.bf16 %v5252, %v5251
    %v7066 = vpack.c.bf16 %v5254, %v5253
    %v7067 = vpack.c.bf16 %v5256, %v5255
    %v7068 = vpack.c.bf16 %v5258, %v5257
    %v7069 = vpack.c.bf16 %v5260, %v5259
    %v7070 = vpack.c.bf16 %v5262, %v5261
    %v7071 = vpack.c.bf16 %v5264, %v5263
    %v7072 = vpack.c.bf16 %v5266, %v5265
    %v7073 = vpack.c.bf16 %v5268, %v5267
    %v7074 = vpack.c.bf16 %v5270, %v5269
    %v7075 = vpack.c.bf16 %v5272, %v5271
    %v7076 = vpack.c.bf16 %v5274, %v5273
    %v7077 = vpack.c.bf16 %v5276, %v5275
    %v7078 = vpack.c.bf16 %v5278, %v5277
    %v7079 = vpack.c.bf16 %v5280, %v5279
    %v7080 = vpack.c.bf16 %v5282, %v5281
    %v7081 = vpack.c.bf16 %v5284, %v5283
    %v7082 = vpack.c.bf16 %v5286, %v5285
    %7083 = vmatprep.subr.bf16.mxu0 0
    %7084 = vmatpush1.bf16.msra.mxu0 %v7059
    %7085 = vmatprep.subr.bf16.mxu0 0
    %7086 = vmatpush1.bf16.msra.mxu0 %v7060
    %7087 = vmatprep.subr.bf16.mxu0 0
    %7088 = vmatpush1.bf16.msra.mxu0 %v7061
    %7089 = vmatprep.subr.bf16.mxu0 0
    %7090 = vmatpush1.bf16.msra.mxu0 %v7062
    %7091 = vmatprep.subr.bf16.mxu0 0
    %7092 = vmatpush1.bf16.msra.mxu0 %v7063
    %7093 = vmatprep.subr.bf16.mxu0 0
    %7094 = vmatpush1.bf16.msra.mxu0 %v7064
    %7095 = vmatprep.subr.bf16.mxu0 0
    %7096 = vmatpush1.bf16.msra.mxu0 %v7065
    %7097 = vmatprep.subr.bf16.mxu0 0
    %7098 = vmatpush1.bf16.msra.mxu0 %v7066
    %7099 = vmatprep.subr.bf16.mxu0 0
    %7100 = vmatpush1.bf16.msra.mxu0 %v7067
    %7101 = vmatprep.subr.bf16.mxu0 0
    %7102 = vmatpush1.bf16.msra.mxu0 %v7068
    %7103 = vmatprep.subr.bf16.mxu0 0
    %7104 = vmatpush1.bf16.msra.mxu0 %v7069
    %7105 = vmatprep.subr.bf16.mxu0 0
    %7106 = vmatpush1.bf16.msra.mxu0 %v7070
    %7107 = vmatprep.subr.bf16.mxu0 0
    %7108 = vmatpush1.bf16.msra.mxu0 %v7071
    %7109 = vmatprep.subr.bf16.mxu0 0
    %7110 = vmatpush1.bf16.msra.mxu0 %v7072
    %7111 = vmatprep.subr.bf16.mxu0 0
    %7112 = vmatpush1.bf16.msra.mxu0 %v7073
    %7113 = vmatprep.subr.bf16.mxu0 0
    %7114 = vmatpush1.bf16.msra.mxu0 %v7074
    %7115 = vmatprep.mubr.bf16.mxu0 %v7054
    %7116 = vmatmul.mubr.bf16.gmra.mrb[0].mxu0 %v7053
    %v7117 = vpop.f32.mrb[0].mxu0
    %v7118 = vadd.f32 0.0, %v7117
    %v7119 = vpop.f32.mrb[0].mxu0
    %v7120 = vpop.f32.mrb[0].mxu0
    %v7121 = vadd.f32 0.0, %v7120
    %v7122 = vpop.f32.mrb[0].mxu0
    %7123 = vmatprep.mubr.bf16.mxu0 %v7057
    %7124 = vmatmul.mubr.bf16.gmra.mrb[0].mxu0 %v7056
    %v7125 = vpop.f32.mrb[0].mxu0
    %v7126 = vadd.f32 0.0, %v7125
    %v7127 = vpop.f32.mrb[0].mxu0
    %v7128 = vpop.f32.mrb[0].mxu0
    %v7129 = vpop.f32.mrb[0].mxu0
    %7130 = vdwg.mxu0
    %7131 = vmatprep.subr.bf16.mxu0 0
    %7132 = vmatpush1.bf16.msra.mxu0 %v7075
    %7133 = vmatprep.subr.bf16.mxu0 0
    %7134 = vmatpush1.bf16.msra.mxu0 %v7076
    %7135 = vmatprep.subr.bf16.mxu0 0
    %7136 = vmatpush1.bf16.msra.mxu0 %v7077
    %7137 = vmatprep.subr.bf16.mxu0 0
    %7138 = vmatpush1.bf16.msra.mxu0 %v7078
    %7139 = vmatprep.subr.bf16.mxu0 0
    %7140 = vmatpush1.bf16.msra.mxu0 %v7079
    %7141 = vmatprep.subr.bf16.mxu0 0
    %7142 = vmatpush1.bf16.msra.mxu0 %v7080
    %7143 = vmatprep.subr.bf16.mxu0 0
    %7144 = vmatpush1.bf16.msra.mxu0 %v7081
    %7145 = vmatprep.subr.bf16.mxu0 0
    %7146 = vmatpush1.bf16.msra.mxu0 %v7082
    %7147 = vmatprep.subr.bf16.mxu0 0
    %7148 = vmatpush1.bf16.msra.mxu0 0
    %7149 = vmatprep.subr.bf16.mxu0 0
    %7150 = vmatpush1.bf16.msra.mxu0 0
    %7151 = vmatprep.subr.bf16.mxu0 0
    %7152 = vmatpush1.bf16.msra.mxu0 0
    %7153 = vmatprep.subr.bf16.mxu0 0
    %7154 = vmatpush1.bf16.msra.mxu0 0
    %7155 = vmatprep.subr.bf16.mxu0 0
    %7156 = vmatpush1.bf16.msra.mxu0 0
    %7157 = vmatprep.subr.bf16.mxu0 0
    %7158 = vmatpush1.bf16.msra.mxu0 0
    %7159 = vmatprep.subr.bf16.mxu0 0
    %7160 = vmatpush1.bf16.msra.mxu0 0
    %7161 = vmatprep.subr.bf16.mxu0 0
    %7162 = vmatpush1.bf16.msra.mxu0 0
    %7163 = vmatprep.mubr.bf16.mxu0 0
    %7164 = vmatmul.mubr.bf16.gmra.mrb[0].mxu0 %v7055
    %v7165 = vpop.f32.mrb[0].mxu0
    %v7166 = vadd.f32 %v7118, %v7165
    %v7167 = vpop.f32.mrb[0].mxu0
    %v7168 = vpop.f32.mrb[0].mxu0
    %v7169 = vadd.f32 %v7121, %v7168
    %v7170 = vpop.f32.mrb[0].mxu0
    %7171 = vmatprep.mubr.bf16.mxu0 0
    %7172 = vmatmul.mubr.bf16.gmra.mrb[0].mxu0 %v7058
    %v7173 = vpop.f32.mrb[0].mxu0
    %v7174 = vadd.f32 %v7126, %v7173
    %v7175 = vpop.f32.mrb[0].mxu0
    %v7176 = vpop.f32.mrb[0].mxu0
    %v7177 = vpop.f32.mrb[0].mxu0
    %7178 = vdwg.mxu0
    %v7179 = vpack.c.bf16 %v7006, %v7005
    %v7180 = vpack.c.bf16 %v7008, %v7007
    %v7181 = vpack.c.bf16 %v7010, %v7009
    %v7182 = vpack.c.bf16 %v7012, %v7011
    %v7183 = vpack.c.bf16 %v7014, %v7013
    %v7184 = vpack.c.bf16 %v7016, %v7015
    %v7185 = vpack.c.bf16 %v7018, %v7017
    %v7186 = vpack.c.bf16 %v7020, %v7019
    %v7187 = vpack.c.bf16 %v7022, %v7021
    %v7188 = vpack.c.bf16 %v7024, %v7023
    %v7189 = vpack.c.bf16 %v7026, %v7025
    %v7190 = vpack.c.bf16 %v7028, %v7027
    %v7191 = vpack.c.bf16 %v7030, %v7029
    %v7192 = vpack.c.bf16 %v7032, %v7031
    %v7193 = vpack.c.bf16 %v7034, %v7033
    %v7194 = vpack.c.bf16 %v7036, %v7035
    %v7195 = vpack.c.bf16 %v7038, %v7037
    %v7196 = vpack.c.bf16 %v7040, %v7039
    %v7197 = vpack.c.bf16 %v7042, %v7041
    %v7198 = vpack.c.bf16 %v7044, %v7043
    %v7199 = vpack.c.bf16 %v7046, %v7045
    %v7200 = vpack.c.bf16 %v7048, %v7047
    %v7201 = vpack.c.bf16 %v7050, %v7049
    %v7202 = vpack.c.bf16 %v7052, %v7051
    %7203 = vmatprep.subr.bf16.mxu0 0
    %7204 = vmatpush1.bf16.msra.mxu0 %v7179
    %7205 = vmatprep.subr.bf16.mxu0 0
    %7206 = vmatpush1.bf16.msra.mxu0 %v7180
    %7207 = vmatprep.subr.bf16.mxu0 0
    %7208 = vmatpush1.bf16.msra.mxu0 %v7181
    %7209 = vmatprep.subr.bf16.mxu0 0
    %7210 = vmatpush1.bf16.msra.mxu0 %v7182
    %7211 = vmatprep.subr.bf16.mxu0 0
    %7212 = vmatpush1.bf16.msra.mxu0 %v7183
    %7213 = vmatprep.subr.bf16.mxu0 0
    %7214 = vmatpush1.bf16.msra.mxu0 %v7184
    %7215 = vmatprep.subr.bf16.mxu0 0
    %7216 = vmatpush1.bf16.msra.mxu0 %v7185
    %7217 = vmatprep.subr.bf16.mxu0 0
    %7218 = vmatpush1.bf16.msra.mxu0 %v7186
    %7219 = vmatprep.subr.bf16.mxu0 0
    %7220 = vmatpush1.bf16.msra.mxu0 %v7187
    %7221 = vmatprep.subr.bf16.mxu0 0
    %7222 = vmatpush1.bf16.msra.mxu0 %v7188
    %7223 = vmatprep.subr.bf16.mxu0 0
    %7224 = vmatpush1.bf16.msra.mxu0 %v7189
    %7225 = vmatprep.subr.bf16.mxu0 0
    %7226 = vmatpush1.bf16.msra.mxu0 %v7190
    %7227 = vmatprep.subr.bf16.mxu0 0
    %7228 = vmatpush1.bf16.msra.mxu0 %v7191
    %7229 = vmatprep.subr.bf16.mxu0 0
    %7230 = vmatpush1.bf16.msra.mxu0 %v7192
    %7231 = vmatprep.subr.bf16.mxu0 0
    %7232 = vmatpush1.bf16.msra.mxu0 %v7193
    %7233 = vmatprep.subr.bf16.mxu0 0
    %7234 = vmatpush1.bf16.msra.mxu0 %v7194
    %7235 = vmatprep.mubr.bf16.mxu0 %v7054
    %7236 = vmatmul.mubr.bf16.gmra.mrb[0].mxu0 %v7053
    %v7237 = vpop.f32.mrb[0].mxu0
    %v7238 = vadd.f32 0.0, %v7237
    %v7239 = vpop.f32.mrb[0].mxu0
    %v7240 = vpop.f32.mrb[0].mxu0
    %v7241 = vadd.f32 0.0, %v7240
    %v7242 = vpop.f32.mrb[0].mxu0
    %7243 = vmatprep.mubr.bf16.mxu0 %v7057
    %7244 = vmatmul.mubr.bf16.gmra.mrb[0].mxu0 %v7056
    %v7245 = vpop.f32.mrb[0].mxu0
    %v7246 = vadd.f32 0.0, %v7245
    %v7247 = vpop.f32.mrb[0].mxu0
    %v7248 = vpop.f32.mrb[0].mxu0
    %v7249 = vpop.f32.mrb[0].mxu0
    %7250 = vdwg.mxu0
    %7251 = vmatprep.subr.bf16.mxu0 0
    %7252 = vmatpush1.bf16.msra.mxu0 %v7195
    %7253 = vmatprep.subr.bf16.mxu0 0
    %7254 = vmatpush1.bf16.msra.mxu0 %v7196
    %7255 = vmatprep.subr.bf16.mxu0 0
    %7256 = vmatpush1.bf16.msra.mxu0 %v7197
    %7257 = vmatprep.subr.bf16.mxu0 0
    %7258 = vmatpush1.bf16.msra.mxu0 %v7198
    %7259 = vmatprep.subr.bf16.mxu0 0
    %7260 = vmatpush1.bf16.msra.mxu0 %v7199
    %7261 = vmatprep.subr.bf16.mxu0 0
    %7262 = vmatpush1.bf16.msra.mxu0 %v7200
    %7263 = vmatprep.subr.bf16.mxu0 0
    %7264 = vmatpush1.bf16.msra.mxu0 %v7201
    %7265 = vmatprep.subr.bf16.mxu0 0
    %7266 = vmatpush1.bf16.msra.mxu0 %v7202
    %7267 = vmatprep.subr.bf16.mxu0 0
    %7268 = vmatpush1.bf16.msra.mxu0 0
    %7269 = vmatprep.subr.bf16.mxu0 0
    %7270 = vmatpush1.bf16.msra.mxu0 0
    %7271 = vmatprep.subr.bf16.mxu0 0
    %7272 = vmatpush1.bf16.msra.mxu0 0
    %7273 = vmatprep.subr.bf16.mxu0 0
    %7274 = vmatpush1.bf16.msra.mxu0 0
    %7275 = vmatprep.subr.bf16.mxu0 0
    %7276 = vmatpush1.bf16.msra.mxu0 0
    %7277 = vmatprep.subr.bf16.mxu0 0
    %7278 = vmatpush1.bf16.msra.mxu0 0
    %7279 = vmatprep.subr.bf16.mxu0 0
    %7280 = vmatpush1.bf16.msra.mxu0 0
    %7281 = vmatprep.subr.bf16.mxu0 0
    %7282 = vmatpush1.bf16.msra.mxu0 0
    %7283 = vmatprep.mubr.bf16.mxu0 0
    %7284 = vmatmul.mubr.bf16.gmra.mrb[0].mxu0 %v7055
    %v7285 = vpop.f32.mrb[0].mxu0
    %v7286 = vadd.f32 %v7238, %v7285
    %v7287 = vpop.f32.mrb[0].mxu0
    %v7288 = vpop.f32.mrb[0].mxu0
    %v7289 = vadd.f32 %v7241, %v7288
    %v7290 = vpop.f32.mrb[0].mxu0
    %7291 = vmatprep.mubr.bf16.mxu0 0
    %7292 = vmatmul.mubr.bf16.gmra.mrb[0].mxu0 %v7058
    %v7293 = vpop.f32.mrb[0].mxu0
    %v7294 = vadd.f32 %v7246, %v7293
    %v7295 = vpop.f32.mrb[0].mxu0
    %v7296 = vpop.f32.mrb[0].mxu0
    %v7297 = vpop.f32.mrb[0].mxu0
    %7298 = vdwg.mxu0
    %v7299 = vld [vmem:[#allocation18] sm:$0xff]
    %v7300 = vld [vmem:[#allocation18 + $0x8] sm:$0xff]
    %v7301 = vld [vmem:[#allocation18 + $0x10] sm:$0xff]
    %v7302 = vld [vmem:[#allocation18 + $0x18] sm:$0xff]
    %v7303 = vld [vmem:[#allocation18 + $0x20] sm:$0xff]
    %v7304 = vld [vmem:[#allocation18 + $0x28] sm:$0xff]
    %v7305 = vld [vmem:[#allocation18 + $0x30] sm:$0xff]
    %v7306 = vld [vmem:[#allocation18 + $0x38] sm:$0xff]
    %v7307 = vld [vmem:[#allocation18 + $0x40] sm:$0xff]
    %v7308 = vld [vmem:[#allocation18 + $0x48] sm:$0xff]
    %v7309 = vld [vmem:[#allocation18 + $0x50] sm:$0xff]
    %v7310 = vld [vmem:[#allocation18 + $0x58] sm:$0xff]
    %v7311 = vld [vmem:[#allocation18 + $0x60] sm:$0xff]
    %v7312 = vld [vmem:[#allocation18 + $0x68] sm:$0xff]
    %v7313 = vld [vmem:[#allocation18 + $0x70] sm:$0xff]
    %v7314 = vld [vmem:[#allocation18 + $0x78] sm:$0xff]
    %v7315 = vpack.c.bf16 %v7169, %v7166
    %v7316 = vpack.c.bf16 %v7174, %v7174
    %v7317 = vpack.c.bf16 %v7300, %v7299
    %v7318 = vpack.c.bf16 %v7302, %v7301
    %v7319 = vpack.c.bf16 %v7304, %v7303
    %v7320 = vpack.c.bf16 %v7306, %v7305
    %v7321 = vpack.c.bf16 %v7308, %v7307
    %v7322 = vpack.c.bf16 %v7310, %v7309
    %v7323 = vpack.c.bf16 %v7312, %v7311
    %v7324 = vpack.c.bf16 %v7314, %v7313
    %v7325 = vld [vmem:[#allocation20] sm:$0xff]
    %v7326 = vld [vmem:[#allocation20 + $0x8] sm:$0xff]
    %v7327 = vld [vmem:[#allocation20 + $0x10] sm:$0xff]
    %v7328 = vld [vmem:[#allocation20 + $0x18] sm:$0xff]
    %v7329 = vld [vmem:[#allocation20 + $0x20] sm:$0xff]
    %v7330 = vld [vmem:[#allocation20 + $0x28] sm:$0xff]
    %v7331 = vld [vmem:[#allocation20 + $0x30] sm:$0xff]
    %v7332 = vld [vmem:[#allocation20 + $0x38] sm:$0xff]
    %v7333 = vld [vmem:[#allocation20 + $0x40] sm:$0xff]
    %v7334 = vld [vmem:[#allocation20 + $0x48] sm:$0xff]
    %v7335 = vld [vmem:[#allocation20 + $0x50] sm:$0xff]
    %v7336 = vld [vmem:[#allocation20 + $0x58] sm:$0xff]
    %v7337 = vld [vmem:[#allocation20 + $0x60] sm:$0xff]
    %v7338 = vld [vmem:[#allocation20 + $0x68] sm:$0xff]
    %v7339 = vld [vmem:[#allocation20 + $0x70] sm:$0xff]
    %v7340 = vld [vmem:[#allocation20 + $0x78] sm:$0xff]
    %v7341 = vpack.c.bf16 %v7289, %v7286
    %v7342 = vpack.c.bf16 %v7294, %v7294
    %v7343 = vpack.c.bf16 %v7326, %v7325
    %v7344 = vpack.c.bf16 %v7328, %v7327
    %v7345 = vpack.c.bf16 %v7330, %v7329
    %v7346 = vpack.c.bf16 %v7332, %v7331
    %v7347 = vpack.c.bf16 %v7334, %v7333
    %v7348 = vpack.c.bf16 %v7336, %v7335
    %v7349 = vpack.c.bf16 %v7338, %v7337
    %v7350 = vpack.c.bf16 %v7340, %v7339
    %7351 = vmatprep.subr.bf16.mxu0 0
    %7352 = vmatpush1.bf16.msra.mxu0 %v7343
    %7353 = vmatprep.subr.bf16.mxu0 0
    %7354 = vmatpush1.bf16.msra.mxu0 %v7344
    %7355 = vmatprep.subr.bf16.mxu0 0
    %7356 = vmatpush1.bf16.msra.mxu0 %v7345
    %7357 = vmatprep.subr.bf16.mxu0 0
    %7358 = vmatpush1.bf16.msra.mxu0 %v7346
    %7359 = vmatprep.subr.bf16.mxu0 0
    %7360 = vmatpush1.bf16.msra.mxu0 %v7347
    %7361 = vmatprep.subr.bf16.mxu0 0
    %7362 = vmatpush1.bf16.msra.mxu0 %v7348
    %7363 = vmatprep.subr.bf16.mxu0 0
    %7364 = vmatpush1.bf16.msra.mxu0 %v7349
    %7365 = vmatprep.subr.bf16.mxu0 0
    %7366 = vmatpush1.bf16.msra.mxu0 %v7350
    %7367 = vmatprep.subr.bf16.mxu0 0
    %7368 = vmatpush1.bf16.msra.mxu0 0
    %7369 = vmatprep.subr.bf16.mxu0 0
    %7370 = vmatpush1.bf16.msra.mxu0 0
    %7371 = vmatprep.subr.bf16.mxu0 0
    %7372 = vmatpush1.bf16.msra.mxu0 0
    %7373 = vmatprep.subr.bf16.mxu0 0
    %7374 = vmatpush1.bf16.msra.mxu0 0
    %7375 = vmatprep.subr.bf16.mxu0 0
    %7376 = vmatpush1.bf16.msra.mxu0 0
    %7377 = vmatprep.subr.bf16.mxu0 0
    %7378 = vmatpush1.bf16.msra.mxu0 0
    %7379 = vmatprep.subr.bf16.mxu0 0
    %7380 = vmatpush1.bf16.msra.mxu0 0
    %7381 = vmatprep.subr.bf16.mxu0 0
    %7382 = vmatpush1.bf16.msra.mxu0 0
    %7383 = vmatprep.mubr.bf16.mxu0 0
    %7384 = vmatmul.mubr.bf16.gmra.mrb[0].mxu0 %v7341
    %v7385 = vpop.f32.mrb[0].mxu0
    %v7386 = vadd.f32 0.0, %v7385
    %v7387 = vpop.f32.mrb[0].mxu0
    %v7388 = vpop.f32.mrb[0].mxu0
    %v7389 = vadd.f32 0.0, %v7388
    %v7390 = vpop.f32.mrb[0].mxu0
    %7391 = vmatprep.mubr.bf16.mxu0 0
    %7392 = vmatmul.mubr.bf16.gmra.mrb[0].mxu0 %v7342
    %v7393 = vpop.f32.mrb[0].mxu0
    %v7394 = vadd.f32 0.0, %v7393
    %v7395 = vpop.f32.mrb[0].mxu0
    %v7396 = vpop.f32.mrb[0].mxu0
    %v7397 = vpop.f32.mrb[0].mxu0
    %7398 = vdwg.mxu0
    %7399 = vmatprep.subr.bf16.mxu0 0
    %7400 = vmatpush1.bf16.msra.mxu0 %v7317
    %7401 = vmatprep.subr.bf16.mxu0 0
    %7402 = vmatpush1.bf16.msra.mxu0 %v7318
    %7403 = vmatprep.subr.bf16.mxu0 0
    %7404 = vmatpush1.bf16.msra.mxu0 %v7319
    %7405 = vmatprep.subr.bf16.mxu0 0
    %7406 = vmatpush1.bf16.msra.mxu0 %v7320
    %7407 = vmatprep.subr.bf16.mxu0 0
    %7408 = vmatpush1.bf16.msra.mxu0 %v7321
    %7409 = vmatprep.subr.bf16.mxu0 0
    %7410 = vmatpush1.bf16.msra.mxu0 %v7322
    %7411 = vmatprep.subr.bf16.mxu0 0
    %7412 = vmatpush1.bf16.msra.mxu0 %v7323
    %7413 = vmatprep.subr.bf16.mxu0 0
    %7414 = vmatpush1.bf16.msra.mxu0 %v7324
    %7415 = vmatprep.subr.bf16.mxu0 0
    %7416 = vmatpush1.bf16.msra.mxu0 0
    %7417 = vmatprep.subr.bf16.mxu0 0
    %7418 = vmatpush1.bf16.msra.mxu0 0
    %7419 = vmatprep.subr.bf16.mxu0 0
    %7420 = vmatpush1.bf16.msra.mxu0 0
    %7421 = vmatprep.subr.bf16.mxu0 0
    %7422 = vmatpush1.bf16.msra.mxu0 0
    %7423 = vmatprep.subr.bf16.mxu0 0
    %7424 = vmatpush1.bf16.msra.mxu0 0
    %7425 = vmatprep.subr.bf16.mxu0 0
    %7426 = vmatpush1.bf16.msra.mxu0 0
    %7427 = vmatprep.subr.bf16.mxu0 0
    %7428 = vmatpush1.bf16.msra.mxu0 0
    %7429 = vmatprep.subr.bf16.mxu0 0
    %7430 = vmatpush1.bf16.msra.mxu0 0
    %7431 = vmatprep.mubr.bf16.mxu0 0
    %7432 = vmatmul.mubr.bf16.gmra.mrb[0].mxu0 %v7315
    %v7433 = vpop.f32.mrb[0].mxu0
    %v7434 = vadd.f32 %v7386, %v7433
    %v7435 = vpop.f32.mrb[0].mxu0
    %v7436 = vpop.f32.mrb[0].mxu0
    %v7437 = vadd.f32 %v7389, %v7436
    %v7438 = vpop.f32.mrb[0].mxu0
    %7439 = vmatprep.mubr.bf16.mxu0 0
    %7440 = vmatmul.mubr.bf16.gmra.mrb[0].mxu0 %v7316
    %v7441 = vpop.f32.mrb[0].mxu0
    %v7442 = vadd.f32 %v7394, %v7441
    %v7443 = vpop.f32.mrb[0].mxu0
    %v7444 = vpop.f32.mrb[0].mxu0
    %v7445 = vpop.f32.mrb[0].mxu0
    %7446 = vdwg.mxu0
    %v7447 = vld [vmem:[%s16] sm:$0x1]
    %v7449 = vlaneseq
    %v7450 = vshrl.u32 %v7449, 7
    %v7451 = vsub.s32 0, %v7450
    %v7452 = vrot.slane %v7447, %v7451
    %v7454 = vadd.f32 %v7434, %v7452
    %v7455 = vadd.f32 %v7437, %v7452
    %v7456 = vadd.f32 %v7442, %v7452
    %v7457 = vmax.f32 %v7454, 0.0
    %v7458 = vmax.f32 %v7455, 0.0
    %v7459 = vmax.f32 %v7456, 0.0
    %v7460 = vld [vmem:[#allocation21] sm:$0xff]
    %v7461 = vld [vmem:[#allocation21 + $0x8] sm:$0xff]
    %v7462 = vld [vmem:[#allocation21 + $0x10] sm:$0xff]
    %v7463 = vld [vmem:[#allocation21 + $0x18] sm:$0xff]
    %v7464 = vld [vmem:[#allocation21 + $0x20] sm:$0xff]
    %v7465 = vld [vmem:[#allocation21 + $0x28] sm:$0xff]
    %v7466 = vld [vmem:[#allocation21 + $0x30] sm:$0xff]
    %v7467 = vld [vmem:[#allocation21 + $0x38] sm:$0xff]
    %v7468 = vld [vmem:[#allocation21 + $0x40] sm:$0xff]
    %v7469 = vld [vmem:[#allocation21 + $0x48] sm:$0xff]
    %v7470 = vld [vmem:[#allocation21 + $0x50] sm:$0xff]
    %v7471 = vld [vmem:[#allocation21 + $0x58] sm:$0xff]
    %v7472 = vld [vmem:[#allocation21 + $0x60] sm:$0xff]
    %v7473 = vld [vmem:[#allocation21 + $0x68] sm:$0xff]
    %v7474 = vld [vmem:[#allocation21 + $0x70] sm:$0xff]
    %v7475 = vld [vmem:[#allocation21 + $0x78] sm:$0xff]
    %v7476 = vpack.c.bf16 %v7458, %v7457
    %v7477 = vpack.c.bf16 %v7459, %v7459
    %v7478 = vpack.c.bf16 %v7461, %v7460
    %v7479 = vpack.c.bf16 %v7463, %v7462
    %v7480 = vpack.c.bf16 %v7465, %v7464
    %v7481 = vpack.c.bf16 %v7467, %v7466
    %v7482 = vpack.c.bf16 %v7469, %v7468
    %v7483 = vpack.c.bf16 %v7471, %v7470
    %v7484 = vpack.c.bf16 %v7473, %v7472
    %v7485 = vpack.c.bf16 %v7475, %v7474
    %v7486 = vld [vmem:[%s18] sm:$0x1]
    %v7488 = vlaneseq
    %v7489 = vshrl.u32 %v7488, 7
    %v7490 = vsub.s32 0, %v7489
    %v7491 = vrot.slane %v7486, %v7490
    %7493 = vmatprep.subr.bf16.mxu0 0
    %7494 = vmatpush1.bf16.msra.mxu0 %v7478
    %7495 = vmatprep.subr.bf16.mxu0 0
    %7496 = vmatpush1.bf16.msra.mxu0 %v7479
    %7497 = vmatprep.subr.bf16.mxu0 0
    %7498 = vmatpush1.bf16.msra.mxu0 %v7480
    %7499 = vmatprep.subr.bf16.mxu0 0
    %7500 = vmatpush1.bf16.msra.mxu0 %v7481
    %7501 = vmatprep.subr.bf16.mxu0 0
    %7502 = vmatpush1.bf16.msra.mxu0 %v7482
    %7503 = vmatprep.subr.bf16.mxu0 0
    %7504 = vmatpush1.bf16.msra.mxu0 %v7483
    %7505 = vmatprep.subr.bf16.mxu0 0
    %7506 = vmatpush1.bf16.msra.mxu0 %v7484
    %7507 = vmatprep.subr.bf16.mxu0 0
    %7508 = vmatpush1.bf16.msra.mxu0 %v7485
    %7509 = vmatprep.subr.bf16.mxu0 0
    %7510 = vmatpush1.bf16.msra.mxu0 0
    %7511 = vmatprep.subr.bf16.mxu0 0
    %7512 = vmatpush1.bf16.msra.mxu0 0
    %7513 = vmatprep.subr.bf16.mxu0 0
    %7514 = vmatpush1.bf16.msra.mxu0 0
    %7515 = vmatprep.subr.bf16.mxu0 0
    %7516 = vmatpush1.bf16.msra.mxu0 0
    %7517 = vmatprep.subr.bf16.mxu0 0
    %7518 = vmatpush1.bf16.msra.mxu0 0
    %7519 = vmatprep.subr.bf16.mxu0 0
    %7520 = vmatpush1.bf16.msra.mxu0 0
    %7521 = vmatprep.subr.bf16.mxu0 0
    %7522 = vmatpush1.bf16.msra.mxu0 0
    %7523 = vmatprep.subr.bf16.mxu0 0
    %7524 = vmatpush1.bf16.msra.mxu0 0
    %7525 = vmatprep.mubr.bf16.mxu0 0
    %7526 = vmatmul.mubr.bf16.gmra.mrb[0].mxu0 %v7476
    %v7527 = vpop.f32.mrb[0].mxu0
    %v7528 = vadd.f32 %v7491, %v7527
    %v7529 = vpop.f32.mrb[0].mxu0
    %v7530 = vpop.f32.mrb[0].mxu0
    %v7531 = vadd.f32 %v7491, %v7530
    %v7532 = vpop.f32.mrb[0].mxu0
    %7533 = vmatprep.mubr.bf16.mxu0 0
    %7534 = vmatmul.mubr.bf16.gmra.mrb[0].mxu0 %v7477
    %v7535 = vpop.f32.mrb[0].mxu0
    %v7536 = vadd.f32 %v7491, %v7535
    %v7537 = vpop.f32.mrb[0].mxu0
    %v7538 = vpop.f32.mrb[0].mxu0
    %v7539 = vpop.f32.mrb[0].mxu0
    %7540 = vdwg.mxu0
    %v7541 = vmax.f32 %v7528, 0.0
    %v7542 = vmax.f32 %v7531, 0.0
    %v7543 = vmax.f32 %v7536, 0.0
    %v7544 = vld [vmem:[#allocation23] sm:$0xff]
    %v7545 = vld [vmem:[#allocation23 + $0x8] sm:$0xff]
    %v7546 = vld [vmem:[#allocation23 + $0x10] sm:$0xff]
    %v7547 = vld [vmem:[#allocation23 + $0x18] sm:$0xff]
    %v7548 = vld [vmem:[#allocation23 + $0x20] sm:$0xff]
    %v7549 = vld [vmem:[#allocation23 + $0x28] sm:$0xff]
    %v7550 = vld [vmem:[#allocation23 + $0x30] sm:$0xff]
    %v7551 = vld [vmem:[#allocation23 + $0x38] sm:$0xff]
    %v7552 = vld [vmem:[#allocation23 + $0x40] sm:$0xff]
    %v7553 = vld [vmem:[#allocation23 + $0x48] sm:$0xff]
    %v7554 = vld [vmem:[#allocation23 + $0x50] sm:$0xff]
    %v7555 = vld [vmem:[#allocation23 + $0x58] sm:$0xff]
    %v7556 = vld [vmem:[#allocation23 + $0x60] sm:$0xff]
    %v7557 = vld [vmem:[#allocation23 + $0x68] sm:$0xff]
    %v7558 = vld [vmem:[#allocation23 + $0x70] sm:$0xff]
    %v7559 = vld [vmem:[#allocation23 + $0x78] sm:$0xff]
    %v7560 = vpack.c.bf16 %v7542, %v7541
    %v7561 = vpack.c.bf16 %v7543, %v7543
    %v7562 = vpack.c.bf16 %v7545, %v7544
    %v7563 = vpack.c.bf16 %v7547, %v7546
    %v7564 = vpack.c.bf16 %v7549, %v7548
    %v7565 = vpack.c.bf16 %v7551, %v7550
    %v7566 = vpack.c.bf16 %v7553, %v7552
    %v7567 = vpack.c.bf16 %v7555, %v7554
    %v7568 = vpack.c.bf16 %v7557, %v7556
    %v7569 = vpack.c.bf16 %v7559, %v7558
    %v7570 = vld [vmem:[%s20] sm:$0x1]
    %v7572 = vlaneseq
    %v7573 = vshrl.u32 %v7572, 7
    %v7574 = vsub.s32 0, %v7573
    %v7575 = vrot.slane %v7570, %v7574
    %7577 = vmatprep.subr.bf16.mxu0 0
    %7578 = vmatpush1.bf16.msra.mxu0 %v7562
    %7579 = vmatprep.subr.bf16.mxu0 0
    %7580 = vmatpush1.bf16.msra.mxu0 %v7563
    %7581 = vmatprep.subr.bf16.mxu0 0
    %7582 = vmatpush1.bf16.msra.mxu0 %v7564
    %7583 = vmatprep.subr.bf16.mxu0 0
    %7584 = vmatpush1.bf16.msra.mxu0 %v7565
    %7585 = vmatprep.subr.bf16.mxu0 0
    %7586 = vmatpush1.bf16.msra.mxu0 %v7566
    %7587 = vmatprep.subr.bf16.mxu0 0
    %7588 = vmatpush1.bf16.msra.mxu0 %v7567
    %7589 = vmatprep.subr.bf16.mxu0 0
    %7590 = vmatpush1.bf16.msra.mxu0 %v7568
    %7591 = vmatprep.subr.bf16.mxu0 0
    %7592 = vmatpush1.bf16.msra.mxu0 %v7569
    %7593 = vmatprep.subr.bf16.mxu0 0
    %7594 = vmatpush1.bf16.msra.mxu0 0
    %7595 = vmatprep.subr.bf16.mxu0 0
    %7596 = vmatpush1.bf16.msra.mxu0 0
    %7597 = vmatprep.subr.bf16.mxu0 0
    %7598 = vmatpush1.bf16.msra.mxu0 0
    %7599 = vmatprep.subr.bf16.mxu0 0
    %7600 = vmatpush1.bf16.msra.mxu0 0
    %7601 = vmatprep.subr.bf16.mxu0 0
    %7602 = vmatpush1.bf16.msra.mxu0 0
    %7603 = vmatprep.subr.bf16.mxu0 0
    %7604 = vmatpush1.bf16.msra.mxu0 0
    %7605 = vmatprep.subr.bf16.mxu0 0
    %7606 = vmatpush1.bf16.msra.mxu0 0
    %7607 = vmatprep.subr.bf16.mxu0 0
    %7608 = vmatpush1.bf16.msra.mxu0 0
    %7609 = vmatprep.mubr.bf16.mxu0 0
    %7610 = vmatmul.mubr.bf16.gmra.mrb[0].mxu0 %v7560
    %v7611 = vpop.f32.mrb[0].mxu0
    %v7612 = vadd.f32 %v7575, %v7611
    %v7613 = vpop.f32.mrb[0].mxu0
    %v7614 = vpop.f32.mrb[0].mxu0
    %v7615 = vadd.f32 %v7575, %v7614
    %v7616 = vpop.f32.mrb[0].mxu0
    %7617 = vmatprep.mubr.bf16.mxu0 0
    %7618 = vmatmul.mubr.bf16.gmra.mrb[0].mxu0 %v7561
    %v7619 = vpop.f32.mrb[0].mxu0
    %v7620 = vadd.f32 %v7575, %v7619
    %v7621 = vpop.f32.mrb[0].mxu0
    %v7622 = vpop.f32.mrb[0].mxu0
    %v7623 = vpop.f32.mrb[0].mxu0
    %7624 = vdwg.mxu0
    %7625 = vst [vmem:[#allocation24] sm:$0xff] %v7612
    %7626 = vst [vmem:[#allocation24 + $0x8] sm:$0xff] %v7615
    %7627 = vst [vmem:[#allocation24 + $0x10] sm:$0xff] %v7620
    // Predicated region
    $region130: #{tpu_custom_call.1} parent=1 // pred_check
      _
    $region131: #{tpu_custom_call.1} parent=1 // pred_check_branch
      %7629 = sbr.rel (0) target = $region133
    $region132: #{tpu_custom_call.1} parent=1 // pred_region
      %s7631 = ssub.s32 384, 384
      %7632 = vsyncadd [#allocation8], %s7631
      %s7633 = sshll.u32 [#allocation24], 4
      %s7634 = int_to_ptr.vmem [resolvable:$true] %s7633
      %7639 = dma.vmem_to_hbm [thread:$0]  %s7634, 384, %s21, [#allocation8], 128, 128, 8
    $region133: #{tpu_custom_call.1} parent=1 // pred_fallthru
      _
    // Predicated region
    $region134: #{tpu_custom_call.1} parent=1 // pred_check
      _
    $region135: #{tpu_custom_call.1} parent=1 // pred_check_branch
      %7641 = sbr.rel (0) target = $region137
    $region136: #{tpu_custom_call.1} parent=1 // pred_region
      %7642 = dma.done [#allocation8], 384
    $region137: #{tpu_custom_call.1} parent=1 // pred_fallthru
      _
    %7643 = vsyncpa [#allocation7], 1
    %7644 = vsyncpa [#allocation10], 1
    %7645 = vsyncpa [#allocation13], 1
    %7646 = vsyncpa [#allocation16], 1
    %7647 = vsyncpa [#allocation19], 1
    %7648 = vsyncpa [#allocation22], 1
    %7649 = vsyncpa [#allocation8], 1
  %7650 = vsyncmov [#allocation3]
  %s7651 = vpop.sfrf %7650
  %p7652 = scmp.eq.s32.totalorder %s7651, 0
  %p7653 = pneg %p7652
  %7655 = shalt.err (%p7653)
  %s7656 = scalar_lea.sflag [#allocation3], 1
  %7657 = vsyncmov %s7656
  %s7658 = vpop.sfrf %7657
  %p7659 = scmp.eq.s32.totalorder %s7658, 0
  %p7660 = pneg %p7659
  %7662 = shalt.err (%p7660)

</llo_original>
